<compile_context>
chip_gen: v7x
topology: tpu7x:2x2x1
jax: 0.10.0
libtpu: 0.0.40
codegen_flags: <defaults>
</compile_context>

<pallas_src>
import functools
import math

import jax
import jax.numpy as jnp
from jax import lax
from jax.experimental import pallas as pl
from jax.experimental.pallas import tpu as pltpu

IN_F = 80     # lstm1 input feature size
H1 = 256      # lstm1 hidden size (per direction)
H2 = 32       # lstm2 hidden size (per direction); 4*H2 = 128 = one lane tile
FC_H = 100    # fc_ha output size
BP = 8        # batch rows padded to a full sublane group


# ---------------------------------------------------------------------------
# Fused-gate LSTM cell math (input projection already added into `pre`)
# ---------------------------------------------------------------------------
def _lstm_gates(pre, c, h_width):
    """pre: (BP, 4*h_width) fused gate pre-activations, PyTorch order i,f,g,o."""
    i = jax.nn.sigmoid(pre[:, 0 * h_width:1 * h_width])
    f = jax.nn.sigmoid(pre[:, 1 * h_width:2 * h_width])
    g = jnp.tanh(pre[:, 2 * h_width:3 * h_width])
    o = jax.nn.sigmoid(pre[:, 3 * h_width:4 * h_width])
    c_new = f * c + i * g
    h_new = o * jnp.tanh(c_new)
    return h_new, c_new


# ---------------------------------------------------------------------------
# Pallas kernel
# ---------------------------------------------------------------------------
def lstmnet_kernel(T, B,
                   x_ref, wih1_ref, b1_ref,
                   whh1f_hbm, whh1b_hbm,
                   wih2f_hbm, whh2f_ref, b2f_ref,
                   wih2b_hbm, b2b_ref,
                   wha_ref, bha_ref, w1_ref, b1h_ref,
                   out_ref,
                   xp1_scr, x1_scr, xp2_scr,
                   whh1f_buf, whh1b_buf, wih2f_buf, wih2b_buf,
                   dma_sem):
    f32 = jnp.float32
    bf16 = jnp.bfloat16
    G1 = 4 * H1

    # ---- Phase 0: launch weight prefetch DMAs (hidden behind Phases 1-2) ---
    cp_whh1f = pltpu.make_async_copy(whh1f_hbm, whh1f_buf, dma_sem.at[0])
    cp_whh1b = pltpu.make_async_copy(whh1b_hbm, whh1b_buf, dma_sem.at[1])
    cp_wih2f = pltpu.make_async_copy(wih2f_hbm, wih2f_buf, dma_sem.at[2])
    cp_wih2b = pltpu.make_async_copy(wih2b_hbm, wih2b_buf, dma_sem.at[3])
    cp_whh1f.start()
    cp_whh1b.start()
    cp_wih2f.start()
    cp_wih2b.start()

    # ---- Phase 1: fused layer-1 input projections (both directions at once)
    # One (T*BP, 80) @ (80, 2048) bf16 matmul, bias folded in.
    x_bf = x_ref[...].astype(bf16)
    xp1_scr[...] = (jnp.dot(x_bf, wih1_ref[...], preferred_element_type=f32)
                    + b1_ref[...])

    # ---- Phase 2: layer-1 fwd + bwd, interleaved, fully unrolled ----------
    cp_whh1f.wait()
    cp_whh1b.wait()
    hf = jnp.zeros((BP, H1), f32)
    cf = jnp.zeros((BP, H1), f32)
    hb = jnp.zeros((BP, H1), f32)
    cb = jnp.zeros((BP, H1), f32)
    for s in range(T):                    # static unroll: T is compile-time
        tf, tb = s, T - 1 - s
        pre_f = (xp1_scr[BP * tf:BP * (tf + 1), 0:G1]
                 + jnp.dot(hf.astype(bf16), whh1f_buf[...],
                           preferred_element_type=f32))
        pre_b = (xp1_scr[BP * tb:BP * (tb + 1), G1:2 * G1]
                 + jnp.dot(hb.astype(bf16), whh1b_buf[...],
                           preferred_element_type=f32))
        hf, cf = _lstm_gates(pre_f, cf, H1)
        hb, cb = _lstm_gates(pre_b, cb, H1)
        # Merged (T*BP, 2*H1) slab: fwd -> cols [0:256], bwd -> cols [256:512].
        x1_scr[BP * tf:BP * (tf + 1), 0:H1] = hf
        x1_scr[BP * tb:BP * (tb + 1), H1:2 * H1] = hb

    # ---- Phase 3: hoisted layer-2 forward input projection -----------------
    cp_wih2f.wait()
    xp2_scr[...] = (jnp.dot(x1_scr[...].astype(bf16), wih2f_buf[...],
                            preferred_element_type=f32) + b2f_ref[...])

    # ---- Phase 4: layer-2 forward (only the final hidden state is needed) --
    h2 = jnp.zeros((BP, H2), f32)
    c2 = jnp.zeros((BP, H2), f32)
    whh2f = whh2f_ref[...]                                  # (H2, 4*H2) bf16
    for t in range(T):
        pre = (xp2_scr[BP * t:BP * (t + 1), :]
               + jnp.dot(h2.astype(bf16), whh2f, preferred_element_type=f32))
        h2, c2 = _lstm_gates(pre, c2, H2)
    h2f = h2

    # ---- Phase 5: layer-2 reverse direction --------------------------------
    # The head only consumes x2[-1]; the reverse direction's output at t=T-1
    # is its FIRST step with a zero initial state, so no recurrent matmul is
    # needed.  (Fragile if the head ever reads other timesteps.)
    cp_wih2b.wait()
    pre_rb = (jnp.dot(x1_scr[BP * (T - 1):BP * T, :].astype(bf16),
                      wih2b_buf[...], preferred_element_type=f32)
              + b2b_ref[...])
    h2b, _ = _lstm_gates(pre_rb, jnp.zeros((BP, H2), f32), H2)

    # ---- Phase 6: attention head (softmax over the batch axis, matching the
    #      PyTorch Softmax(dim=1) applied to a (1, B, 1) tensor).  Head math
    #      stays f32; padded batch rows are masked out of the softmax. --------
    ht = jnp.concatenate([h2f, h2b], axis=-1)               # (BP, 2*H2)
    ha = jnp.tanh(jnp.dot(ht, wha_ref[...], preferred_element_type=f32)
                  + bha_ref[...])                            # (BP, FC_H)
    alp = jnp.sum(ha * w1_ref[...], axis=-1, keepdims=True) + b1h_ref[...]
    row = lax.broadcasted_iota(jnp.int32, (BP, 1), 0)
    alp = jnp.where(row < B, alp, jnp.float32(-1e30))        # mask padded rows
    m = jnp.max(alp, axis=0, keepdims=True)
    e = jnp.exp(alp - m)
    al = e / jnp.sum(e, axis=0, keepdims=True)               # (BP, 1)
    # bmm(al.view(1,1,B), ht.view(1,B,D)).squeeze(0) == weighted sum over batch
    out_ref[...] = jnp.sum(al * ht, axis=0, keepdims=True)   # (1, 2*H2)


def lstmnet_forward(x, params):
    T, B, F = x.shape
    # Host-side: pad the batch axis to a full sublane group and flatten to 2-D.
    x_pad = jnp.zeros((T, BP, F), jnp.float32).at[:, :B, :].set(x)
    x2d = x_pad.reshape(T * BP, F)
    args = (x2d,
            params["wih1_k"], params["b1_k"],
            params["whh1f_k"], params["whh1b_k"],
            params["wih2f_k"], params["whh2f_k"], params["b2f_k"],
            params["wih2b_k"], params["b2b_k"],
            params["wha"], params["bha"], params["w1"], params["b1"])
    vmem = pl.BlockSpec(memory_space=pltpu.MemorySpace.VMEM)
    hbm = pl.BlockSpec(memory_space=pl.ANY)      # manually DMA'd (prefetched)
    in_specs = [
        vmem, vmem, vmem,        # x, wih1 (fused), b1 (fused)
        hbm, hbm,                # whh1f, whh1b          (Phase 2)
        hbm, vmem, vmem,         # wih2f, whh2f, b2f     (Phases 3/4)
        hbm, vmem,               # wih2b, b2b            (Phase 5)
        vmem, vmem, vmem, vmem,  # wha, bha, w1, b1      (Phase 6)
    ]
    kernel = functools.partial(lstmnet_kernel, T, B)
    return pl.pallas_call(
        kernel,
        out_shape=jax.ShapeDtypeStruct((1, 2 * H2), jnp.float32),
        in_specs=in_specs,
        out_specs=pl.BlockSpec(memory_space=pltpu.MemorySpace.VMEM),
        scratch_shapes=[
            pltpu.VMEM((T * BP, 2 * 4 * H1), jnp.float32),   # fused l1 projections
            pltpu.VMEM((T * BP, 2 * H1), jnp.float32),       # merged l1 outputs
            pltpu.VMEM((T * BP, 4 * H2), jnp.float32),       # hoisted l2 fwd proj
            pltpu.VMEM((H1, 4 * H1), jnp.bfloat16),          # whh1f prefetch buf
            pltpu.VMEM((H1, 4 * H1), jnp.bfloat16),          # whh1b prefetch buf
            pltpu.VMEM((2 * H1, 4 * H2), jnp.bfloat16),      # wih2f prefetch buf
            pltpu.VMEM((2 * H1, 4 * H2), jnp.bfloat16),      # wih2b prefetch buf
            pltpu.SemaphoreType.DMA((4,)),
        ],
    )(*args)


# ---------------------------------------------------------------------------
# Deterministic parameter init (PyTorch-style uniform(-1/sqrt(H), 1/sqrt(H)))
# f32 copies feed the reference; fused/bf16 copies feed the kernel.
# ---------------------------------------------------------------------------
def _init_lstm_dir(key, in_dim, H):
    k1, k2, k3, k4 = jax.random.split(key, 4)
    bound = 1.0 / math.sqrt(H)
    w_ih = jax.random.uniform(k1, (4 * H, in_dim), jnp.float32, -bound, bound)
    w_hh = jax.random.uniform(k2, (4 * H, H), jnp.float32, -bound, bound)
    b_ih = jax.random.uniform(k3, (4 * H,), jnp.float32, -bound, bound)
    b_hh = jax.random.uniform(k4, (4 * H,), jnp.float32, -bound, bound)
    # Fused, transposed layout: (in, 4H), (H, 4H), (1, 4H); gate order i,f,g,o.
    return w_ih.T, w_hh.T, (b_ih + b_hh).reshape(1, 4 * H)


def init_params(key):
    keys = jax.random.split(key, 8)
    bf16 = jnp.bfloat16
    p = {}
    p["wih1f"], p["whh1f"], p["b1f"] = _init_lstm_dir(keys[0], IN_F, H1)
    p["wih1b"], p["whh1b"], p["b1b"] = _init_lstm_dir(keys[1], IN_F, H1)
    p["wih2f"], p["whh2f"], p["b2f"] = _init_lstm_dir(keys[2], 2 * H1, H2)
    p["wih2b"], p["whh2b"], p["b2b"] = _init_lstm_dir(keys[3], 2 * H1, H2)
    bnd_ha = 1.0 / math.sqrt(2 * H2)
    w_ha = jax.random.uniform(keys[4], (FC_H, 2 * H2), jnp.float32, -bnd_ha, bnd_ha)
    b_ha = jax.random.uniform(keys[5], (FC_H,), jnp.float32, -bnd_ha, bnd_ha)
    bnd_1 = 1.0 / math.sqrt(FC_H)
    w_1 = jax.random.uniform(keys[6], (1, FC_H), jnp.float32, -bnd_1, bnd_1)
    b_1 = jax.random.uniform(keys[7], (1,), jnp.float32, -bnd_1, bnd_1)
    p["wha"] = w_ha.T                  # (2*H2, FC_H)
    p["bha"] = b_ha.reshape(1, FC_H)   # (1, FC_H)
    p["w1"] = w_1                      # (1, FC_H); applied via mul + lane-reduce
    p["b1"] = b_1.reshape(1, 1)        # (1, 1)

    # --- kernel-packed copies (bf16 MXU operands, fused layer-1 directions) ---
    p["wih1_k"] = jnp.concatenate([p["wih1f"], p["wih1b"]], axis=1).astype(bf16)  # (80, 2048)
    p["b1_k"] = jnp.concatenate([p["b1f"], p["b1b"]], axis=1)                     # (1, 2048) f32
    p["whh1f_k"] = p["whh1f"].astype(bf16)     # (256, 1024)
    p["whh1b_k"] = p["whh1b"].astype(bf16)     # (256, 1024)
    p["wih2f_k"] = p["wih2f"].astype(bf16)     # (512, 128) -- one lane tile wide
    p["whh2f_k"] = p["whh2f"].astype(bf16)     # (32, 128)
    p["b2f_k"] = p["b2f"]                      # (1, 128) f32
    p["wih2b_k"] = p["wih2b"].astype(bf16)     # (512, 128)
    p["b2b_k"] = p["b2b"]                      # (1, 128) f32
    # whh2b is only needed by the full reference; the kernel's single reverse
    # step starts from a zero state so its recurrent term vanishes.
    return p


# ---------------------------------------------------------------------------
# Pure-JAX f32 reference (full bidirectional LSTM, unfused weights)
# ---------------------------------------------------------------------------
def _lstm_dir_ref(xs, wih, whh, b, H, reverse):
    _, B, _ = xs.shape

    def step(carry, x_t):
        h, c = carry
        pre = x_t @ wih + h @ whh + b
        i = jax.nn.sigmoid(pre[:, 0:H])
        f = jax.nn.sigmoid(pre[:, H:2 * H])
        g = jnp.tanh(pre[:, 2 * H:3 * H])
        o = jnp.tanh(pre[:, 3 * H:4 * H]) if False else jax.nn.sigmoid(pre[:, 3 * H:4 * H])
        c = f * c + i * g
        h = o * jnp.tanh(c)
        return (h, c), h

    z = jnp.zeros((B, H), jnp.float32)
    xs_iter = xs[::-1] if reverse else xs
    _, hs = lax.scan(step, (z, z), xs_iter)
    return hs[::-1] if reverse else hs


def lstmnet_ref(x, p):
    h1f = _lstm_dir_ref(x, p["wih1f"], p["whh1f"], p["b1f"], H1, False)
    h1b = _lstm_dir_ref(x, p["wih1b"], p["whh1b"], p["b1b"], H1, True)
    x1 = jnp.concatenate([h1f, h1b], axis=-1)
    h2f = _lstm_dir_ref(x1, p["wih2f"], p["whh2f"], p["b2f"], H2, False)
    h2b = _lstm_dir_ref(x1, p["wih2b"], p["whh2b"], p["b2b"], H2, True)
    x2 = jnp.concatenate([h2f, h2b], axis=-1)
    ht = x2[-1]                                              # (B, 2*H2)
    ha = jnp.tanh(ht @ p["wha"] + p["bha"])                  # (B, FC_H)
    alp = jnp.sum(ha * p["w1"], axis=-1, keepdims=True) + p["b1"]
    al = jax.nn.softmax(alp, axis=0)
    return jnp.sum(al * ht, axis=0, keepdims=True)           # (1, 2*H2)


if __name__ == "__main__":
    key = jax.random.PRNGKey(0)
    kx, kp = jax.random.split(key)
    T, B = 8, 2                      # seq_len=8, batch=2, features fixed at 80
    x = jax.random.normal(kx, (T, B, IN_F), jnp.float32)
    params = init_params(kp)

    out = lstmnet_forward(x, params)
    out = jax.block_until_ready(out)

    ref = lstmnet_ref(x, params)
    assert out.shape == (1, 2 * H2), out.shape
    err = float(jnp.max(jnp.abs(out - ref)))
    # bf16 MXU operands (f32 accumulation) over the two recurrent chains give
    # a few 1e-3 of rounding vs. the f32 reference; 2e-2 still catches any
    # structural bug (wrong gate order / missing direction => errors >= 5e-2).
    assert err < 2e-2, f"max abs err too large: {err}"
    print("KERNEL_OK")
</pallas_src>

<mosaic_0001>
module attributes {stable_mosaic.version = 11 : i64} {
  func.func @lstmnet_kernel(%arg0: memref<64x80xf32, #tpu.memory_space<vmem>>, %arg1: memref<80x2048xbf16, #tpu.memory_space<vmem>>, %arg2: memref<1x2048xf32, #tpu.memory_space<vmem>>, %arg3: memref<256x1024xbf16, #tpu.memory_space<any>>, %arg4: memref<256x1024xbf16, #tpu.memory_space<any>>, %arg5: memref<512x128xbf16, #tpu.memory_space<any>>, %arg6: memref<32x128xbf16, #tpu.memory_space<vmem>>, %arg7: memref<1x128xf32, #tpu.memory_space<vmem>>, %arg8: memref<512x128xbf16, #tpu.memory_space<any>>, %arg9: memref<1x128xf32, #tpu.memory_space<vmem>>, %arg10: memref<64x100xf32, #tpu.memory_space<vmem>>, %arg11: memref<1x100xf32, #tpu.memory_space<vmem>>, %arg12: memref<1x100xf32, #tpu.memory_space<vmem>>, %arg13: memref<1x1xf32, #tpu.memory_space<vmem>>, %arg14: memref<1x64xf32, #tpu.memory_space<vmem>>, %arg15: memref<64x2048xf32, #tpu.memory_space<vmem>>, %arg16: memref<64x512xf32, #tpu.memory_space<vmem>>, %arg17: memref<64x128xf32, #tpu.memory_space<vmem>>, %arg18: memref<256x1024xbf16, #tpu.memory_space<vmem>>, %arg19: memref<256x1024xbf16, #tpu.memory_space<vmem>>, %arg20: memref<512x128xbf16, #tpu.memory_space<vmem>>, %arg21: memref<512x128xbf16, #tpu.memory_space<vmem>>, %arg22: memref<4x!tpu.dma_semaphore, #tpu.memory_space<semaphore_mem>>) attributes {dimension_semantics = [], scalar_prefetch = 0 : i64, scratch_operands = 8 : i64, tpu.core_type = #tpu.core_type<tc>} {
    %c0_i32 = arith.constant 0 : i32
    %0 = tpu.memref_slice %arg22[%c0_i32] : memref<4x!tpu.dma_semaphore, #tpu.memory_space<semaphore_mem>> -> memref<1x!tpu.dma_semaphore, #tpu.memory_space<semaphore_mem>>
    %1 = tpu.memref_squeeze %0 : memref<1x!tpu.dma_semaphore, #tpu.memory_space<semaphore_mem>> -> memref<!tpu.dma_semaphore, #tpu.memory_space<semaphore_mem>>
    tpu.enqueue_dma source(%arg3 : memref<256x1024xbf16, #tpu.memory_space<any>>) target(%arg18 : memref<256x1024xbf16, #tpu.memory_space<vmem>>) target_semaphore(%1 : memref<!tpu.dma_semaphore, #tpu.memory_space<semaphore_mem>>)
    %c1_i32 = arith.constant 1 : i32
    %2 = tpu.memref_slice %arg22[%c1_i32] : memref<4x!tpu.dma_semaphore, #tpu.memory_space<semaphore_mem>> -> memref<1x!tpu.dma_semaphore, #tpu.memory_space<semaphore_mem>>
    %3 = tpu.memref_squeeze %2 : memref<1x!tpu.dma_semaphore, #tpu.memory_space<semaphore_mem>> -> memref<!tpu.dma_semaphore, #tpu.memory_space<semaphore_mem>>
    tpu.enqueue_dma source(%arg4 : memref<256x1024xbf16, #tpu.memory_space<any>>) target(%arg19 : memref<256x1024xbf16, #tpu.memory_space<vmem>>) target_semaphore(%3 : memref<!tpu.dma_semaphore, #tpu.memory_space<semaphore_mem>>)
    %c2_i32 = arith.constant 2 : i32
    %4 = tpu.memref_slice %arg22[%c2_i32] : memref<4x!tpu.dma_semaphore, #tpu.memory_space<semaphore_mem>> -> memref<1x!tpu.dma_semaphore, #tpu.memory_space<semaphore_mem>>
    %5 = tpu.memref_squeeze %4 : memref<1x!tpu.dma_semaphore, #tpu.memory_space<semaphore_mem>> -> memref<!tpu.dma_semaphore, #tpu.memory_space<semaphore_mem>>
    tpu.enqueue_dma source(%arg5 : memref<512x128xbf16, #tpu.memory_space<any>>) target(%arg20 : memref<512x128xbf16, #tpu.memory_space<vmem>>) target_semaphore(%5 : memref<!tpu.dma_semaphore, #tpu.memory_space<semaphore_mem>>)
    %c3_i32 = arith.constant 3 : i32
    %6 = tpu.memref_slice %arg22[%c3_i32] : memref<4x!tpu.dma_semaphore, #tpu.memory_space<semaphore_mem>> -> memref<1x!tpu.dma_semaphore, #tpu.memory_space<semaphore_mem>>
    %7 = tpu.memref_squeeze %6 : memref<1x!tpu.dma_semaphore, #tpu.memory_space<semaphore_mem>> -> memref<!tpu.dma_semaphore, #tpu.memory_space<semaphore_mem>>
    tpu.enqueue_dma source(%arg8 : memref<512x128xbf16, #tpu.memory_space<any>>) target(%arg21 : memref<512x128xbf16, #tpu.memory_space<vmem>>) target_semaphore(%7 : memref<!tpu.dma_semaphore, #tpu.memory_space<semaphore_mem>>)
    %c0 = arith.constant 0 : index
    %c0_0 = arith.constant 0 : index
    %8 = vector.load %arg0[%c0, %c0_0] : memref<64x80xf32, #tpu.memory_space<vmem>>, vector<64x80xf32>
    %9 = arith.truncf %8 : vector<64x80xf32> to vector<64x80xbf16>
    %c0_1 = arith.constant 0 : index
    %c0_2 = arith.constant 0 : index
    %10 = vector.load %arg1[%c0_1, %c0_2] : memref<80x2048xbf16, #tpu.memory_space<vmem>>, vector<80x2048xbf16>
    %cst = arith.constant dense<0.000000e+00> : vector<64x2048xf32>
    %11 = tpu.matmul %9, %10, %cst {dimension_numbers = #tpu.dot_dimension_numbers<[1], [0], [0], [1], [0, 0, 1, 1], [], []>} : vector<64x80xbf16>, vector<80x2048xbf16>, vector<64x2048xf32> -> vector<64x2048xf32>
    %c0_3 = arith.constant 0 : index
    %c0_4 = arith.constant 0 : index
    %12 = vector.load %arg2[%c0_3, %c0_4] : memref<1x2048xf32, #tpu.memory_space<vmem>>, vector<1x2048xf32>
    %13 = vector.broadcast %12 : vector<1x2048xf32> to vector<64x2048xf32>
    %14 = arith.addf %11, %13 : vector<64x2048xf32>
    %c0_5 = arith.constant 0 : index
    %c0_6 = arith.constant 0 : index
    %15 = vector.load %arg15[%c0_5, %c0_6] : memref<64x2048xf32, #tpu.memory_space<vmem>>, vector<64x2048xf32>
    tpu.vector_store %arg15[%c0_5, %c0_6], %14 {strides = array<i32>} : memref<64x2048xf32, #tpu.memory_space<vmem>>, vector<64x2048xf32>,
    %c0_i32_7 = arith.constant 0 : i32
    %16 = tpu.memref_slice %arg22[%c0_i32_7] : memref<4x!tpu.dma_semaphore, #tpu.memory_space<semaphore_mem>> -> memref<1x!tpu.dma_semaphore, #tpu.memory_space<semaphore_mem>>
    %17 = tpu.memref_squeeze %16 : memref<1x!tpu.dma_semaphore, #tpu.memory_space<semaphore_mem>> -> memref<!tpu.dma_semaphore, #tpu.memory_space<semaphore_mem>>
    tpu.wait_dma2 semaphore(%17 : memref<!tpu.dma_semaphore, #tpu.memory_space<semaphore_mem>>) src(%arg3 : memref<256x1024xbf16, #tpu.memory_space<any>>) dst(%arg18 : memref<256x1024xbf16, #tpu.memory_space<vmem>>)
    %c1_i32_8 = arith.constant 1 : i32
    %18 = tpu.memref_slice %arg22[%c1_i32_8] : memref<4x!tpu.dma_semaphore, #tpu.memory_space<semaphore_mem>> -> memref<1x!tpu.dma_semaphore, #tpu.memory_space<semaphore_mem>>
    %19 = tpu.memref_squeeze %18 : memref<1x!tpu.dma_semaphore, #tpu.memory_space<semaphore_mem>> -> memref<!tpu.dma_semaphore, #tpu.memory_space<semaphore_mem>>
    tpu.wait_dma2 semaphore(%19 : memref<!tpu.dma_semaphore, #tpu.memory_space<semaphore_mem>>) src(%arg4 : memref<256x1024xbf16, #tpu.memory_space<any>>) dst(%arg19 : memref<256x1024xbf16, #tpu.memory_space<vmem>>)
    %cst_9 = arith.constant 0.000000e+00 : f32
    %20 = vector.broadcast %cst_9 : f32 to vector<8x256xf32>
    %cst_10 = arith.constant 0.000000e+00 : f32
    %21 = vector.broadcast %cst_10 : f32 to vector<8x256xf32>
    %cst_11 = arith.constant 0.000000e+00 : f32
    %22 = vector.broadcast %cst_11 : f32 to vector<8x256xf32>
    %cst_12 = arith.constant 0.000000e+00 : f32
    %23 = vector.broadcast %cst_12 : f32 to vector<8x256xf32>
    %c0_13 = arith.constant 0 : index
    %c0_14 = arith.constant 0 : index
    %24 = vector.load %arg15[%c0_13, %c0_14] : memref<64x2048xf32, #tpu.memory_space<vmem>>, vector<8x1024xf32>
    %25 = arith.truncf %20 : vector<8x256xf32> to vector<8x256xbf16>
    %c0_15 = arith.constant 0 : index
    %c0_16 = arith.constant 0 : index
    %26 = vector.load %arg18[%c0_15, %c0_16] : memref<256x1024xbf16, #tpu.memory_space<vmem>>, vector<256x1024xbf16>
    %cst_17 = arith.constant dense<0.000000e+00> : vector<8x1024xf32>
    %27 = tpu.matmul %25, %26, %cst_17 {dimension_numbers = #tpu.dot_dimension_numbers<[1], [0], [0], [1], [0, 0, 1, 1], [], []>} : vector<8x256xbf16>, vector<256x1024xbf16>, vector<8x1024xf32> -> vector<8x1024xf32>
    %28 = arith.addf %24, %27 : vector<8x1024xf32>
    %c56 = arith.constant 56 : index
    %c1024 = arith.constant 1024 : index
    %29 = vector.load %arg15[%c56, %c1024] : memref<64x2048xf32, #tpu.memory_space<vmem>>, vector<8x1024xf32>
    %30 = arith.truncf %22 : vector<8x256xf32> to vector<8x256xbf16>
    %c0_18 = arith.constant 0 : index
    %c0_19 = arith.constant 0 : index
    %31 = vector.load %arg19[%c0_18, %c0_19] : memref<256x1024xbf16, #tpu.memory_space<vmem>>, vector<256x1024xbf16>
    %cst_20 = arith.constant dense<0.000000e+00> : vector<8x1024xf32>
    %32 = tpu.matmul %30, %31, %cst_20 {dimension_numbers = #tpu.dot_dimension_numbers<[1], [0], [0], [1], [0, 0, 1, 1], [], []>} : vector<8x256xbf16>, vector<256x1024xbf16>, vector<8x1024xf32> -> vector<8x1024xf32>
    %33 = arith.addf %29, %32 : vector<8x1024xf32>
    %34 = vector.extract_strided_slice %28 {offsets = [0, 0], sizes = [8, 256], strides = [1, 1]} : vector<8x1024xf32> to vector<8x256xf32>
    %35 = arith.negf %34 : vector<8x256xf32>
    %36 = math.exp %35 : vector<8x256xf32>
    %cst_21 = arith.constant 1.000000e+00 : f32
    %37 = vector.broadcast %cst_21 : f32 to vector<8x256xf32>
    %38 = arith.addf %37, %36 : vector<8x256xf32>
    %39 = arith.divf %37, %38 : vector<8x256xf32>
    %40 = vector.extract_strided_slice %28 {offsets = [0, 256], sizes = [8, 256], strides = [1, 1]} : vector<8x1024xf32> to vector<8x256xf32>
    %41 = arith.negf %40 : vector<8x256xf32>
    %42 = math.exp %41 : vector<8x256xf32>
    %cst_22 = arith.constant 1.000000e+00 : f32
    %43 = vector.broadcast %cst_22 : f32 to vector<8x256xf32>
    %44 = arith.addf %43, %42 : vector<8x256xf32>
    %45 = arith.divf %43, %44 : vector<8x256xf32>
    %46 = vector.extract_strided_slice %28 {offsets = [0, 512], sizes = [8, 256], strides = [1, 1]} : vector<8x1024xf32> to vector<8x256xf32>
    %47 = math.tanh %46 : vector<8x256xf32>
    %48 = vector.extract_strided_slice %28 {offsets = [0, 768], sizes = [8, 256], strides = [1, 1]} : vector<8x1024xf32> to vector<8x256xf32>
    %49 = arith.negf %48 : vector<8x256xf32>
    %50 = math.exp %49 : vector<8x256xf32>
    %cst_23 = arith.constant 1.000000e+00 : f32
    %51 = vector.broadcast %cst_23 : f32 to vector<8x256xf32>
    %52 = arith.addf %51, %50 : vector<8x256xf32>
    %53 = arith.divf %51, %52 : vector<8x256xf32>
    %54 = arith.mulf %45, %21 : vector<8x256xf32>
    %55 = arith.mulf %39, %47 : vector<8x256xf32>
    %56 = arith.addf %54, %55 : vector<8x256xf32>
    %57 = math.tanh %56 : vector<8x256xf32>
    %58 = arith.mulf %53, %57 : vector<8x256xf32>
    %59 = vector.extract_strided_slice %33 {offsets = [0, 0], sizes = [8, 256], strides = [1, 1]} : vector<8x1024xf32> to vector<8x256xf32>
    %60 = arith.negf %59 : vector<8x256xf32>
    %61 = math.exp %60 : vector<8x256xf32>
    %cst_24 = arith.constant 1.000000e+00 : f32
    %62 = vector.broadcast %cst_24 : f32 to vector<8x256xf32>
    %63 = arith.addf %62, %61 : vector<8x256xf32>
    %64 = arith.divf %62, %63 : vector<8x256xf32>
    %65 = vector.extract_strided_slice %33 {offsets = [0, 256], sizes = [8, 256], strides = [1, 1]} : vector<8x1024xf32> to vector<8x256xf32>
    %66 = arith.negf %65 : vector<8x256xf32>
    %67 = math.exp %66 : vector<8x256xf32>
    %cst_25 = arith.constant 1.000000e+00 : f32
    %68 = vector.broadcast %cst_25 : f32 to vector<8x256xf32>
    %69 = arith.addf %68, %67 : vector<8x256xf32>
    %70 = arith.divf %68, %69 : vector<8x256xf32>
    %71 = vector.extract_strided_slice %33 {offsets = [0, 512], sizes = [8, 256], strides = [1, 1]} : vector<8x1024xf32> to vector<8x256xf32>
    %72 = math.tanh %71 : vector<8x256xf32>
    %73 = vector.extract_strided_slice %33 {offsets = [0, 768], sizes = [8, 256], strides = [1, 1]} : vector<8x1024xf32> to vector<8x256xf32>
    %74 = arith.negf %73 : vector<8x256xf32>
    %75 = math.exp %74 : vector<8x256xf32>
    %cst_26 = arith.constant 1.000000e+00 : f32
    %76 = vector.broadcast %cst_26 : f32 to vector<8x256xf32>
    %77 = arith.addf %76, %75 : vector<8x256xf32>
    %78 = arith.divf %76, %77 : vector<8x256xf32>
    %79 = arith.mulf %70, %23 : vector<8x256xf32>
    %80 = arith.mulf %64, %72 : vector<8x256xf32>
    %81 = arith.addf %79, %80 : vector<8x256xf32>
    %82 = math.tanh %81 : vector<8x256xf32>
    %83 = arith.mulf %78, %82 : vector<8x256xf32>
    %c0_27 = arith.constant 0 : index
    %c0_28 = arith.constant 0 : index
    %84 = vector.load %arg16[%c0_27, %c0_28] : memref<64x512xf32, #tpu.memory_space<vmem>>, vector<8x256xf32>
    tpu.vector_store %arg16[%c0_27, %c0_28], %58 {strides = array<i32>} : memref<64x512xf32, #tpu.memory_space<vmem>>, vector<8x256xf32>,
    %c56_29 = arith.constant 56 : index
    %c256 = arith.constant 256 : index
    %85 = vector.load %arg16[%c56_29, %c256] : memref<64x512xf32, #tpu.memory_space<vmem>>, vector<8x256xf32>
    tpu.vector_store %arg16[%c56_29, %c256], %83 {strides = array<i32>} : memref<64x512xf32, #tpu.memory_space<vmem>>, vector<8x256xf32>,
    %c8 = arith.constant 8 : index
    %c0_30 = arith.constant 0 : index
    %86 = vector.load %arg15[%c8, %c0_30] : memref<64x2048xf32, #tpu.memory_space<vmem>>, vector<8x1024xf32>
    %87 = arith.truncf %58 : vector<8x256xf32> to vector<8x256xbf16>
    %c0_31 = arith.constant 0 : index
    %c0_32 = arith.constant 0 : index
    %88 = vector.load %arg18[%c0_31, %c0_32] : memref<256x1024xbf16, #tpu.memory_space<vmem>>, vector<256x1024xbf16>
    %cst_33 = arith.constant dense<0.000000e+00> : vector<8x1024xf32>
    %89 = tpu.matmul %87, %88, %cst_33 {dimension_numbers = #tpu.dot_dimension_numbers<[1], [0], [0], [1], [0, 0, 1, 1], [], []>} : vector<8x256xbf16>, vector<256x1024xbf16>, vector<8x1024xf32> -> vector<8x1024xf32>
    %90 = arith.addf %86, %89 : vector<8x1024xf32>
    %c48 = arith.constant 48 : index
    %c1024_34 = arith.constant 1024 : index
    %91 = vector.load %arg15[%c48, %c1024_34] : memref<64x2048xf32, #tpu.memory_space<vmem>>, vector<8x1024xf32>
    %92 = arith.truncf %83 : vector<8x256xf32> to vector<8x256xbf16>
    %c0_35 = arith.constant 0 : index
    %c0_36 = arith.constant 0 : index
    %93 = vector.load %arg19[%c0_35, %c0_36] : memref<256x1024xbf16, #tpu.memory_space<vmem>>, vector<256x1024xbf16>
    %cst_37 = arith.constant dense<0.000000e+00> : vector<8x1024xf32>
    %94 = tpu.matmul %92, %93, %cst_37 {dimension_numbers = #tpu.dot_dimension_numbers<[1], [0], [0], [1], [0, 0, 1, 1], [], []>} : vector<8x256xbf16>, vector<256x1024xbf16>, vector<8x1024xf32> -> vector<8x1024xf32>
    %95 = arith.addf %91, %94 : vector<8x1024xf32>
    %96 = vector.extract_strided_slice %90 {offsets = [0, 0], sizes = [8, 256], strides = [1, 1]} : vector<8x1024xf32> to vector<8x256xf32>
    %97 = arith.negf %96 : vector<8x256xf32>
    %98 = math.exp %97 : vector<8x256xf32>
    %cst_38 = arith.constant 1.000000e+00 : f32
    %99 = vector.broadcast %cst_38 : f32 to vector<8x256xf32>
    %100 = arith.addf %99, %98 : vector<8x256xf32>
    %101 = arith.divf %99, %100 : vector<8x256xf32>
    %102 = vector.extract_strided_slice %90 {offsets = [0, 256], sizes = [8, 256], strides = [1, 1]} : vector<8x1024xf32> to vector<8x256xf32>
    %103 = arith.negf %102 : vector<8x256xf32>
    %104 = math.exp %103 : vector<8x256xf32>
    %cst_39 = arith.constant 1.000000e+00 : f32
    %105 = vector.broadcast %cst_39 : f32 to vector<8x256xf32>
    %106 = arith.addf %105, %104 : vector<8x256xf32>
    %107 = arith.divf %105, %106 : vector<8x256xf32>
    %108 = vector.extract_strided_slice %90 {offsets = [0, 512], sizes = [8, 256], strides = [1, 1]} : vector<8x1024xf32> to vector<8x256xf32>
    %109 = math.tanh %108 : vector<8x256xf32>
    %110 = vector.extract_strided_slice %90 {offsets = [0, 768], sizes = [8, 256], strides = [1, 1]} : vector<8x1024xf32> to vector<8x256xf32>
    %111 = arith.negf %110 : vector<8x256xf32>
    %112 = math.exp %111 : vector<8x256xf32>
    %cst_40 = arith.constant 1.000000e+00 : f32
    %113 = vector.broadcast %cst_40 : f32 to vector<8x256xf32>
    %114 = arith.addf %113, %112 : vector<8x256xf32>
    %115 = arith.divf %113, %114 : vector<8x256xf32>
    %116 = arith.mulf %107, %56 : vector<8x256xf32>
    %117 = arith.mulf %101, %109 : vector<8x256xf32>
    %118 = arith.addf %116, %117 : vector<8x256xf32>
    %119 = math.tanh %118 : vector<8x256xf32>
    %120 = arith.mulf %115, %119 : vector<8x256xf32>
    %121 = vector.extract_strided_slice %95 {offsets = [0, 0], sizes = [8, 256], strides = [1, 1]} : vector<8x1024xf32> to vector<8x256xf32>
    %122 = arith.negf %121 : vector<8x256xf32>
    %123 = math.exp %122 : vector<8x256xf32>
    %cst_41 = arith.constant 1.000000e+00 : f32
    %124 = vector.broadcast %cst_41 : f32 to vector<8x256xf32>
    %125 = arith.addf %124, %123 : vector<8x256xf32>
    %126 = arith.divf %124, %125 : vector<8x256xf32>
    %127 = vector.extract_strided_slice %95 {offsets = [0, 256], sizes = [8, 256], strides = [1, 1]} : vector<8x1024xf32> to vector<8x256xf32>
    %128 = arith.negf %127 : vector<8x256xf32>
    %129 = math.exp %128 : vector<8x256xf32>
    %cst_42 = arith.constant 1.000000e+00 : f32
    %130 = vector.broadcast %cst_42 : f32 to vector<8x256xf32>
    %131 = arith.addf %130, %129 : vector<8x256xf32>
    %132 = arith.divf %130, %131 : vector<8x256xf32>
    %133 = vector.extract_strided_slice %95 {offsets = [0, 512], sizes = [8, 256], strides = [1, 1]} : vector<8x1024xf32> to vector<8x256xf32>
    %134 = math.tanh %133 : vector<8x256xf32>
    %135 = vector.extract_strided_slice %95 {offsets = [0, 768], sizes = [8, 256], strides = [1, 1]} : vector<8x1024xf32> to vector<8x256xf32>
    %136 = arith.negf %135 : vector<8x256xf32>
    %137 = math.exp %136 : vector<8x256xf32>
    %cst_43 = arith.constant 1.000000e+00 : f32
    %138 = vector.broadcast %cst_43 : f32 to vector<8x256xf32>
    %139 = arith.addf %138, %137 : vector<8x256xf32>
    %140 = arith.divf %138, %139 : vector<8x256xf32>
    %141 = arith.mulf %132, %81 : vector<8x256xf32>
    %142 = arith.mulf %126, %134 : vector<8x256xf32>
    %143 = arith.addf %141, %142 : vector<8x256xf32>
    %144 = math.tanh %143 : vector<8x256xf32>
    %145 = arith.mulf %140, %144 : vector<8x256xf32>
    %c8_44 = arith.constant 8 : index
    %c0_45 = arith.constant 0 : index
    %146 = vector.load %arg16[%c8_44, %c0_45] : memref<64x512xf32, #tpu.memory_space<vmem>>, vector<8x256xf32>
    tpu.vector_store %arg16[%c8_44, %c0_45], %120 {strides = array<i32>} : memref<64x512xf32, #tpu.memory_space<vmem>>, vector<8x256xf32>,
    %c48_46 = arith.constant 48 : index
    %c256_47 = arith.constant 256 : index
    %147 = vector.load %arg16[%c48_46, %c256_47] : memref<64x512xf32, #tpu.memory_space<vmem>>, vector<8x256xf32>
    tpu.vector_store %arg16[%c48_46, %c256_47], %145 {strides = array<i32>} : memref<64x512xf32, #tpu.memory_space<vmem>>, vector<8x256xf32>,
    %c16 = arith.constant 16 : index
    %c0_48 = arith.constant 0 : index
    %148 = vector.load %arg15[%c16, %c0_48] : memref<64x2048xf32, #tpu.memory_space<vmem>>, vector<8x1024xf32>
    %149 = arith.truncf %120 : vector<8x256xf32> to vector<8x256xbf16>
    %c0_49 = arith.constant 0 : index
    %c0_50 = arith.constant 0 : index
    %150 = vector.load %arg18[%c0_49, %c0_50] : memref<256x1024xbf16, #tpu.memory_space<vmem>>, vector<256x1024xbf16>
    %cst_51 = arith.constant dense<0.000000e+00> : vector<8x1024xf32>
    %151 = tpu.matmul %149, %150, %cst_51 {dimension_numbers = #tpu.dot_dimension_numbers<[1], [0], [0], [1], [0, 0, 1, 1], [], []>} : vector<8x256xbf16>, vector<256x1024xbf16>, vector<8x1024xf32> -> vector<8x1024xf32>
    %152 = arith.addf %148, %151 : vector<8x1024xf32>
    %c40 = arith.constant 40 : index
    %c1024_52 = arith.constant 1024 : index
    %153 = vector.load %arg15[%c40, %c1024_52] : memref<64x2048xf32, #tpu.memory_space<vmem>>, vector<8x1024xf32>
    %154 = arith.truncf %145 : vector<8x256xf32> to vector<8x256xbf16>
    %c0_53 = arith.constant 0 : index
    %c0_54 = arith.constant 0 : index
    %155 = vector.load %arg19[%c0_53, %c0_54] : memref<256x1024xbf16, #tpu.memory_space<vmem>>, vector<256x1024xbf16>
    %cst_55 = arith.constant dense<0.000000e+00> : vector<8x1024xf32>
    %156 = tpu.matmul %154, %155, %cst_55 {dimension_numbers = #tpu.dot_dimension_numbers<[1], [0], [0], [1], [0, 0, 1, 1], [], []>} : vector<8x256xbf16>, vector<256x1024xbf16>, vector<8x1024xf32> -> vector<8x1024xf32>
    %157 = arith.addf %153, %156 : vector<8x1024xf32>
    %158 = vector.extract_strided_slice %152 {offsets = [0, 0], sizes = [8, 256], strides = [1, 1]} : vector<8x1024xf32> to vector<8x256xf32>
    %159 = arith.negf %158 : vector<8x256xf32>
    %160 = math.exp %159 : vector<8x256xf32>
    %cst_56 = arith.constant 1.000000e+00 : f32
    %161 = vector.broadcast %cst_56 : f32 to vector<8x256xf32>
    %162 = arith.addf %161, %160 : vector<8x256xf32>
    %163 = arith.divf %161, %162 : vector<8x256xf32>
    %164 = vector.extract_strided_slice %152 {offsets = [0, 256], sizes = [8, 256], strides = [1, 1]} : vector<8x1024xf32> to vector<8x256xf32>
    %165 = arith.negf %164 : vector<8x256xf32>
    %166 = math.exp %165 : vector<8x256xf32>
    %cst_57 = arith.constant 1.000000e+00 : f32
    %167 = vector.broadcast %cst_57 : f32 to vector<8x256xf32>
    %168 = arith.addf %167, %166 : vector<8x256xf32>
    %169 = arith.divf %167, %168 : vector<8x256xf32>
    %170 = vector.extract_strided_slice %152 {offsets = [0, 512], sizes = [8, 256], strides = [1, 1]} : vector<8x1024xf32> to vector<8x256xf32>
    %171 = math.tanh %170 : vector<8x256xf32>
    %172 = vector.extract_strided_slice %152 {offsets = [0, 768], sizes = [8, 256], strides = [1, 1]} : vector<8x1024xf32> to vector<8x256xf32>
    %173 = arith.negf %172 : vector<8x256xf32>
    %174 = math.exp %173 : vector<8x256xf32>
    %cst_58 = arith.constant 1.000000e+00 : f32
    %175 = vector.broadcast %cst_58 : f32 to vector<8x256xf32>
    %176 = arith.addf %175, %174 : vector<8x256xf32>
    %177 = arith.divf %175, %176 : vector<8x256xf32>
    %178 = arith.mulf %169, %118 : vector<8x256xf32>
    %179 = arith.mulf %163, %171 : vector<8x256xf32>
    %180 = arith.addf %178, %179 : vector<8x256xf32>
    %181 = math.tanh %180 : vector<8x256xf32>
    %182 = arith.mulf %177, %181 : vector<8x256xf32>
    %183 = vector.extract_strided_slice %157 {offsets = [0, 0], sizes = [8, 256], strides = [1, 1]} : vector<8x1024xf32> to vector<8x256xf32>
    %184 = arith.negf %183 : vector<8x256xf32>
    %185 = math.exp %184 : vector<8x256xf32>
    %cst_59 = arith.constant 1.000000e+00 : f32
    %186 = vector.broadcast %cst_59 : f32 to vector<8x256xf32>
    %187 = arith.addf %186, %185 : vector<8x256xf32>
    %188 = arith.divf %186, %187 : vector<8x256xf32>
    %189 = vector.extract_strided_slice %157 {offsets = [0, 256], sizes = [8, 256], strides = [1, 1]} : vector<8x1024xf32> to vector<8x256xf32>
    %190 = arith.negf %189 : vector<8x256xf32>
    %191 = math.exp %190 : vector<8x256xf32>
    %cst_60 = arith.constant 1.000000e+00 : f32
    %192 = vector.broadcast %cst_60 : f32 to vector<8x256xf32>
    %193 = arith.addf %192, %191 : vector<8x256xf32>
    %194 = arith.divf %192, %193 : vector<8x256xf32>
    %195 = vector.extract_strided_slice %157 {offsets = [0, 512], sizes = [8, 256], strides = [1, 1]} : vector<8x1024xf32> to vector<8x256xf32>
    %196 = math.tanh %195 : vector<8x256xf32>
    %197 = vector.extract_strided_slice %157 {offsets = [0, 768], sizes = [8, 256], strides = [1, 1]} : vector<8x1024xf32> to vector<8x256xf32>
    %198 = arith.negf %197 : vector<8x256xf32>
    %199 = math.exp %198 : vector<8x256xf32>
    %cst_61 = arith.constant 1.000000e+00 : f32
    %200 = vector.broadcast %cst_61 : f32 to vector<8x256xf32>
    %201 = arith.addf %200, %199 : vector<8x256xf32>
    %202 = arith.divf %200, %201 : vector<8x256xf32>
    %203 = arith.mulf %194, %143 : vector<8x256xf32>
    %204 = arith.mulf %188, %196 : vector<8x256xf32>
    %205 = arith.addf %203, %204 : vector<8x256xf32>
    %206 = math.tanh %205 : vector<8x256xf32>
    %207 = arith.mulf %202, %206 : vector<8x256xf32>
    %c16_62 = arith.constant 16 : index
    %c0_63 = arith.constant 0 : index
    %208 = vector.load %arg16[%c16_62, %c0_63] : memref<64x512xf32, #tpu.memory_space<vmem>>, vector<8x256xf32>
    tpu.vector_store %arg16[%c16_62, %c0_63], %182 {strides = array<i32>} : memref<64x512xf32, #tpu.memory_space<vmem>>, vector<8x256xf32>,
    %c40_64 = arith.constant 40 : index
    %c256_65 = arith.constant 256 : index
    %209 = vector.load %arg16[%c40_64, %c256_65] : memref<64x512xf32, #tpu.memory_space<vmem>>, vector<8x256xf32>
    tpu.vector_store %arg16[%c40_64, %c256_65], %207 {strides = array<i32>} : memref<64x512xf32, #tpu.memory_space<vmem>>, vector<8x256xf32>,
    %c24 = arith.constant 24 : index
    %c0_66 = arith.constant 0 : index
    %210 = vector.load %arg15[%c24, %c0_66] : memref<64x2048xf32, #tpu.memory_space<vmem>>, vector<8x1024xf32>
    %211 = arith.truncf %182 : vector<8x256xf32> to vector<8x256xbf16>
    %c0_67 = arith.constant 0 : index
    %c0_68 = arith.constant 0 : index
    %212 = vector.load %arg18[%c0_67, %c0_68] : memref<256x1024xbf16, #tpu.memory_space<vmem>>, vector<256x1024xbf16>
    %cst_69 = arith.constant dense<0.000000e+00> : vector<8x1024xf32>
    %213 = tpu.matmul %211, %212, %cst_69 {dimension_numbers = #tpu.dot_dimension_numbers<[1], [0], [0], [1], [0, 0, 1, 1], [], []>} : vector<8x256xbf16>, vector<256x1024xbf16>, vector<8x1024xf32> -> vector<8x1024xf32>
    %214 = arith.addf %210, %213 : vector<8x1024xf32>
    %c32 = arith.constant 32 : index
    %c1024_70 = arith.constant 1024 : index
    %215 = vector.load %arg15[%c32, %c1024_70] : memref<64x2048xf32, #tpu.memory_space<vmem>>, vector<8x1024xf32>
    %216 = arith.truncf %207 : vector<8x256xf32> to vector<8x256xbf16>
    %c0_71 = arith.constant 0 : index
    %c0_72 = arith.constant 0 : index
    %217 = vector.load %arg19[%c0_71, %c0_72] : memref<256x1024xbf16, #tpu.memory_space<vmem>>, vector<256x1024xbf16>
    %cst_73 = arith.constant dense<0.000000e+00> : vector<8x1024xf32>
    %218 = tpu.matmul %216, %217, %cst_73 {dimension_numbers = #tpu.dot_dimension_numbers<[1], [0], [0], [1], [0, 0, 1, 1], [], []>} : vector<8x256xbf16>, vector<256x1024xbf16>, vector<8x1024xf32> -> vector<8x1024xf32>
    %219 = arith.addf %215, %218 : vector<8x1024xf32>
    %220 = vector.extract_strided_slice %214 {offsets = [0, 0], sizes = [8, 256], strides = [1, 1]} : vector<8x1024xf32> to vector<8x256xf32>
    %221 = arith.negf %220 : vector<8x256xf32>
    %222 = math.exp %221 : vector<8x256xf32>
    %cst_74 = arith.constant 1.000000e+00 : f32
    %223 = vector.broadcast %cst_74 : f32 to vector<8x256xf32>
    %224 = arith.addf %223, %222 : vector<8x256xf32>
    %225 = arith.divf %223, %224 : vector<8x256xf32>
    %226 = vector.extract_strided_slice %214 {offsets = [0, 256], sizes = [8, 256], strides = [1, 1]} : vector<8x1024xf32> to vector<8x256xf32>
    %227 = arith.negf %226 : vector<8x256xf32>
    %228 = math.exp %227 : vector<8x256xf32>
    %cst_75 = arith.constant 1.000000e+00 : f32
    %229 = vector.broadcast %cst_75 : f32 to vector<8x256xf32>
    %230 = arith.addf %229, %228 : vector<8x256xf32>
    %231 = arith.divf %229, %230 : vector<8x256xf32>
    %232 = vector.extract_strided_slice %214 {offsets = [0, 512], sizes = [8, 256], strides = [1, 1]} : vector<8x1024xf32> to vector<8x256xf32>
    %233 = math.tanh %232 : vector<8x256xf32>
    %234 = vector.extract_strided_slice %214 {offsets = [0, 768], sizes = [8, 256], strides = [1, 1]} : vector<8x1024xf32> to vector<8x256xf32>
    %235 = arith.negf %234 : vector<8x256xf32>
    %236 = math.exp %235 : vector<8x256xf32>
    %cst_76 = arith.constant 1.000000e+00 : f32
    %237 = vector.broadcast %cst_76 : f32 to vector<8x256xf32>
    %238 = arith.addf %237, %236 : vector<8x256xf32>
    %239 = arith.divf %237, %238 : vector<8x256xf32>
    %240 = arith.mulf %231, %180 : vector<8x256xf32>
    %241 = arith.mulf %225, %233 : vector<8x256xf32>
    %242 = arith.addf %240, %241 : vector<8x256xf32>
    %243 = math.tanh %242 : vector<8x256xf32>
    %244 = arith.mulf %239, %243 : vector<8x256xf32>
    %245 = vector.extract_strided_slice %219 {offsets = [0, 0], sizes = [8, 256], strides = [1, 1]} : vector<8x1024xf32> to vector<8x256xf32>
    %246 = arith.negf %245 : vector<8x256xf32>
    %247 = math.exp %246 : vector<8x256xf32>
    %cst_77 = arith.constant 1.000000e+00 : f32
    %248 = vector.broadcast %cst_77 : f32 to vector<8x256xf32>
    %249 = arith.addf %248, %247 : vector<8x256xf32>
    %250 = arith.divf %248, %249 : vector<8x256xf32>
    %251 = vector.extract_strided_slice %219 {offsets = [0, 256], sizes = [8, 256], strides = [1, 1]} : vector<8x1024xf32> to vector<8x256xf32>
    %252 = arith.negf %251 : vector<8x256xf32>
    %253 = math.exp %252 : vector<8x256xf32>
    %cst_78 = arith.constant 1.000000e+00 : f32
    %254 = vector.broadcast %cst_78 : f32 to vector<8x256xf32>
    %255 = arith.addf %254, %253 : vector<8x256xf32>
    %256 = arith.divf %254, %255 : vector<8x256xf32>
    %257 = vector.extract_strided_slice %219 {offsets = [0, 512], sizes = [8, 256], strides = [1, 1]} : vector<8x1024xf32> to vector<8x256xf32>
    %258 = math.tanh %257 : vector<8x256xf32>
    %259 = vector.extract_strided_slice %219 {offsets = [0, 768], sizes = [8, 256], strides = [1, 1]} : vector<8x1024xf32> to vector<8x256xf32>
    %260 = arith.negf %259 : vector<8x256xf32>
    %261 = math.exp %260 : vector<8x256xf32>
    %cst_79 = arith.constant 1.000000e+00 : f32
    %262 = vector.broadcast %cst_79 : f32 to vector<8x256xf32>
    %263 = arith.addf %262, %261 : vector<8x256xf32>
    %264 = arith.divf %262, %263 : vector<8x256xf32>
    %265 = arith.mulf %256, %205 : vector<8x256xf32>
    %266 = arith.mulf %250, %258 : vector<8x256xf32>
    %267 = arith.addf %265, %266 : vector<8x256xf32>
    %268 = math.tanh %267 : vector<8x256xf32>
    %269 = arith.mulf %264, %268 : vector<8x256xf32>
    %c24_80 = arith.constant 24 : index
    %c0_81 = arith.constant 0 : index
    %270 = vector.load %arg16[%c24_80, %c0_81] : memref<64x512xf32, #tpu.memory_space<vmem>>, vector<8x256xf32>
    tpu.vector_store %arg16[%c24_80, %c0_81], %244 {strides = array<i32>} : memref<64x512xf32, #tpu.memory_space<vmem>>, vector<8x256xf32>,
    %c32_82 = arith.constant 32 : index
    %c256_83 = arith.constant 256 : index
    %271 = vector.load %arg16[%c32_82, %c256_83] : memref<64x512xf32, #tpu.memory_space<vmem>>, vector<8x256xf32>
    tpu.vector_store %arg16[%c32_82, %c256_83], %269 {strides = array<i32>} : memref<64x512xf32, #tpu.memory_space<vmem>>, vector<8x256xf32>,
    %c32_84 = arith.constant 32 : index
    %c0_85 = arith.constant 0 : index
    %272 = vector.load %arg15[%c32_84, %c0_85] : memref<64x2048xf32, #tpu.memory_space<vmem>>, vector<8x1024xf32>
    %273 = arith.truncf %244 : vector<8x256xf32> to vector<8x256xbf16>
    %c0_86 = arith.constant 0 : index
    %c0_87 = arith.constant 0 : index
    %274 = vector.load %arg18[%c0_86, %c0_87] : memref<256x1024xbf16, #tpu.memory_space<vmem>>, vector<256x1024xbf16>
    %cst_88 = arith.constant dense<0.000000e+00> : vector<8x1024xf32>
    %275 = tpu.matmul %273, %274, %cst_88 {dimension_numbers = #tpu.dot_dimension_numbers<[1], [0], [0], [1], [0, 0, 1, 1], [], []>} : vector<8x256xbf16>, vector<256x1024xbf16>, vector<8x1024xf32> -> vector<8x1024xf32>
    %276 = arith.addf %272, %275 : vector<8x1024xf32>
    %c24_89 = arith.constant 24 : index
    %c1024_90 = arith.constant 1024 : index
    %277 = vector.load %arg15[%c24_89, %c1024_90] : memref<64x2048xf32, #tpu.memory_space<vmem>>, vector<8x1024xf32>
    %278 = arith.truncf %269 : vector<8x256xf32> to vector<8x256xbf16>
    %c0_91 = arith.constant 0 : index
    %c0_92 = arith.constant 0 : index
    %279 = vector.load %arg19[%c0_91, %c0_92] : memref<256x1024xbf16, #tpu.memory_space<vmem>>, vector<256x1024xbf16>
    %cst_93 = arith.constant dense<0.000000e+00> : vector<8x1024xf32>
    %280 = tpu.matmul %278, %279, %cst_93 {dimension_numbers = #tpu.dot_dimension_numbers<[1], [0], [0], [1], [0, 0, 1, 1], [], []>} : vector<8x256xbf16>, vector<256x1024xbf16>, vector<8x1024xf32> -> vector<8x1024xf32>
    %281 = arith.addf %277, %280 : vector<8x1024xf32>
    %282 = vector.extract_strided_slice %276 {offsets = [0, 0], sizes = [8, 256], strides = [1, 1]} : vector<8x1024xf32> to vector<8x256xf32>
    %283 = arith.negf %282 : vector<8x256xf32>
    %284 = math.exp %283 : vector<8x256xf32>
    %cst_94 = arith.constant 1.000000e+00 : f32
    %285 = vector.broadcast %cst_94 : f32 to vector<8x256xf32>
    %286 = arith.addf %285, %284 : vector<8x256xf32>
    %287 = arith.divf %285, %286 : vector<8x256xf32>
    %288 = vector.extract_strided_slice %276 {offsets = [0, 256], sizes = [8, 256], strides = [1, 1]} : vector<8x1024xf32> to vector<8x256xf32>
    %289 = arith.negf %288 : vector<8x256xf32>
    %290 = math.exp %289 : vector<8x256xf32>
    %cst_95 = arith.constant 1.000000e+00 : f32
    %291 = vector.broadcast %cst_95 : f32 to vector<8x256xf32>
    %292 = arith.addf %291, %290 : vector<8x256xf32>
    %293 = arith.divf %291, %292 : vector<8x256xf32>
    %294 = vector.extract_strided_slice %276 {offsets = [0, 512], sizes = [8, 256], strides = [1, 1]} : vector<8x1024xf32> to vector<8x256xf32>
    %295 = math.tanh %294 : vector<8x256xf32>
    %296 = vector.extract_strided_slice %276 {offsets = [0, 768], sizes = [8, 256], strides = [1, 1]} : vector<8x1024xf32> to vector<8x256xf32>
    %297 = arith.negf %296 : vector<8x256xf32>
    %298 = math.exp %297 : vector<8x256xf32>
    %cst_96 = arith.constant 1.000000e+00 : f32
    %299 = vector.broadcast %cst_96 : f32 to vector<8x256xf32>
    %300 = arith.addf %299, %298 : vector<8x256xf32>
    %301 = arith.divf %299, %300 : vector<8x256xf32>
    %302 = arith.mulf %293, %242 : vector<8x256xf32>
    %303 = arith.mulf %287, %295 : vector<8x256xf32>
    %304 = arith.addf %302, %303 : vector<8x256xf32>
    %305 = math.tanh %304 : vector<8x256xf32>
    %306 = arith.mulf %301, %305 : vector<8x256xf32>
    %307 = vector.extract_strided_slice %281 {offsets = [0, 0], sizes = [8, 256], strides = [1, 1]} : vector<8x1024xf32> to vector<8x256xf32>
    %308 = arith.negf %307 : vector<8x256xf32>
    %309 = math.exp %308 : vector<8x256xf32>
    %cst_97 = arith.constant 1.000000e+00 : f32
    %310 = vector.broadcast %cst_97 : f32 to vector<8x256xf32>
    %311 = arith.addf %310, %309 : vector<8x256xf32>
    %312 = arith.divf %310, %311 : vector<8x256xf32>
    %313 = vector.extract_strided_slice %281 {offsets = [0, 256], sizes = [8, 256], strides = [1, 1]} : vector<8x1024xf32> to vector<8x256xf32>
    %314 = arith.negf %313 : vector<8x256xf32>
    %315 = math.exp %314 : vector<8x256xf32>
    %cst_98 = arith.constant 1.000000e+00 : f32
    %316 = vector.broadcast %cst_98 : f32 to vector<8x256xf32>
    %317 = arith.addf %316, %315 : vector<8x256xf32>
    %318 = arith.divf %316, %317 : vector<8x256xf32>
    %319 = vector.extract_strided_slice %281 {offsets = [0, 512], sizes = [8, 256], strides = [1, 1]} : vector<8x1024xf32> to vector<8x256xf32>
    %320 = math.tanh %319 : vector<8x256xf32>
    %321 = vector.extract_strided_slice %281 {offsets = [0, 768], sizes = [8, 256], strides = [1, 1]} : vector<8x1024xf32> to vector<8x256xf32>
    %322 = arith.negf %321 : vector<8x256xf32>
    %323 = math.exp %322 : vector<8x256xf32>
    %cst_99 = arith.constant 1.000000e+00 : f32
    %324 = vector.broadcast %cst_99 : f32 to vector<8x256xf32>
    %325 = arith.addf %324, %323 : vector<8x256xf32>
    %326 = arith.divf %324, %325 : vector<8x256xf32>
    %327 = arith.mulf %318, %267 : vector<8x256xf32>
    %328 = arith.mulf %312, %320 : vector<8x256xf32>
    %329 = arith.addf %327, %328 : vector<8x256xf32>
    %330 = math.tanh %329 : vector<8x256xf32>
    %331 = arith.mulf %326, %330 : vector<8x256xf32>
    %c32_100 = arith.constant 32 : index
    %c0_101 = arith.constant 0 : index
    %332 = vector.load %arg16[%c32_100, %c0_101] : memref<64x512xf32, #tpu.memory_space<vmem>>, vector<8x256xf32>
    tpu.vector_store %arg16[%c32_100, %c0_101], %306 {strides = array<i32>} : memref<64x512xf32, #tpu.memory_space<vmem>>, vector<8x256xf32>,
    %c24_102 = arith.constant 24 : index
    %c256_103 = arith.constant 256 : index
    %333 = vector.load %arg16[%c24_102, %c256_103] : memref<64x512xf32, #tpu.memory_space<vmem>>, vector<8x256xf32>
    tpu.vector_store %arg16[%c24_102, %c256_103], %331 {strides = array<i32>} : memref<64x512xf32, #tpu.memory_space<vmem>>, vector<8x256xf32>,
    %c40_104 = arith.constant 40 : index
    %c0_105 = arith.constant 0 : index
    %334 = vector.load %arg15[%c40_104, %c0_105] : memref<64x2048xf32, #tpu.memory_space<vmem>>, vector<8x1024xf32>
    %335 = arith.truncf %306 : vector<8x256xf32> to vector<8x256xbf16>
    %c0_106 = arith.constant 0 : index
    %c0_107 = arith.constant 0 : index
    %336 = vector.load %arg18[%c0_106, %c0_107] : memref<256x1024xbf16, #tpu.memory_space<vmem>>, vector<256x1024xbf16>
    %cst_108 = arith.constant dense<0.000000e+00> : vector<8x1024xf32>
    %337 = tpu.matmul %335, %336, %cst_108 {dimension_numbers = #tpu.dot_dimension_numbers<[1], [0], [0], [1], [0, 0, 1, 1], [], []>} : vector<8x256xbf16>, vector<256x1024xbf16>, vector<8x1024xf32> -> vector<8x1024xf32>
    %338 = arith.addf %334, %337 : vector<8x1024xf32>
    %c16_109 = arith.constant 16 : index
    %c1024_110 = arith.constant 1024 : index
    %339 = vector.load %arg15[%c16_109, %c1024_110] : memref<64x2048xf32, #tpu.memory_space<vmem>>, vector<8x1024xf32>
    %340 = arith.truncf %331 : vector<8x256xf32> to vector<8x256xbf16>
    %c0_111 = arith.constant 0 : index
    %c0_112 = arith.constant 0 : index
    %341 = vector.load %arg19[%c0_111, %c0_112] : memref<256x1024xbf16, #tpu.memory_space<vmem>>, vector<256x1024xbf16>
    %cst_113 = arith.constant dense<0.000000e+00> : vector<8x1024xf32>
    %342 = tpu.matmul %340, %341, %cst_113 {dimension_numbers = #tpu.dot_dimension_numbers<[1], [0], [0], [1], [0, 0, 1, 1], [], []>} : vector<8x256xbf16>, vector<256x1024xbf16>, vector<8x1024xf32> -> vector<8x1024xf32>
    %343 = arith.addf %339, %342 : vector<8x1024xf32>
    %344 = vector.extract_strided_slice %338 {offsets = [0, 0], sizes = [8, 256], strides = [1, 1]} : vector<8x1024xf32> to vector<8x256xf32>
    %345 = arith.negf %344 : vector<8x256xf32>
    %346 = math.exp %345 : vector<8x256xf32>
    %cst_114 = arith.constant 1.000000e+00 : f32
    %347 = vector.broadcast %cst_114 : f32 to vector<8x256xf32>
    %348 = arith.addf %347, %346 : vector<8x256xf32>
    %349 = arith.divf %347, %348 : vector<8x256xf32>
    %350 = vector.extract_strided_slice %338 {offsets = [0, 256], sizes = [8, 256], strides = [1, 1]} : vector<8x1024xf32> to vector<8x256xf32>
    %351 = arith.negf %350 : vector<8x256xf32>
    %352 = math.exp %351 : vector<8x256xf32>
    %cst_115 = arith.constant 1.000000e+00 : f32
    %353 = vector.broadcast %cst_115 : f32 to vector<8x256xf32>
    %354 = arith.addf %353, %352 : vector<8x256xf32>
    %355 = arith.divf %353, %354 : vector<8x256xf32>
    %356 = vector.extract_strided_slice %338 {offsets = [0, 512], sizes = [8, 256], strides = [1, 1]} : vector<8x1024xf32> to vector<8x256xf32>
    %357 = math.tanh %356 : vector<8x256xf32>
    %358 = vector.extract_strided_slice %338 {offsets = [0, 768], sizes = [8, 256], strides = [1, 1]} : vector<8x1024xf32> to vector<8x256xf32>
    %359 = arith.negf %358 : vector<8x256xf32>
    %360 = math.exp %359 : vector<8x256xf32>
    %cst_116 = arith.constant 1.000000e+00 : f32
    %361 = vector.broadcast %cst_116 : f32 to vector<8x256xf32>
    %362 = arith.addf %361, %360 : vector<8x256xf32>
    %363 = arith.divf %361, %362 : vector<8x256xf32>
    %364 = arith.mulf %355, %304 : vector<8x256xf32>
    %365 = arith.mulf %349, %357 : vector<8x256xf32>
    %366 = arith.addf %364, %365 : vector<8x256xf32>
    %367 = math.tanh %366 : vector<8x256xf32>
    %368 = arith.mulf %363, %367 : vector<8x256xf32>
    %369 = vector.extract_strided_slice %343 {offsets = [0, 0], sizes = [8, 256], strides = [1, 1]} : vector<8x1024xf32> to vector<8x256xf32>
    %370 = arith.negf %369 : vector<8x256xf32>
    %371 = math.exp %370 : vector<8x256xf32>
    %cst_117 = arith.constant 1.000000e+00 : f32
    %372 = vector.broadcast %cst_117 : f32 to vector<8x256xf32>
    %373 = arith.addf %372, %371 : vector<8x256xf32>
    %374 = arith.divf %372, %373 : vector<8x256xf32>
    %375 = vector.extract_strided_slice %343 {offsets = [0, 256], sizes = [8, 256], strides = [1, 1]} : vector<8x1024xf32> to vector<8x256xf32>
    %376 = arith.negf %375 : vector<8x256xf32>
    %377 = math.exp %376 : vector<8x256xf32>
    %cst_118 = arith.constant 1.000000e+00 : f32
    %378 = vector.broadcast %cst_118 : f32 to vector<8x256xf32>
    %379 = arith.addf %378, %377 : vector<8x256xf32>
    %380 = arith.divf %378, %379 : vector<8x256xf32>
    %381 = vector.extract_strided_slice %343 {offsets = [0, 512], sizes = [8, 256], strides = [1, 1]} : vector<8x1024xf32> to vector<8x256xf32>
    %382 = math.tanh %381 : vector<8x256xf32>
    %383 = vector.extract_strided_slice %343 {offsets = [0, 768], sizes = [8, 256], strides = [1, 1]} : vector<8x1024xf32> to vector<8x256xf32>
    %384 = arith.negf %383 : vector<8x256xf32>
    %385 = math.exp %384 : vector<8x256xf32>
    %cst_119 = arith.constant 1.000000e+00 : f32
    %386 = vector.broadcast %cst_119 : f32 to vector<8x256xf32>
    %387 = arith.addf %386, %385 : vector<8x256xf32>
    %388 = arith.divf %386, %387 : vector<8x256xf32>
    %389 = arith.mulf %380, %329 : vector<8x256xf32>
    %390 = arith.mulf %374, %382 : vector<8x256xf32>
    %391 = arith.addf %389, %390 : vector<8x256xf32>
    %392 = math.tanh %391 : vector<8x256xf32>
    %393 = arith.mulf %388, %392 : vector<8x256xf32>
    %c40_120 = arith.constant 40 : index
    %c0_121 = arith.constant 0 : index
    %394 = vector.load %arg16[%c40_120, %c0_121] : memref<64x512xf32, #tpu.memory_space<vmem>>, vector<8x256xf32>
    tpu.vector_store %arg16[%c40_120, %c0_121], %368 {strides = array<i32>} : memref<64x512xf32, #tpu.memory_space<vmem>>, vector<8x256xf32>,
    %c16_122 = arith.constant 16 : index
    %c256_123 = arith.constant 256 : index
    %395 = vector.load %arg16[%c16_122, %c256_123] : memref<64x512xf32, #tpu.memory_space<vmem>>, vector<8x256xf32>
    tpu.vector_store %arg16[%c16_122, %c256_123], %393 {strides = array<i32>} : memref<64x512xf32, #tpu.memory_space<vmem>>, vector<8x256xf32>,
    %c48_124 = arith.constant 48 : index
    %c0_125 = arith.constant 0 : index
    %396 = vector.load %arg15[%c48_124, %c0_125] : memref<64x2048xf32, #tpu.memory_space<vmem>>, vector<8x1024xf32>
    %397 = arith.truncf %368 : vector<8x256xf32> to vector<8x256xbf16>
    %c0_126 = arith.constant 0 : index
    %c0_127 = arith.constant 0 : index
    %398 = vector.load %arg18[%c0_126, %c0_127] : memref<256x1024xbf16, #tpu.memory_space<vmem>>, vector<256x1024xbf16>
    %cst_128 = arith.constant dense<0.000000e+00> : vector<8x1024xf32>
    %399 = tpu.matmul %397, %398, %cst_128 {dimension_numbers = #tpu.dot_dimension_numbers<[1], [0], [0], [1], [0, 0, 1, 1], [], []>} : vector<8x256xbf16>, vector<256x1024xbf16>, vector<8x1024xf32> -> vector<8x1024xf32>
    %400 = arith.addf %396, %399 : vector<8x1024xf32>
    %c8_129 = arith.constant 8 : index
    %c1024_130 = arith.constant 1024 : index
    %401 = vector.load %arg15[%c8_129, %c1024_130] : memref<64x2048xf32, #tpu.memory_space<vmem>>, vector<8x1024xf32>
    %402 = arith.truncf %393 : vector<8x256xf32> to vector<8x256xbf16>
    %c0_131 = arith.constant 0 : index
    %c0_132 = arith.constant 0 : index
    %403 = vector.load %arg19[%c0_131, %c0_132] : memref<256x1024xbf16, #tpu.memory_space<vmem>>, vector<256x1024xbf16>
    %cst_133 = arith.constant dense<0.000000e+00> : vector<8x1024xf32>
    %404 = tpu.matmul %402, %403, %cst_133 {dimension_numbers = #tpu.dot_dimension_numbers<[1], [0], [0], [1], [0, 0, 1, 1], [], []>} : vector<8x256xbf16>, vector<256x1024xbf16>, vector<8x1024xf32> -> vector<8x1024xf32>
    %405 = arith.addf %401, %404 : vector<8x1024xf32>
    %406 = vector.extract_strided_slice %400 {offsets = [0, 0], sizes = [8, 256], strides = [1, 1]} : vector<8x1024xf32> to vector<8x256xf32>
    %407 = arith.negf %406 : vector<8x256xf32>
    %408 = math.exp %407 : vector<8x256xf32>
    %cst_134 = arith.constant 1.000000e+00 : f32
    %409 = vector.broadcast %cst_134 : f32 to vector<8x256xf32>
    %410 = arith.addf %409, %408 : vector<8x256xf32>
    %411 = arith.divf %409, %410 : vector<8x256xf32>
    %412 = vector.extract_strided_slice %400 {offsets = [0, 256], sizes = [8, 256], strides = [1, 1]} : vector<8x1024xf32> to vector<8x256xf32>
    %413 = arith.negf %412 : vector<8x256xf32>
    %414 = math.exp %413 : vector<8x256xf32>
    %cst_135 = arith.constant 1.000000e+00 : f32
    %415 = vector.broadcast %cst_135 : f32 to vector<8x256xf32>
    %416 = arith.addf %415, %414 : vector<8x256xf32>
    %417 = arith.divf %415, %416 : vector<8x256xf32>
    %418 = vector.extract_strided_slice %400 {offsets = [0, 512], sizes = [8, 256], strides = [1, 1]} : vector<8x1024xf32> to vector<8x256xf32>
    %419 = math.tanh %418 : vector<8x256xf32>
    %420 = vector.extract_strided_slice %400 {offsets = [0, 768], sizes = [8, 256], strides = [1, 1]} : vector<8x1024xf32> to vector<8x256xf32>
    %421 = arith.negf %420 : vector<8x256xf32>
    %422 = math.exp %421 : vector<8x256xf32>
    %cst_136 = arith.constant 1.000000e+00 : f32
    %423 = vector.broadcast %cst_136 : f32 to vector<8x256xf32>
    %424 = arith.addf %423, %422 : vector<8x256xf32>
    %425 = arith.divf %423, %424 : vector<8x256xf32>
    %426 = arith.mulf %417, %366 : vector<8x256xf32>
    %427 = arith.mulf %411, %419 : vector<8x256xf32>
    %428 = arith.addf %426, %427 : vector<8x256xf32>
    %429 = math.tanh %428 : vector<8x256xf32>
    %430 = arith.mulf %425, %429 : vector<8x256xf32>
    %431 = vector.extract_strided_slice %405 {offsets = [0, 0], sizes = [8, 256], strides = [1, 1]} : vector<8x1024xf32> to vector<8x256xf32>
    %432 = arith.negf %431 : vector<8x256xf32>
    %433 = math.exp %432 : vector<8x256xf32>
    %cst_137 = arith.constant 1.000000e+00 : f32
    %434 = vector.broadcast %cst_137 : f32 to vector<8x256xf32>
    %435 = arith.addf %434, %433 : vector<8x256xf32>
    %436 = arith.divf %434, %435 : vector<8x256xf32>
    %437 = vector.extract_strided_slice %405 {offsets = [0, 256], sizes = [8, 256], strides = [1, 1]} : vector<8x1024xf32> to vector<8x256xf32>
    %438 = arith.negf %437 : vector<8x256xf32>
    %439 = math.exp %438 : vector<8x256xf32>
    %cst_138 = arith.constant 1.000000e+00 : f32
    %440 = vector.broadcast %cst_138 : f32 to vector<8x256xf32>
    %441 = arith.addf %440, %439 : vector<8x256xf32>
    %442 = arith.divf %440, %441 : vector<8x256xf32>
    %443 = vector.extract_strided_slice %405 {offsets = [0, 512], sizes = [8, 256], strides = [1, 1]} : vector<8x1024xf32> to vector<8x256xf32>
    %444 = math.tanh %443 : vector<8x256xf32>
    %445 = vector.extract_strided_slice %405 {offsets = [0, 768], sizes = [8, 256], strides = [1, 1]} : vector<8x1024xf32> to vector<8x256xf32>
    %446 = arith.negf %445 : vector<8x256xf32>
    %447 = math.exp %446 : vector<8x256xf32>
    %cst_139 = arith.constant 1.000000e+00 : f32
    %448 = vector.broadcast %cst_139 : f32 to vector<8x256xf32>
    %449 = arith.addf %448, %447 : vector<8x256xf32>
    %450 = arith.divf %448, %449 : vector<8x256xf32>
    %451 = arith.mulf %442, %391 : vector<8x256xf32>
    %452 = arith.mulf %436, %444 : vector<8x256xf32>
    %453 = arith.addf %451, %452 : vector<8x256xf32>
    %454 = math.tanh %453 : vector<8x256xf32>
    %455 = arith.mulf %450, %454 : vector<8x256xf32>
    %c48_140 = arith.constant 48 : index
    %c0_141 = arith.constant 0 : index
    %456 = vector.load %arg16[%c48_140, %c0_141] : memref<64x512xf32, #tpu.memory_space<vmem>>, vector<8x256xf32>
    tpu.vector_store %arg16[%c48_140, %c0_141], %430 {strides = array<i32>} : memref<64x512xf32, #tpu.memory_space<vmem>>, vector<8x256xf32>,
    %c8_142 = arith.constant 8 : index
    %c256_143 = arith.constant 256 : index
    %457 = vector.load %arg16[%c8_142, %c256_143] : memref<64x512xf32, #tpu.memory_space<vmem>>, vector<8x256xf32>
    tpu.vector_store %arg16[%c8_142, %c256_143], %455 {strides = array<i32>} : memref<64x512xf32, #tpu.memory_space<vmem>>, vector<8x256xf32>,
    %c56_144 = arith.constant 56 : index
    %c0_145 = arith.constant 0 : index
    %458 = vector.load %arg15[%c56_144, %c0_145] : memref<64x2048xf32, #tpu.memory_space<vmem>>, vector<8x1024xf32>
    %459 = arith.truncf %430 : vector<8x256xf32> to vector<8x256xbf16>
    %c0_146 = arith.constant 0 : index
    %c0_147 = arith.constant 0 : index
    %460 = vector.load %arg18[%c0_146, %c0_147] : memref<256x1024xbf16, #tpu.memory_space<vmem>>, vector<256x1024xbf16>
    %cst_148 = arith.constant dense<0.000000e+00> : vector<8x1024xf32>
    %461 = tpu.matmul %459, %460, %cst_148 {dimension_numbers = #tpu.dot_dimension_numbers<[1], [0], [0], [1], [0, 0, 1, 1], [], []>} : vector<8x256xbf16>, vector<256x1024xbf16>, vector<8x1024xf32> -> vector<8x1024xf32>
    %462 = arith.addf %458, %461 : vector<8x1024xf32>
    %c0_149 = arith.constant 0 : index
    %c1024_150 = arith.constant 1024 : index
    %463 = vector.load %arg15[%c0_149, %c1024_150] : memref<64x2048xf32, #tpu.memory_space<vmem>>, vector<8x1024xf32>
    %464 = arith.truncf %455 : vector<8x256xf32> to vector<8x256xbf16>
    %c0_151 = arith.constant 0 : index
    %c0_152 = arith.constant 0 : index
    %465 = vector.load %arg19[%c0_151, %c0_152] : memref<256x1024xbf16, #tpu.memory_space<vmem>>, vector<256x1024xbf16>
    %cst_153 = arith.constant dense<0.000000e+00> : vector<8x1024xf32>
    %466 = tpu.matmul %464, %465, %cst_153 {dimension_numbers = #tpu.dot_dimension_numbers<[1], [0], [0], [1], [0, 0, 1, 1], [], []>} : vector<8x256xbf16>, vector<256x1024xbf16>, vector<8x1024xf32> -> vector<8x1024xf32>
    %467 = arith.addf %463, %466 : vector<8x1024xf32>
    %468 = vector.extract_strided_slice %462 {offsets = [0, 0], sizes = [8, 256], strides = [1, 1]} : vector<8x1024xf32> to vector<8x256xf32>
    %469 = arith.negf %468 : vector<8x256xf32>
    %470 = math.exp %469 : vector<8x256xf32>
    %cst_154 = arith.constant 1.000000e+00 : f32
    %471 = vector.broadcast %cst_154 : f32 to vector<8x256xf32>
    %472 = arith.addf %471, %470 : vector<8x256xf32>
    %473 = arith.divf %471, %472 : vector<8x256xf32>
    %474 = vector.extract_strided_slice %462 {offsets = [0, 256], sizes = [8, 256], strides = [1, 1]} : vector<8x1024xf32> to vector<8x256xf32>
    %475 = arith.negf %474 : vector<8x256xf32>
    %476 = math.exp %475 : vector<8x256xf32>
    %cst_155 = arith.constant 1.000000e+00 : f32
    %477 = vector.broadcast %cst_155 : f32 to vector<8x256xf32>
    %478 = arith.addf %477, %476 : vector<8x256xf32>
    %479 = arith.divf %477, %478 : vector<8x256xf32>
    %480 = vector.extract_strided_slice %462 {offsets = [0, 512], sizes = [8, 256], strides = [1, 1]} : vector<8x1024xf32> to vector<8x256xf32>
    %481 = math.tanh %480 : vector<8x256xf32>
    %482 = vector.extract_strided_slice %462 {offsets = [0, 768], sizes = [8, 256], strides = [1, 1]} : vector<8x1024xf32> to vector<8x256xf32>
    %483 = arith.negf %482 : vector<8x256xf32>
    %484 = math.exp %483 : vector<8x256xf32>
    %cst_156 = arith.constant 1.000000e+00 : f32
    %485 = vector.broadcast %cst_156 : f32 to vector<8x256xf32>
    %486 = arith.addf %485, %484 : vector<8x256xf32>
    %487 = arith.divf %485, %486 : vector<8x256xf32>
    %488 = arith.mulf %479, %428 : vector<8x256xf32>
    %489 = arith.mulf %473, %481 : vector<8x256xf32>
    %490 = arith.addf %488, %489 : vector<8x256xf32>
    %491 = math.tanh %490 : vector<8x256xf32>
    %492 = arith.mulf %487, %491 : vector<8x256xf32>
    %493 = vector.extract_strided_slice %467 {offsets = [0, 0], sizes = [8, 256], strides = [1, 1]} : vector<8x1024xf32> to vector<8x256xf32>
    %494 = arith.negf %493 : vector<8x256xf32>
    %495 = math.exp %494 : vector<8x256xf32>
    %cst_157 = arith.constant 1.000000e+00 : f32
    %496 = vector.broadcast %cst_157 : f32 to vector<8x256xf32>
    %497 = arith.addf %496, %495 : vector<8x256xf32>
    %498 = arith.divf %496, %497 : vector<8x256xf32>
    %499 = vector.extract_strided_slice %467 {offsets = [0, 256], sizes = [8, 256], strides = [1, 1]} : vector<8x1024xf32> to vector<8x256xf32>
    %500 = arith.negf %499 : vector<8x256xf32>
    %501 = math.exp %500 : vector<8x256xf32>
    %cst_158 = arith.constant 1.000000e+00 : f32
    %502 = vector.broadcast %cst_158 : f32 to vector<8x256xf32>
    %503 = arith.addf %502, %501 : vector<8x256xf32>
    %504 = arith.divf %502, %503 : vector<8x256xf32>
    %505 = vector.extract_strided_slice %467 {offsets = [0, 512], sizes = [8, 256], strides = [1, 1]} : vector<8x1024xf32> to vector<8x256xf32>
    %506 = math.tanh %505 : vector<8x256xf32>
    %507 = vector.extract_strided_slice %467 {offsets = [0, 768], sizes = [8, 256], strides = [1, 1]} : vector<8x1024xf32> to vector<8x256xf32>
    %508 = arith.negf %507 : vector<8x256xf32>
    %509 = math.exp %508 : vector<8x256xf32>
    %cst_159 = arith.constant 1.000000e+00 : f32
    %510 = vector.broadcast %cst_159 : f32 to vector<8x256xf32>
    %511 = arith.addf %510, %509 : vector<8x256xf32>
    %512 = arith.divf %510, %511 : vector<8x256xf32>
    %513 = arith.mulf %504, %453 : vector<8x256xf32>
    %514 = arith.mulf %498, %506 : vector<8x256xf32>
    %515 = arith.addf %513, %514 : vector<8x256xf32>
    %516 = math.tanh %515 : vector<8x256xf32>
    %517 = arith.mulf %512, %516 : vector<8x256xf32>
    %c56_160 = arith.constant 56 : index
    %c0_161 = arith.constant 0 : index
    %518 = vector.load %arg16[%c56_160, %c0_161] : memref<64x512xf32, #tpu.memory_space<vmem>>, vector<8x256xf32>
    tpu.vector_store %arg16[%c56_160, %c0_161], %492 {strides = array<i32>} : memref<64x512xf32, #tpu.memory_space<vmem>>, vector<8x256xf32>,
    %c0_162 = arith.constant 0 : index
    %c256_163 = arith.constant 256 : index
    %519 = vector.load %arg16[%c0_162, %c256_163] : memref<64x512xf32, #tpu.memory_space<vmem>>, vector<8x256xf32>
    tpu.vector_store %arg16[%c0_162, %c256_163], %517 {strides = array<i32>} : memref<64x512xf32, #tpu.memory_space<vmem>>, vector<8x256xf32>,
    %c2_i32_164 = arith.constant 2 : i32
    %520 = tpu.memref_slice %arg22[%c2_i32_164] : memref<4x!tpu.dma_semaphore, #tpu.memory_space<semaphore_mem>> -> memref<1x!tpu.dma_semaphore, #tpu.memory_space<semaphore_mem>>
    %521 = tpu.memref_squeeze %520 : memref<1x!tpu.dma_semaphore, #tpu.memory_space<semaphore_mem>> -> memref<!tpu.dma_semaphore, #tpu.memory_space<semaphore_mem>>
    tpu.wait_dma2 semaphore(%521 : memref<!tpu.dma_semaphore, #tpu.memory_space<semaphore_mem>>) src(%arg5 : memref<512x128xbf16, #tpu.memory_space<any>>) dst(%arg20 : memref<512x128xbf16, #tpu.memory_space<vmem>>)
    %c0_165 = arith.constant 0 : index
    %c0_166 = arith.constant 0 : index
    %522 = vector.load %arg16[%c0_165, %c0_166] : memref<64x512xf32, #tpu.memory_space<vmem>>, vector<64x512xf32>
    %523 = arith.truncf %522 : vector<64x512xf32> to vector<64x512xbf16>
    %c0_167 = arith.constant 0 : index
    %c0_168 = arith.constant 0 : index
    %524 = vector.load %arg20[%c0_167, %c0_168] : memref<512x128xbf16, #tpu.memory_space<vmem>>, vector<512x128xbf16>
    %cst_169 = arith.constant dense<0.000000e+00> : vector<64x128xf32>
    %525 = tpu.matmul %523, %524, %cst_169 {dimension_numbers = #tpu.dot_dimension_numbers<[1], [0], [0], [1], [0, 0, 1, 1], [], []>} : vector<64x512xbf16>, vector<512x128xbf16>, vector<64x128xf32> -> vector<64x128xf32>
    %c0_170 = arith.constant 0 : index
    %c0_171 = arith.constant 0 : index
    %526 = vector.load %arg7[%c0_170, %c0_171] : memref<1x128xf32, #tpu.memory_space<vmem>>, vector<1x128xf32>
    %527 = vector.broadcast %526 : vector<1x128xf32> to vector<64x128xf32>
    %528 = arith.addf %525, %527 : vector<64x128xf32>
    %c0_172 = arith.constant 0 : index
    %c0_173 = arith.constant 0 : index
    %529 = vector.load %arg17[%c0_172, %c0_173] : memref<64x128xf32, #tpu.memory_space<vmem>>, vector<64x128xf32>
    tpu.vector_store %arg17[%c0_172, %c0_173], %528 {strides = array<i32>} : memref<64x128xf32, #tpu.memory_space<vmem>>, vector<64x128xf32>,
    %cst_174 = arith.constant 0.000000e+00 : f32
    %530 = vector.broadcast %cst_174 : f32 to vector<8x32xf32>
    %cst_175 = arith.constant 0.000000e+00 : f32
    %531 = vector.broadcast %cst_175 : f32 to vector<8x32xf32>
    %c0_176 = arith.constant 0 : index
    %c0_177 = arith.constant 0 : index
    %532 = vector.load %arg6[%c0_176, %c0_177] : memref<32x128xbf16, #tpu.memory_space<vmem>>, vector<32x128xbf16>
    %c0_178 = arith.constant 0 : index
    %c0_179 = arith.constant 0 : index
    %533 = vector.load %arg17[%c0_178, %c0_179] : memref<64x128xf32, #tpu.memory_space<vmem>>, vector<8x128xf32>
    %534 = arith.truncf %530 : vector<8x32xf32> to vector<8x32xbf16>
    %cst_180 = arith.constant dense<0.000000e+00> : vector<8x128xf32>
    %535 = tpu.matmul %534, %532, %cst_180 {dimension_numbers = #tpu.dot_dimension_numbers<[1], [0], [0], [1], [0, 0, 1, 1], [], []>} : vector<8x32xbf16>, vector<32x128xbf16>, vector<8x128xf32> -> vector<8x128xf32>
    %536 = arith.addf %533, %535 : vector<8x128xf32>
    %537 = vector.extract_strided_slice %536 {offsets = [0, 0], sizes = [8, 32], strides = [1, 1]} : vector<8x128xf32> to vector<8x32xf32>
    %538 = arith.negf %537 : vector<8x32xf32>
    %539 = math.exp %538 : vector<8x32xf32>
    %cst_181 = arith.constant 1.000000e+00 : f32
    %540 = vector.broadcast %cst_181 : f32 to vector<8x32xf32>
    %541 = arith.addf %540, %539 : vector<8x32xf32>
    %542 = arith.divf %540, %541 : vector<8x32xf32>
    %543 = vector.extract_strided_slice %536 {offsets = [0, 32], sizes = [8, 32], strides = [1, 1]} : vector<8x128xf32> to vector<8x32xf32>
    %544 = arith.negf %543 : vector<8x32xf32>
    %545 = math.exp %544 : vector<8x32xf32>
    %cst_182 = arith.constant 1.000000e+00 : f32
    %546 = vector.broadcast %cst_182 : f32 to vector<8x32xf32>
    %547 = arith.addf %546, %545 : vector<8x32xf32>
    %548 = arith.divf %546, %547 : vector<8x32xf32>
    %549 = vector.extract_strided_slice %536 {offsets = [0, 64], sizes = [8, 32], strides = [1, 1]} : vector<8x128xf32> to vector<8x32xf32>
    %550 = math.tanh %549 : vector<8x32xf32>
    %551 = vector.extract_strided_slice %536 {offsets = [0, 96], sizes = [8, 32], strides = [1, 1]} : vector<8x128xf32> to vector<8x32xf32>
    %552 = arith.negf %551 : vector<8x32xf32>
    %553 = math.exp %552 : vector<8x32xf32>
    %cst_183 = arith.constant 1.000000e+00 : f32
    %554 = vector.broadcast %cst_183 : f32 to vector<8x32xf32>
    %555 = arith.addf %554, %553 : vector<8x32xf32>
    %556 = arith.divf %554, %555 : vector<8x32xf32>
    %557 = arith.mulf %548, %531 : vector<8x32xf32>
    %558 = arith.mulf %542, %550 : vector<8x32xf32>
    %559 = arith.addf %557, %558 : vector<8x32xf32>
    %560 = math.tanh %559 : vector<8x32xf32>
    %561 = arith.mulf %556, %560 : vector<8x32xf32>
    %c8_184 = arith.constant 8 : index
    %c0_185 = arith.constant 0 : index
    %562 = vector.load %arg17[%c8_184, %c0_185] : memref<64x128xf32, #tpu.memory_space<vmem>>, vector<8x128xf32>
    %563 = arith.truncf %561 : vector<8x32xf32> to vector<8x32xbf16>
    %cst_186 = arith.constant dense<0.000000e+00> : vector<8x128xf32>
    %564 = tpu.matmul %563, %532, %cst_186 {dimension_numbers = #tpu.dot_dimension_numbers<[1], [0], [0], [1], [0, 0, 1, 1], [], []>} : vector<8x32xbf16>, vector<32x128xbf16>, vector<8x128xf32> -> vector<8x128xf32>
    %565 = arith.addf %562, %564 : vector<8x128xf32>
    %566 = vector.extract_strided_slice %565 {offsets = [0, 0], sizes = [8, 32], strides = [1, 1]} : vector<8x128xf32> to vector<8x32xf32>
    %567 = arith.negf %566 : vector<8x32xf32>
    %568 = math.exp %567 : vector<8x32xf32>
    %cst_187 = arith.constant 1.000000e+00 : f32
    %569 = vector.broadcast %cst_187 : f32 to vector<8x32xf32>
    %570 = arith.addf %569, %568 : vector<8x32xf32>
    %571 = arith.divf %569, %570 : vector<8x32xf32>
    %572 = vector.extract_strided_slice %565 {offsets = [0, 32], sizes = [8, 32], strides = [1, 1]} : vector<8x128xf32> to vector<8x32xf32>
    %573 = arith.negf %572 : vector<8x32xf32>
    %574 = math.exp %573 : vector<8x32xf32>
    %cst_188 = arith.constant 1.000000e+00 : f32
    %575 = vector.broadcast %cst_188 : f32 to vector<8x32xf32>
    %576 = arith.addf %575, %574 : vector<8x32xf32>
    %577 = arith.divf %575, %576 : vector<8x32xf32>
    %578 = vector.extract_strided_slice %565 {offsets = [0, 64], sizes = [8, 32], strides = [1, 1]} : vector<8x128xf32> to vector<8x32xf32>
    %579 = math.tanh %578 : vector<8x32xf32>
    %580 = vector.extract_strided_slice %565 {offsets = [0, 96], sizes = [8, 32], strides = [1, 1]} : vector<8x128xf32> to vector<8x32xf32>
    %581 = arith.negf %580 : vector<8x32xf32>
    %582 = math.exp %581 : vector<8x32xf32>
    %cst_189 = arith.constant 1.000000e+00 : f32
    %583 = vector.broadcast %cst_189 : f32 to vector<8x32xf32>
    %584 = arith.addf %583, %582 : vector<8x32xf32>
    %585 = arith.divf %583, %584 : vector<8x32xf32>
    %586 = arith.mulf %577, %559 : vector<8x32xf32>
    %587 = arith.mulf %571, %579 : vector<8x32xf32>
    %588 = arith.addf %586, %587 : vector<8x32xf32>
    %589 = math.tanh %588 : vector<8x32xf32>
    %590 = arith.mulf %585, %589 : vector<8x32xf32>
    %c16_190 = arith.constant 16 : index
    %c0_191 = arith.constant 0 : index
    %591 = vector.load %arg17[%c16_190, %c0_191] : memref<64x128xf32, #tpu.memory_space<vmem>>, vector<8x128xf32>
    %592 = arith.truncf %590 : vector<8x32xf32> to vector<8x32xbf16>
    %cst_192 = arith.constant dense<0.000000e+00> : vector<8x128xf32>
    %593 = tpu.matmul %592, %532, %cst_192 {dimension_numbers = #tpu.dot_dimension_numbers<[1], [0], [0], [1], [0, 0, 1, 1], [], []>} : vector<8x32xbf16>, vector<32x128xbf16>, vector<8x128xf32> -> vector<8x128xf32>
    %594 = arith.addf %591, %593 : vector<8x128xf32>
    %595 = vector.extract_strided_slice %594 {offsets = [0, 0], sizes = [8, 32], strides = [1, 1]} : vector<8x128xf32> to vector<8x32xf32>
    %596 = arith.negf %595 : vector<8x32xf32>
    %597 = math.exp %596 : vector<8x32xf32>
    %cst_193 = arith.constant 1.000000e+00 : f32
    %598 = vector.broadcast %cst_193 : f32 to vector<8x32xf32>
    %599 = arith.addf %598, %597 : vector<8x32xf32>
    %600 = arith.divf %598, %599 : vector<8x32xf32>
    %601 = vector.extract_strided_slice %594 {offsets = [0, 32], sizes = [8, 32], strides = [1, 1]} : vector<8x128xf32> to vector<8x32xf32>
    %602 = arith.negf %601 : vector<8x32xf32>
    %603 = math.exp %602 : vector<8x32xf32>
    %cst_194 = arith.constant 1.000000e+00 : f32
    %604 = vector.broadcast %cst_194 : f32 to vector<8x32xf32>
    %605 = arith.addf %604, %603 : vector<8x32xf32>
    %606 = arith.divf %604, %605 : vector<8x32xf32>
    %607 = vector.extract_strided_slice %594 {offsets = [0, 64], sizes = [8, 32], strides = [1, 1]} : vector<8x128xf32> to vector<8x32xf32>
    %608 = math.tanh %607 : vector<8x32xf32>
    %609 = vector.extract_strided_slice %594 {offsets = [0, 96], sizes = [8, 32], strides = [1, 1]} : vector<8x128xf32> to vector<8x32xf32>
    %610 = arith.negf %609 : vector<8x32xf32>
    %611 = math.exp %610 : vector<8x32xf32>
    %cst_195 = arith.constant 1.000000e+00 : f32
    %612 = vector.broadcast %cst_195 : f32 to vector<8x32xf32>
    %613 = arith.addf %612, %611 : vector<8x32xf32>
    %614 = arith.divf %612, %613 : vector<8x32xf32>
    %615 = arith.mulf %606, %588 : vector<8x32xf32>
    %616 = arith.mulf %600, %608 : vector<8x32xf32>
    %617 = arith.addf %615, %616 : vector<8x32xf32>
    %618 = math.tanh %617 : vector<8x32xf32>
    %619 = arith.mulf %614, %618 : vector<8x32xf32>
    %c24_196 = arith.constant 24 : index
    %c0_197 = arith.constant 0 : index
    %620 = vector.load %arg17[%c24_196, %c0_197] : memref<64x128xf32, #tpu.memory_space<vmem>>, vector<8x128xf32>
    %621 = arith.truncf %619 : vector<8x32xf32> to vector<8x32xbf16>
    %cst_198 = arith.constant dense<0.000000e+00> : vector<8x128xf32>
    %622 = tpu.matmul %621, %532, %cst_198 {dimension_numbers = #tpu.dot_dimension_numbers<[1], [0], [0], [1], [0, 0, 1, 1], [], []>} : vector<8x32xbf16>, vector<32x128xbf16>, vector<8x128xf32> -> vector<8x128xf32>
    %623 = arith.addf %620, %622 : vector<8x128xf32>
    %624 = vector.extract_strided_slice %623 {offsets = [0, 0], sizes = [8, 32], strides = [1, 1]} : vector<8x128xf32> to vector<8x32xf32>
    %625 = arith.negf %624 : vector<8x32xf32>
    %626 = math.exp %625 : vector<8x32xf32>
    %cst_199 = arith.constant 1.000000e+00 : f32
    %627 = vector.broadcast %cst_199 : f32 to vector<8x32xf32>
    %628 = arith.addf %627, %626 : vector<8x32xf32>
    %629 = arith.divf %627, %628 : vector<8x32xf32>
    %630 = vector.extract_strided_slice %623 {offsets = [0, 32], sizes = [8, 32], strides = [1, 1]} : vector<8x128xf32> to vector<8x32xf32>
    %631 = arith.negf %630 : vector<8x32xf32>
    %632 = math.exp %631 : vector<8x32xf32>
    %cst_200 = arith.constant 1.000000e+00 : f32
    %633 = vector.broadcast %cst_200 : f32 to vector<8x32xf32>
    %634 = arith.addf %633, %632 : vector<8x32xf32>
    %635 = arith.divf %633, %634 : vector<8x32xf32>
    %636 = vector.extract_strided_slice %623 {offsets = [0, 64], sizes = [8, 32], strides = [1, 1]} : vector<8x128xf32> to vector<8x32xf32>
    %637 = math.tanh %636 : vector<8x32xf32>
    %638 = vector.extract_strided_slice %623 {offsets = [0, 96], sizes = [8, 32], strides = [1, 1]} : vector<8x128xf32> to vector<8x32xf32>
    %639 = arith.negf %638 : vector<8x32xf32>
    %640 = math.exp %639 : vector<8x32xf32>
    %cst_201 = arith.constant 1.000000e+00 : f32
    %641 = vector.broadcast %cst_201 : f32 to vector<8x32xf32>
    %642 = arith.addf %641, %640 : vector<8x32xf32>
    %643 = arith.divf %641, %642 : vector<8x32xf32>
    %644 = arith.mulf %635, %617 : vector<8x32xf32>
    %645 = arith.mulf %629, %637 : vector<8x32xf32>
    %646 = arith.addf %644, %645 : vector<8x32xf32>
    %647 = math.tanh %646 : vector<8x32xf32>
    %648 = arith.mulf %643, %647 : vector<8x32xf32>
    %c32_202 = arith.constant 32 : index
    %c0_203 = arith.constant 0 : index
    %649 = vector.load %arg17[%c32_202, %c0_203] : memref<64x128xf32, #tpu.memory_space<vmem>>, vector<8x128xf32>
    %650 = arith.truncf %648 : vector<8x32xf32> to vector<8x32xbf16>
    %cst_204 = arith.constant dense<0.000000e+00> : vector<8x128xf32>
    %651 = tpu.matmul %650, %532, %cst_204 {dimension_numbers = #tpu.dot_dimension_numbers<[1], [0], [0], [1], [0, 0, 1, 1], [], []>} : vector<8x32xbf16>, vector<32x128xbf16>, vector<8x128xf32> -> vector<8x128xf32>
    %652 = arith.addf %649, %651 : vector<8x128xf32>
    %653 = vector.extract_strided_slice %652 {offsets = [0, 0], sizes = [8, 32], strides = [1, 1]} : vector<8x128xf32> to vector<8x32xf32>
    %654 = arith.negf %653 : vector<8x32xf32>
    %655 = math.exp %654 : vector<8x32xf32>
    %cst_205 = arith.constant 1.000000e+00 : f32
    %656 = vector.broadcast %cst_205 : f32 to vector<8x32xf32>
    %657 = arith.addf %656, %655 : vector<8x32xf32>
    %658 = arith.divf %656, %657 : vector<8x32xf32>
    %659 = vector.extract_strided_slice %652 {offsets = [0, 32], sizes = [8, 32], strides = [1, 1]} : vector<8x128xf32> to vector<8x32xf32>
    %660 = arith.negf %659 : vector<8x32xf32>
    %661 = math.exp %660 : vector<8x32xf32>
    %cst_206 = arith.constant 1.000000e+00 : f32
    %662 = vector.broadcast %cst_206 : f32 to vector<8x32xf32>
    %663 = arith.addf %662, %661 : vector<8x32xf32>
    %664 = arith.divf %662, %663 : vector<8x32xf32>
    %665 = vector.extract_strided_slice %652 {offsets = [0, 64], sizes = [8, 32], strides = [1, 1]} : vector<8x128xf32> to vector<8x32xf32>
    %666 = math.tanh %665 : vector<8x32xf32>
    %667 = vector.extract_strided_slice %652 {offsets = [0, 96], sizes = [8, 32], strides = [1, 1]} : vector<8x128xf32> to vector<8x32xf32>
    %668 = arith.negf %667 : vector<8x32xf32>
    %669 = math.exp %668 : vector<8x32xf32>
    %cst_207 = arith.constant 1.000000e+00 : f32
    %670 = vector.broadcast %cst_207 : f32 to vector<8x32xf32>
    %671 = arith.addf %670, %669 : vector<8x32xf32>
    %672 = arith.divf %670, %671 : vector<8x32xf32>
    %673 = arith.mulf %664, %646 : vector<8x32xf32>
    %674 = arith.mulf %658, %666 : vector<8x32xf32>
    %675 = arith.addf %673, %674 : vector<8x32xf32>
    %676 = math.tanh %675 : vector<8x32xf32>
    %677 = arith.mulf %672, %676 : vector<8x32xf32>
    %c40_208 = arith.constant 40 : index
    %c0_209 = arith.constant 0 : index
    %678 = vector.load %arg17[%c40_208, %c0_209] : memref<64x128xf32, #tpu.memory_space<vmem>>, vector<8x128xf32>
    %679 = arith.truncf %677 : vector<8x32xf32> to vector<8x32xbf16>
    %cst_210 = arith.constant dense<0.000000e+00> : vector<8x128xf32>
    %680 = tpu.matmul %679, %532, %cst_210 {dimension_numbers = #tpu.dot_dimension_numbers<[1], [0], [0], [1], [0, 0, 1, 1], [], []>} : vector<8x32xbf16>, vector<32x128xbf16>, vector<8x128xf32> -> vector<8x128xf32>
    %681 = arith.addf %678, %680 : vector<8x128xf32>
    %682 = vector.extract_strided_slice %681 {offsets = [0, 0], sizes = [8, 32], strides = [1, 1]} : vector<8x128xf32> to vector<8x32xf32>
    %683 = arith.negf %682 : vector<8x32xf32>
    %684 = math.exp %683 : vector<8x32xf32>
    %cst_211 = arith.constant 1.000000e+00 : f32
    %685 = vector.broadcast %cst_211 : f32 to vector<8x32xf32>
    %686 = arith.addf %685, %684 : vector<8x32xf32>
    %687 = arith.divf %685, %686 : vector<8x32xf32>
    %688 = vector.extract_strided_slice %681 {offsets = [0, 32], sizes = [8, 32], strides = [1, 1]} : vector<8x128xf32> to vector<8x32xf32>
    %689 = arith.negf %688 : vector<8x32xf32>
    %690 = math.exp %689 : vector<8x32xf32>
    %cst_212 = arith.constant 1.000000e+00 : f32
    %691 = vector.broadcast %cst_212 : f32 to vector<8x32xf32>
    %692 = arith.addf %691, %690 : vector<8x32xf32>
    %693 = arith.divf %691, %692 : vector<8x32xf32>
    %694 = vector.extract_strided_slice %681 {offsets = [0, 64], sizes = [8, 32], strides = [1, 1]} : vector<8x128xf32> to vector<8x32xf32>
    %695 = math.tanh %694 : vector<8x32xf32>
    %696 = vector.extract_strided_slice %681 {offsets = [0, 96], sizes = [8, 32], strides = [1, 1]} : vector<8x128xf32> to vector<8x32xf32>
    %697 = arith.negf %696 : vector<8x32xf32>
    %698 = math.exp %697 : vector<8x32xf32>
    %cst_213 = arith.constant 1.000000e+00 : f32
    %699 = vector.broadcast %cst_213 : f32 to vector<8x32xf32>
    %700 = arith.addf %699, %698 : vector<8x32xf32>
    %701 = arith.divf %699, %700 : vector<8x32xf32>
    %702 = arith.mulf %693, %675 : vector<8x32xf32>
    %703 = arith.mulf %687, %695 : vector<8x32xf32>
    %704 = arith.addf %702, %703 : vector<8x32xf32>
    %705 = math.tanh %704 : vector<8x32xf32>
    %706 = arith.mulf %701, %705 : vector<8x32xf32>
    %c48_214 = arith.constant 48 : index
    %c0_215 = arith.constant 0 : index
    %707 = vector.load %arg17[%c48_214, %c0_215] : memref<64x128xf32, #tpu.memory_space<vmem>>, vector<8x128xf32>
    %708 = arith.truncf %706 : vector<8x32xf32> to vector<8x32xbf16>
    %cst_216 = arith.constant dense<0.000000e+00> : vector<8x128xf32>
    %709 = tpu.matmul %708, %532, %cst_216 {dimension_numbers = #tpu.dot_dimension_numbers<[1], [0], [0], [1], [0, 0, 1, 1], [], []>} : vector<8x32xbf16>, vector<32x128xbf16>, vector<8x128xf32> -> vector<8x128xf32>
    %710 = arith.addf %707, %709 : vector<8x128xf32>
    %711 = vector.extract_strided_slice %710 {offsets = [0, 0], sizes = [8, 32], strides = [1, 1]} : vector<8x128xf32> to vector<8x32xf32>
    %712 = arith.negf %711 : vector<8x32xf32>
    %713 = math.exp %712 : vector<8x32xf32>
    %cst_217 = arith.constant 1.000000e+00 : f32
    %714 = vector.broadcast %cst_217 : f32 to vector<8x32xf32>
    %715 = arith.addf %714, %713 : vector<8x32xf32>
    %716 = arith.divf %714, %715 : vector<8x32xf32>
    %717 = vector.extract_strided_slice %710 {offsets = [0, 32], sizes = [8, 32], strides = [1, 1]} : vector<8x128xf32> to vector<8x32xf32>
    %718 = arith.negf %717 : vector<8x32xf32>
    %719 = math.exp %718 : vector<8x32xf32>
    %cst_218 = arith.constant 1.000000e+00 : f32
    %720 = vector.broadcast %cst_218 : f32 to vector<8x32xf32>
    %721 = arith.addf %720, %719 : vector<8x32xf32>
    %722 = arith.divf %720, %721 : vector<8x32xf32>
    %723 = vector.extract_strided_slice %710 {offsets = [0, 64], sizes = [8, 32], strides = [1, 1]} : vector<8x128xf32> to vector<8x32xf32>
    %724 = math.tanh %723 : vector<8x32xf32>
    %725 = vector.extract_strided_slice %710 {offsets = [0, 96], sizes = [8, 32], strides = [1, 1]} : vector<8x128xf32> to vector<8x32xf32>
    %726 = arith.negf %725 : vector<8x32xf32>
    %727 = math.exp %726 : vector<8x32xf32>
    %cst_219 = arith.constant 1.000000e+00 : f32
    %728 = vector.broadcast %cst_219 : f32 to vector<8x32xf32>
    %729 = arith.addf %728, %727 : vector<8x32xf32>
    %730 = arith.divf %728, %729 : vector<8x32xf32>
    %731 = arith.mulf %722, %704 : vector<8x32xf32>
    %732 = arith.mulf %716, %724 : vector<8x32xf32>
    %733 = arith.addf %731, %732 : vector<8x32xf32>
    %734 = math.tanh %733 : vector<8x32xf32>
    %735 = arith.mulf %730, %734 : vector<8x32xf32>
    %c56_220 = arith.constant 56 : index
    %c0_221 = arith.constant 0 : index
    %736 = vector.load %arg17[%c56_220, %c0_221] : memref<64x128xf32, #tpu.memory_space<vmem>>, vector<8x128xf32>
    %737 = arith.truncf %735 : vector<8x32xf32> to vector<8x32xbf16>
    %cst_222 = arith.constant dense<0.000000e+00> : vector<8x128xf32>
    %738 = tpu.matmul %737, %532, %cst_222 {dimension_numbers = #tpu.dot_dimension_numbers<[1], [0], [0], [1], [0, 0, 1, 1], [], []>} : vector<8x32xbf16>, vector<32x128xbf16>, vector<8x128xf32> -> vector<8x128xf32>
    %739 = arith.addf %736, %738 : vector<8x128xf32>
    %740 = vector.extract_strided_slice %739 {offsets = [0, 0], sizes = [8, 32], strides = [1, 1]} : vector<8x128xf32> to vector<8x32xf32>
    %741 = arith.negf %740 : vector<8x32xf32>
    %742 = math.exp %741 : vector<8x32xf32>
    %cst_223 = arith.constant 1.000000e+00 : f32
    %743 = vector.broadcast %cst_223 : f32 to vector<8x32xf32>
    %744 = arith.addf %743, %742 : vector<8x32xf32>
    %745 = arith.divf %743, %744 : vector<8x32xf32>
    %746 = vector.extract_strided_slice %739 {offsets = [0, 32], sizes = [8, 32], strides = [1, 1]} : vector<8x128xf32> to vector<8x32xf32>
    %747 = arith.negf %746 : vector<8x32xf32>
    %748 = math.exp %747 : vector<8x32xf32>
    %cst_224 = arith.constant 1.000000e+00 : f32
    %749 = vector.broadcast %cst_224 : f32 to vector<8x32xf32>
    %750 = arith.addf %749, %748 : vector<8x32xf32>
    %751 = arith.divf %749, %750 : vector<8x32xf32>
    %752 = vector.extract_strided_slice %739 {offsets = [0, 64], sizes = [8, 32], strides = [1, 1]} : vector<8x128xf32> to vector<8x32xf32>
    %753 = math.tanh %752 : vector<8x32xf32>
    %754 = vector.extract_strided_slice %739 {offsets = [0, 96], sizes = [8, 32], strides = [1, 1]} : vector<8x128xf32> to vector<8x32xf32>
    %755 = arith.negf %754 : vector<8x32xf32>
    %756 = math.exp %755 : vector<8x32xf32>
    %cst_225 = arith.constant 1.000000e+00 : f32
    %757 = vector.broadcast %cst_225 : f32 to vector<8x32xf32>
    %758 = arith.addf %757, %756 : vector<8x32xf32>
    %759 = arith.divf %757, %758 : vector<8x32xf32>
    %760 = arith.mulf %751, %733 : vector<8x32xf32>
    %761 = arith.mulf %745, %753 : vector<8x32xf32>
    %762 = arith.addf %760, %761 : vector<8x32xf32>
    %763 = math.tanh %762 : vector<8x32xf32>
    %764 = arith.mulf %759, %763 : vector<8x32xf32>
    %c3_i32_226 = arith.constant 3 : i32
    %765 = tpu.memref_slice %arg22[%c3_i32_226] : memref<4x!tpu.dma_semaphore, #tpu.memory_space<semaphore_mem>> -> memref<1x!tpu.dma_semaphore, #tpu.memory_space<semaphore_mem>>
    %766 = tpu.memref_squeeze %765 : memref<1x!tpu.dma_semaphore, #tpu.memory_space<semaphore_mem>> -> memref<!tpu.dma_semaphore, #tpu.memory_space<semaphore_mem>>
    tpu.wait_dma2 semaphore(%766 : memref<!tpu.dma_semaphore, #tpu.memory_space<semaphore_mem>>) src(%arg8 : memref<512x128xbf16, #tpu.memory_space<any>>) dst(%arg21 : memref<512x128xbf16, #tpu.memory_space<vmem>>)
    %c56_227 = arith.constant 56 : index
    %c0_228 = arith.constant 0 : index
    %767 = vector.load %arg16[%c56_227, %c0_228] : memref<64x512xf32, #tpu.memory_space<vmem>>, vector<8x512xf32>
    %768 = arith.truncf %767 : vector<8x512xf32> to vector<8x512xbf16>
    %c0_229 = arith.constant 0 : index
    %c0_230 = arith.constant 0 : index
    %769 = vector.load %arg21[%c0_229, %c0_230] : memref<512x128xbf16, #tpu.memory_space<vmem>>, vector<512x128xbf16>
    %cst_231 = arith.constant dense<0.000000e+00> : vector<8x128xf32>
    %770 = tpu.matmul %768, %769, %cst_231 {dimension_numbers = #tpu.dot_dimension_numbers<[1], [0], [0], [1], [0, 0, 1, 1], [], []>} : vector<8x512xbf16>, vector<512x128xbf16>, vector<8x128xf32> -> vector<8x128xf32>
    %c0_232 = arith.constant 0 : index
    %c0_233 = arith.constant 0 : index
    %771 = vector.load %arg9[%c0_232, %c0_233] : memref<1x128xf32, #tpu.memory_space<vmem>>, vector<1x128xf32>
    %772 = vector.broadcast %771 : vector<1x128xf32> to vector<8x128xf32>
    %773 = arith.addf %770, %772 : vector<8x128xf32>
    %cst_234 = arith.constant 0.000000e+00 : f32
    %774 = vector.broadcast %cst_234 : f32 to vector<8x32xf32>
    %775 = vector.extract_strided_slice %773 {offsets = [0, 0], sizes = [8, 32], strides = [1, 1]} : vector<8x128xf32> to vector<8x32xf32>
    %776 = arith.negf %775 : vector<8x32xf32>
    %777 = math.exp %776 : vector<8x32xf32>
    %cst_235 = arith.constant 1.000000e+00 : f32
    %778 = vector.broadcast %cst_235 : f32 to vector<8x32xf32>
    %779 = arith.addf %778, %777 : vector<8x32xf32>
    %780 = arith.divf %778, %779 : vector<8x32xf32>
    %781 = vector.extract_strided_slice %773 {offsets = [0, 32], sizes = [8, 32], strides = [1, 1]} : vector<8x128xf32> to vector<8x32xf32>
    %782 = arith.negf %781 : vector<8x32xf32>
    %783 = math.exp %782 : vector<8x32xf32>
    %cst_236 = arith.constant 1.000000e+00 : f32
    %784 = vector.broadcast %cst_236 : f32 to vector<8x32xf32>
    %785 = arith.addf %784, %783 : vector<8x32xf32>
    %786 = arith.divf %784, %785 : vector<8x32xf32>
    %787 = vector.extract_strided_slice %773 {offsets = [0, 64], sizes = [8, 32], strides = [1, 1]} : vector<8x128xf32> to vector<8x32xf32>
    %788 = math.tanh %787 : vector<8x32xf32>
    %789 = vector.extract_strided_slice %773 {offsets = [0, 96], sizes = [8, 32], strides = [1, 1]} : vector<8x128xf32> to vector<8x32xf32>
    %790 = arith.negf %789 : vector<8x32xf32>
    %791 = math.exp %790 : vector<8x32xf32>
    %cst_237 = arith.constant 1.000000e+00 : f32
    %792 = vector.broadcast %cst_237 : f32 to vector<8x32xf32>
    %793 = arith.addf %792, %791 : vector<8x32xf32>
    %794 = arith.divf %792, %793 : vector<8x32xf32>
    %795 = arith.mulf %786, %774 : vector<8x32xf32>
    %796 = arith.mulf %780, %788 : vector<8x32xf32>
    %797 = arith.addf %795, %796 : vector<8x32xf32>
    %798 = math.tanh %797 : vector<8x32xf32>
    %799 = arith.mulf %794, %798 : vector<8x32xf32>
    %800 = tpu.concatenate %764, %799 in 1 : vector<8x32xf32>, vector<8x32xf32> -> vector<8x64xf32>
    %c0_238 = arith.constant 0 : index
    %c0_239 = arith.constant 0 : index
    %801 = vector.load %arg10[%c0_238, %c0_239] : memref<64x100xf32, #tpu.memory_space<vmem>>, vector<64x100xf32>
    %cst_240 = arith.constant dense<0.000000e+00> : vector<8x100xf32>
    %802 = tpu.matmul %800, %801, %cst_240 {dimension_numbers = #tpu.dot_dimension_numbers<[1], [0], [0], [1], [0, 0, 1, 1], [], []>} : vector<8x64xf32>, vector<64x100xf32>, vector<8x100xf32> -> vector<8x100xf32>
    %c0_241 = arith.constant 0 : index
    %c0_242 = arith.constant 0 : index
    %803 = vector.load %arg11[%c0_241, %c0_242] : memref<1x100xf32, #tpu.memory_space<vmem>>, vector<1x100xf32>
    %804 = vector.broadcast %803 : vector<1x100xf32> to vector<8x100xf32>
    %805 = arith.addf %802, %804 : vector<8x100xf32>
    %806 = math.tanh %805 : vector<8x100xf32>
    %c0_243 = arith.constant 0 : index
    %c0_244 = arith.constant 0 : index
    %807 = vector.load %arg12[%c0_243, %c0_244] : memref<1x100xf32, #tpu.memory_space<vmem>>, vector<1x100xf32>
    %808 = vector.broadcast %807 : vector<1x100xf32> to vector<8x100xf32>
    %809 = arith.mulf %806, %808 : vector<8x100xf32>
    %cst_245 = arith.constant dense<0.000000e+00> : vector<8xf32>
    %810 = vector.multi_reduction <add>, %809, %cst_245 [1] : vector<8x100xf32> to vector<8xf32>
    %811 = vector.shape_cast %810 : vector<8xf32> to vector<8x1xf32>
    %c0_246 = arith.constant 0 : index
    %c0_247 = arith.constant 0 : index
    %812 = vector.load %arg13[%c0_246, %c0_247] : memref<1x1xf32, #tpu.memory_space<vmem>>, vector<1x1xf32>
    %813 = vector.broadcast %812 : vector<1x1xf32> to vector<8x1xf32>
    %814 = arith.addf %811, %813 : vector<8x1xf32>
    %815 = tpu.iota {dimensions = array<i32: 0>} : vector<8x1xi32>
    %c2_i32_248 = arith.constant 2 : i32
    %816 = vector.broadcast %c2_i32_248 : i32 to vector<8x1xi32>
    %817 = arith.cmpi slt, %815, %816 : vector<8x1xi32>
    %cst_249 = arith.constant -1.000000e+30 : f32
    %818 = vector.broadcast %cst_249 : f32 to vector<8x1xf32>
    %819 = arith.select %817, %814, %818 : vector<8x1xi1>, vector<8x1xf32>
    %cst_250 = arith.constant dense<0xFF800000> : vector<1xf32>
    %820 = vector.multi_reduction <maximumf>, %819, %cst_250 [0] : vector<8x1xf32> to vector<1xf32>
    %821 = vector.shape_cast %820 : vector<1xf32> to vector<1x1xf32>
    %822 = vector.broadcast %821 : vector<1x1xf32> to vector<8x1xf32>
    %823 = arith.subf %819, %822 : vector<8x1xf32>
    %824 = math.exp %823 : vector<8x1xf32>
    %cst_251 = arith.constant dense<0.000000e+00> : vector<1xf32>
    %825 = vector.multi_reduction <add>, %824, %cst_251 [0] : vector<8x1xf32> to vector<1xf32>
    %826 = vector.shape_cast %825 : vector<1xf32> to vector<1x1xf32>
    %827 = vector.broadcast %826 : vector<1x1xf32> to vector<8x1xf32>
    %828 = arith.divf %824, %827 : vector<8x1xf32>
    %829 = vector.broadcast %828 : vector<8x1xf32> to vector<8x64xf32>
    %830 = arith.mulf %829, %800 : vector<8x64xf32>
    %cst_252 = arith.constant dense<0.000000e+00> : vector<64xf32>
    %831 = vector.multi_reduction <add>, %830, %cst_252 [0] : vector<8x64xf32> to vector<64xf32>
    %832 = vector.shape_cast %831 : vector<64xf32> to vector<1x64xf32>
    %c0_253 = arith.constant 0 : index
    %c0_254 = arith.constant 0 : index
    %833 = vector.load %arg14[%c0_253, %c0_254] : memref<1x64xf32, #tpu.memory_space<vmem>>, vector<1x64xf32>
    tpu.vector_store %arg14[%c0_253, %c0_254], %832 {strides = array<i32>} : memref<1x64xf32, #tpu.memory_space<vmem>>, vector<1x64xf32>,
    return
  }
}

</mosaic_0001>

<llo_original>
// kernel: tpu_custom_call.1
$region0: #{tpu_custom_call.1}
  #allocation0 [shape = 'u32[]', space=smem, size = 0x4, offset = 0x4, fixed_abs, tag = 'smem constant byte address 0x4 - core index']
  #allocation1 [shape = 'u32[144,128]{1,0:T(1,128)}', space=vmem, size = 0x12000, scoped, tag = 'internal scratch']
  #allocation2 [shape = 'f32[64,2048]{1,0:T(8,128)}', space=vmem, size = 0x80000, scoped, tag = 'scratch operand']
  #allocation3 [shape = 'f32[64,512]{1,0:T(8,128)}', space=vmem, size = 0x20000, scoped, tag = 'scratch operand']
  #allocation4 [shape = 'f32[64,128]{1,0:T(8,128)}', space=vmem, size = 0x8000, scoped, tag = 'scratch operand']
  #allocation5 [shape = 'bf16[256,1024]{1,0:T(16,128)(2,1)}', space=vmem, size = 0x80000, scoped, tag = 'scratch operand']
  #allocation6 [shape = 'bf16[256,1024]{1,0:T(16,128)(2,1)}', space=vmem, size = 0x80000, scoped, tag = 'scratch operand']
  #allocation7 [shape = 'bf16[512,128]{1,0:T(16,128)(2,1)}', space=vmem, size = 0x20000, scoped, tag = 'scratch operand']
  #allocation8 [shape = 'bf16[512,128]{1,0:T(16,128)(2,1)}', space=vmem, size = 0x20000, scoped, tag = 'scratch operand']
  #allocation9 [shape = 's32[4]{0}', space=sflag, size = 0x10, scoped, tag = 'scratch operand']
  #allocation10 [shape = 'f32[1,1]{1,0:T(1,128)S(1)}', space=vmem, size = 0x200, scoped, tag = 'scoped memory for tpu_custom_call.1']
  #allocation20 [shape = 's32[]', space=sflag, size = 0x4, offset = 0, fixed_abs, tag = 'sflag constant byte address 0x0 - dummy sync flag']
  #allocation22 [shape = 's32[]', space=sflag, size = 0x4, offset = 0, fixed_abs, tag = 'sflag constant byte address 0x0 - dummy sync flag']
  #allocation24 [shape = 's32[]', space=sflag, size = 0x4, offset = 0, fixed_abs, tag = 'sflag constant byte address 0x0 - dummy sync flag']
  #allocation25 [shape = 's32[]', space=sflag, size = 0x4, offset = 0, fixed_abs, tag = 'sflag constant byte address 0x0 - dummy sync flag']
  #allocation26 [shape = 'u32[]', space=smem, size = 0x4, offset = 0x44, fixed_abs, tag = 'smem constant byte address 0x44 - assertion arg 0']
  #allocation27 [shape = 'u32[]', space=smem, size = 0x4, offset = 0x48, fixed_abs, tag = 'smem constant byte address 0x48 - assertion arg 1']
  #allocation28 [shape = 's32[]', space=sflag, size = 0x4, offset = 0, fixed_abs, tag = 'sflag constant byte address 0x0 - dummy sync flag']
  #allocation29 [shape = 's32[]', space=sflag, size = 0x4, offset = 0, fixed_abs, tag = 'sflag constant byte address 0x0 - dummy sync flag']
  %s0 = inlined_call_operand.hbm [shape: f32[64,80], index: 0, kind: input, shape index: {}]
  %s1 = inlined_call_operand.hbm [shape: bf16[80,2048], index: 1, kind: input, shape index: {}]
  %s2 = inlined_call_operand.hbm [shape: f32[1,2048], index: 2, kind: input, shape index: {}]
  %s3 = inlined_call_operand.hbm [shape: bf16[256,1024], index: 3, kind: input, shape index: {}]
  %s4 = inlined_call_operand.hbm [shape: bf16[256,1024], index: 4, kind: input, shape index: {}]
  %s5 = inlined_call_operand.hbm [shape: bf16[512,128], index: 5, kind: input, shape index: {}]
  %s6 = inlined_call_operand.vmem [shape: bf16[32,128], index: 6, kind: input, shape index: {}]
  %s7 = inlined_call_operand.vmem [shape: f32[1,128], index: 7, kind: input, shape index: {}]
  %s8 = inlined_call_operand.hbm [shape: bf16[512,128], index: 8, kind: input, shape index: {}]
  %s9 = inlined_call_operand.vmem [shape: f32[1,128], index: 9, kind: input, shape index: {}]
  %s10 = inlined_call_operand.hbm [shape: f32[64,100], index: 10, kind: input, shape index: {}]
  %s11 = inlined_call_operand.vmem [shape: f32[1,100], index: 11, kind: input, shape index: {}]
  %s12 = inlined_call_operand.vmem [shape: f32[1,100], index: 12, kind: input, shape index: {}]
  %s13 = inlined_call_operand.<no memory space> [shape: f32[1,1], index: 13, kind: input, shape index: {}]
  %s14 = inlined_call_operand.hbm [shape: f32[1,64], index: 14, kind: output, shape index: {}]
  %s15 = sld [smem:[#allocation0]]
  $region74: #{tpu_custom_call.1} parent=0
    _
  %s17 = ssub.s32 1, %s15
  %s18 = scalar_select 0, %s17, %s15
  %v19 = vstv %s13
  %20 = vst [vmem:[#allocation10] sm:$0x1] %v19
  $region1: #{tpu_custom_call.1} parent=0
    #allocation11 [shape = 'u8[32768]{0}', space=vmem, size = 0x8000, scoped, tag = 'input window, operand 0, single buffered']
    #allocation12 [shape = 's32[1]{0}', space=sflag, size = 0x4, scoped, tag = 'scoped memory for tpu_custom_call.1']
    #allocation13 [shape = 's32[1]{0}', space=sflag, size = 0x4, scoped, tag = 'scoped memory for tpu_custom_call.1']
    #allocation14 [shape = 'u8[327680]{0}', space=vmem, size = 0x50000, scoped, tag = 'input window, operand 1, single buffered']
    #allocation15 [shape = 's32[1]{0}', space=sflag, size = 0x4, scoped, tag = 'scoped memory for tpu_custom_call.1']
    #allocation16 [shape = 'u8[8192]{0}', space=vmem, size = 0x2000, scoped, tag = 'input window, operand 2, single buffered']
    #allocation17 [shape = 'u8[32768]{0}', space=vmem, size = 0x8000, scoped, tag = 'input window, operand 10, single buffered']
    #allocation18 [shape = 's32[1]{0}', space=sflag, size = 0x4, scoped, tag = 'scoped memory for tpu_custom_call.1']
    #allocation19 [shape = 'u8[512]{0}', space=vmem, size = 0x400, scoped, tag = 'output window, operand 0, single buffered']
    #allocation21 [shape = 'u32[9]{0}', space=smem, size = 0x24, scoped, tag = 'DMA stride descriptor']
    #allocation23 [shape = 'u32[9]{0}', space=smem, size = 0x24, scoped, tag = 'DMA stride descriptor']
    %21 = vsyncpa [#allocation12], 0
    %22 = vsyncpa [#allocation15], 0
    %23 = vsyncpa [#allocation18], 0
    %24 = vsyncpa [#allocation13], 0
    // Predicated region
    $region2: #{tpu_custom_call.1} parent=1 // pred_check
      _
    $region3: #{tpu_custom_call.1} parent=1 // pred_check_branch
      %26 = sbr.rel (0) target = $region5
    $region4: #{tpu_custom_call.1} parent=1 // pred_region
      %s28 = ssub.s32 1024, 1024
      %29 = vsyncadd [#allocation12], %s28
      %s30 = sshll.u32 [#allocation11], 4
      %s31 = int_to_ptr.vmem [resolvable:$true] %s30
      %36 = dma.hbm_to_vmem [thread:$0]  %s0, 1024, %s31, [#allocation12], 128, 128, 8
    $region5: #{tpu_custom_call.1} parent=1 // pred_fallthru
      _
    // Predicated region
    $region6: #{tpu_custom_call.1} parent=1 // pred_check
      _
    $region7: #{tpu_custom_call.1} parent=1 // pred_check_branch
      %38 = sbr.rel (0) target = $region9
    $region8: #{tpu_custom_call.1} parent=1 // pred_region
      %s40 = ssub.s32 10240, 10240
      %41 = vsyncadd [#allocation15], %s40
      %s42 = sshll.u32 [#allocation14], 4
      %s43 = int_to_ptr.vmem [resolvable:$true] %s42
      %48 = dma.hbm_to_vmem [thread:$0]  %s1, 10240, %s43, [#allocation15], 1024, 1024, 64
    $region9: #{tpu_custom_call.1} parent=1 // pred_fallthru
      _
    // Predicated region
    $region10: #{tpu_custom_call.1} parent=1 // pred_check
      _
    $region11: #{tpu_custom_call.1} parent=1 // pred_check_branch
      %50 = sbr.rel (0) target = $region13
    $region12: #{tpu_custom_call.1} parent=1 // pred_region
      %s52 = ssub.s32 256, 256
      %53 = vsyncadd [#allocation15], %s52
      %s55 = sshll.u32 [#allocation16], 4
      %s56 = int_to_ptr.vmem [resolvable:$true] %s55
      %58 = dma.hbm_to_vmem [thread:$0]  %s2, 256, %s56, [#allocation15]
    $region13: #{tpu_custom_call.1} parent=1 // pred_fallthru
      _
    // Predicated region
    $region14: #{tpu_custom_call.1} parent=1 // pred_check
      _
    $region15: #{tpu_custom_call.1} parent=1 // pred_check_branch
      %60 = sbr.rel (0) target = $region17
    $region16: #{tpu_custom_call.1} parent=1 // pred_region
      _
    $region17: #{tpu_custom_call.1} parent=1 // pred_fallthru
      _
    // Predicated region
    $region18: #{tpu_custom_call.1} parent=1 // pred_check
      _
    $region19: #{tpu_custom_call.1} parent=1 // pred_check_branch
      %62 = sbr.rel (0) target = $region21
    $region20: #{tpu_custom_call.1} parent=1 // pred_region
      _
    $region21: #{tpu_custom_call.1} parent=1 // pred_fallthru
      _
    // Predicated region
    $region22: #{tpu_custom_call.1} parent=1 // pred_check
      _
    $region23: #{tpu_custom_call.1} parent=1 // pred_check_branch
      %64 = sbr.rel (0) target = $region25
    $region24: #{tpu_custom_call.1} parent=1 // pred_region
      _
    $region25: #{tpu_custom_call.1} parent=1 // pred_fallthru
      _
    // Predicated region
    $region26: #{tpu_custom_call.1} parent=1 // pred_check
      _
    $region27: #{tpu_custom_call.1} parent=1 // pred_check_branch
      %66 = sbr.rel (0) target = $region29
    $region28: #{tpu_custom_call.1} parent=1 // pred_region
      %s68 = ssub.s32 1024, 1024
      %69 = vsyncadd [#allocation18], %s68
      %s70 = sshll.u32 [#allocation17], 4
      %s71 = int_to_ptr.vmem [resolvable:$true] %s70
      %76 = dma.hbm_to_vmem [thread:$0]  %s10, 1024, %s71, [#allocation18], 128, 128, 8
    $region29: #{tpu_custom_call.1} parent=1 // pred_fallthru
      _
    // Predicated region
    $region30: #{tpu_custom_call.1} parent=1 // pred_check
      _
    $region31: #{tpu_custom_call.1} parent=1 // pred_check_branch
      %78 = sbr.rel (0) target = $region33
    $region32: #{tpu_custom_call.1} parent=1 // pred_region
      _
    $region33: #{tpu_custom_call.1} parent=1 // pred_fallthru
      _
    // Predicated region
    $region34: #{tpu_custom_call.1} parent=1 // pred_check
      _
    $region35: #{tpu_custom_call.1} parent=1 // pred_check_branch
      %80 = sbr.rel (0) target = $region37
    $region36: #{tpu_custom_call.1} parent=1 // pred_region
      _
    $region37: #{tpu_custom_call.1} parent=1 // pred_fallthru
      _
    // Predicated region
    $region38: #{tpu_custom_call.1} parent=1 // pred_check
      _
    $region39: #{tpu_custom_call.1} parent=1 // pred_check_branch
      %82 = sbr.rel (0) target = $region41
    $region40: #{tpu_custom_call.1} parent=1 // pred_region
      _
    $region41: #{tpu_custom_call.1} parent=1 // pred_fallthru
      _
    // Predicated region
    $region42: #{tpu_custom_call.1} parent=1 // pred_check
      _
    $region43: #{tpu_custom_call.1} parent=1 // pred_check_branch
      %84 = sbr.rel (0) target = $region45
    $region44: #{tpu_custom_call.1} parent=1 // pred_region
      %85 = dma.done [#allocation12], 1024
    $region45: #{tpu_custom_call.1} parent=1 // pred_fallthru
      _
    // Predicated region
    $region46: #{tpu_custom_call.1} parent=1 // pred_check
      _
    $region47: #{tpu_custom_call.1} parent=1 // pred_check_branch
      %87 = sbr.rel (0) target = $region49
    $region48: #{tpu_custom_call.1} parent=1 // pred_region
      %88 = dma.done [#allocation15], 10240
    $region49: #{tpu_custom_call.1} parent=1 // pred_fallthru
      _
    // Predicated region
    $region50: #{tpu_custom_call.1} parent=1 // pred_check
      _
    $region51: #{tpu_custom_call.1} parent=1 // pred_check_branch
      %90 = sbr.rel (0) target = $region53
    $region52: #{tpu_custom_call.1} parent=1 // pred_region
      %91 = dma.done [#allocation15], 256
    $region53: #{tpu_custom_call.1} parent=1 // pred_fallthru
      _
    // Predicated region
    $region54: #{tpu_custom_call.1} parent=1 // pred_check
      _
    $region55: #{tpu_custom_call.1} parent=1 // pred_check_branch
      %93 = sbr.rel (0) target = $region57
    $region56: #{tpu_custom_call.1} parent=1 // pred_region
      %94 = dma.done [#allocation18], 1024
    $region57: #{tpu_custom_call.1} parent=1 // pred_fallthru
      _
    %s97 = sshll.u32 1, 14
    %s98 = sxor.u32 4294967295, %s97
    %s100 = sld [smem:[#allocation0]]
    %s101 = sadd.s32 2, %s100
    %s103 = sshll.u32 7, 26
    %s104 = sxor.u32 4294967295, %s103
    %s105 = sand.u32 0, %s104
    %s106 = sshll.u32 %s101, 26
    %s107 = sor.u32 %s105, %s106
    %s108 = sshll.u32 [#allocation5], 4
    %s109 = int_to_ptr.vmem [resolvable:$true] %s108
    %112 = sst [smem:[#allocation21]] 1024
    %s113 = scalar_lea.smem [#allocation21], 1
    %114 = sst [smem:[%s113]] 1024
    %s115 = scalar_lea.smem [#allocation21], 2
    %116 = sst [smem:[%s115]] 8
    %s117 = scalar_lea.smem [#allocation21], 3
    %118 = sst [smem:[%s117]] 64
    %s119 = scalar_lea.smem [#allocation21], 4
    %120 = sst [smem:[%s119]] 128
    %s121 = scalar_lea.smem [#allocation21], 5
    %122 = sst [smem:[%s121]] 2
    %s123 = scalar_lea.smem [#allocation21], 6
    %124 = sst [smem:[%s123]] 512
    %s125 = scalar_lea.smem [#allocation21], 7
    %126 = sst [smem:[%s125]] 64
    %s127 = scalar_lea.smem [#allocation21], 8
    %128 = sst [smem:[%s127]] 4
    %130 = dma.general %s3, 16384, %s109, [#allocation9], [#allocation20], [#allocation21], %s107, 0
    %s131 = scalar_lea.sflag [#allocation9], 1
    %s133 = sshll.u32 1, 14
    %s134 = sxor.u32 4294967295, %s133
    %s136 = sadd.s32 2, %s100
    %s138 = sshll.u32 7, 26
    %s139 = sxor.u32 4294967295, %s138
    %s140 = sand.u32 0, %s139
    %s141 = sshll.u32 %s136, 26
    %s142 = sor.u32 %s140, %s141
    %s143 = sshll.u32 [#allocation6], 4
    %s144 = int_to_ptr.vmem [resolvable:$true] %s143
    %147 = sst [smem:[#allocation23]] 1024
    %s148 = scalar_lea.smem [#allocation23], 1
    %149 = sst [smem:[%s148]] 1024
    %s150 = scalar_lea.smem [#allocation23], 2
    %151 = sst [smem:[%s150]] 8
    %s152 = scalar_lea.smem [#allocation23], 3
    %153 = sst [smem:[%s152]] 64
    %s154 = scalar_lea.smem [#allocation23], 4
    %155 = sst [smem:[%s154]] 128
    %s156 = scalar_lea.smem [#allocation23], 5
    %157 = sst [smem:[%s156]] 2
    %s158 = scalar_lea.smem [#allocation23], 6
    %159 = sst [smem:[%s158]] 512
    %s160 = scalar_lea.smem [#allocation23], 7
    %161 = sst [smem:[%s160]] 64
    %s162 = scalar_lea.smem [#allocation23], 8
    %163 = sst [smem:[%s162]] 4
    %165 = dma.general %s4, 16384, %s144, %s131, [#allocation22], [#allocation23], %s142, 0
    %s166 = scalar_lea.sflag [#allocation9], 2
    // Predicated region
    $region58: #{tpu_custom_call.1} parent=1 // pred_check
      _
    $region59: #{tpu_custom_call.1} parent=1 // pred_check_branch
      %168 = sbr.rel target = $region61
    $region60: #{tpu_custom_call.1} parent=1 // pred_region
      %169 = sst [smem:[#allocation26]] [#allocation25]
      %170 = sst [smem:[#allocation27]] [#allocation24]
    $region61: #{tpu_custom_call.1} parent=1 // pred_fallthru
      _
    %172 = shalt.err (0)
    %s174 = sshll.u32 [#allocation7], 4
    %s175 = int_to_ptr.vmem [resolvable:$true] %s174
    %177 = dma.hbm_to_vmem [thread:$0]  %s5, 4096, %s175, %s166
    %s178 = scalar_lea.sflag [#allocation9], 3
    // Predicated region
    $region62: #{tpu_custom_call.1} parent=1 // pred_check
      _
    $region63: #{tpu_custom_call.1} parent=1 // pred_check_branch
      %180 = sbr.rel target = $region65
    $region64: #{tpu_custom_call.1} parent=1 // pred_region
      %181 = sst [smem:[#allocation26]] [#allocation29]
      %182 = sst [smem:[#allocation27]] [#allocation28]
    $region65: #{tpu_custom_call.1} parent=1 // pred_fallthru
      _
    %184 = shalt.err (0)
    %s186 = sshll.u32 [#allocation8], 4
    %s187 = int_to_ptr.vmem [resolvable:$true] %s186
    %189 = dma.hbm_to_vmem [thread:$0]  %s8, 4096, %s187, %s178
    %v190 = vld [vmem:[#allocation11] sm:$0xff]
    %v191 = vld [vmem:[#allocation11 + $0x8] sm:$0xff]
    %v192 = vld [vmem:[#allocation11 + $0x10] sm:$0xff]
    %v193 = vld [vmem:[#allocation11 + $0x18] sm:$0xff]
    %v194 = vld [vmem:[#allocation11 + $0x20] sm:$0xff]
    %v195 = vld [vmem:[#allocation11 + $0x28] sm:$0xff]
    %v196 = vld [vmem:[#allocation11 + $0x30] sm:$0xff]
    %v197 = vld [vmem:[#allocation11 + $0x38] sm:$0xff]
    %v198 = vpack.c.bf16 %v191, %v190
    %v199 = vpack.c.bf16 %v193, %v192
    %v200 = vpack.c.bf16 %v195, %v194
    %v201 = vpack.c.bf16 %v197, %v196
    %v202 = vld [vmem:[#allocation14] sm:$0xff]
    %v203 = vld [vmem:[#allocation14 + $0x8] sm:$0xff]
    %v204 = vld [vmem:[#allocation14 + $0x10] sm:$0xff]
    %v205 = vld [vmem:[#allocation14 + $0x18] sm:$0xff]
    %v206 = vld [vmem:[#allocation14 + $0x20] sm:$0xff]
    %v207 = vld [vmem:[#allocation14 + $0x28] sm:$0xff]
    %v208 = vld [vmem:[#allocation14 + $0x30] sm:$0xff]
    %v209 = vld [vmem:[#allocation14 + $0x38] sm:$0xff]
    %v210 = vld [vmem:[#allocation14 + $0x40] sm:$0xff]
    %v211 = vld [vmem:[#allocation14 + $0x48] sm:$0xff]
    %v212 = vld [vmem:[#allocation14 + $0x50] sm:$0xff]
    %v213 = vld [vmem:[#allocation14 + $0x58] sm:$0xff]
    %v214 = vld [vmem:[#allocation14 + $0x60] sm:$0xff]
    %v215 = vld [vmem:[#allocation14 + $0x68] sm:$0xff]
    %v216 = vld [vmem:[#allocation14 + $0x70] sm:$0xff]
    %v217 = vld [vmem:[#allocation14 + $0x78] sm:$0xff]
    %v218 = vld [vmem:[#allocation14 + $0x80] sm:$0xff]
    %v219 = vld [vmem:[#allocation14 + $0x88] sm:$0xff]
    %v220 = vld [vmem:[#allocation14 + $0x90] sm:$0xff]
    %v221 = vld [vmem:[#allocation14 + $0x98] sm:$0xff]
    %v222 = vld [vmem:[#allocation14 + $0xa0] sm:$0xff]
    %v223 = vld [vmem:[#allocation14 + $0xa8] sm:$0xff]
    %v224 = vld [vmem:[#allocation14 + $0xb0] sm:$0xff]
    %v225 = vld [vmem:[#allocation14 + $0xb8] sm:$0xff]
    %v226 = vld [vmem:[#allocation14 + $0xc0] sm:$0xff]
    %v227 = vld [vmem:[#allocation14 + $0xc8] sm:$0xff]
    %v228 = vld [vmem:[#allocation14 + $0xd0] sm:$0xff]
    %v229 = vld [vmem:[#allocation14 + $0xd8] sm:$0xff]
    %v230 = vld [vmem:[#allocation14 + $0xe0] sm:$0xff]
    %v231 = vld [vmem:[#allocation14 + $0xe8] sm:$0xff]
    %v232 = vld [vmem:[#allocation14 + $0xf0] sm:$0xff]
    %v233 = vld [vmem:[#allocation14 + $0xf8] sm:$0xff]
    %v234 = vld [vmem:[#allocation14 + $0x100] sm:$0xff]
    %v235 = vld [vmem:[#allocation14 + $0x108] sm:$0xff]
    %v236 = vld [vmem:[#allocation14 + $0x110] sm:$0xff]
    %v237 = vld [vmem:[#allocation14 + $0x118] sm:$0xff]
    %v238 = vld [vmem:[#allocation14 + $0x120] sm:$0xff]
    %v239 = vld [vmem:[#allocation14 + $0x128] sm:$0xff]
    %v240 = vld [vmem:[#allocation14 + $0x130] sm:$0xff]
    %v241 = vld [vmem:[#allocation14 + $0x138] sm:$0xff]
    %v242 = vld [vmem:[#allocation14 + $0x140] sm:$0xff]
    %v243 = vld [vmem:[#allocation14 + $0x148] sm:$0xff]
    %v244 = vld [vmem:[#allocation14 + $0x150] sm:$0xff]
    %v245 = vld [vmem:[#allocation14 + $0x158] sm:$0xff]
    %v246 = vld [vmem:[#allocation14 + $0x160] sm:$0xff]
    %v247 = vld [vmem:[#allocation14 + $0x168] sm:$0xff]
    %v248 = vld [vmem:[#allocation14 + $0x170] sm:$0xff]
    %v249 = vld [vmem:[#allocation14 + $0x178] sm:$0xff]
    %v250 = vld [vmem:[#allocation14 + $0x180] sm:$0xff]
    %v251 = vld [vmem:[#allocation14 + $0x188] sm:$0xff]
    %v252 = vld [vmem:[#allocation14 + $0x190] sm:$0xff]
    %v253 = vld [vmem:[#allocation14 + $0x198] sm:$0xff]
    %v254 = vld [vmem:[#allocation14 + $0x1a0] sm:$0xff]
    %v255 = vld [vmem:[#allocation14 + $0x1a8] sm:$0xff]
    %v256 = vld [vmem:[#allocation14 + $0x1b0] sm:$0xff]
    %v257 = vld [vmem:[#allocation14 + $0x1b8] sm:$0xff]
    %v258 = vld [vmem:[#allocation14 + $0x1c0] sm:$0xff]
    %v259 = vld [vmem:[#allocation14 + $0x1c8] sm:$0xff]
    %v260 = vld [vmem:[#allocation14 + $0x1d0] sm:$0xff]
    %v261 = vld [vmem:[#allocation14 + $0x1d8] sm:$0xff]
    %v262 = vld [vmem:[#allocation14 + $0x1e0] sm:$0xff]
    %v263 = vld [vmem:[#allocation14 + $0x1e8] sm:$0xff]
    %v264 = vld [vmem:[#allocation14 + $0x1f0] sm:$0xff]
    %v265 = vld [vmem:[#allocation14 + $0x1f8] sm:$0xff]
    %v266 = vld [vmem:[#allocation14 + $0x200] sm:$0xff]
    %v267 = vld [vmem:[#allocation14 + $0x208] sm:$0xff]
    %v268 = vld [vmem:[#allocation14 + $0x210] sm:$0xff]
    %v269 = vld [vmem:[#allocation14 + $0x218] sm:$0xff]
    %v270 = vld [vmem:[#allocation14 + $0x220] sm:$0xff]
    %v271 = vld [vmem:[#allocation14 + $0x228] sm:$0xff]
    %v272 = vld [vmem:[#allocation14 + $0x230] sm:$0xff]
    %v273 = vld [vmem:[#allocation14 + $0x238] sm:$0xff]
    %v274 = vld [vmem:[#allocation14 + $0x240] sm:$0xff]
    %v275 = vld [vmem:[#allocation14 + $0x248] sm:$0xff]
    %v276 = vld [vmem:[#allocation14 + $0x250] sm:$0xff]
    %v277 = vld [vmem:[#allocation14 + $0x258] sm:$0xff]
    %v278 = vld [vmem:[#allocation14 + $0x260] sm:$0xff]
    %v279 = vld [vmem:[#allocation14 + $0x268] sm:$0xff]
    %v280 = vld [vmem:[#allocation14 + $0x270] sm:$0xff]
    %v281 = vld [vmem:[#allocation14 + $0x278] sm:$0xff]
    %v282 = vld [vmem:[#allocation16] sm:$0xff]
    %v283 = vld [vmem:[#allocation16 + $0x8] sm:$0xff]
    %v286 = vlaneseq
    %v287 = vshrl.u32 %v286, 7
    %v288 = vsub.s32 0, %v287
    %v289 = vrot.slane %v282, %v288
    %v290 = vlaneseq
    %v291 = vshrl.u32 %v290, 7
    %v292 = vsub.s32 1, %v291
    %v293 = vrot.slane %v282, %v292
    %v294 = vlaneseq
    %v295 = vshrl.u32 %v294, 7
    %v296 = vsub.s32 2, %v295
    %v297 = vrot.slane %v282, %v296
    %v298 = vlaneseq
    %v299 = vshrl.u32 %v298, 7
    %v300 = vsub.s32 3, %v299
    %v301 = vrot.slane %v282, %v300
    %v302 = vlaneseq
    %v303 = vshrl.u32 %v302, 7
    %v304 = vsub.s32 4, %v303
    %v305 = vrot.slane %v282, %v304
    %v306 = vlaneseq
    %v307 = vshrl.u32 %v306, 7
    %v308 = vsub.s32 5, %v307
    %v309 = vrot.slane %v282, %v308
    %v310 = vlaneseq
    %v311 = vshrl.u32 %v310, 7
    %v312 = vsub.s32 6, %v311
    %v313 = vrot.slane %v282, %v312
    %v314 = vlaneseq
    %v315 = vshrl.u32 %v314, 7
    %v316 = vsub.s32 7, %v315
    %v317 = vrot.slane %v282, %v316
    %v318 = vlaneseq
    %v319 = vshrl.u32 %v318, 7
    %v320 = vsub.s32 0, %v319
    %v321 = vrot.slane %v283, %v320
    %v322 = vlaneseq
    %v323 = vshrl.u32 %v322, 7
    %v324 = vsub.s32 1, %v323
    %v325 = vrot.slane %v283, %v324
    %v326 = vlaneseq
    %v327 = vshrl.u32 %v326, 7
    %v328 = vsub.s32 2, %v327
    %v329 = vrot.slane %v283, %v328
    %v330 = vlaneseq
    %v331 = vshrl.u32 %v330, 7
    %v332 = vsub.s32 3, %v331
    %v333 = vrot.slane %v283, %v332
    %v334 = vlaneseq
    %v335 = vshrl.u32 %v334, 7
    %v336 = vsub.s32 4, %v335
    %v337 = vrot.slane %v283, %v336
    %v338 = vlaneseq
    %v339 = vshrl.u32 %v338, 7
    %v340 = vsub.s32 5, %v339
    %v341 = vrot.slane %v283, %v340
    %v342 = vlaneseq
    %v343 = vshrl.u32 %v342, 7
    %v344 = vsub.s32 6, %v343
    %v345 = vrot.slane %v283, %v344
    %v346 = vlaneseq
    %v347 = vshrl.u32 %v346, 7
    %v348 = vsub.s32 7, %v347
    %v349 = vrot.slane %v283, %v348
    %v446 = vunpack.c.l.b16 %v202
    %v447 = vunpack.c.h.b16 %v202
    %v448 = vunpack.c.l.b16 %v203
    %v449 = vunpack.c.h.b16 %v203
    %v450 = vunpack.c.l.b16 %v204
    %v451 = vunpack.c.h.b16 %v204
    %v452 = vunpack.c.l.b16 %v205
    %v453 = vunpack.c.h.b16 %v205
    %v454 = vunpack.c.l.b16 %v206
    %v455 = vunpack.c.h.b16 %v206
    %v456 = vunpack.c.l.b16 %v207
    %v457 = vunpack.c.h.b16 %v207
    %v458 = vunpack.c.l.b16 %v208
    %v459 = vunpack.c.h.b16 %v208
    %v460 = vunpack.c.l.b16 %v209
    %v461 = vunpack.c.h.b16 %v209
    %v462 = vunpack.c.l.b16 %v210
    %v463 = vunpack.c.h.b16 %v210
    %v464 = vunpack.c.l.b16 %v211
    %v465 = vunpack.c.h.b16 %v211
    %v466 = vunpack.c.l.b16 %v212
    %v467 = vunpack.c.h.b16 %v212
    %v468 = vunpack.c.l.b16 %v213
    %v469 = vunpack.c.h.b16 %v213
    %v470 = vunpack.c.l.b16 %v214
    %v471 = vunpack.c.h.b16 %v214
    %v472 = vunpack.c.l.b16 %v215
    %v473 = vunpack.c.h.b16 %v215
    %v474 = vunpack.c.l.b16 %v216
    %v475 = vunpack.c.h.b16 %v216
    %v476 = vunpack.c.l.b16 %v217
    %v477 = vunpack.c.h.b16 %v217
    %v478 = vunpack.c.l.b16 %v218
    %v479 = vunpack.c.h.b16 %v218
    %v480 = vunpack.c.l.b16 %v219
    %v481 = vunpack.c.h.b16 %v219
    %v482 = vunpack.c.l.b16 %v220
    %v483 = vunpack.c.h.b16 %v220
    %v484 = vunpack.c.l.b16 %v221
    %v485 = vunpack.c.h.b16 %v221
    %v486 = vunpack.c.l.b16 %v222
    %v487 = vunpack.c.h.b16 %v222
    %v488 = vunpack.c.l.b16 %v223
    %v489 = vunpack.c.h.b16 %v223
    %v490 = vunpack.c.l.b16 %v224
    %v491 = vunpack.c.h.b16 %v224
    %v492 = vunpack.c.l.b16 %v225
    %v493 = vunpack.c.h.b16 %v225
    %v494 = vunpack.c.l.b16 %v226
    %v495 = vunpack.c.h.b16 %v226
    %v496 = vunpack.c.l.b16 %v227
    %v497 = vunpack.c.h.b16 %v227
    %v498 = vunpack.c.l.b16 %v228
    %v499 = vunpack.c.h.b16 %v228
    %v500 = vunpack.c.l.b16 %v229
    %v501 = vunpack.c.h.b16 %v229
    %v502 = vunpack.c.l.b16 %v230
    %v503 = vunpack.c.h.b16 %v230
    %v504 = vunpack.c.l.b16 %v231
    %v505 = vunpack.c.h.b16 %v231
    %v506 = vunpack.c.l.b16 %v232
    %v507 = vunpack.c.h.b16 %v232
    %v508 = vunpack.c.l.b16 %v233
    %v509 = vunpack.c.h.b16 %v233
    %v510 = vunpack.c.l.b16 %v234
    %v511 = vunpack.c.h.b16 %v234
    %v512 = vunpack.c.l.b16 %v235
    %v513 = vunpack.c.h.b16 %v235
    %v514 = vunpack.c.l.b16 %v236
    %v515 = vunpack.c.h.b16 %v236
    %v516 = vunpack.c.l.b16 %v237
    %v517 = vunpack.c.h.b16 %v237
    %v518 = vunpack.c.l.b16 %v238
    %v519 = vunpack.c.h.b16 %v238
    %v520 = vunpack.c.l.b16 %v239
    %v521 = vunpack.c.h.b16 %v239
    %v522 = vunpack.c.l.b16 %v240
    %v523 = vunpack.c.h.b16 %v240
    %v524 = vunpack.c.l.b16 %v241
    %v525 = vunpack.c.h.b16 %v241
    %v526 = vunpack.c.l.b16 %v242
    %v527 = vunpack.c.h.b16 %v242
    %v528 = vunpack.c.l.b16 %v243
    %v529 = vunpack.c.h.b16 %v243
    %v530 = vunpack.c.l.b16 %v244
    %v531 = vunpack.c.h.b16 %v244
    %v532 = vunpack.c.l.b16 %v245
    %v533 = vunpack.c.h.b16 %v245
    %v534 = vunpack.c.l.b16 %v246
    %v535 = vunpack.c.h.b16 %v246
    %v536 = vunpack.c.l.b16 %v247
    %v537 = vunpack.c.h.b16 %v247
    %v538 = vunpack.c.l.b16 %v248
    %v539 = vunpack.c.h.b16 %v248
    %v540 = vunpack.c.l.b16 %v249
    %v541 = vunpack.c.h.b16 %v249
    %v542 = vunpack.c.l.b16 %v250
    %v543 = vunpack.c.h.b16 %v250
    %v544 = vunpack.c.l.b16 %v251
    %v545 = vunpack.c.h.b16 %v251
    %v546 = vunpack.c.l.b16 %v252
    %v547 = vunpack.c.h.b16 %v252
    %v548 = vunpack.c.l.b16 %v253
    %v549 = vunpack.c.h.b16 %v253
    %v550 = vunpack.c.l.b16 %v254
    %v551 = vunpack.c.h.b16 %v254
    %v552 = vunpack.c.l.b16 %v255
    %v553 = vunpack.c.h.b16 %v255
    %v554 = vunpack.c.l.b16 %v256
    %v555 = vunpack.c.h.b16 %v256
    %v556 = vunpack.c.l.b16 %v257
    %v557 = vunpack.c.h.b16 %v257
    %v558 = vunpack.c.l.b16 %v258
    %v559 = vunpack.c.h.b16 %v258
    %v560 = vunpack.c.l.b16 %v259
    %v561 = vunpack.c.h.b16 %v259
    %v562 = vunpack.c.l.b16 %v260
    %v563 = vunpack.c.h.b16 %v260
    %v564 = vunpack.c.l.b16 %v261
    %v565 = vunpack.c.h.b16 %v261
    %v566 = vunpack.c.l.b16 %v262
    %v567 = vunpack.c.h.b16 %v262
    %v568 = vunpack.c.l.b16 %v263
    %v569 = vunpack.c.h.b16 %v263
    %v570 = vunpack.c.l.b16 %v264
    %v571 = vunpack.c.h.b16 %v264
    %v572 = vunpack.c.l.b16 %v265
    %v573 = vunpack.c.h.b16 %v265
    %v574 = vunpack.c.l.b16 %v266
    %v575 = vunpack.c.h.b16 %v266
    %v576 = vunpack.c.l.b16 %v267
    %v577 = vunpack.c.h.b16 %v267
    %v578 = vunpack.c.l.b16 %v268
    %v579 = vunpack.c.h.b16 %v268
    %v580 = vunpack.c.l.b16 %v269
    %v581 = vunpack.c.h.b16 %v269
    %v582 = vunpack.c.l.b16 %v270
    %v583 = vunpack.c.h.b16 %v270
    %v584 = vunpack.c.l.b16 %v271
    %v585 = vunpack.c.h.b16 %v271
    %v586 = vunpack.c.l.b16 %v272
    %v587 = vunpack.c.h.b16 %v272
    %v588 = vunpack.c.l.b16 %v273
    %v589 = vunpack.c.h.b16 %v273
    %v590 = vunpack.c.l.b16 %v274
    %v591 = vunpack.c.h.b16 %v274
    %v592 = vunpack.c.l.b16 %v275
    %v593 = vunpack.c.h.b16 %v275
    %v594 = vunpack.c.l.b16 %v276
    %v595 = vunpack.c.h.b16 %v276
    %v596 = vunpack.c.l.b16 %v277
    %v597 = vunpack.c.h.b16 %v277
    %v598 = vunpack.c.l.b16 %v278
    %v599 = vunpack.c.h.b16 %v278
    %v600 = vunpack.c.l.b16 %v279
    %v601 = vunpack.c.h.b16 %v279
    %v602 = vunpack.c.l.b16 %v280
    %v603 = vunpack.c.h.b16 %v280
    %v604 = vunpack.c.l.b16 %v281
    %v605 = vunpack.c.h.b16 %v281
    %v606 = vpack.c.b16 %v462, %v446
    %v607 = vpack.c.b16 %v463, %v447
    %v608 = vpack.c.b16 %v464, %v448
    %v609 = vpack.c.b16 %v465, %v449
    %v610 = vpack.c.b16 %v466, %v450
    %v611 = vpack.c.b16 %v467, %v451
    %v612 = vpack.c.b16 %v468, %v452
    %v613 = vpack.c.b16 %v469, %v453
    %v614 = vpack.c.b16 %v470, %v454
    %v615 = vpack.c.b16 %v471, %v455
    %v616 = vpack.c.b16 %v472, %v456
    %v617 = vpack.c.b16 %v473, %v457
    %v618 = vpack.c.b16 %v474, %v458
    %v619 = vpack.c.b16 %v475, %v459
    %v620 = vpack.c.b16 %v476, %v460
    %v621 = vpack.c.b16 %v477, %v461
    %v622 = vpack.c.b16 %v494, %v478
    %v623 = vpack.c.b16 %v495, %v479
    %v624 = vpack.c.b16 %v496, %v480
    %v625 = vpack.c.b16 %v497, %v481
    %v626 = vpack.c.b16 %v498, %v482
    %v627 = vpack.c.b16 %v499, %v483
    %v628 = vpack.c.b16 %v500, %v484
    %v629 = vpack.c.b16 %v501, %v485
    %v630 = vpack.c.b16 %v502, %v486
    %v631 = vpack.c.b16 %v503, %v487
    %v632 = vpack.c.b16 %v504, %v488
    %v633 = vpack.c.b16 %v505, %v489
    %v634 = vpack.c.b16 %v506, %v490
    %v635 = vpack.c.b16 %v507, %v491
    %v636 = vpack.c.b16 %v508, %v492
    %v637 = vpack.c.b16 %v509, %v493
    %v638 = vpack.c.b16 %v526, %v510
    %v639 = vpack.c.b16 %v527, %v511
    %v640 = vpack.c.b16 %v528, %v512
    %v641 = vpack.c.b16 %v529, %v513
    %v642 = vpack.c.b16 %v530, %v514
    %v643 = vpack.c.b16 %v531, %v515
    %v644 = vpack.c.b16 %v532, %v516
    %v645 = vpack.c.b16 %v533, %v517
    %v646 = vpack.c.b16 %v534, %v518
    %v647 = vpack.c.b16 %v535, %v519
    %v648 = vpack.c.b16 %v536, %v520
    %v649 = vpack.c.b16 %v537, %v521
    %v650 = vpack.c.b16 %v538, %v522
    %v651 = vpack.c.b16 %v539, %v523
    %v652 = vpack.c.b16 %v540, %v524
    %v653 = vpack.c.b16 %v541, %v525
    %v654 = vpack.c.b16 %v558, %v542
    %v655 = vpack.c.b16 %v559, %v543
    %v656 = vpack.c.b16 %v560, %v544
    %v657 = vpack.c.b16 %v561, %v545
    %v658 = vpack.c.b16 %v562, %v546
    %v659 = vpack.c.b16 %v563, %v547
    %v660 = vpack.c.b16 %v564, %v548
    %v661 = vpack.c.b16 %v565, %v549
    %v662 = vpack.c.b16 %v566, %v550
    %v663 = vpack.c.b16 %v567, %v551
    %v664 = vpack.c.b16 %v568, %v552
    %v665 = vpack.c.b16 %v569, %v553
    %v666 = vpack.c.b16 %v570, %v554
    %v667 = vpack.c.b16 %v571, %v555
    %v668 = vpack.c.b16 %v572, %v556
    %v669 = vpack.c.b16 %v573, %v557
    %v670 = vpack.c.b16 %v590, %v574
    %v671 = vpack.c.b16 %v591, %v575
    %v672 = vpack.c.b16 %v592, %v576
    %v673 = vpack.c.b16 %v593, %v577
    %v674 = vpack.c.b16 %v594, %v578
    %v675 = vpack.c.b16 %v595, %v579
    %v676 = vpack.c.b16 %v596, %v580
    %v677 = vpack.c.b16 %v597, %v581
    %v678 = vpack.c.b16 %v598, %v582
    %v679 = vpack.c.b16 %v599, %v583
    %v680 = vpack.c.b16 %v600, %v584
    %v681 = vpack.c.b16 %v601, %v585
    %v682 = vpack.c.b16 %v602, %v586
    %v683 = vpack.c.b16 %v603, %v587
    %v684 = vpack.c.b16 %v604, %v588
    %v685 = vpack.c.b16 %v605, %v589
    %vm766 = vcmask 654336
    %v768 = vsel %vm766, %v198, 0
    %v771 = vsel %vm766, %v199, 0
    %v774 = vsel %vm766, %v200, 0
    %v777 = vsel %vm766, %v201, 0
    %779 = vmatprep.subr.bf16.mxu0 %v607
    %780 = vmatpush1.bf16.msra.mxu0 %v606
    %781 = vmatprep.subr.bf16.mxu0 %v623
    %782 = vmatpush1.bf16.msra.mxu0 %v622
    %783 = vmatprep.subr.bf16.mxu0 %v639
    %784 = vmatpush1.bf16.msra.mxu0 %v638
    %785 = vmatprep.subr.bf16.mxu0 %v655
    %786 = vmatpush1.bf16.msra.mxu0 %v654
    %787 = vmatprep.subr.bf16.mxu0 %v671
    %788 = vmatpush1.bf16.msra.mxu0 %v670
    %789 = vmatprep.subr.bf16.mxu0 0
    %790 = vmatpush1.bf16.msra.mxu0 0
    %791 = vmatprep.subr.bf16.mxu0 0
    %792 = vmatpush1.bf16.msra.mxu0 0
    %793 = vmatprep.subr.bf16.mxu0 0
    %794 = vmatpush1.bf16.msra.mxu0 0
    %795 = vmatprep.subr.bf16.mxu0 0
    %796 = vmatpush1.bf16.msra.mxu0 0
    %797 = vmatprep.subr.bf16.mxu0 0
    %798 = vmatpush1.bf16.msra.mxu0 0
    %799 = vmatprep.subr.bf16.mxu0 0
    %800 = vmatpush1.bf16.msra.mxu0 0
    %801 = vmatprep.subr.bf16.mxu0 0
    %802 = vmatpush1.bf16.msra.mxu0 0
    %803 = vmatprep.subr.bf16.mxu0 0
    %804 = vmatpush1.bf16.msra.mxu0 0
    %805 = vmatprep.subr.bf16.mxu0 0
    %806 = vmatpush1.bf16.msra.mxu0 0
    %807 = vmatprep.subr.bf16.mxu0 0
    %808 = vmatpush1.bf16.msra.mxu0 0
    %809 = vmatprep.subr.bf16.mxu0 0
    %810 = vmatpush1.bf16.msra.mxu0 0
    %811 = vmatprep.mubr.bf16.mxu0 0
    %812 = vmatmul.mubr.bf16.gmra.mrb[0].mxu0 %v768
    %v813 = vpop.f32.mrb[0].mxu0
    %v814 = vadd.f32 %v289, %v813
    %v815 = vpop.f32.mrb[0].mxu0
    %v816 = vadd.f32 %v293, %v815
    %v817 = vpop.f32.mrb[0].mxu0
    %v818 = vadd.f32 %v289, %v817
    %v819 = vpop.f32.mrb[0].mxu0
    %v820 = vadd.f32 %v293, %v819
    %821 = vmatprep.mubr.bf16.mxu0 0
    %822 = vmatmul.mubr.bf16.gmra.mrb[0].mxu0 %v771
    %v823 = vpop.f32.mrb[0].mxu0
    %v824 = vadd.f32 %v289, %v823
    %v825 = vpop.f32.mrb[0].mxu0
    %v826 = vadd.f32 %v293, %v825
    %v827 = vpop.f32.mrb[0].mxu0
    %v828 = vadd.f32 %v289, %v827
    %v829 = vpop.f32.mrb[0].mxu0
    %v830 = vadd.f32 %v293, %v829
    %831 = vmatprep.mubr.bf16.mxu0 0
    %832 = vmatmul.mubr.bf16.gmra.mrb[0].mxu0 %v774
    %v833 = vpop.f32.mrb[0].mxu0
    %v834 = vadd.f32 %v289, %v833
    %v835 = vpop.f32.mrb[0].mxu0
    %v836 = vadd.f32 %v293, %v835
    %v837 = vpop.f32.mrb[0].mxu0
    %v838 = vadd.f32 %v289, %v837
    %v839 = vpop.f32.mrb[0].mxu0
    %v840 = vadd.f32 %v293, %v839
    %841 = vmatprep.mubr.bf16.mxu0 0
    %842 = vmatmul.mubr.bf16.gmra.mrb[0].mxu0 %v777
    %v843 = vpop.f32.mrb[0].mxu0
    %v844 = vadd.f32 %v289, %v843
    %v845 = vpop.f32.mrb[0].mxu0
    %v846 = vadd.f32 %v293, %v845
    %v847 = vpop.f32.mrb[0].mxu0
    %v848 = vadd.f32 %v289, %v847
    %v849 = vpop.f32.mrb[0].mxu0
    %v850 = vadd.f32 %v293, %v849
    %851 = vdwg.mxu0
    %852 = vmatprep.subr.bf16.mxu0 %v609
    %853 = vmatpush1.bf16.msra.mxu0 %v608
    %854 = vmatprep.subr.bf16.mxu0 %v625
    %855 = vmatpush1.bf16.msra.mxu0 %v624
    %856 = vmatprep.subr.bf16.mxu0 %v641
    %857 = vmatpush1.bf16.msra.mxu0 %v640
    %858 = vmatprep.subr.bf16.mxu0 %v657
    %859 = vmatpush1.bf16.msra.mxu0 %v656
    %860 = vmatprep.subr.bf16.mxu0 %v673
    %861 = vmatpush1.bf16.msra.mxu0 %v672
    %862 = vmatprep.subr.bf16.mxu0 0
    %863 = vmatpush1.bf16.msra.mxu0 0
    %864 = vmatprep.subr.bf16.mxu0 0
    %865 = vmatpush1.bf16.msra.mxu0 0
    %866 = vmatprep.subr.bf16.mxu0 0
    %867 = vmatpush1.bf16.msra.mxu0 0
    %868 = vmatprep.subr.bf16.mxu0 0
    %869 = vmatpush1.bf16.msra.mxu0 0
    %870 = vmatprep.subr.bf16.mxu0 0
    %871 = vmatpush1.bf16.msra.mxu0 0
    %872 = vmatprep.subr.bf16.mxu0 0
    %873 = vmatpush1.bf16.msra.mxu0 0
    %874 = vmatprep.subr.bf16.mxu0 0
    %875 = vmatpush1.bf16.msra.mxu0 0
    %876 = vmatprep.subr.bf16.mxu0 0
    %877 = vmatpush1.bf16.msra.mxu0 0
    %878 = vmatprep.subr.bf16.mxu0 0
    %879 = vmatpush1.bf16.msra.mxu0 0
    %880 = vmatprep.subr.bf16.mxu0 0
    %881 = vmatpush1.bf16.msra.mxu0 0
    %882 = vmatprep.subr.bf16.mxu0 0
    %883 = vmatpush1.bf16.msra.mxu0 0
    %884 = vmatprep.mubr.bf16.mxu0 0
    %885 = vmatmul.mubr.bf16.gmra.mrb[0].mxu0 %v768
    %v886 = vpop.f32.mrb[0].mxu0
    %v887 = vadd.f32 %v297, %v886
    %v888 = vpop.f32.mrb[0].mxu0
    %v889 = vadd.f32 %v301, %v888
    %v890 = vpop.f32.mrb[0].mxu0
    %v891 = vadd.f32 %v297, %v890
    %v892 = vpop.f32.mrb[0].mxu0
    %v893 = vadd.f32 %v301, %v892
    %894 = vmatprep.mubr.bf16.mxu0 0
    %895 = vmatmul.mubr.bf16.gmra.mrb[0].mxu0 %v771
    %v896 = vpop.f32.mrb[0].mxu0
    %v897 = vadd.f32 %v297, %v896
    %v898 = vpop.f32.mrb[0].mxu0
    %v899 = vadd.f32 %v301, %v898
    %v900 = vpop.f32.mrb[0].mxu0
    %v901 = vadd.f32 %v297, %v900
    %v902 = vpop.f32.mrb[0].mxu0
    %v903 = vadd.f32 %v301, %v902
    %904 = vmatprep.mubr.bf16.mxu0 0
    %905 = vmatmul.mubr.bf16.gmra.mrb[0].mxu0 %v774
    %v906 = vpop.f32.mrb[0].mxu0
    %v907 = vadd.f32 %v297, %v906
    %v908 = vpop.f32.mrb[0].mxu0
    %v909 = vadd.f32 %v301, %v908
    %v910 = vpop.f32.mrb[0].mxu0
    %v911 = vadd.f32 %v297, %v910
    %v912 = vpop.f32.mrb[0].mxu0
    %v913 = vadd.f32 %v301, %v912
    %914 = vmatprep.mubr.bf16.mxu0 0
    %915 = vmatmul.mubr.bf16.gmra.mrb[0].mxu0 %v777
    %v916 = vpop.f32.mrb[0].mxu0
    %v917 = vadd.f32 %v297, %v916
    %v918 = vpop.f32.mrb[0].mxu0
    %v919 = vadd.f32 %v301, %v918
    %v920 = vpop.f32.mrb[0].mxu0
    %v921 = vadd.f32 %v297, %v920
    %v922 = vpop.f32.mrb[0].mxu0
    %v923 = vadd.f32 %v301, %v922
    %924 = vdwg.mxu0
    %925 = vmatprep.subr.bf16.mxu0 %v611
    %926 = vmatpush1.bf16.msra.mxu0 %v610
    %927 = vmatprep.subr.bf16.mxu0 %v627
    %928 = vmatpush1.bf16.msra.mxu0 %v626
    %929 = vmatprep.subr.bf16.mxu0 %v643
    %930 = vmatpush1.bf16.msra.mxu0 %v642
    %931 = vmatprep.subr.bf16.mxu0 %v659
    %932 = vmatpush1.bf16.msra.mxu0 %v658
    %933 = vmatprep.subr.bf16.mxu0 %v675
    %934 = vmatpush1.bf16.msra.mxu0 %v674
    %935 = vmatprep.subr.bf16.mxu0 0
    %936 = vmatpush1.bf16.msra.mxu0 0
    %937 = vmatprep.subr.bf16.mxu0 0
    %938 = vmatpush1.bf16.msra.mxu0 0
    %939 = vmatprep.subr.bf16.mxu0 0
    %940 = vmatpush1.bf16.msra.mxu0 0
    %941 = vmatprep.subr.bf16.mxu0 0
    %942 = vmatpush1.bf16.msra.mxu0 0
    %943 = vmatprep.subr.bf16.mxu0 0
    %944 = vmatpush1.bf16.msra.mxu0 0
    %945 = vmatprep.subr.bf16.mxu0 0
    %946 = vmatpush1.bf16.msra.mxu0 0
    %947 = vmatprep.subr.bf16.mxu0 0
    %948 = vmatpush1.bf16.msra.mxu0 0
    %949 = vmatprep.subr.bf16.mxu0 0
    %950 = vmatpush1.bf16.msra.mxu0 0
    %951 = vmatprep.subr.bf16.mxu0 0
    %952 = vmatpush1.bf16.msra.mxu0 0
    %953 = vmatprep.subr.bf16.mxu0 0
    %954 = vmatpush1.bf16.msra.mxu0 0
    %955 = vmatprep.subr.bf16.mxu0 0
    %956 = vmatpush1.bf16.msra.mxu0 0
    %957 = vmatprep.mubr.bf16.mxu0 0
    %958 = vmatmul.mubr.bf16.gmra.mrb[0].mxu0 %v768
    %v959 = vpop.f32.mrb[0].mxu0
    %v960 = vadd.f32 %v305, %v959
    %v961 = vpop.f32.mrb[0].mxu0
    %v962 = vadd.f32 %v309, %v961
    %v963 = vpop.f32.mrb[0].mxu0
    %v964 = vadd.f32 %v305, %v963
    %v965 = vpop.f32.mrb[0].mxu0
    %v966 = vadd.f32 %v309, %v965
    %967 = vmatprep.mubr.bf16.mxu0 0
    %968 = vmatmul.mubr.bf16.gmra.mrb[0].mxu0 %v771
    %v969 = vpop.f32.mrb[0].mxu0
    %v970 = vadd.f32 %v305, %v969
    %v971 = vpop.f32.mrb[0].mxu0
    %v972 = vadd.f32 %v309, %v971
    %v973 = vpop.f32.mrb[0].mxu0
    %v974 = vadd.f32 %v305, %v973
    %v975 = vpop.f32.mrb[0].mxu0
    %v976 = vadd.f32 %v309, %v975
    %977 = vmatprep.mubr.bf16.mxu0 0
    %978 = vmatmul.mubr.bf16.gmra.mrb[0].mxu0 %v774
    %v979 = vpop.f32.mrb[0].mxu0
    %v980 = vadd.f32 %v305, %v979
    %v981 = vpop.f32.mrb[0].mxu0
    %v982 = vadd.f32 %v309, %v981
    %v983 = vpop.f32.mrb[0].mxu0
    %v984 = vadd.f32 %v305, %v983
    %v985 = vpop.f32.mrb[0].mxu0
    %v986 = vadd.f32 %v309, %v985
    %987 = vmatprep.mubr.bf16.mxu0 0
    %988 = vmatmul.mubr.bf16.gmra.mrb[0].mxu0 %v777
    %v989 = vpop.f32.mrb[0].mxu0
    %v990 = vadd.f32 %v305, %v989
    %v991 = vpop.f32.mrb[0].mxu0
    %v992 = vadd.f32 %v309, %v991
    %v993 = vpop.f32.mrb[0].mxu0
    %v994 = vadd.f32 %v305, %v993
    %v995 = vpop.f32.mrb[0].mxu0
    %v996 = vadd.f32 %v309, %v995
    %997 = vdwg.mxu0
    %998 = vmatprep.subr.bf16.mxu0 %v613
    %999 = vmatpush1.bf16.msra.mxu0 %v612
    %1000 = vmatprep.subr.bf16.mxu0 %v629
    %1001 = vmatpush1.bf16.msra.mxu0 %v628
    %1002 = vmatprep.subr.bf16.mxu0 %v645
    %1003 = vmatpush1.bf16.msra.mxu0 %v644
    %1004 = vmatprep.subr.bf16.mxu0 %v661
    %1005 = vmatpush1.bf16.msra.mxu0 %v660
    %1006 = vmatprep.subr.bf16.mxu0 %v677
    %1007 = vmatpush1.bf16.msra.mxu0 %v676
    %1008 = vmatprep.subr.bf16.mxu0 0
    %1009 = vmatpush1.bf16.msra.mxu0 0
    %1010 = vmatprep.subr.bf16.mxu0 0
    %1011 = vmatpush1.bf16.msra.mxu0 0
    %1012 = vmatprep.subr.bf16.mxu0 0
    %1013 = vmatpush1.bf16.msra.mxu0 0
    %1014 = vmatprep.subr.bf16.mxu0 0
    %1015 = vmatpush1.bf16.msra.mxu0 0
    %1016 = vmatprep.subr.bf16.mxu0 0
    %1017 = vmatpush1.bf16.msra.mxu0 0
    %1018 = vmatprep.subr.bf16.mxu0 0
    %1019 = vmatpush1.bf16.msra.mxu0 0
    %1020 = vmatprep.subr.bf16.mxu0 0
    %1021 = vmatpush1.bf16.msra.mxu0 0
    %1022 = vmatprep.subr.bf16.mxu0 0
    %1023 = vmatpush1.bf16.msra.mxu0 0
    %1024 = vmatprep.subr.bf16.mxu0 0
    %1025 = vmatpush1.bf16.msra.mxu0 0
    %1026 = vmatprep.subr.bf16.mxu0 0
    %1027 = vmatpush1.bf16.msra.mxu0 0
    %1028 = vmatprep.subr.bf16.mxu0 0
    %1029 = vmatpush1.bf16.msra.mxu0 0
    %1030 = vmatprep.mubr.bf16.mxu0 0
    %1031 = vmatmul.mubr.bf16.gmra.mrb[0].mxu0 %v768
    %v1032 = vpop.f32.mrb[0].mxu0
    %v1033 = vadd.f32 %v313, %v1032
    %v1034 = vpop.f32.mrb[0].mxu0
    %v1035 = vadd.f32 %v317, %v1034
    %v1036 = vpop.f32.mrb[0].mxu0
    %v1037 = vadd.f32 %v313, %v1036
    %v1038 = vpop.f32.mrb[0].mxu0
    %v1039 = vadd.f32 %v317, %v1038
    %1040 = vmatprep.mubr.bf16.mxu0 0
    %1041 = vmatmul.mubr.bf16.gmra.mrb[0].mxu0 %v771
    %v1042 = vpop.f32.mrb[0].mxu0
    %v1043 = vadd.f32 %v313, %v1042
    %v1044 = vpop.f32.mrb[0].mxu0
    %v1045 = vadd.f32 %v317, %v1044
    %v1046 = vpop.f32.mrb[0].mxu0
    %v1047 = vadd.f32 %v313, %v1046
    %v1048 = vpop.f32.mrb[0].mxu0
    %v1049 = vadd.f32 %v317, %v1048
    %1050 = vmatprep.mubr.bf16.mxu0 0
    %1051 = vmatmul.mubr.bf16.gmra.mrb[0].mxu0 %v774
    %v1052 = vpop.f32.mrb[0].mxu0
    %v1053 = vadd.f32 %v313, %v1052
    %v1054 = vpop.f32.mrb[0].mxu0
    %v1055 = vadd.f32 %v317, %v1054
    %v1056 = vpop.f32.mrb[0].mxu0
    %v1057 = vadd.f32 %v313, %v1056
    %v1058 = vpop.f32.mrb[0].mxu0
    %v1059 = vadd.f32 %v317, %v1058
    %1060 = vmatprep.mubr.bf16.mxu0 0
    %1061 = vmatmul.mubr.bf16.gmra.mrb[0].mxu0 %v777
    %v1062 = vpop.f32.mrb[0].mxu0
    %v1063 = vadd.f32 %v313, %v1062
    %v1064 = vpop.f32.mrb[0].mxu0
    %v1065 = vadd.f32 %v317, %v1064
    %v1066 = vpop.f32.mrb[0].mxu0
    %v1067 = vadd.f32 %v313, %v1066
    %v1068 = vpop.f32.mrb[0].mxu0
    %v1069 = vadd.f32 %v317, %v1068
    %1070 = vdwg.mxu0
    %1071 = vmatprep.subr.bf16.mxu0 %v615
    %1072 = vmatpush1.bf16.msra.mxu0 %v614
    %1073 = vmatprep.subr.bf16.mxu0 %v631
    %1074 = vmatpush1.bf16.msra.mxu0 %v630
    %1075 = vmatprep.subr.bf16.mxu0 %v647
    %1076 = vmatpush1.bf16.msra.mxu0 %v646
    %1077 = vmatprep.subr.bf16.mxu0 %v663
    %1078 = vmatpush1.bf16.msra.mxu0 %v662
    %1079 = vmatprep.subr.bf16.mxu0 %v679
    %1080 = vmatpush1.bf16.msra.mxu0 %v678
    %1081 = vmatprep.subr.bf16.mxu0 0
    %1082 = vmatpush1.bf16.msra.mxu0 0
    %1083 = vmatprep.subr.bf16.mxu0 0
    %1084 = vmatpush1.bf16.msra.mxu0 0
    %1085 = vmatprep.subr.bf16.mxu0 0
    %1086 = vmatpush1.bf16.msra.mxu0 0
    %1087 = vmatprep.subr.bf16.mxu0 0
    %1088 = vmatpush1.bf16.msra.mxu0 0
    %1089 = vmatprep.subr.bf16.mxu0 0
    %1090 = vmatpush1.bf16.msra.mxu0 0
    %1091 = vmatprep.subr.bf16.mxu0 0
    %1092 = vmatpush1.bf16.msra.mxu0 0
    %1093 = vmatprep.subr.bf16.mxu0 0
    %1094 = vmatpush1.bf16.msra.mxu0 0
    %1095 = vmatprep.subr.bf16.mxu0 0
    %1096 = vmatpush1.bf16.msra.mxu0 0
    %1097 = vmatprep.subr.bf16.mxu0 0
    %1098 = vmatpush1.bf16.msra.mxu0 0
    %1099 = vmatprep.subr.bf16.mxu0 0
    %1100 = vmatpush1.bf16.msra.mxu0 0
    %1101 = vmatprep.subr.bf16.mxu0 0
    %1102 = vmatpush1.bf16.msra.mxu0 0
    %1103 = vmatprep.mubr.bf16.mxu0 0
    %1104 = vmatmul.mubr.bf16.gmra.mrb[0].mxu0 %v768
    %v1105 = vpop.f32.mrb[0].mxu0
    %v1106 = vadd.f32 %v321, %v1105
    %v1107 = vpop.f32.mrb[0].mxu0
    %v1108 = vadd.f32 %v325, %v1107
    %v1109 = vpop.f32.mrb[0].mxu0
    %v1110 = vadd.f32 %v321, %v1109
    %v1111 = vpop.f32.mrb[0].mxu0
    %v1112 = vadd.f32 %v325, %v1111
    %1113 = vmatprep.mubr.bf16.mxu0 0
    %1114 = vmatmul.mubr.bf16.gmra.mrb[0].mxu0 %v771
    %v1115 = vpop.f32.mrb[0].mxu0
    %v1116 = vadd.f32 %v321, %v1115
    %v1117 = vpop.f32.mrb[0].mxu0
    %v1118 = vadd.f32 %v325, %v1117
    %v1119 = vpop.f32.mrb[0].mxu0
    %v1120 = vadd.f32 %v321, %v1119
    %v1121 = vpop.f32.mrb[0].mxu0
    %v1122 = vadd.f32 %v325, %v1121
    %1123 = vmatprep.mubr.bf16.mxu0 0
    %1124 = vmatmul.mubr.bf16.gmra.mrb[0].mxu0 %v774
    %v1125 = vpop.f32.mrb[0].mxu0
    %v1126 = vadd.f32 %v321, %v1125
    %v1127 = vpop.f32.mrb[0].mxu0
    %v1128 = vadd.f32 %v325, %v1127
    %v1129 = vpop.f32.mrb[0].mxu0
    %v1130 = vadd.f32 %v321, %v1129
    %v1131 = vpop.f32.mrb[0].mxu0
    %v1132 = vadd.f32 %v325, %v1131
    %1133 = vmatprep.mubr.bf16.mxu0 0
    %1134 = vmatmul.mubr.bf16.gmra.mrb[0].mxu0 %v777
    %v1135 = vpop.f32.mrb[0].mxu0
    %v1136 = vadd.f32 %v321, %v1135
    %v1137 = vpop.f32.mrb[0].mxu0
    %v1138 = vadd.f32 %v325, %v1137
    %v1139 = vpop.f32.mrb[0].mxu0
    %v1140 = vadd.f32 %v321, %v1139
    %v1141 = vpop.f32.mrb[0].mxu0
    %v1142 = vadd.f32 %v325, %v1141
    %1143 = vdwg.mxu0
    %1144 = vmatprep.subr.bf16.mxu0 %v617
    %1145 = vmatpush1.bf16.msra.mxu0 %v616
    %1146 = vmatprep.subr.bf16.mxu0 %v633
    %1147 = vmatpush1.bf16.msra.mxu0 %v632
    %1148 = vmatprep.subr.bf16.mxu0 %v649
    %1149 = vmatpush1.bf16.msra.mxu0 %v648
    %1150 = vmatprep.subr.bf16.mxu0 %v665
    %1151 = vmatpush1.bf16.msra.mxu0 %v664
    %1152 = vmatprep.subr.bf16.mxu0 %v681
    %1153 = vmatpush1.bf16.msra.mxu0 %v680
    %1154 = vmatprep.subr.bf16.mxu0 0
    %1155 = vmatpush1.bf16.msra.mxu0 0
    %1156 = vmatprep.subr.bf16.mxu0 0
    %1157 = vmatpush1.bf16.msra.mxu0 0
    %1158 = vmatprep.subr.bf16.mxu0 0
    %1159 = vmatpush1.bf16.msra.mxu0 0
    %1160 = vmatprep.subr.bf16.mxu0 0
    %1161 = vmatpush1.bf16.msra.mxu0 0
    %1162 = vmatprep.subr.bf16.mxu0 0
    %1163 = vmatpush1.bf16.msra.mxu0 0
    %1164 = vmatprep.subr.bf16.mxu0 0
    %1165 = vmatpush1.bf16.msra.mxu0 0
    %1166 = vmatprep.subr.bf16.mxu0 0
    %1167 = vmatpush1.bf16.msra.mxu0 0
    %1168 = vmatprep.subr.bf16.mxu0 0
    %1169 = vmatpush1.bf16.msra.mxu0 0
    %1170 = vmatprep.subr.bf16.mxu0 0
    %1171 = vmatpush1.bf16.msra.mxu0 0
    %1172 = vmatprep.subr.bf16.mxu0 0
    %1173 = vmatpush1.bf16.msra.mxu0 0
    %1174 = vmatprep.subr.bf16.mxu0 0
    %1175 = vmatpush1.bf16.msra.mxu0 0
    %1176 = vmatprep.mubr.bf16.mxu0 0
    %1177 = vmatmul.mubr.bf16.gmra.mrb[0].mxu0 %v768
    %v1178 = vpop.f32.mrb[0].mxu0
    %v1179 = vadd.f32 %v329, %v1178
    %v1180 = vpop.f32.mrb[0].mxu0
    %v1181 = vadd.f32 %v333, %v1180
    %v1182 = vpop.f32.mrb[0].mxu0
    %v1183 = vadd.f32 %v329, %v1182
    %v1184 = vpop.f32.mrb[0].mxu0
    %v1185 = vadd.f32 %v333, %v1184
    %1186 = vmatprep.mubr.bf16.mxu0 0
    %1187 = vmatmul.mubr.bf16.gmra.mrb[0].mxu0 %v771
    %v1188 = vpop.f32.mrb[0].mxu0
    %v1189 = vadd.f32 %v329, %v1188
    %v1190 = vpop.f32.mrb[0].mxu0
    %v1191 = vadd.f32 %v333, %v1190
    %v1192 = vpop.f32.mrb[0].mxu0
    %v1193 = vadd.f32 %v329, %v1192
    %v1194 = vpop.f32.mrb[0].mxu0
    %v1195 = vadd.f32 %v333, %v1194
    %1196 = vmatprep.mubr.bf16.mxu0 0
    %1197 = vmatmul.mubr.bf16.gmra.mrb[0].mxu0 %v774
    %v1198 = vpop.f32.mrb[0].mxu0
    %v1199 = vadd.f32 %v329, %v1198
    %v1200 = vpop.f32.mrb[0].mxu0
    %v1201 = vadd.f32 %v333, %v1200
    %v1202 = vpop.f32.mrb[0].mxu0
    %v1203 = vadd.f32 %v329, %v1202
    %v1204 = vpop.f32.mrb[0].mxu0
    %v1205 = vadd.f32 %v333, %v1204
    %1206 = vmatprep.mubr.bf16.mxu0 0
    %1207 = vmatmul.mubr.bf16.gmra.mrb[0].mxu0 %v777
    %v1208 = vpop.f32.mrb[0].mxu0
    %v1209 = vadd.f32 %v329, %v1208
    %v1210 = vpop.f32.mrb[0].mxu0
    %v1211 = vadd.f32 %v333, %v1210
    %v1212 = vpop.f32.mrb[0].mxu0
    %v1213 = vadd.f32 %v329, %v1212
    %v1214 = vpop.f32.mrb[0].mxu0
    %v1215 = vadd.f32 %v333, %v1214
    %1216 = vdwg.mxu0
    %1217 = vmatprep.subr.bf16.mxu0 %v619
    %1218 = vmatpush1.bf16.msra.mxu0 %v618
    %1219 = vmatprep.subr.bf16.mxu0 %v635
    %1220 = vmatpush1.bf16.msra.mxu0 %v634
    %1221 = vmatprep.subr.bf16.mxu0 %v651
    %1222 = vmatpush1.bf16.msra.mxu0 %v650
    %1223 = vmatprep.subr.bf16.mxu0 %v667
    %1224 = vmatpush1.bf16.msra.mxu0 %v666
    %1225 = vmatprep.subr.bf16.mxu0 %v683
    %1226 = vmatpush1.bf16.msra.mxu0 %v682
    %1227 = vmatprep.subr.bf16.mxu0 0
    %1228 = vmatpush1.bf16.msra.mxu0 0
    %1229 = vmatprep.subr.bf16.mxu0 0
    %1230 = vmatpush1.bf16.msra.mxu0 0
    %1231 = vmatprep.subr.bf16.mxu0 0
    %1232 = vmatpush1.bf16.msra.mxu0 0
    %1233 = vmatprep.subr.bf16.mxu0 0
    %1234 = vmatpush1.bf16.msra.mxu0 0
    %1235 = vmatprep.subr.bf16.mxu0 0
    %1236 = vmatpush1.bf16.msra.mxu0 0
    %1237 = vmatprep.subr.bf16.mxu0 0
    %1238 = vmatpush1.bf16.msra.mxu0 0
    %1239 = vmatprep.subr.bf16.mxu0 0
    %1240 = vmatpush1.bf16.msra.mxu0 0
    %1241 = vmatprep.subr.bf16.mxu0 0
    %1242 = vmatpush1.bf16.msra.mxu0 0
    %1243 = vmatprep.subr.bf16.mxu0 0
    %1244 = vmatpush1.bf16.msra.mxu0 0
    %1245 = vmatprep.subr.bf16.mxu0 0
    %1246 = vmatpush1.bf16.msra.mxu0 0
    %1247 = vmatprep.subr.bf16.mxu0 0
    %1248 = vmatpush1.bf16.msra.mxu0 0
    %1249 = vmatprep.mubr.bf16.mxu0 0
    %1250 = vmatmul.mubr.bf16.gmra.mrb[0].mxu0 %v768
    %v1251 = vpop.f32.mrb[0].mxu0
    %v1252 = vadd.f32 %v337, %v1251
    %v1253 = vpop.f32.mrb[0].mxu0
    %v1254 = vadd.f32 %v341, %v1253
    %v1255 = vpop.f32.mrb[0].mxu0
    %v1256 = vadd.f32 %v337, %v1255
    %v1257 = vpop.f32.mrb[0].mxu0
    %v1258 = vadd.f32 %v341, %v1257
    %1259 = vmatprep.mubr.bf16.mxu0 0
    %1260 = vmatmul.mubr.bf16.gmra.mrb[0].mxu0 %v771
    %v1261 = vpop.f32.mrb[0].mxu0
    %v1262 = vadd.f32 %v337, %v1261
    %v1263 = vpop.f32.mrb[0].mxu0
    %v1264 = vadd.f32 %v341, %v1263
    %v1265 = vpop.f32.mrb[0].mxu0
    %v1266 = vadd.f32 %v337, %v1265
    %v1267 = vpop.f32.mrb[0].mxu0
    %v1268 = vadd.f32 %v341, %v1267
    %1269 = vmatprep.mubr.bf16.mxu0 0
    %1270 = vmatmul.mubr.bf16.gmra.mrb[0].mxu0 %v774
    %v1271 = vpop.f32.mrb[0].mxu0
    %v1272 = vadd.f32 %v337, %v1271
    %v1273 = vpop.f32.mrb[0].mxu0
    %v1274 = vadd.f32 %v341, %v1273
    %v1275 = vpop.f32.mrb[0].mxu0
    %v1276 = vadd.f32 %v337, %v1275
    %v1277 = vpop.f32.mrb[0].mxu0
    %v1278 = vadd.f32 %v341, %v1277
    %1279 = vmatprep.mubr.bf16.mxu0 0
    %1280 = vmatmul.mubr.bf16.gmra.mrb[0].mxu0 %v777
    %v1281 = vpop.f32.mrb[0].mxu0
    %v1282 = vadd.f32 %v337, %v1281
    %v1283 = vpop.f32.mrb[0].mxu0
    %v1284 = vadd.f32 %v341, %v1283
    %v1285 = vpop.f32.mrb[0].mxu0
    %v1286 = vadd.f32 %v337, %v1285
    %v1287 = vpop.f32.mrb[0].mxu0
    %v1288 = vadd.f32 %v341, %v1287
    %1289 = vdwg.mxu0
    %1290 = vmatprep.subr.bf16.mxu0 %v621
    %1291 = vmatpush1.bf16.msra.mxu0 %v620
    %1292 = vmatprep.subr.bf16.mxu0 %v637
    %1293 = vmatpush1.bf16.msra.mxu0 %v636
    %1294 = vmatprep.subr.bf16.mxu0 %v653
    %1295 = vmatpush1.bf16.msra.mxu0 %v652
    %1296 = vmatprep.subr.bf16.mxu0 %v669
    %1297 = vmatpush1.bf16.msra.mxu0 %v668
    %1298 = vmatprep.subr.bf16.mxu0 %v685
    %1299 = vmatpush1.bf16.msra.mxu0 %v684
    %1300 = vmatprep.subr.bf16.mxu0 0
    %1301 = vmatpush1.bf16.msra.mxu0 0
    %1302 = vmatprep.subr.bf16.mxu0 0
    %1303 = vmatpush1.bf16.msra.mxu0 0
    %1304 = vmatprep.subr.bf16.mxu0 0
    %1305 = vmatpush1.bf16.msra.mxu0 0
    %1306 = vmatprep.subr.bf16.mxu0 0
    %1307 = vmatpush1.bf16.msra.mxu0 0
    %1308 = vmatprep.subr.bf16.mxu0 0
    %1309 = vmatpush1.bf16.msra.mxu0 0
    %1310 = vmatprep.subr.bf16.mxu0 0
    %1311 = vmatpush1.bf16.msra.mxu0 0
    %1312 = vmatprep.subr.bf16.mxu0 0
    %1313 = vmatpush1.bf16.msra.mxu0 0
    %1314 = vmatprep.subr.bf16.mxu0 0
    %1315 = vmatpush1.bf16.msra.mxu0 0
    %1316 = vmatprep.subr.bf16.mxu0 0
    %1317 = vmatpush1.bf16.msra.mxu0 0
    %1318 = vmatprep.subr.bf16.mxu0 0
    %1319 = vmatpush1.bf16.msra.mxu0 0
    %1320 = vmatprep.subr.bf16.mxu0 0
    %1321 = vmatpush1.bf16.msra.mxu0 0
    %1322 = vmatprep.mubr.bf16.mxu0 0
    %1323 = vmatmul.mubr.bf16.gmra.mrb[0].mxu0 %v768
    %v1324 = vpop.f32.mrb[0].mxu0
    %v1325 = vadd.f32 %v345, %v1324
    %v1326 = vpop.f32.mrb[0].mxu0
    %v1327 = vadd.f32 %v349, %v1326
    %v1328 = vpop.f32.mrb[0].mxu0
    %v1329 = vadd.f32 %v345, %v1328
    %v1330 = vpop.f32.mrb[0].mxu0
    %v1331 = vadd.f32 %v349, %v1330
    %1332 = vmatprep.mubr.bf16.mxu0 0
    %1333 = vmatmul.mubr.bf16.gmra.mrb[0].mxu0 %v771
    %v1334 = vpop.f32.mrb[0].mxu0
    %v1335 = vadd.f32 %v345, %v1334
    %v1336 = vpop.f32.mrb[0].mxu0
    %v1337 = vadd.f32 %v349, %v1336
    %v1338 = vpop.f32.mrb[0].mxu0
    %v1339 = vadd.f32 %v345, %v1338
    %v1340 = vpop.f32.mrb[0].mxu0
    %v1341 = vadd.f32 %v349, %v1340
    %1342 = vmatprep.mubr.bf16.mxu0 0
    %1343 = vmatmul.mubr.bf16.gmra.mrb[0].mxu0 %v774
    %v1344 = vpop.f32.mrb[0].mxu0
    %v1345 = vadd.f32 %v345, %v1344
    %v1346 = vpop.f32.mrb[0].mxu0
    %v1347 = vadd.f32 %v349, %v1346
    %v1348 = vpop.f32.mrb[0].mxu0
    %v1349 = vadd.f32 %v345, %v1348
    %v1350 = vpop.f32.mrb[0].mxu0
    %v1351 = vadd.f32 %v349, %v1350
    %1352 = vmatprep.mubr.bf16.mxu0 0
    %1353 = vmatmul.mubr.bf16.gmra.mrb[0].mxu0 %v777
    %v1354 = vpop.f32.mrb[0].mxu0
    %v1355 = vadd.f32 %v345, %v1354
    %v1356 = vpop.f32.mrb[0].mxu0
    %v1357 = vadd.f32 %v349, %v1356
    %v1358 = vpop.f32.mrb[0].mxu0
    %v1359 = vadd.f32 %v345, %v1358
    %v1360 = vpop.f32.mrb[0].mxu0
    %v1361 = vadd.f32 %v349, %v1360
    %1362 = vdwg.mxu0
    %1363 = vst [vmem:[#allocation2] sm:$0xff] %v814
    %1364 = vst [vmem:[#allocation2 + $0x8] sm:$0xff] %v816
    %1365 = vst [vmem:[#allocation2 + $0x10] sm:$0xff] %v887
    %1366 = vst [vmem:[#allocation2 + $0x18] sm:$0xff] %v889
    %1367 = vst [vmem:[#allocation2 + $0x20] sm:$0xff] %v960
    %1368 = vst [vmem:[#allocation2 + $0x28] sm:$0xff] %v962
    %1369 = vst [vmem:[#allocation2 + $0x30] sm:$0xff] %v1033
    %1370 = vst [vmem:[#allocation2 + $0x38] sm:$0xff] %v1035
    %1371 = vst [vmem:[#allocation2 + $0x40] sm:$0xff] %v1106
    %1372 = vst [vmem:[#allocation2 + $0x48] sm:$0xff] %v1108
    %1373 = vst [vmem:[#allocation2 + $0x50] sm:$0xff] %v1179
    %1374 = vst [vmem:[#allocation2 + $0x58] sm:$0xff] %v1181
    %1375 = vst [vmem:[#allocation2 + $0x60] sm:$0xff] %v1252
    %1376 = vst [vmem:[#allocation2 + $0x68] sm:$0xff] %v1254
    %1377 = vst [vmem:[#allocation2 + $0x70] sm:$0xff] %v1325
    %1378 = vst [vmem:[#allocation2 + $0x78] sm:$0xff] %v1327
    %1379 = vst [vmem:[#allocation2 + $0x80] sm:$0xff] %v818
    %1380 = vst [vmem:[#allocation2 + $0x88] sm:$0xff] %v820
    %1381 = vst [vmem:[#allocation2 + $0x90] sm:$0xff] %v891
    %1382 = vst [vmem:[#allocation2 + $0x98] sm:$0xff] %v893
    %1383 = vst [vmem:[#allocation2 + $0xa0] sm:$0xff] %v964
    %1384 = vst [vmem:[#allocation2 + $0xa8] sm:$0xff] %v966
    %1385 = vst [vmem:[#allocation2 + $0xb0] sm:$0xff] %v1037
    %1386 = vst [vmem:[#allocation2 + $0xb8] sm:$0xff] %v1039
    %1387 = vst [vmem:[#allocation2 + $0xc0] sm:$0xff] %v1110
    %1388 = vst [vmem:[#allocation2 + $0xc8] sm:$0xff] %v1112
    %1389 = vst [vmem:[#allocation2 + $0xd0] sm:$0xff] %v1183
    %1390 = vst [vmem:[#allocation2 + $0xd8] sm:$0xff] %v1185
    %1391 = vst [vmem:[#allocation2 + $0xe0] sm:$0xff] %v1256
    %1392 = vst [vmem:[#allocation2 + $0xe8] sm:$0xff] %v1258
    %1393 = vst [vmem:[#allocation2 + $0xf0] sm:$0xff] %v1329
    %1394 = vst [vmem:[#allocation2 + $0xf8] sm:$0xff] %v1331
    %1395 = vst [vmem:[#allocation2 + $0x100] sm:$0xff] %v824
    %1396 = vst [vmem:[#allocation2 + $0x108] sm:$0xff] %v826
    %1397 = vst [vmem:[#allocation2 + $0x110] sm:$0xff] %v897
    %1398 = vst [vmem:[#allocation2 + $0x118] sm:$0xff] %v899
    %1399 = vst [vmem:[#allocation2 + $0x120] sm:$0xff] %v970
    %1400 = vst [vmem:[#allocation2 + $0x128] sm:$0xff] %v972
    %1401 = vst [vmem:[#allocation2 + $0x130] sm:$0xff] %v1043
    %1402 = vst [vmem:[#allocation2 + $0x138] sm:$0xff] %v1045
    %1403 = vst [vmem:[#allocation2 + $0x140] sm:$0xff] %v1116
    %1404 = vst [vmem:[#allocation2 + $0x148] sm:$0xff] %v1118
    %1405 = vst [vmem:[#allocation2 + $0x150] sm:$0xff] %v1189
    %1406 = vst [vmem:[#allocation2 + $0x158] sm:$0xff] %v1191
    %1407 = vst [vmem:[#allocation2 + $0x160] sm:$0xff] %v1262
    %1408 = vst [vmem:[#allocation2 + $0x168] sm:$0xff] %v1264
    %1409 = vst [vmem:[#allocation2 + $0x170] sm:$0xff] %v1335
    %1410 = vst [vmem:[#allocation2 + $0x178] sm:$0xff] %v1337
    %1411 = vst [vmem:[#allocation2 + $0x180] sm:$0xff] %v828
    %1412 = vst [vmem:[#allocation2 + $0x188] sm:$0xff] %v830
    %1413 = vst [vmem:[#allocation2 + $0x190] sm:$0xff] %v901
    %1414 = vst [vmem:[#allocation2 + $0x198] sm:$0xff] %v903
    %1415 = vst [vmem:[#allocation2 + $0x1a0] sm:$0xff] %v974
    %1416 = vst [vmem:[#allocation2 + $0x1a8] sm:$0xff] %v976
    %1417 = vst [vmem:[#allocation2 + $0x1b0] sm:$0xff] %v1047
    %1418 = vst [vmem:[#allocation2 + $0x1b8] sm:$0xff] %v1049
    %1419 = vst [vmem:[#allocation2 + $0x1c0] sm:$0xff] %v1120
    %1420 = vst [vmem:[#allocation2 + $0x1c8] sm:$0xff] %v1122
    %1421 = vst [vmem:[#allocation2 + $0x1d0] sm:$0xff] %v1193
    %1422 = vst [vmem:[#allocation2 + $0x1d8] sm:$0xff] %v1195
    %1423 = vst [vmem:[#allocation2 + $0x1e0] sm:$0xff] %v1266
    %1424 = vst [vmem:[#allocation2 + $0x1e8] sm:$0xff] %v1268
    %1425 = vst [vmem:[#allocation2 + $0x1f0] sm:$0xff] %v1339
    %1426 = vst [vmem:[#allocation2 + $0x1f8] sm:$0xff] %v1341
    %1427 = vst [vmem:[#allocation2 + $0x200] sm:$0xff] %v834
    %1428 = vst [vmem:[#allocation2 + $0x208] sm:$0xff] %v836
    %1429 = vst [vmem:[#allocation2 + $0x210] sm:$0xff] %v907
    %1430 = vst [vmem:[#allocation2 + $0x218] sm:$0xff] %v909
    %1431 = vst [vmem:[#allocation2 + $0x220] sm:$0xff] %v980
    %1432 = vst [vmem:[#allocation2 + $0x228] sm:$0xff] %v982
    %1433 = vst [vmem:[#allocation2 + $0x230] sm:$0xff] %v1053
    %1434 = vst [vmem:[#allocation2 + $0x238] sm:$0xff] %v1055
    %1435 = vst [vmem:[#allocation2 + $0x240] sm:$0xff] %v1126
    %1436 = vst [vmem:[#allocation2 + $0x248] sm:$0xff] %v1128
    %1437 = vst [vmem:[#allocation2 + $0x250] sm:$0xff] %v1199
    %1438 = vst [vmem:[#allocation2 + $0x258] sm:$0xff] %v1201
    %1439 = vst [vmem:[#allocation2 + $0x260] sm:$0xff] %v1272
    %1440 = vst [vmem:[#allocation2 + $0x268] sm:$0xff] %v1274
    %1441 = vst [vmem:[#allocation2 + $0x270] sm:$0xff] %v1345
    %1442 = vst [vmem:[#allocation2 + $0x278] sm:$0xff] %v1347
    %1443 = vst [vmem:[#allocation2 + $0x280] sm:$0xff] %v838
    %1444 = vst [vmem:[#allocation2 + $0x288] sm:$0xff] %v840
    %1445 = vst [vmem:[#allocation2 + $0x290] sm:$0xff] %v911
    %1446 = vst [vmem:[#allocation2 + $0x298] sm:$0xff] %v913
    %1447 = vst [vmem:[#allocation2 + $0x2a0] sm:$0xff] %v984
    %1448 = vst [vmem:[#allocation2 + $0x2a8] sm:$0xff] %v986
    %1449 = vst [vmem:[#allocation2 + $0x2b0] sm:$0xff] %v1057
    %1450 = vst [vmem:[#allocation2 + $0x2b8] sm:$0xff] %v1059
    %1451 = vst [vmem:[#allocation2 + $0x2c0] sm:$0xff] %v1130
    %1452 = vst [vmem:[#allocation2 + $0x2c8] sm:$0xff] %v1132
    %1453 = vst [vmem:[#allocation2 + $0x2d0] sm:$0xff] %v1203
    %1454 = vst [vmem:[#allocation2 + $0x2d8] sm:$0xff] %v1205
    %1455 = vst [vmem:[#allocation2 + $0x2e0] sm:$0xff] %v1276
    %1456 = vst [vmem:[#allocation2 + $0x2e8] sm:$0xff] %v1278
    %1457 = vst [vmem:[#allocation2 + $0x2f0] sm:$0xff] %v1349
    %1458 = vst [vmem:[#allocation2 + $0x2f8] sm:$0xff] %v1351
    %1459 = vst [vmem:[#allocation2 + $0x300] sm:$0xff] %v844
    %1460 = vst [vmem:[#allocation2 + $0x308] sm:$0xff] %v846
    %1461 = vst [vmem:[#allocation2 + $0x310] sm:$0xff] %v917
    %1462 = vst [vmem:[#allocation2 + $0x318] sm:$0xff] %v919
    %1463 = vst [vmem:[#allocation2 + $0x320] sm:$0xff] %v990
    %1464 = vst [vmem:[#allocation2 + $0x328] sm:$0xff] %v992
    %1465 = vst [vmem:[#allocation2 + $0x330] sm:$0xff] %v1063
    %1466 = vst [vmem:[#allocation2 + $0x338] sm:$0xff] %v1065
    %1467 = vst [vmem:[#allocation2 + $0x340] sm:$0xff] %v1136
    %1468 = vst [vmem:[#allocation2 + $0x348] sm:$0xff] %v1138
    %1469 = vst [vmem:[#allocation2 + $0x350] sm:$0xff] %v1209
    %1470 = vst [vmem:[#allocation2 + $0x358] sm:$0xff] %v1211
    %1471 = vst [vmem:[#allocation2 + $0x360] sm:$0xff] %v1282
    %1472 = vst [vmem:[#allocation2 + $0x368] sm:$0xff] %v1284
    %1473 = vst [vmem:[#allocation2 + $0x370] sm:$0xff] %v1355
    %1474 = vst [vmem:[#allocation2 + $0x378] sm:$0xff] %v1357
    %1475 = vst [vmem:[#allocation2 + $0x380] sm:$0xff] %v848
    %1476 = vst [vmem:[#allocation2 + $0x388] sm:$0xff] %v850
    %1477 = vst [vmem:[#allocation2 + $0x390] sm:$0xff] %v921
    %1478 = vst [vmem:[#allocation2 + $0x398] sm:$0xff] %v923
    %1479 = vst [vmem:[#allocation2 + $0x3a0] sm:$0xff] %v994
    %1480 = vst [vmem:[#allocation2 + $0x3a8] sm:$0xff] %v996
    %1481 = vst [vmem:[#allocation2 + $0x3b0] sm:$0xff] %v1067
    %1482 = vst [vmem:[#allocation2 + $0x3b8] sm:$0xff] %v1069
    %1483 = vst [vmem:[#allocation2 + $0x3c0] sm:$0xff] %v1140
    %1484 = vst [vmem:[#allocation2 + $0x3c8] sm:$0xff] %v1142
    %1485 = vst [vmem:[#allocation2 + $0x3d0] sm:$0xff] %v1213
    %1486 = vst [vmem:[#allocation2 + $0x3d8] sm:$0xff] %v1215
    %1487 = vst [vmem:[#allocation2 + $0x3e0] sm:$0xff] %v1286
    %1488 = vst [vmem:[#allocation2 + $0x3e8] sm:$0xff] %v1288
    %1489 = vst [vmem:[#allocation2 + $0x3f0] sm:$0xff] %v1359
    %1490 = vst [vmem:[#allocation2 + $0x3f8] sm:$0xff] %v1361
    %s1491 = smul.u32 4, 32
    %s1492 = smul.u32 %s1491, 8
    %s1493 = sshll.u32 %s1492, 4
    %1494 = dma.done [#allocation9], %s1493
    %s1495 = sshll.u32 %s1492, 4
    %1496 = dma.done %s131, %s1495
    %v1497 = vld [vmem:[#allocation2] sm:$0xff]
    %v1498 = vld [vmem:[#allocation2 + $0x8] sm:$0xff]
    %v1499 = vld [vmem:[#allocation2 + $0x10] sm:$0xff]
    %v1500 = vld [vmem:[#allocation2 + $0x18] sm:$0xff]
    %v1501 = vld [vmem:[#allocation2 + $0x20] sm:$0xff]
    %v1502 = vld [vmem:[#allocation2 + $0x28] sm:$0xff]
    %v1503 = vld [vmem:[#allocation2 + $0x30] sm:$0xff]
    %v1504 = vld [vmem:[#allocation2 + $0x38] sm:$0xff]
    %v1505 = vld [vmem:[#allocation5] sm:$0xff]
    %v1506 = vld [vmem:[#allocation5 + $0x8] sm:$0xff]
    %v1507 = vld [vmem:[#allocation5 + $0x10] sm:$0xff]
    %v1508 = vld [vmem:[#allocation5 + $0x18] sm:$0xff]
    %v1509 = vld [vmem:[#allocation5 + $0x20] sm:$0xff]
    %v1510 = vld [vmem:[#allocation5 + $0x28] sm:$0xff]
    %v1511 = vld [vmem:[#allocation5 + $0x30] sm:$0xff]
    %v1512 = vld [vmem:[#allocation5 + $0x38] sm:$0xff]
    %v1513 = vld [vmem:[#allocation5 + $0x40] sm:$0xff]
    %v1514 = vld [vmem:[#allocation5 + $0x48] sm:$0xff]
    %v1515 = vld [vmem:[#allocation5 + $0x50] sm:$0xff]
    %v1516 = vld [vmem:[#allocation5 + $0x58] sm:$0xff]
    %v1517 = vld [vmem:[#allocation5 + $0x60] sm:$0xff]
    %v1518 = vld [vmem:[#allocation5 + $0x68] sm:$0xff]
    %v1519 = vld [vmem:[#allocation5 + $0x70] sm:$0xff]
    %v1520 = vld [vmem:[#allocation5 + $0x78] sm:$0xff]
    %v1521 = vld [vmem:[#allocation5 + $0x80] sm:$0xff]
    %v1522 = vld [vmem:[#allocation5 + $0x88] sm:$0xff]
    %v1523 = vld [vmem:[#allocation5 + $0x90] sm:$0xff]
    %v1524 = vld [vmem:[#allocation5 + $0x98] sm:$0xff]
    %v1525 = vld [vmem:[#allocation5 + $0xa0] sm:$0xff]
    %v1526 = vld [vmem:[#allocation5 + $0xa8] sm:$0xff]
    %v1527 = vld [vmem:[#allocation5 + $0xb0] sm:$0xff]
    %v1528 = vld [vmem:[#allocation5 + $0xb8] sm:$0xff]
    %v1529 = vld [vmem:[#allocation5 + $0xc0] sm:$0xff]
    %v1530 = vld [vmem:[#allocation5 + $0xc8] sm:$0xff]
    %v1531 = vld [vmem:[#allocation5 + $0xd0] sm:$0xff]
    %v1532 = vld [vmem:[#allocation5 + $0xd8] sm:$0xff]
    %v1533 = vld [vmem:[#allocation5 + $0xe0] sm:$0xff]
    %v1534 = vld [vmem:[#allocation5 + $0xe8] sm:$0xff]
    %v1535 = vld [vmem:[#allocation5 + $0xf0] sm:$0xff]
    %v1536 = vld [vmem:[#allocation5 + $0xf8] sm:$0xff]
    %v1537 = vld [vmem:[#allocation5 + $0x100] sm:$0xff]
    %v1538 = vld [vmem:[#allocation5 + $0x108] sm:$0xff]
    %v1539 = vld [vmem:[#allocation5 + $0x110] sm:$0xff]
    %v1540 = vld [vmem:[#allocation5 + $0x118] sm:$0xff]
    %v1541 = vld [vmem:[#allocation5 + $0x120] sm:$0xff]
    %v1542 = vld [vmem:[#allocation5 + $0x128] sm:$0xff]
    %v1543 = vld [vmem:[#allocation5 + $0x130] sm:$0xff]
    %v1544 = vld [vmem:[#allocation5 + $0x138] sm:$0xff]
    %v1545 = vld [vmem:[#allocation5 + $0x140] sm:$0xff]
    %v1546 = vld [vmem:[#allocation5 + $0x148] sm:$0xff]
    %v1547 = vld [vmem:[#allocation5 + $0x150] sm:$0xff]
    %v1548 = vld [vmem:[#allocation5 + $0x158] sm:$0xff]
    %v1549 = vld [vmem:[#allocation5 + $0x160] sm:$0xff]
    %v1550 = vld [vmem:[#allocation5 + $0x168] sm:$0xff]
    %v1551 = vld [vmem:[#allocation5 + $0x170] sm:$0xff]
    %v1552 = vld [vmem:[#allocation5 + $0x178] sm:$0xff]
    %v1553 = vld [vmem:[#allocation5 + $0x180] sm:$0xff]
    %v1554 = vld [vmem:[#allocation5 + $0x188] sm:$0xff]
    %v1555 = vld [vmem:[#allocation5 + $0x190] sm:$0xff]
    %v1556 = vld [vmem:[#allocation5 + $0x198] sm:$0xff]
    %v1557 = vld [vmem:[#allocation5 + $0x1a0] sm:$0xff]
    %v1558 = vld [vmem:[#allocation5 + $0x1a8] sm:$0xff]
    %v1559 = vld [vmem:[#allocation5 + $0x1b0] sm:$0xff]
    %v1560 = vld [vmem:[#allocation5 + $0x1b8] sm:$0xff]
    %v1561 = vld [vmem:[#allocation5 + $0x1c0] sm:$0xff]
    %v1562 = vld [vmem:[#allocation5 + $0x1c8] sm:$0xff]
    %v1563 = vld [vmem:[#allocation5 + $0x1d0] sm:$0xff]
    %v1564 = vld [vmem:[#allocation5 + $0x1d8] sm:$0xff]
    %v1565 = vld [vmem:[#allocation5 + $0x1e0] sm:$0xff]
    %v1566 = vld [vmem:[#allocation5 + $0x1e8] sm:$0xff]
    %v1567 = vld [vmem:[#allocation5 + $0x1f0] sm:$0xff]
    %v1568 = vld [vmem:[#allocation5 + $0x1f8] sm:$0xff]
    %v1569 = vld [vmem:[#allocation5 + $0x200] sm:$0xff]
    %v1570 = vld [vmem:[#allocation5 + $0x208] sm:$0xff]
    %v1571 = vld [vmem:[#allocation5 + $0x210] sm:$0xff]
    %v1572 = vld [vmem:[#allocation5 + $0x218] sm:$0xff]
    %v1573 = vld [vmem:[#allocation5 + $0x220] sm:$0xff]
    %v1574 = vld [vmem:[#allocation5 + $0x228] sm:$0xff]
    %v1575 = vld [vmem:[#allocation5 + $0x230] sm:$0xff]
    %v1576 = vld [vmem:[#allocation5 + $0x238] sm:$0xff]
    %v1577 = vld [vmem:[#allocation5 + $0x240] sm:$0xff]
    %v1578 = vld [vmem:[#allocation5 + $0x248] sm:$0xff]
    %v1579 = vld [vmem:[#allocation5 + $0x250] sm:$0xff]
    %v1580 = vld [vmem:[#allocation5 + $0x258] sm:$0xff]
    %v1581 = vld [vmem:[#allocation5 + $0x260] sm:$0xff]
    %v1582 = vld [vmem:[#allocation5 + $0x268] sm:$0xff]
    %v1583 = vld [vmem:[#allocation5 + $0x270] sm:$0xff]
    %v1584 = vld [vmem:[#allocation5 + $0x278] sm:$0xff]
    %v1585 = vld [vmem:[#allocation5 + $0x280] sm:$0xff]
    %v1586 = vld [vmem:[#allocation5 + $0x288] sm:$0xff]
    %v1587 = vld [vmem:[#allocation5 + $0x290] sm:$0xff]
    %v1588 = vld [vmem:[#allocation5 + $0x298] sm:$0xff]
    %v1589 = vld [vmem:[#allocation5 + $0x2a0] sm:$0xff]
    %v1590 = vld [vmem:[#allocation5 + $0x2a8] sm:$0xff]
    %v1591 = vld [vmem:[#allocation5 + $0x2b0] sm:$0xff]
    %v1592 = vld [vmem:[#allocation5 + $0x2b8] sm:$0xff]
    %v1593 = vld [vmem:[#allocation5 + $0x2c0] sm:$0xff]
    %v1594 = vld [vmem:[#allocation5 + $0x2c8] sm:$0xff]
    %v1595 = vld [vmem:[#allocation5 + $0x2d0] sm:$0xff]
    %v1596 = vld [vmem:[#allocation5 + $0x2d8] sm:$0xff]
    %v1597 = vld [vmem:[#allocation5 + $0x2e0] sm:$0xff]
    %v1598 = vld [vmem:[#allocation5 + $0x2e8] sm:$0xff]
    %v1599 = vld [vmem:[#allocation5 + $0x2f0] sm:$0xff]
    %v1600 = vld [vmem:[#allocation5 + $0x2f8] sm:$0xff]
    %v1601 = vld [vmem:[#allocation5 + $0x300] sm:$0xff]
    %v1602 = vld [vmem:[#allocation5 + $0x308] sm:$0xff]
    %v1603 = vld [vmem:[#allocation5 + $0x310] sm:$0xff]
    %v1604 = vld [vmem:[#allocation5 + $0x318] sm:$0xff]
    %v1605 = vld [vmem:[#allocation5 + $0x320] sm:$0xff]
    %v1606 = vld [vmem:[#allocation5 + $0x328] sm:$0xff]
    %v1607 = vld [vmem:[#allocation5 + $0x330] sm:$0xff]
    %v1608 = vld [vmem:[#allocation5 + $0x338] sm:$0xff]
    %v1609 = vld [vmem:[#allocation5 + $0x340] sm:$0xff]
    %v1610 = vld [vmem:[#allocation5 + $0x348] sm:$0xff]
    %v1611 = vld [vmem:[#allocation5 + $0x350] sm:$0xff]
    %v1612 = vld [vmem:[#allocation5 + $0x358] sm:$0xff]
    %v1613 = vld [vmem:[#allocation5 + $0x360] sm:$0xff]
    %v1614 = vld [vmem:[#allocation5 + $0x368] sm:$0xff]
    %v1615 = vld [vmem:[#allocation5 + $0x370] sm:$0xff]
    %v1616 = vld [vmem:[#allocation5 + $0x378] sm:$0xff]
    %v1617 = vld [vmem:[#allocation5 + $0x380] sm:$0xff]
    %v1618 = vld [vmem:[#allocation5 + $0x388] sm:$0xff]
    %v1619 = vld [vmem:[#allocation5 + $0x390] sm:$0xff]
    %v1620 = vld [vmem:[#allocation5 + $0x398] sm:$0xff]
    %v1621 = vld [vmem:[#allocation5 + $0x3a0] sm:$0xff]
    %v1622 = vld [vmem:[#allocation5 + $0x3a8] sm:$0xff]
    %v1623 = vld [vmem:[#allocation5 + $0x3b0] sm:$0xff]
    %v1624 = vld [vmem:[#allocation5 + $0x3b8] sm:$0xff]
    %v1625 = vld [vmem:[#allocation5 + $0x3c0] sm:$0xff]
    %v1626 = vld [vmem:[#allocation5 + $0x3c8] sm:$0xff]
    %v1627 = vld [vmem:[#allocation5 + $0x3d0] sm:$0xff]
    %v1628 = vld [vmem:[#allocation5 + $0x3d8] sm:$0xff]
    %v1629 = vld [vmem:[#allocation5 + $0x3e0] sm:$0xff]
    %v1630 = vld [vmem:[#allocation5 + $0x3e8] sm:$0xff]
    %v1631 = vld [vmem:[#allocation5 + $0x3f0] sm:$0xff]
    %v1632 = vld [vmem:[#allocation5 + $0x3f8] sm:$0xff]
    %1633 = vmatprep.subr.bf16.mxu0 %v1506
    %1634 = vmatpush1.bf16.msra.mxu0 %v1505
    %1635 = vmatprep.subr.bf16.mxu0 %v1514
    %1636 = vmatpush1.bf16.msra.mxu0 %v1513
    %1637 = vmatprep.subr.bf16.mxu0 %v1522
    %1638 = vmatpush1.bf16.msra.mxu0 %v1521
    %1639 = vmatprep.subr.bf16.mxu0 %v1530
    %1640 = vmatpush1.bf16.msra.mxu0 %v1529
    %1641 = vmatprep.subr.bf16.mxu0 %v1538
    %1642 = vmatpush1.bf16.msra.mxu0 %v1537
    %1643 = vmatprep.subr.bf16.mxu0 %v1546
    %1644 = vmatpush1.bf16.msra.mxu0 %v1545
    %1645 = vmatprep.subr.bf16.mxu0 %v1554
    %1646 = vmatpush1.bf16.msra.mxu0 %v1553
    %1647 = vmatprep.subr.bf16.mxu0 %v1562
    %1648 = vmatpush1.bf16.msra.mxu0 %v1561
    %1649 = vmatprep.subr.bf16.mxu0 %v1570
    %1650 = vmatpush1.bf16.msra.mxu0 %v1569
    %1651 = vmatprep.subr.bf16.mxu0 %v1578
    %1652 = vmatpush1.bf16.msra.mxu0 %v1577
    %1653 = vmatprep.subr.bf16.mxu0 %v1586
    %1654 = vmatpush1.bf16.msra.mxu0 %v1585
    %1655 = vmatprep.subr.bf16.mxu0 %v1594
    %1656 = vmatpush1.bf16.msra.mxu0 %v1593
    %1657 = vmatprep.subr.bf16.mxu0 %v1602
    %1658 = vmatpush1.bf16.msra.mxu0 %v1601
    %1659 = vmatprep.subr.bf16.mxu0 %v1610
    %1660 = vmatpush1.bf16.msra.mxu0 %v1609
    %1661 = vmatprep.subr.bf16.mxu0 %v1618
    %1662 = vmatpush1.bf16.msra.mxu0 %v1617
    %1663 = vmatprep.subr.bf16.mxu0 %v1626
    %1664 = vmatpush1.bf16.msra.mxu0 %v1625
    %1665 = vmatprep.mubr.bf16.mxu0 0
    %1666 = vmatmul.mubr.bf16.gmra.mrb[0].mxu0 0
    %v1667 = vpop.f32.mrb[0].mxu0
    %v1668 = vadd.f32 0.0, %v1667
    %v1669 = vpop.f32.mrb[0].mxu0
    %v1670 = vadd.f32 0.0, %v1669
    %v1671 = vpop.f32.mrb[0].mxu0
    %v1672 = vpop.f32.mrb[0].mxu0
    %1673 = vdwg.mxu0
    %1674 = vmatprep.subr.bf16.mxu0 %v1508
    %1675 = vmatpush1.bf16.msra.mxu0 %v1507
    %1676 = vmatprep.subr.bf16.mxu0 %v1516
    %1677 = vmatpush1.bf16.msra.mxu0 %v1515
    %1678 = vmatprep.subr.bf16.mxu0 %v1524
    %1679 = vmatpush1.bf16.msra.mxu0 %v1523
    %1680 = vmatprep.subr.bf16.mxu0 %v1532
    %1681 = vmatpush1.bf16.msra.mxu0 %v1531
    %1682 = vmatprep.subr.bf16.mxu0 %v1540
    %1683 = vmatpush1.bf16.msra.mxu0 %v1539
    %1684 = vmatprep.subr.bf16.mxu0 %v1548
    %1685 = vmatpush1.bf16.msra.mxu0 %v1547
    %1686 = vmatprep.subr.bf16.mxu0 %v1556
    %1687 = vmatpush1.bf16.msra.mxu0 %v1555
    %1688 = vmatprep.subr.bf16.mxu0 %v1564
    %1689 = vmatpush1.bf16.msra.mxu0 %v1563
    %1690 = vmatprep.subr.bf16.mxu0 %v1572
    %1691 = vmatpush1.bf16.msra.mxu0 %v1571
    %1692 = vmatprep.subr.bf16.mxu0 %v1580
    %1693 = vmatpush1.bf16.msra.mxu0 %v1579
    %1694 = vmatprep.subr.bf16.mxu0 %v1588
    %1695 = vmatpush1.bf16.msra.mxu0 %v1587
    %1696 = vmatprep.subr.bf16.mxu0 %v1596
    %1697 = vmatpush1.bf16.msra.mxu0 %v1595
    %1698 = vmatprep.subr.bf16.mxu0 %v1604
    %1699 = vmatpush1.bf16.msra.mxu0 %v1603
    %1700 = vmatprep.subr.bf16.mxu0 %v1612
    %1701 = vmatpush1.bf16.msra.mxu0 %v1611
    %1702 = vmatprep.subr.bf16.mxu0 %v1620
    %1703 = vmatpush1.bf16.msra.mxu0 %v1619
    %1704 = vmatprep.subr.bf16.mxu0 %v1628
    %1705 = vmatpush1.bf16.msra.mxu0 %v1627
    %1706 = vmatprep.mubr.bf16.mxu0 0
    %1707 = vmatmul.mubr.bf16.gmra.mrb[0].mxu0 0
    %v1708 = vpop.f32.mrb[0].mxu0
    %v1709 = vadd.f32 0.0, %v1708
    %v1710 = vpop.f32.mrb[0].mxu0
    %v1711 = vadd.f32 0.0, %v1710
    %v1712 = vpop.f32.mrb[0].mxu0
    %v1713 = vpop.f32.mrb[0].mxu0
    %1714 = vdwg.mxu0
    %1715 = vmatprep.subr.bf16.mxu0 %v1510
    %1716 = vmatpush1.bf16.msra.mxu0 %v1509
    %1717 = vmatprep.subr.bf16.mxu0 %v1518
    %1718 = vmatpush1.bf16.msra.mxu0 %v1517
    %1719 = vmatprep.subr.bf16.mxu0 %v1526
    %1720 = vmatpush1.bf16.msra.mxu0 %v1525
    %1721 = vmatprep.subr.bf16.mxu0 %v1534
    %1722 = vmatpush1.bf16.msra.mxu0 %v1533
    %1723 = vmatprep.subr.bf16.mxu0 %v1542
    %1724 = vmatpush1.bf16.msra.mxu0 %v1541
    %1725 = vmatprep.subr.bf16.mxu0 %v1550
    %1726 = vmatpush1.bf16.msra.mxu0 %v1549
    %1727 = vmatprep.subr.bf16.mxu0 %v1558
    %1728 = vmatpush1.bf16.msra.mxu0 %v1557
    %1729 = vmatprep.subr.bf16.mxu0 %v1566
    %1730 = vmatpush1.bf16.msra.mxu0 %v1565
    %1731 = vmatprep.subr.bf16.mxu0 %v1574
    %1732 = vmatpush1.bf16.msra.mxu0 %v1573
    %1733 = vmatprep.subr.bf16.mxu0 %v1582
    %1734 = vmatpush1.bf16.msra.mxu0 %v1581
    %1735 = vmatprep.subr.bf16.mxu0 %v1590
    %1736 = vmatpush1.bf16.msra.mxu0 %v1589
    %1737 = vmatprep.subr.bf16.mxu0 %v1598
    %1738 = vmatpush1.bf16.msra.mxu0 %v1597
    %1739 = vmatprep.subr.bf16.mxu0 %v1606
    %1740 = vmatpush1.bf16.msra.mxu0 %v1605
    %1741 = vmatprep.subr.bf16.mxu0 %v1614
    %1742 = vmatpush1.bf16.msra.mxu0 %v1613
    %1743 = vmatprep.subr.bf16.mxu0 %v1622
    %1744 = vmatpush1.bf16.msra.mxu0 %v1621
    %1745 = vmatprep.subr.bf16.mxu0 %v1630
    %1746 = vmatpush1.bf16.msra.mxu0 %v1629
    %1747 = vmatprep.mubr.bf16.mxu0 0
    %1748 = vmatmul.mubr.bf16.gmra.mrb[0].mxu0 0
    %v1749 = vpop.f32.mrb[0].mxu0
    %v1750 = vadd.f32 0.0, %v1749
    %v1751 = vpop.f32.mrb[0].mxu0
    %v1752 = vadd.f32 0.0, %v1751
    %v1753 = vpop.f32.mrb[0].mxu0
    %v1754 = vpop.f32.mrb[0].mxu0
    %1755 = vdwg.mxu0
    %1756 = vmatprep.subr.bf16.mxu0 %v1512
    %1757 = vmatpush1.bf16.msra.mxu0 %v1511
    %1758 = vmatprep.subr.bf16.mxu0 %v1520
    %1759 = vmatpush1.bf16.msra.mxu0 %v1519
    %1760 = vmatprep.subr.bf16.mxu0 %v1528
    %1761 = vmatpush1.bf16.msra.mxu0 %v1527
    %1762 = vmatprep.subr.bf16.mxu0 %v1536
    %1763 = vmatpush1.bf16.msra.mxu0 %v1535
    %1764 = vmatprep.subr.bf16.mxu0 %v1544
    %1765 = vmatpush1.bf16.msra.mxu0 %v1543
    %1766 = vmatprep.subr.bf16.mxu0 %v1552
    %1767 = vmatpush1.bf16.msra.mxu0 %v1551
    %1768 = vmatprep.subr.bf16.mxu0 %v1560
    %1769 = vmatpush1.bf16.msra.mxu0 %v1559
    %1770 = vmatprep.subr.bf16.mxu0 %v1568
    %1771 = vmatpush1.bf16.msra.mxu0 %v1567
    %1772 = vmatprep.subr.bf16.mxu0 %v1576
    %1773 = vmatpush1.bf16.msra.mxu0 %v1575
    %1774 = vmatprep.subr.bf16.mxu0 %v1584
    %1775 = vmatpush1.bf16.msra.mxu0 %v1583
    %1776 = vmatprep.subr.bf16.mxu0 %v1592
    %1777 = vmatpush1.bf16.msra.mxu0 %v1591
    %1778 = vmatprep.subr.bf16.mxu0 %v1600
    %1779 = vmatpush1.bf16.msra.mxu0 %v1599
    %1780 = vmatprep.subr.bf16.mxu0 %v1608
    %1781 = vmatpush1.bf16.msra.mxu0 %v1607
    %1782 = vmatprep.subr.bf16.mxu0 %v1616
    %1783 = vmatpush1.bf16.msra.mxu0 %v1615
    %1784 = vmatprep.subr.bf16.mxu0 %v1624
    %1785 = vmatpush1.bf16.msra.mxu0 %v1623
    %1786 = vmatprep.subr.bf16.mxu0 %v1632
    %1787 = vmatpush1.bf16.msra.mxu0 %v1631
    %1788 = vmatprep.mubr.bf16.mxu0 0
    %1789 = vmatmul.mubr.bf16.gmra.mrb[0].mxu0 0
    %v1790 = vpop.f32.mrb[0].mxu0
    %v1791 = vadd.f32 0.0, %v1790
    %v1792 = vpop.f32.mrb[0].mxu0
    %v1793 = vadd.f32 0.0, %v1792
    %v1794 = vpop.f32.mrb[0].mxu0
    %v1795 = vpop.f32.mrb[0].mxu0
    %1796 = vdwg.mxu0
    %v1797 = vadd.f32 %v1497, %v1668
    %v1798 = vadd.f32 %v1498, %v1670
    %v1799 = vadd.f32 %v1499, %v1709
    %v1800 = vadd.f32 %v1500, %v1711
    %v1801 = vadd.f32 %v1501, %v1750
    %v1802 = vadd.f32 %v1502, %v1752
    %v1803 = vadd.f32 %v1503, %v1791
    %v1804 = vadd.f32 %v1504, %v1793
    %v1805 = vld [vmem:[#allocation2 + $0x3c0] sm:$0xff]
    %v1806 = vld [vmem:[#allocation2 + $0x3c8] sm:$0xff]
    %v1807 = vld [vmem:[#allocation2 + $0x3d0] sm:$0xff]
    %v1808 = vld [vmem:[#allocation2 + $0x3d8] sm:$0xff]
    %v1809 = vld [vmem:[#allocation2 + $0x3e0] sm:$0xff]
    %v1810 = vld [vmem:[#allocation2 + $0x3e8] sm:$0xff]
    %v1811 = vld [vmem:[#allocation2 + $0x3f0] sm:$0xff]
    %v1812 = vld [vmem:[#allocation2 + $0x3f8] sm:$0xff]
    %v1813 = vld [vmem:[#allocation6] sm:$0xff]
    %v1814 = vld [vmem:[#allocation6 + $0x8] sm:$0xff]
    %v1815 = vld [vmem:[#allocation6 + $0x10] sm:$0xff]
    %v1816 = vld [vmem:[#allocation6 + $0x18] sm:$0xff]
    %v1817 = vld [vmem:[#allocation6 + $0x20] sm:$0xff]
    %v1818 = vld [vmem:[#allocation6 + $0x28] sm:$0xff]
    %v1819 = vld [vmem:[#allocation6 + $0x30] sm:$0xff]
    %v1820 = vld [vmem:[#allocation6 + $0x38] sm:$0xff]
    %v1821 = vld [vmem:[#allocation6 + $0x40] sm:$0xff]
    %v1822 = vld [vmem:[#allocation6 + $0x48] sm:$0xff]
    %v1823 = vld [vmem:[#allocation6 + $0x50] sm:$0xff]
    %v1824 = vld [vmem:[#allocation6 + $0x58] sm:$0xff]
    %v1825 = vld [vmem:[#allocation6 + $0x60] sm:$0xff]
    %v1826 = vld [vmem:[#allocation6 + $0x68] sm:$0xff]
    %v1827 = vld [vmem:[#allocation6 + $0x70] sm:$0xff]
    %v1828 = vld [vmem:[#allocation6 + $0x78] sm:$0xff]
    %v1829 = vld [vmem:[#allocation6 + $0x80] sm:$0xff]
    %v1830 = vld [vmem:[#allocation6 + $0x88] sm:$0xff]
    %v1831 = vld [vmem:[#allocation6 + $0x90] sm:$0xff]
    %v1832 = vld [vmem:[#allocation6 + $0x98] sm:$0xff]
    %v1833 = vld [vmem:[#allocation6 + $0xa0] sm:$0xff]
    %v1834 = vld [vmem:[#allocation6 + $0xa8] sm:$0xff]
    %v1835 = vld [vmem:[#allocation6 + $0xb0] sm:$0xff]
    %v1836 = vld [vmem:[#allocation6 + $0xb8] sm:$0xff]
    %v1837 = vld [vmem:[#allocation6 + $0xc0] sm:$0xff]
    %v1838 = vld [vmem:[#allocation6 + $0xc8] sm:$0xff]
    %v1839 = vld [vmem:[#allocation6 + $0xd0] sm:$0xff]
    %v1840 = vld [vmem:[#allocation6 + $0xd8] sm:$0xff]
    %v1841 = vld [vmem:[#allocation6 + $0xe0] sm:$0xff]
    %v1842 = vld [vmem:[#allocation6 + $0xe8] sm:$0xff]
    %v1843 = vld [vmem:[#allocation6 + $0xf0] sm:$0xff]
    %v1844 = vld [vmem:[#allocation6 + $0xf8] sm:$0xff]
    %v1845 = vld [vmem:[#allocation6 + $0x100] sm:$0xff]
    %v1846 = vld [vmem:[#allocation6 + $0x108] sm:$0xff]
    %v1847 = vld [vmem:[#allocation6 + $0x110] sm:$0xff]
    %v1848 = vld [vmem:[#allocation6 + $0x118] sm:$0xff]
    %v1849 = vld [vmem:[#allocation6 + $0x120] sm:$0xff]
    %v1850 = vld [vmem:[#allocation6 + $0x128] sm:$0xff]
    %v1851 = vld [vmem:[#allocation6 + $0x130] sm:$0xff]
    %v1852 = vld [vmem:[#allocation6 + $0x138] sm:$0xff]
    %v1853 = vld [vmem:[#allocation6 + $0x140] sm:$0xff]
    %v1854 = vld [vmem:[#allocation6 + $0x148] sm:$0xff]
    %v1855 = vld [vmem:[#allocation6 + $0x150] sm:$0xff]
    %v1856 = vld [vmem:[#allocation6 + $0x158] sm:$0xff]
    %v1857 = vld [vmem:[#allocation6 + $0x160] sm:$0xff]
    %v1858 = vld [vmem:[#allocation6 + $0x168] sm:$0xff]
    %v1859 = vld [vmem:[#allocation6 + $0x170] sm:$0xff]
    %v1860 = vld [vmem:[#allocation6 + $0x178] sm:$0xff]
    %v1861 = vld [vmem:[#allocation6 + $0x180] sm:$0xff]
    %v1862 = vld [vmem:[#allocation6 + $0x188] sm:$0xff]
    %v1863 = vld [vmem:[#allocation6 + $0x190] sm:$0xff]
    %v1864 = vld [vmem:[#allocation6 + $0x198] sm:$0xff]
    %v1865 = vld [vmem:[#allocation6 + $0x1a0] sm:$0xff]
    %v1866 = vld [vmem:[#allocation6 + $0x1a8] sm:$0xff]
    %v1867 = vld [vmem:[#allocation6 + $0x1b0] sm:$0xff]
    %v1868 = vld [vmem:[#allocation6 + $0x1b8] sm:$0xff]
    %v1869 = vld [vmem:[#allocation6 + $0x1c0] sm:$0xff]
    %v1870 = vld [vmem:[#allocation6 + $0x1c8] sm:$0xff]
    %v1871 = vld [vmem:[#allocation6 + $0x1d0] sm:$0xff]
    %v1872 = vld [vmem:[#allocation6 + $0x1d8] sm:$0xff]
    %v1873 = vld [vmem:[#allocation6 + $0x1e0] sm:$0xff]
    %v1874 = vld [vmem:[#allocation6 + $0x1e8] sm:$0xff]
    %v1875 = vld [vmem:[#allocation6 + $0x1f0] sm:$0xff]
    %v1876 = vld [vmem:[#allocation6 + $0x1f8] sm:$0xff]
    %v1877 = vld [vmem:[#allocation6 + $0x200] sm:$0xff]
    %v1878 = vld [vmem:[#allocation6 + $0x208] sm:$0xff]
    %v1879 = vld [vmem:[#allocation6 + $0x210] sm:$0xff]
    %v1880 = vld [vmem:[#allocation6 + $0x218] sm:$0xff]
    %v1881 = vld [vmem:[#allocation6 + $0x220] sm:$0xff]
    %v1882 = vld [vmem:[#allocation6 + $0x228] sm:$0xff]
    %v1883 = vld [vmem:[#allocation6 + $0x230] sm:$0xff]
    %v1884 = vld [vmem:[#allocation6 + $0x238] sm:$0xff]
    %v1885 = vld [vmem:[#allocation6 + $0x240] sm:$0xff]
    %v1886 = vld [vmem:[#allocation6 + $0x248] sm:$0xff]
    %v1887 = vld [vmem:[#allocation6 + $0x250] sm:$0xff]
    %v1888 = vld [vmem:[#allocation6 + $0x258] sm:$0xff]
    %v1889 = vld [vmem:[#allocation6 + $0x260] sm:$0xff]
    %v1890 = vld [vmem:[#allocation6 + $0x268] sm:$0xff]
    %v1891 = vld [vmem:[#allocation6 + $0x270] sm:$0xff]
    %v1892 = vld [vmem:[#allocation6 + $0x278] sm:$0xff]
    %v1893 = vld [vmem:[#allocation6 + $0x280] sm:$0xff]
    %v1894 = vld [vmem:[#allocation6 + $0x288] sm:$0xff]
    %v1895 = vld [vmem:[#allocation6 + $0x290] sm:$0xff]
    %v1896 = vld [vmem:[#allocation6 + $0x298] sm:$0xff]
    %v1897 = vld [vmem:[#allocation6 + $0x2a0] sm:$0xff]
    %v1898 = vld [vmem:[#allocation6 + $0x2a8] sm:$0xff]
    %v1899 = vld [vmem:[#allocation6 + $0x2b0] sm:$0xff]
    %v1900 = vld [vmem:[#allocation6 + $0x2b8] sm:$0xff]
    %v1901 = vld [vmem:[#allocation6 + $0x2c0] sm:$0xff]
    %v1902 = vld [vmem:[#allocation6 + $0x2c8] sm:$0xff]
    %v1903 = vld [vmem:[#allocation6 + $0x2d0] sm:$0xff]
    %v1904 = vld [vmem:[#allocation6 + $0x2d8] sm:$0xff]
    %v1905 = vld [vmem:[#allocation6 + $0x2e0] sm:$0xff]
    %v1906 = vld [vmem:[#allocation6 + $0x2e8] sm:$0xff]
    %v1907 = vld [vmem:[#allocation6 + $0x2f0] sm:$0xff]
    %v1908 = vld [vmem:[#allocation6 + $0x2f8] sm:$0xff]
    %v1909 = vld [vmem:[#allocation6 + $0x300] sm:$0xff]
    %v1910 = vld [vmem:[#allocation6 + $0x308] sm:$0xff]
    %v1911 = vld [vmem:[#allocation6 + $0x310] sm:$0xff]
    %v1912 = vld [vmem:[#allocation6 + $0x318] sm:$0xff]
    %v1913 = vld [vmem:[#allocation6 + $0x320] sm:$0xff]
    %v1914 = vld [vmem:[#allocation6 + $0x328] sm:$0xff]
    %v1915 = vld [vmem:[#allocation6 + $0x330] sm:$0xff]
    %v1916 = vld [vmem:[#allocation6 + $0x338] sm:$0xff]
    %v1917 = vld [vmem:[#allocation6 + $0x340] sm:$0xff]
    %v1918 = vld [vmem:[#allocation6 + $0x348] sm:$0xff]
    %v1919 = vld [vmem:[#allocation6 + $0x350] sm:$0xff]
    %v1920 = vld [vmem:[#allocation6 + $0x358] sm:$0xff]
    %v1921 = vld [vmem:[#allocation6 + $0x360] sm:$0xff]
    %v1922 = vld [vmem:[#allocation6 + $0x368] sm:$0xff]
    %v1923 = vld [vmem:[#allocation6 + $0x370] sm:$0xff]
    %v1924 = vld [vmem:[#allocation6 + $0x378] sm:$0xff]
    %v1925 = vld [vmem:[#allocation6 + $0x380] sm:$0xff]
    %v1926 = vld [vmem:[#allocation6 + $0x388] sm:$0xff]
    %v1927 = vld [vmem:[#allocation6 + $0x390] sm:$0xff]
    %v1928 = vld [vmem:[#allocation6 + $0x398] sm:$0xff]
    %v1929 = vld [vmem:[#allocation6 + $0x3a0] sm:$0xff]
    %v1930 = vld [vmem:[#allocation6 + $0x3a8] sm:$0xff]
    %v1931 = vld [vmem:[#allocation6 + $0x3b0] sm:$0xff]
    %v1932 = vld [vmem:[#allocation6 + $0x3b8] sm:$0xff]
    %v1933 = vld [vmem:[#allocation6 + $0x3c0] sm:$0xff]
    %v1934 = vld [vmem:[#allocation6 + $0x3c8] sm:$0xff]
    %v1935 = vld [vmem:[#allocation6 + $0x3d0] sm:$0xff]
    %v1936 = vld [vmem:[#allocation6 + $0x3d8] sm:$0xff]
    %v1937 = vld [vmem:[#allocation6 + $0x3e0] sm:$0xff]
    %v1938 = vld [vmem:[#allocation6 + $0x3e8] sm:$0xff]
    %v1939 = vld [vmem:[#allocation6 + $0x3f0] sm:$0xff]
    %v1940 = vld [vmem:[#allocation6 + $0x3f8] sm:$0xff]
    %1941 = vmatprep.subr.bf16.mxu0 %v1814
    %1942 = vmatpush1.bf16.msra.mxu0 %v1813
    %1943 = vmatprep.subr.bf16.mxu0 %v1822
    %1944 = vmatpush1.bf16.msra.mxu0 %v1821
    %1945 = vmatprep.subr.bf16.mxu0 %v1830
    %1946 = vmatpush1.bf16.msra.mxu0 %v1829
    %1947 = vmatprep.subr.bf16.mxu0 %v1838
    %1948 = vmatpush1.bf16.msra.mxu0 %v1837
    %1949 = vmatprep.subr.bf16.mxu0 %v1846
    %1950 = vmatpush1.bf16.msra.mxu0 %v1845
    %1951 = vmatprep.subr.bf16.mxu0 %v1854
    %1952 = vmatpush1.bf16.msra.mxu0 %v1853
    %1953 = vmatprep.subr.bf16.mxu0 %v1862
    %1954 = vmatpush1.bf16.msra.mxu0 %v1861
    %1955 = vmatprep.subr.bf16.mxu0 %v1870
    %1956 = vmatpush1.bf16.msra.mxu0 %v1869
    %1957 = vmatprep.subr.bf16.mxu0 %v1878
    %1958 = vmatpush1.bf16.msra.mxu0 %v1877
    %1959 = vmatprep.subr.bf16.mxu0 %v1886
    %1960 = vmatpush1.bf16.msra.mxu0 %v1885
    %1961 = vmatprep.subr.bf16.mxu0 %v1894
    %1962 = vmatpush1.bf16.msra.mxu0 %v1893
    %1963 = vmatprep.subr.bf16.mxu0 %v1902
    %1964 = vmatpush1.bf16.msra.mxu0 %v1901
    %1965 = vmatprep.subr.bf16.mxu0 %v1910
    %1966 = vmatpush1.bf16.msra.mxu0 %v1909
    %1967 = vmatprep.subr.bf16.mxu0 %v1918
    %1968 = vmatpush1.bf16.msra.mxu0 %v1917
    %1969 = vmatprep.subr.bf16.mxu0 %v1926
    %1970 = vmatpush1.bf16.msra.mxu0 %v1925
    %1971 = vmatprep.subr.bf16.mxu0 %v1934
    %1972 = vmatpush1.bf16.msra.mxu0 %v1933
    %1973 = vmatprep.mubr.bf16.mxu0 0
    %1974 = vmatmul.mubr.bf16.gmra.mrb[0].mxu0 0
    %v1975 = vpop.f32.mrb[0].mxu0
    %v1976 = vadd.f32 0.0, %v1975
    %v1977 = vpop.f32.mrb[0].mxu0
    %v1978 = vadd.f32 0.0, %v1977
    %v1979 = vpop.f32.mrb[0].mxu0
    %v1980 = vpop.f32.mrb[0].mxu0
    %1981 = vdwg.mxu0
    %1982 = vmatprep.subr.bf16.mxu0 %v1816
    %1983 = vmatpush1.bf16.msra.mxu0 %v1815
    %1984 = vmatprep.subr.bf16.mxu0 %v1824
    %1985 = vmatpush1.bf16.msra.mxu0 %v1823
    %1986 = vmatprep.subr.bf16.mxu0 %v1832
    %1987 = vmatpush1.bf16.msra.mxu0 %v1831
    %1988 = vmatprep.subr.bf16.mxu0 %v1840
    %1989 = vmatpush1.bf16.msra.mxu0 %v1839
    %1990 = vmatprep.subr.bf16.mxu0 %v1848
    %1991 = vmatpush1.bf16.msra.mxu0 %v1847
    %1992 = vmatprep.subr.bf16.mxu0 %v1856
    %1993 = vmatpush1.bf16.msra.mxu0 %v1855
    %1994 = vmatprep.subr.bf16.mxu0 %v1864
    %1995 = vmatpush1.bf16.msra.mxu0 %v1863
    %1996 = vmatprep.subr.bf16.mxu0 %v1872
    %1997 = vmatpush1.bf16.msra.mxu0 %v1871
    %1998 = vmatprep.subr.bf16.mxu0 %v1880
    %1999 = vmatpush1.bf16.msra.mxu0 %v1879
    %2000 = vmatprep.subr.bf16.mxu0 %v1888
    %2001 = vmatpush1.bf16.msra.mxu0 %v1887
    %2002 = vmatprep.subr.bf16.mxu0 %v1896
    %2003 = vmatpush1.bf16.msra.mxu0 %v1895
    %2004 = vmatprep.subr.bf16.mxu0 %v1904
    %2005 = vmatpush1.bf16.msra.mxu0 %v1903
    %2006 = vmatprep.subr.bf16.mxu0 %v1912
    %2007 = vmatpush1.bf16.msra.mxu0 %v1911
    %2008 = vmatprep.subr.bf16.mxu0 %v1920
    %2009 = vmatpush1.bf16.msra.mxu0 %v1919
    %2010 = vmatprep.subr.bf16.mxu0 %v1928
    %2011 = vmatpush1.bf16.msra.mxu0 %v1927
    %2012 = vmatprep.subr.bf16.mxu0 %v1936
    %2013 = vmatpush1.bf16.msra.mxu0 %v1935
    %2014 = vmatprep.mubr.bf16.mxu0 0
    %2015 = vmatmul.mubr.bf16.gmra.mrb[0].mxu0 0
    %v2016 = vpop.f32.mrb[0].mxu0
    %v2017 = vadd.f32 0.0, %v2016
    %v2018 = vpop.f32.mrb[0].mxu0
    %v2019 = vadd.f32 0.0, %v2018
    %v2020 = vpop.f32.mrb[0].mxu0
    %v2021 = vpop.f32.mrb[0].mxu0
    %2022 = vdwg.mxu0
    %2023 = vmatprep.subr.bf16.mxu0 %v1818
    %2024 = vmatpush1.bf16.msra.mxu0 %v1817
    %2025 = vmatprep.subr.bf16.mxu0 %v1826
    %2026 = vmatpush1.bf16.msra.mxu0 %v1825
    %2027 = vmatprep.subr.bf16.mxu0 %v1834
    %2028 = vmatpush1.bf16.msra.mxu0 %v1833
    %2029 = vmatprep.subr.bf16.mxu0 %v1842
    %2030 = vmatpush1.bf16.msra.mxu0 %v1841
    %2031 = vmatprep.subr.bf16.mxu0 %v1850
    %2032 = vmatpush1.bf16.msra.mxu0 %v1849
    %2033 = vmatprep.subr.bf16.mxu0 %v1858
    %2034 = vmatpush1.bf16.msra.mxu0 %v1857
    %2035 = vmatprep.subr.bf16.mxu0 %v1866
    %2036 = vmatpush1.bf16.msra.mxu0 %v1865
    %2037 = vmatprep.subr.bf16.mxu0 %v1874
    %2038 = vmatpush1.bf16.msra.mxu0 %v1873
    %2039 = vmatprep.subr.bf16.mxu0 %v1882
    %2040 = vmatpush1.bf16.msra.mxu0 %v1881
    %2041 = vmatprep.subr.bf16.mxu0 %v1890
    %2042 = vmatpush1.bf16.msra.mxu0 %v1889
    %2043 = vmatprep.subr.bf16.mxu0 %v1898
    %2044 = vmatpush1.bf16.msra.mxu0 %v1897
    %2045 = vmatprep.subr.bf16.mxu0 %v1906
    %2046 = vmatpush1.bf16.msra.mxu0 %v1905
    %2047 = vmatprep.subr.bf16.mxu0 %v1914
    %2048 = vmatpush1.bf16.msra.mxu0 %v1913
    %2049 = vmatprep.subr.bf16.mxu0 %v1922
    %2050 = vmatpush1.bf16.msra.mxu0 %v1921
    %2051 = vmatprep.subr.bf16.mxu0 %v1930
    %2052 = vmatpush1.bf16.msra.mxu0 %v1929
    %2053 = vmatprep.subr.bf16.mxu0 %v1938
    %2054 = vmatpush1.bf16.msra.mxu0 %v1937
    %2055 = vmatprep.mubr.bf16.mxu0 0
    %2056 = vmatmul.mubr.bf16.gmra.mrb[0].mxu0 0
    %v2057 = vpop.f32.mrb[0].mxu0
    %v2058 = vadd.f32 0.0, %v2057
    %v2059 = vpop.f32.mrb[0].mxu0
    %v2060 = vadd.f32 0.0, %v2059
    %v2061 = vpop.f32.mrb[0].mxu0
    %v2062 = vpop.f32.mrb[0].mxu0
    %2063 = vdwg.mxu0
    %2064 = vmatprep.subr.bf16.mxu0 %v1820
    %2065 = vmatpush1.bf16.msra.mxu0 %v1819
    %2066 = vmatprep.subr.bf16.mxu0 %v1828
    %2067 = vmatpush1.bf16.msra.mxu0 %v1827
    %2068 = vmatprep.subr.bf16.mxu0 %v1836
    %2069 = vmatpush1.bf16.msra.mxu0 %v1835
    %2070 = vmatprep.subr.bf16.mxu0 %v1844
    %2071 = vmatpush1.bf16.msra.mxu0 %v1843
    %2072 = vmatprep.subr.bf16.mxu0 %v1852
    %2073 = vmatpush1.bf16.msra.mxu0 %v1851
    %2074 = vmatprep.subr.bf16.mxu0 %v1860
    %2075 = vmatpush1.bf16.msra.mxu0 %v1859
    %2076 = vmatprep.subr.bf16.mxu0 %v1868
    %2077 = vmatpush1.bf16.msra.mxu0 %v1867
    %2078 = vmatprep.subr.bf16.mxu0 %v1876
    %2079 = vmatpush1.bf16.msra.mxu0 %v1875
    %2080 = vmatprep.subr.bf16.mxu0 %v1884
    %2081 = vmatpush1.bf16.msra.mxu0 %v1883
    %2082 = vmatprep.subr.bf16.mxu0 %v1892
    %2083 = vmatpush1.bf16.msra.mxu0 %v1891
    %2084 = vmatprep.subr.bf16.mxu0 %v1900
    %2085 = vmatpush1.bf16.msra.mxu0 %v1899
    %2086 = vmatprep.subr.bf16.mxu0 %v1908
    %2087 = vmatpush1.bf16.msra.mxu0 %v1907
    %2088 = vmatprep.subr.bf16.mxu0 %v1916
    %2089 = vmatpush1.bf16.msra.mxu0 %v1915
    %2090 = vmatprep.subr.bf16.mxu0 %v1924
    %2091 = vmatpush1.bf16.msra.mxu0 %v1923
    %2092 = vmatprep.subr.bf16.mxu0 %v1932
    %2093 = vmatpush1.bf16.msra.mxu0 %v1931
    %2094 = vmatprep.subr.bf16.mxu0 %v1940
    %2095 = vmatpush1.bf16.msra.mxu0 %v1939
    %2096 = vmatprep.mubr.bf16.mxu0 0
    %2097 = vmatmul.mubr.bf16.gmra.mrb[0].mxu0 0
    %v2098 = vpop.f32.mrb[0].mxu0
    %v2099 = vadd.f32 0.0, %v2098
    %v2100 = vpop.f32.mrb[0].mxu0
    %v2101 = vadd.f32 0.0, %v2100
    %v2102 = vpop.f32.mrb[0].mxu0
    %v2103 = vpop.f32.mrb[0].mxu0
    %2104 = vdwg.mxu0
    %v2105 = vadd.f32 %v1805, %v1976
    %v2106 = vadd.f32 %v1806, %v1978
    %v2107 = vadd.f32 %v1807, %v2017
    %v2108 = vadd.f32 %v1808, %v2019
    %v2109 = vadd.f32 %v1809, %v2058
    %v2110 = vadd.f32 %v1810, %v2060
    %v2111 = vadd.f32 %v1811, %v2099
    %v2112 = vadd.f32 %v1812, %v2101
    %v2113 = vxor.u32 %v1797, 2147483648
    %v2114 = vxor.u32 %v1798, 2147483648
    %v2115 = vmul.f32 %v2113, 1.442695
    %v2116 = vpow.pop %v2115
    %v2117 = vmul.f32 %v2114, 1.442695
    %v2118 = vpow.pop %v2117
    %v2119 = vadd.f32 %v2116, 1.0
    %v2120 = vadd.f32 %v2118, 1.0
    %v2121 = vrcp.pop %v2119
    %v2122 = vmul.f32 1.0, %v2121
    %v2123 = vrcp.pop %v2120
    %v2124 = vmul.f32 1.0, %v2123
    %v2125 = vxor.u32 %v1799, 2147483648
    %v2126 = vxor.u32 %v1800, 2147483648
    %v2127 = vmul.f32 %v2125, 1.442695
    %v2128 = vpow.pop %v2127
    %v2129 = vmul.f32 %v2126, 1.442695
    %v2130 = vpow.pop %v2129
    %v2131 = vadd.f32 %v2128, 1.0
    %v2132 = vadd.f32 %v2130, 1.0
    %v2133 = vrcp.pop %v2131
    %v2134 = vmul.f32 1.0, %v2133
    %v2135 = vrcp.pop %v2132
    %v2136 = vmul.f32 1.0, %v2135
    %v2137 = vtanh.pop %v1801
    %v2138 = vtanh.pop %v1802
    %v2139 = vxor.u32 %v1803, 2147483648
    %v2140 = vxor.u32 %v1804, 2147483648
    %v2141 = vmul.f32 %v2139, 1.442695
    %v2142 = vpow.pop %v2141
    %v2143 = vmul.f32 %v2140, 1.442695
    %v2144 = vpow.pop %v2143
    %v2145 = vadd.f32 %v2142, 1.0
    %v2146 = vadd.f32 %v2144, 1.0
    %v2147 = vrcp.pop %v2145
    %v2148 = vmul.f32 1.0, %v2147
    %v2149 = vrcp.pop %v2146
    %v2150 = vmul.f32 1.0, %v2149
    %v2151 = vmul.f32 %v2134, 0.0
    %v2152 = vmul.f32 %v2136, 0.0
    %v2153 = vmul.f32 %v2122, %v2137
    %v2154 = vmul.f32 %v2124, %v2138
    %v2155 = vadd.f32 %v2151, %v2153
    %v2156 = vadd.f32 %v2152, %v2154
    %v2157 = vtanh.pop %v2155
    %v2158 = vtanh.pop %v2156
    %v2159 = vmul.f32 %v2148, %v2157
    %v2160 = vmul.f32 %v2150, %v2158
    %v2161 = vxor.u32 %v2105, 2147483648
    %v2162 = vxor.u32 %v2106, 2147483648
    %v2163 = vmul.f32 %v2161, 1.442695
    %v2164 = vpow.pop %v2163
    %v2165 = vmul.f32 %v2162, 1.442695
    %v2166 = vpow.pop %v2165
    %v2167 = vadd.f32 %v2164, 1.0
    %v2168 = vadd.f32 %v2166, 1.0
    %v2169 = vrcp.pop %v2167
    %v2170 = vmul.f32 1.0, %v2169
    %v2171 = vrcp.pop %v2168
    %v2172 = vmul.f32 1.0, %v2171
    %v2173 = vxor.u32 %v2107, 2147483648
    %v2174 = vxor.u32 %v2108, 2147483648
    %v2175 = vmul.f32 %v2173, 1.442695
    %v2176 = vpow.pop %v2175
    %v2177 = vmul.f32 %v2174, 1.442695
    %v2178 = vpow.pop %v2177
    %v2179 = vadd.f32 %v2176, 1.0
    %v2180 = vadd.f32 %v2178, 1.0
    %v2181 = vrcp.pop %v2179
    %v2182 = vmul.f32 1.0, %v2181
    %v2183 = vrcp.pop %v2180
    %v2184 = vmul.f32 1.0, %v2183
    %v2185 = vtanh.pop %v2109
    %v2186 = vtanh.pop %v2110
    %v2187 = vxor.u32 %v2111, 2147483648
    %v2188 = vxor.u32 %v2112, 2147483648
    %v2189 = vmul.f32 %v2187, 1.442695
    %v2190 = vpow.pop %v2189
    %v2191 = vmul.f32 %v2188, 1.442695
    %v2192 = vpow.pop %v2191
    %v2193 = vadd.f32 %v2190, 1.0
    %v2194 = vadd.f32 %v2192, 1.0
    %v2195 = vrcp.pop %v2193
    %v2196 = vmul.f32 1.0, %v2195
    %v2197 = vrcp.pop %v2194
    %v2198 = vmul.f32 1.0, %v2197
    %v2199 = vmul.f32 %v2182, 0.0
    %v2200 = vmul.f32 %v2184, 0.0
    %v2201 = vmul.f32 %v2170, %v2185
    %v2202 = vmul.f32 %v2172, %v2186
    %v2203 = vadd.f32 %v2199, %v2201
    %v2204 = vadd.f32 %v2200, %v2202
    %v2205 = vtanh.pop %v2203
    %v2206 = vtanh.pop %v2204
    %v2207 = vmul.f32 %v2196, %v2205
    %v2208 = vmul.f32 %v2198, %v2206
    %2209 = vst [vmem:[#allocation3] sm:$0xff] %v2159
    %2210 = vst [vmem:[#allocation3 + $0x8] sm:$0xff] %v2160
    %2211 = vst [vmem:[#allocation3 + $0xf0] sm:$0xff] %v2207
    %2212 = vst [vmem:[#allocation3 + $0xf8] sm:$0xff] %v2208
    %v2213 = vld [vmem:[#allocation2 + $0x80] sm:$0xff]
    %v2214 = vld [vmem:[#allocation2 + $0x88] sm:$0xff]
    %v2215 = vld [vmem:[#allocation2 + $0x90] sm:$0xff]
    %v2216 = vld [vmem:[#allocation2 + $0x98] sm:$0xff]
    %v2217 = vld [vmem:[#allocation2 + $0xa0] sm:$0xff]
    %v2218 = vld [vmem:[#allocation2 + $0xa8] sm:$0xff]
    %v2219 = vld [vmem:[#allocation2 + $0xb0] sm:$0xff]
    %v2220 = vld [vmem:[#allocation2 + $0xb8] sm:$0xff]
    %v2221 = vpack.c.bf16 %v2159, %v2159
    %v2222 = vpack.c.bf16 %v2160, %v2160
    %v2223 = vld [vmem:[#allocation5] sm:$0xff]
    %v2224 = vld [vmem:[#allocation5 + $0x8] sm:$0xff]
    %v2225 = vld [vmem:[#allocation5 + $0x10] sm:$0xff]
    %v2226 = vld [vmem:[#allocation5 + $0x18] sm:$0xff]
    %v2227 = vld [vmem:[#allocation5 + $0x20] sm:$0xff]
    %v2228 = vld [vmem:[#allocation5 + $0x28] sm:$0xff]
    %v2229 = vld [vmem:[#allocation5 + $0x30] sm:$0xff]
    %v2230 = vld [vmem:[#allocation5 + $0x38] sm:$0xff]
    %v2231 = vld [vmem:[#allocation5 + $0x40] sm:$0xff]
    %v2232 = vld [vmem:[#allocation5 + $0x48] sm:$0xff]
    %v2233 = vld [vmem:[#allocation5 + $0x50] sm:$0xff]
    %v2234 = vld [vmem:[#allocation5 + $0x58] sm:$0xff]
    %v2235 = vld [vmem:[#allocation5 + $0x60] sm:$0xff]
    %v2236 = vld [vmem:[#allocation5 + $0x68] sm:$0xff]
    %v2237 = vld [vmem:[#allocation5 + $0x70] sm:$0xff]
    %v2238 = vld [vmem:[#allocation5 + $0x78] sm:$0xff]
    %v2239 = vld [vmem:[#allocation5 + $0x80] sm:$0xff]
    %v2240 = vld [vmem:[#allocation5 + $0x88] sm:$0xff]
    %v2241 = vld [vmem:[#allocation5 + $0x90] sm:$0xff]
    %v2242 = vld [vmem:[#allocation5 + $0x98] sm:$0xff]
    %v2243 = vld [vmem:[#allocation5 + $0xa0] sm:$0xff]
    %v2244 = vld [vmem:[#allocation5 + $0xa8] sm:$0xff]
    %v2245 = vld [vmem:[#allocation5 + $0xb0] sm:$0xff]
    %v2246 = vld [vmem:[#allocation5 + $0xb8] sm:$0xff]
    %v2247 = vld [vmem:[#allocation5 + $0xc0] sm:$0xff]
    %v2248 = vld [vmem:[#allocation5 + $0xc8] sm:$0xff]
    %v2249 = vld [vmem:[#allocation5 + $0xd0] sm:$0xff]
    %v2250 = vld [vmem:[#allocation5 + $0xd8] sm:$0xff]
    %v2251 = vld [vmem:[#allocation5 + $0xe0] sm:$0xff]
    %v2252 = vld [vmem:[#allocation5 + $0xe8] sm:$0xff]
    %v2253 = vld [vmem:[#allocation5 + $0xf0] sm:$0xff]
    %v2254 = vld [vmem:[#allocation5 + $0xf8] sm:$0xff]
    %v2255 = vld [vmem:[#allocation5 + $0x100] sm:$0xff]
    %v2256 = vld [vmem:[#allocation5 + $0x108] sm:$0xff]
    %v2257 = vld [vmem:[#allocation5 + $0x110] sm:$0xff]
    %v2258 = vld [vmem:[#allocation5 + $0x118] sm:$0xff]
    %v2259 = vld [vmem:[#allocation5 + $0x120] sm:$0xff]
    %v2260 = vld [vmem:[#allocation5 + $0x128] sm:$0xff]
    %v2261 = vld [vmem:[#allocation5 + $0x130] sm:$0xff]
    %v2262 = vld [vmem:[#allocation5 + $0x138] sm:$0xff]
    %v2263 = vld [vmem:[#allocation5 + $0x140] sm:$0xff]
    %v2264 = vld [vmem:[#allocation5 + $0x148] sm:$0xff]
    %v2265 = vld [vmem:[#allocation5 + $0x150] sm:$0xff]
    %v2266 = vld [vmem:[#allocation5 + $0x158] sm:$0xff]
    %v2267 = vld [vmem:[#allocation5 + $0x160] sm:$0xff]
    %v2268 = vld [vmem:[#allocation5 + $0x168] sm:$0xff]
    %v2269 = vld [vmem:[#allocation5 + $0x170] sm:$0xff]
    %v2270 = vld [vmem:[#allocation5 + $0x178] sm:$0xff]
    %v2271 = vld [vmem:[#allocation5 + $0x180] sm:$0xff]
    %v2272 = vld [vmem:[#allocation5 + $0x188] sm:$0xff]
    %v2273 = vld [vmem:[#allocation5 + $0x190] sm:$0xff]
    %v2274 = vld [vmem:[#allocation5 + $0x198] sm:$0xff]
    %v2275 = vld [vmem:[#allocation5 + $0x1a0] sm:$0xff]
    %v2276 = vld [vmem:[#allocation5 + $0x1a8] sm:$0xff]
    %v2277 = vld [vmem:[#allocation5 + $0x1b0] sm:$0xff]
    %v2278 = vld [vmem:[#allocation5 + $0x1b8] sm:$0xff]
    %v2279 = vld [vmem:[#allocation5 + $0x1c0] sm:$0xff]
    %v2280 = vld [vmem:[#allocation5 + $0x1c8] sm:$0xff]
    %v2281 = vld [vmem:[#allocation5 + $0x1d0] sm:$0xff]
    %v2282 = vld [vmem:[#allocation5 + $0x1d8] sm:$0xff]
    %v2283 = vld [vmem:[#allocation5 + $0x1e0] sm:$0xff]
    %v2284 = vld [vmem:[#allocation5 + $0x1e8] sm:$0xff]
    %v2285 = vld [vmem:[#allocation5 + $0x1f0] sm:$0xff]
    %v2286 = vld [vmem:[#allocation5 + $0x1f8] sm:$0xff]
    %v2287 = vld [vmem:[#allocation5 + $0x200] sm:$0xff]
    %v2288 = vld [vmem:[#allocation5 + $0x208] sm:$0xff]
    %v2289 = vld [vmem:[#allocation5 + $0x210] sm:$0xff]
    %v2290 = vld [vmem:[#allocation5 + $0x218] sm:$0xff]
    %v2291 = vld [vmem:[#allocation5 + $0x220] sm:$0xff]
    %v2292 = vld [vmem:[#allocation5 + $0x228] sm:$0xff]
    %v2293 = vld [vmem:[#allocation5 + $0x230] sm:$0xff]
    %v2294 = vld [vmem:[#allocation5 + $0x238] sm:$0xff]
    %v2295 = vld [vmem:[#allocation5 + $0x240] sm:$0xff]
    %v2296 = vld [vmem:[#allocation5 + $0x248] sm:$0xff]
    %v2297 = vld [vmem:[#allocation5 + $0x250] sm:$0xff]
    %v2298 = vld [vmem:[#allocation5 + $0x258] sm:$0xff]
    %v2299 = vld [vmem:[#allocation5 + $0x260] sm:$0xff]
    %v2300 = vld [vmem:[#allocation5 + $0x268] sm:$0xff]
    %v2301 = vld [vmem:[#allocation5 + $0x270] sm:$0xff]
    %v2302 = vld [vmem:[#allocation5 + $0x278] sm:$0xff]
    %v2303 = vld [vmem:[#allocation5 + $0x280] sm:$0xff]
    %v2304 = vld [vmem:[#allocation5 + $0x288] sm:$0xff]
    %v2305 = vld [vmem:[#allocation5 + $0x290] sm:$0xff]
    %v2306 = vld [vmem:[#allocation5 + $0x298] sm:$0xff]
    %v2307 = vld [vmem:[#allocation5 + $0x2a0] sm:$0xff]
    %v2308 = vld [vmem:[#allocation5 + $0x2a8] sm:$0xff]
    %v2309 = vld [vmem:[#allocation5 + $0x2b0] sm:$0xff]
    %v2310 = vld [vmem:[#allocation5 + $0x2b8] sm:$0xff]
    %v2311 = vld [vmem:[#allocation5 + $0x2c0] sm:$0xff]
    %v2312 = vld [vmem:[#allocation5 + $0x2c8] sm:$0xff]
    %v2313 = vld [vmem:[#allocation5 + $0x2d0] sm:$0xff]
    %v2314 = vld [vmem:[#allocation5 + $0x2d8] sm:$0xff]
    %v2315 = vld [vmem:[#allocation5 + $0x2e0] sm:$0xff]
    %v2316 = vld [vmem:[#allocation5 + $0x2e8] sm:$0xff]
    %v2317 = vld [vmem:[#allocation5 + $0x2f0] sm:$0xff]
    %v2318 = vld [vmem:[#allocation5 + $0x2f8] sm:$0xff]
    %v2319 = vld [vmem:[#allocation5 + $0x300] sm:$0xff]
    %v2320 = vld [vmem:[#allocation5 + $0x308] sm:$0xff]
    %v2321 = vld [vmem:[#allocation5 + $0x310] sm:$0xff]
    %v2322 = vld [vmem:[#allocation5 + $0x318] sm:$0xff]
    %v2323 = vld [vmem:[#allocation5 + $0x320] sm:$0xff]
    %v2324 = vld [vmem:[#allocation5 + $0x328] sm:$0xff]
    %v2325 = vld [vmem:[#allocation5 + $0x330] sm:$0xff]
    %v2326 = vld [vmem:[#allocation5 + $0x338] sm:$0xff]
    %v2327 = vld [vmem:[#allocation5 + $0x340] sm:$0xff]
    %v2328 = vld [vmem:[#allocation5 + $0x348] sm:$0xff]
    %v2329 = vld [vmem:[#allocation5 + $0x350] sm:$0xff]
    %v2330 = vld [vmem:[#allocation5 + $0x358] sm:$0xff]
    %v2331 = vld [vmem:[#allocation5 + $0x360] sm:$0xff]
    %v2332 = vld [vmem:[#allocation5 + $0x368] sm:$0xff]
    %v2333 = vld [vmem:[#allocation5 + $0x370] sm:$0xff]
    %v2334 = vld [vmem:[#allocation5 + $0x378] sm:$0xff]
    %v2335 = vld [vmem:[#allocation5 + $0x380] sm:$0xff]
    %v2336 = vld [vmem:[#allocation5 + $0x388] sm:$0xff]
    %v2337 = vld [vmem:[#allocation5 + $0x390] sm:$0xff]
    %v2338 = vld [vmem:[#allocation5 + $0x398] sm:$0xff]
    %v2339 = vld [vmem:[#allocation5 + $0x3a0] sm:$0xff]
    %v2340 = vld [vmem:[#allocation5 + $0x3a8] sm:$0xff]
    %v2341 = vld [vmem:[#allocation5 + $0x3b0] sm:$0xff]
    %v2342 = vld [vmem:[#allocation5 + $0x3b8] sm:$0xff]
    %v2343 = vld [vmem:[#allocation5 + $0x3c0] sm:$0xff]
    %v2344 = vld [vmem:[#allocation5 + $0x3c8] sm:$0xff]
    %v2345 = vld [vmem:[#allocation5 + $0x3d0] sm:$0xff]
    %v2346 = vld [vmem:[#allocation5 + $0x3d8] sm:$0xff]
    %v2347 = vld [vmem:[#allocation5 + $0x3e0] sm:$0xff]
    %v2348 = vld [vmem:[#allocation5 + $0x3e8] sm:$0xff]
    %v2349 = vld [vmem:[#allocation5 + $0x3f0] sm:$0xff]
    %v2350 = vld [vmem:[#allocation5 + $0x3f8] sm:$0xff]
    %2351 = vmatprep.subr.bf16.mxu0 %v2224
    %2352 = vmatpush1.bf16.msra.mxu0 %v2223
    %2353 = vmatprep.subr.bf16.mxu0 %v2232
    %2354 = vmatpush1.bf16.msra.mxu0 %v2231
    %2355 = vmatprep.subr.bf16.mxu0 %v2240
    %2356 = vmatpush1.bf16.msra.mxu0 %v2239
    %2357 = vmatprep.subr.bf16.mxu0 %v2248
    %2358 = vmatpush1.bf16.msra.mxu0 %v2247
    %2359 = vmatprep.subr.bf16.mxu0 %v2256
    %2360 = vmatpush1.bf16.msra.mxu0 %v2255
    %2361 = vmatprep.subr.bf16.mxu0 %v2264
    %2362 = vmatpush1.bf16.msra.mxu0 %v2263
    %2363 = vmatprep.subr.bf16.mxu0 %v2272
    %2364 = vmatpush1.bf16.msra.mxu0 %v2271
    %2365 = vmatprep.subr.bf16.mxu0 %v2280
    %2366 = vmatpush1.bf16.msra.mxu0 %v2279
    %2367 = vmatprep.subr.bf16.mxu0 %v2288
    %2368 = vmatpush1.bf16.msra.mxu0 %v2287
    %2369 = vmatprep.subr.bf16.mxu0 %v2296
    %2370 = vmatpush1.bf16.msra.mxu0 %v2295
    %2371 = vmatprep.subr.bf16.mxu0 %v2304
    %2372 = vmatpush1.bf16.msra.mxu0 %v2303
    %2373 = vmatprep.subr.bf16.mxu0 %v2312
    %2374 = vmatpush1.bf16.msra.mxu0 %v2311
    %2375 = vmatprep.subr.bf16.mxu0 %v2320
    %2376 = vmatpush1.bf16.msra.mxu0 %v2319
    %2377 = vmatprep.subr.bf16.mxu0 %v2328
    %2378 = vmatpush1.bf16.msra.mxu0 %v2327
    %2379 = vmatprep.subr.bf16.mxu0 %v2336
    %2380 = vmatpush1.bf16.msra.mxu0 %v2335
    %2381 = vmatprep.subr.bf16.mxu0 %v2344
    %2382 = vmatpush1.bf16.msra.mxu0 %v2343
    %2383 = vmatprep.mubr.bf16.mxu0 %v2222
    %2384 = vmatmul.mubr.bf16.gmra.mrb[0].mxu0 %v2221
    %v2385 = vpop.f32.mrb[0].mxu0
    %v2386 = vadd.f32 0.0, %v2385
    %v2387 = vpop.f32.mrb[0].mxu0
    %v2388 = vadd.f32 0.0, %v2387
    %v2389 = vpop.f32.mrb[0].mxu0
    %v2390 = vpop.f32.mrb[0].mxu0
    %2391 = vdwg.mxu0
    %2392 = vmatprep.subr.bf16.mxu0 %v2226
    %2393 = vmatpush1.bf16.msra.mxu0 %v2225
    %2394 = vmatprep.subr.bf16.mxu0 %v2234
    %2395 = vmatpush1.bf16.msra.mxu0 %v2233
    %2396 = vmatprep.subr.bf16.mxu0 %v2242
    %2397 = vmatpush1.bf16.msra.mxu0 %v2241
    %2398 = vmatprep.subr.bf16.mxu0 %v2250
    %2399 = vmatpush1.bf16.msra.mxu0 %v2249
    %2400 = vmatprep.subr.bf16.mxu0 %v2258
    %2401 = vmatpush1.bf16.msra.mxu0 %v2257
    %2402 = vmatprep.subr.bf16.mxu0 %v2266
    %2403 = vmatpush1.bf16.msra.mxu0 %v2265
    %2404 = vmatprep.subr.bf16.mxu0 %v2274
    %2405 = vmatpush1.bf16.msra.mxu0 %v2273
    %2406 = vmatprep.subr.bf16.mxu0 %v2282
    %2407 = vmatpush1.bf16.msra.mxu0 %v2281
    %2408 = vmatprep.subr.bf16.mxu0 %v2290
    %2409 = vmatpush1.bf16.msra.mxu0 %v2289
    %2410 = vmatprep.subr.bf16.mxu0 %v2298
    %2411 = vmatpush1.bf16.msra.mxu0 %v2297
    %2412 = vmatprep.subr.bf16.mxu0 %v2306
    %2413 = vmatpush1.bf16.msra.mxu0 %v2305
    %2414 = vmatprep.subr.bf16.mxu0 %v2314
    %2415 = vmatpush1.bf16.msra.mxu0 %v2313
    %2416 = vmatprep.subr.bf16.mxu0 %v2322
    %2417 = vmatpush1.bf16.msra.mxu0 %v2321
    %2418 = vmatprep.subr.bf16.mxu0 %v2330
    %2419 = vmatpush1.bf16.msra.mxu0 %v2329
    %2420 = vmatprep.subr.bf16.mxu0 %v2338
    %2421 = vmatpush1.bf16.msra.mxu0 %v2337
    %2422 = vmatprep.subr.bf16.mxu0 %v2346
    %2423 = vmatpush1.bf16.msra.mxu0 %v2345
    %2424 = vmatprep.mubr.bf16.mxu0 %v2222
    %2425 = vmatmul.mubr.bf16.gmra.mrb[0].mxu0 %v2221
    %v2426 = vpop.f32.mrb[0].mxu0
    %v2427 = vadd.f32 0.0, %v2426
    %v2428 = vpop.f32.mrb[0].mxu0
    %v2429 = vadd.f32 0.0, %v2428
    %v2430 = vpop.f32.mrb[0].mxu0
    %v2431 = vpop.f32.mrb[0].mxu0
    %2432 = vdwg.mxu0
    %2433 = vmatprep.subr.bf16.mxu0 %v2228
    %2434 = vmatpush1.bf16.msra.mxu0 %v2227
    %2435 = vmatprep.subr.bf16.mxu0 %v2236
    %2436 = vmatpush1.bf16.msra.mxu0 %v2235
    %2437 = vmatprep.subr.bf16.mxu0 %v2244
    %2438 = vmatpush1.bf16.msra.mxu0 %v2243
    %2439 = vmatprep.subr.bf16.mxu0 %v2252
    %2440 = vmatpush1.bf16.msra.mxu0 %v2251
    %2441 = vmatprep.subr.bf16.mxu0 %v2260
    %2442 = vmatpush1.bf16.msra.mxu0 %v2259
    %2443 = vmatprep.subr.bf16.mxu0 %v2268
    %2444 = vmatpush1.bf16.msra.mxu0 %v2267
    %2445 = vmatprep.subr.bf16.mxu0 %v2276
    %2446 = vmatpush1.bf16.msra.mxu0 %v2275
    %2447 = vmatprep.subr.bf16.mxu0 %v2284
    %2448 = vmatpush1.bf16.msra.mxu0 %v2283
    %2449 = vmatprep.subr.bf16.mxu0 %v2292
    %2450 = vmatpush1.bf16.msra.mxu0 %v2291
    %2451 = vmatprep.subr.bf16.mxu0 %v2300
    %2452 = vmatpush1.bf16.msra.mxu0 %v2299
    %2453 = vmatprep.subr.bf16.mxu0 %v2308
    %2454 = vmatpush1.bf16.msra.mxu0 %v2307
    %2455 = vmatprep.subr.bf16.mxu0 %v2316
    %2456 = vmatpush1.bf16.msra.mxu0 %v2315
    %2457 = vmatprep.subr.bf16.mxu0 %v2324
    %2458 = vmatpush1.bf16.msra.mxu0 %v2323
    %2459 = vmatprep.subr.bf16.mxu0 %v2332
    %2460 = vmatpush1.bf16.msra.mxu0 %v2331
    %2461 = vmatprep.subr.bf16.mxu0 %v2340
    %2462 = vmatpush1.bf16.msra.mxu0 %v2339
    %2463 = vmatprep.subr.bf16.mxu0 %v2348
    %2464 = vmatpush1.bf16.msra.mxu0 %v2347
    %2465 = vmatprep.mubr.bf16.mxu0 %v2222
    %2466 = vmatmul.mubr.bf16.gmra.mrb[0].mxu0 %v2221
    %v2467 = vpop.f32.mrb[0].mxu0
    %v2468 = vadd.f32 0.0, %v2467
    %v2469 = vpop.f32.mrb[0].mxu0
    %v2470 = vadd.f32 0.0, %v2469
    %v2471 = vpop.f32.mrb[0].mxu0
    %v2472 = vpop.f32.mrb[0].mxu0
    %2473 = vdwg.mxu0
    %2474 = vmatprep.subr.bf16.mxu0 %v2230
    %2475 = vmatpush1.bf16.msra.mxu0 %v2229
    %2476 = vmatprep.subr.bf16.mxu0 %v2238
    %2477 = vmatpush1.bf16.msra.mxu0 %v2237
    %2478 = vmatprep.subr.bf16.mxu0 %v2246
    %2479 = vmatpush1.bf16.msra.mxu0 %v2245
    %2480 = vmatprep.subr.bf16.mxu0 %v2254
    %2481 = vmatpush1.bf16.msra.mxu0 %v2253
    %2482 = vmatprep.subr.bf16.mxu0 %v2262
    %2483 = vmatpush1.bf16.msra.mxu0 %v2261
    %2484 = vmatprep.subr.bf16.mxu0 %v2270
    %2485 = vmatpush1.bf16.msra.mxu0 %v2269
    %2486 = vmatprep.subr.bf16.mxu0 %v2278
    %2487 = vmatpush1.bf16.msra.mxu0 %v2277
    %2488 = vmatprep.subr.bf16.mxu0 %v2286
    %2489 = vmatpush1.bf16.msra.mxu0 %v2285
    %2490 = vmatprep.subr.bf16.mxu0 %v2294
    %2491 = vmatpush1.bf16.msra.mxu0 %v2293
    %2492 = vmatprep.subr.bf16.mxu0 %v2302
    %2493 = vmatpush1.bf16.msra.mxu0 %v2301
    %2494 = vmatprep.subr.bf16.mxu0 %v2310
    %2495 = vmatpush1.bf16.msra.mxu0 %v2309
    %2496 = vmatprep.subr.bf16.mxu0 %v2318
    %2497 = vmatpush1.bf16.msra.mxu0 %v2317
    %2498 = vmatprep.subr.bf16.mxu0 %v2326
    %2499 = vmatpush1.bf16.msra.mxu0 %v2325
    %2500 = vmatprep.subr.bf16.mxu0 %v2334
    %2501 = vmatpush1.bf16.msra.mxu0 %v2333
    %2502 = vmatprep.subr.bf16.mxu0 %v2342
    %2503 = vmatpush1.bf16.msra.mxu0 %v2341
    %2504 = vmatprep.subr.bf16.mxu0 %v2350
    %2505 = vmatpush1.bf16.msra.mxu0 %v2349
    %2506 = vmatprep.mubr.bf16.mxu0 %v2222
    %2507 = vmatmul.mubr.bf16.gmra.mrb[0].mxu0 %v2221
    %v2508 = vpop.f32.mrb[0].mxu0
    %v2509 = vadd.f32 0.0, %v2508
    %v2510 = vpop.f32.mrb[0].mxu0
    %v2511 = vadd.f32 0.0, %v2510
    %v2512 = vpop.f32.mrb[0].mxu0
    %v2513 = vpop.f32.mrb[0].mxu0
    %2514 = vdwg.mxu0
    %v2515 = vadd.f32 %v2213, %v2386
    %v2516 = vadd.f32 %v2214, %v2388
    %v2517 = vadd.f32 %v2215, %v2427
    %v2518 = vadd.f32 %v2216, %v2429
    %v2519 = vadd.f32 %v2217, %v2468
    %v2520 = vadd.f32 %v2218, %v2470
    %v2521 = vadd.f32 %v2219, %v2509
    %v2522 = vadd.f32 %v2220, %v2511
    %v2523 = vld [vmem:[#allocation2 + $0x340] sm:$0xff]
    %v2524 = vld [vmem:[#allocation2 + $0x348] sm:$0xff]
    %v2525 = vld [vmem:[#allocation2 + $0x350] sm:$0xff]
    %v2526 = vld [vmem:[#allocation2 + $0x358] sm:$0xff]
    %v2527 = vld [vmem:[#allocation2 + $0x360] sm:$0xff]
    %v2528 = vld [vmem:[#allocation2 + $0x368] sm:$0xff]
    %v2529 = vld [vmem:[#allocation2 + $0x370] sm:$0xff]
    %v2530 = vld [vmem:[#allocation2 + $0x378] sm:$0xff]
    %v2531 = vpack.c.bf16 %v2207, %v2207
    %v2532 = vpack.c.bf16 %v2208, %v2208
    %v2533 = vld [vmem:[#allocation6] sm:$0xff]
    %v2534 = vld [vmem:[#allocation6 + $0x8] sm:$0xff]
    %v2535 = vld [vmem:[#allocation6 + $0x10] sm:$0xff]
    %v2536 = vld [vmem:[#allocation6 + $0x18] sm:$0xff]
    %v2537 = vld [vmem:[#allocation6 + $0x20] sm:$0xff]
    %v2538 = vld [vmem:[#allocation6 + $0x28] sm:$0xff]
    %v2539 = vld [vmem:[#allocation6 + $0x30] sm:$0xff]
    %v2540 = vld [vmem:[#allocation6 + $0x38] sm:$0xff]
    %v2541 = vld [vmem:[#allocation6 + $0x40] sm:$0xff]
    %v2542 = vld [vmem:[#allocation6 + $0x48] sm:$0xff]
    %v2543 = vld [vmem:[#allocation6 + $0x50] sm:$0xff]
    %v2544 = vld [vmem:[#allocation6 + $0x58] sm:$0xff]
    %v2545 = vld [vmem:[#allocation6 + $0x60] sm:$0xff]
    %v2546 = vld [vmem:[#allocation6 + $0x68] sm:$0xff]
    %v2547 = vld [vmem:[#allocation6 + $0x70] sm:$0xff]
    %v2548 = vld [vmem:[#allocation6 + $0x78] sm:$0xff]
    %v2549 = vld [vmem:[#allocation6 + $0x80] sm:$0xff]
    %v2550 = vld [vmem:[#allocation6 + $0x88] sm:$0xff]
    %v2551 = vld [vmem:[#allocation6 + $0x90] sm:$0xff]
    %v2552 = vld [vmem:[#allocation6 + $0x98] sm:$0xff]
    %v2553 = vld [vmem:[#allocation6 + $0xa0] sm:$0xff]
    %v2554 = vld [vmem:[#allocation6 + $0xa8] sm:$0xff]
    %v2555 = vld [vmem:[#allocation6 + $0xb0] sm:$0xff]
    %v2556 = vld [vmem:[#allocation6 + $0xb8] sm:$0xff]
    %v2557 = vld [vmem:[#allocation6 + $0xc0] sm:$0xff]
    %v2558 = vld [vmem:[#allocation6 + $0xc8] sm:$0xff]
    %v2559 = vld [vmem:[#allocation6 + $0xd0] sm:$0xff]
    %v2560 = vld [vmem:[#allocation6 + $0xd8] sm:$0xff]
    %v2561 = vld [vmem:[#allocation6 + $0xe0] sm:$0xff]
    %v2562 = vld [vmem:[#allocation6 + $0xe8] sm:$0xff]
    %v2563 = vld [vmem:[#allocation6 + $0xf0] sm:$0xff]
    %v2564 = vld [vmem:[#allocation6 + $0xf8] sm:$0xff]
    %v2565 = vld [vmem:[#allocation6 + $0x100] sm:$0xff]
    %v2566 = vld [vmem:[#allocation6 + $0x108] sm:$0xff]
    %v2567 = vld [vmem:[#allocation6 + $0x110] sm:$0xff]
    %v2568 = vld [vmem:[#allocation6 + $0x118] sm:$0xff]
    %v2569 = vld [vmem:[#allocation6 + $0x120] sm:$0xff]
    %v2570 = vld [vmem:[#allocation6 + $0x128] sm:$0xff]
    %v2571 = vld [vmem:[#allocation6 + $0x130] sm:$0xff]
    %v2572 = vld [vmem:[#allocation6 + $0x138] sm:$0xff]
    %v2573 = vld [vmem:[#allocation6 + $0x140] sm:$0xff]
    %v2574 = vld [vmem:[#allocation6 + $0x148] sm:$0xff]
    %v2575 = vld [vmem:[#allocation6 + $0x150] sm:$0xff]
    %v2576 = vld [vmem:[#allocation6 + $0x158] sm:$0xff]
    %v2577 = vld [vmem:[#allocation6 + $0x160] sm:$0xff]
    %v2578 = vld [vmem:[#allocation6 + $0x168] sm:$0xff]
    %v2579 = vld [vmem:[#allocation6 + $0x170] sm:$0xff]
    %v2580 = vld [vmem:[#allocation6 + $0x178] sm:$0xff]
    %v2581 = vld [vmem:[#allocation6 + $0x180] sm:$0xff]
    %v2582 = vld [vmem:[#allocation6 + $0x188] sm:$0xff]
    %v2583 = vld [vmem:[#allocation6 + $0x190] sm:$0xff]
    %v2584 = vld [vmem:[#allocation6 + $0x198] sm:$0xff]
    %v2585 = vld [vmem:[#allocation6 + $0x1a0] sm:$0xff]
    %v2586 = vld [vmem:[#allocation6 + $0x1a8] sm:$0xff]
    %v2587 = vld [vmem:[#allocation6 + $0x1b0] sm:$0xff]
    %v2588 = vld [vmem:[#allocation6 + $0x1b8] sm:$0xff]
    %v2589 = vld [vmem:[#allocation6 + $0x1c0] sm:$0xff]
    %v2590 = vld [vmem:[#allocation6 + $0x1c8] sm:$0xff]
    %v2591 = vld [vmem:[#allocation6 + $0x1d0] sm:$0xff]
    %v2592 = vld [vmem:[#allocation6 + $0x1d8] sm:$0xff]
    %v2593 = vld [vmem:[#allocation6 + $0x1e0] sm:$0xff]
    %v2594 = vld [vmem:[#allocation6 + $0x1e8] sm:$0xff]
    %v2595 = vld [vmem:[#allocation6 + $0x1f0] sm:$0xff]
    %v2596 = vld [vmem:[#allocation6 + $0x1f8] sm:$0xff]
    %v2597 = vld [vmem:[#allocation6 + $0x200] sm:$0xff]
    %v2598 = vld [vmem:[#allocation6 + $0x208] sm:$0xff]
    %v2599 = vld [vmem:[#allocation6 + $0x210] sm:$0xff]
    %v2600 = vld [vmem:[#allocation6 + $0x218] sm:$0xff]
    %v2601 = vld [vmem:[#allocation6 + $0x220] sm:$0xff]
    %v2602 = vld [vmem:[#allocation6 + $0x228] sm:$0xff]
    %v2603 = vld [vmem:[#allocation6 + $0x230] sm:$0xff]
    %v2604 = vld [vmem:[#allocation6 + $0x238] sm:$0xff]
    %v2605 = vld [vmem:[#allocation6 + $0x240] sm:$0xff]
    %v2606 = vld [vmem:[#allocation6 + $0x248] sm:$0xff]
    %v2607 = vld [vmem:[#allocation6 + $0x250] sm:$0xff]
    %v2608 = vld [vmem:[#allocation6 + $0x258] sm:$0xff]
    %v2609 = vld [vmem:[#allocation6 + $0x260] sm:$0xff]
    %v2610 = vld [vmem:[#allocation6 + $0x268] sm:$0xff]
    %v2611 = vld [vmem:[#allocation6 + $0x270] sm:$0xff]
    %v2612 = vld [vmem:[#allocation6 + $0x278] sm:$0xff]
    %v2613 = vld [vmem:[#allocation6 + $0x280] sm:$0xff]
    %v2614 = vld [vmem:[#allocation6 + $0x288] sm:$0xff]
    %v2615 = vld [vmem:[#allocation6 + $0x290] sm:$0xff]
    %v2616 = vld [vmem:[#allocation6 + $0x298] sm:$0xff]
    %v2617 = vld [vmem:[#allocation6 + $0x2a0] sm:$0xff]
    %v2618 = vld [vmem:[#allocation6 + $0x2a8] sm:$0xff]
    %v2619 = vld [vmem:[#allocation6 + $0x2b0] sm:$0xff]
    %v2620 = vld [vmem:[#allocation6 + $0x2b8] sm:$0xff]
    %v2621 = vld [vmem:[#allocation6 + $0x2c0] sm:$0xff]
    %v2622 = vld [vmem:[#allocation6 + $0x2c8] sm:$0xff]
    %v2623 = vld [vmem:[#allocation6 + $0x2d0] sm:$0xff]
    %v2624 = vld [vmem:[#allocation6 + $0x2d8] sm:$0xff]
    %v2625 = vld [vmem:[#allocation6 + $0x2e0] sm:$0xff]
    %v2626 = vld [vmem:[#allocation6 + $0x2e8] sm:$0xff]
    %v2627 = vld [vmem:[#allocation6 + $0x2f0] sm:$0xff]
    %v2628 = vld [vmem:[#allocation6 + $0x2f8] sm:$0xff]
    %v2629 = vld [vmem:[#allocation6 + $0x300] sm:$0xff]
    %v2630 = vld [vmem:[#allocation6 + $0x308] sm:$0xff]
    %v2631 = vld [vmem:[#allocation6 + $0x310] sm:$0xff]
    %v2632 = vld [vmem:[#allocation6 + $0x318] sm:$0xff]
    %v2633 = vld [vmem:[#allocation6 + $0x320] sm:$0xff]
    %v2634 = vld [vmem:[#allocation6 + $0x328] sm:$0xff]
    %v2635 = vld [vmem:[#allocation6 + $0x330] sm:$0xff]
    %v2636 = vld [vmem:[#allocation6 + $0x338] sm:$0xff]
    %v2637 = vld [vmem:[#allocation6 + $0x340] sm:$0xff]
    %v2638 = vld [vmem:[#allocation6 + $0x348] sm:$0xff]
    %v2639 = vld [vmem:[#allocation6 + $0x350] sm:$0xff]
    %v2640 = vld [vmem:[#allocation6 + $0x358] sm:$0xff]
    %v2641 = vld [vmem:[#allocation6 + $0x360] sm:$0xff]
    %v2642 = vld [vmem:[#allocation6 + $0x368] sm:$0xff]
    %v2643 = vld [vmem:[#allocation6 + $0x370] sm:$0xff]
    %v2644 = vld [vmem:[#allocation6 + $0x378] sm:$0xff]
    %v2645 = vld [vmem:[#allocation6 + $0x380] sm:$0xff]
    %v2646 = vld [vmem:[#allocation6 + $0x388] sm:$0xff]
    %v2647 = vld [vmem:[#allocation6 + $0x390] sm:$0xff]
    %v2648 = vld [vmem:[#allocation6 + $0x398] sm:$0xff]
    %v2649 = vld [vmem:[#allocation6 + $0x3a0] sm:$0xff]
    %v2650 = vld [vmem:[#allocation6 + $0x3a8] sm:$0xff]
    %v2651 = vld [vmem:[#allocation6 + $0x3b0] sm:$0xff]
    %v2652 = vld [vmem:[#allocation6 + $0x3b8] sm:$0xff]
    %v2653 = vld [vmem:[#allocation6 + $0x3c0] sm:$0xff]
    %v2654 = vld [vmem:[#allocation6 + $0x3c8] sm:$0xff]
    %v2655 = vld [vmem:[#allocation6 + $0x3d0] sm:$0xff]
    %v2656 = vld [vmem:[#allocation6 + $0x3d8] sm:$0xff]
    %v2657 = vld [vmem:[#allocation6 + $0x3e0] sm:$0xff]
    %v2658 = vld [vmem:[#allocation6 + $0x3e8] sm:$0xff]
    %v2659 = vld [vmem:[#allocation6 + $0x3f0] sm:$0xff]
    %v2660 = vld [vmem:[#allocation6 + $0x3f8] sm:$0xff]
    %2661 = vmatprep.subr.bf16.mxu0 %v2534
    %2662 = vmatpush1.bf16.msra.mxu0 %v2533
    %2663 = vmatprep.subr.bf16.mxu0 %v2542
    %2664 = vmatpush1.bf16.msra.mxu0 %v2541
    %2665 = vmatprep.subr.bf16.mxu0 %v2550
    %2666 = vmatpush1.bf16.msra.mxu0 %v2549
    %2667 = vmatprep.subr.bf16.mxu0 %v2558
    %2668 = vmatpush1.bf16.msra.mxu0 %v2557
    %2669 = vmatprep.subr.bf16.mxu0 %v2566
    %2670 = vmatpush1.bf16.msra.mxu0 %v2565
    %2671 = vmatprep.subr.bf16.mxu0 %v2574
    %2672 = vmatpush1.bf16.msra.mxu0 %v2573
    %2673 = vmatprep.subr.bf16.mxu0 %v2582
    %2674 = vmatpush1.bf16.msra.mxu0 %v2581
    %2675 = vmatprep.subr.bf16.mxu0 %v2590
    %2676 = vmatpush1.bf16.msra.mxu0 %v2589
    %2677 = vmatprep.subr.bf16.mxu0 %v2598
    %2678 = vmatpush1.bf16.msra.mxu0 %v2597
    %2679 = vmatprep.subr.bf16.mxu0 %v2606
    %2680 = vmatpush1.bf16.msra.mxu0 %v2605
    %2681 = vmatprep.subr.bf16.mxu0 %v2614
    %2682 = vmatpush1.bf16.msra.mxu0 %v2613
    %2683 = vmatprep.subr.bf16.mxu0 %v2622
    %2684 = vmatpush1.bf16.msra.mxu0 %v2621
    %2685 = vmatprep.subr.bf16.mxu0 %v2630
    %2686 = vmatpush1.bf16.msra.mxu0 %v2629
    %2687 = vmatprep.subr.bf16.mxu0 %v2638
    %2688 = vmatpush1.bf16.msra.mxu0 %v2637
    %2689 = vmatprep.subr.bf16.mxu0 %v2646
    %2690 = vmatpush1.bf16.msra.mxu0 %v2645
    %2691 = vmatprep.subr.bf16.mxu0 %v2654
    %2692 = vmatpush1.bf16.msra.mxu0 %v2653
    %2693 = vmatprep.mubr.bf16.mxu0 %v2532
    %2694 = vmatmul.mubr.bf16.gmra.mrb[0].mxu0 %v2531
    %v2695 = vpop.f32.mrb[0].mxu0
    %v2696 = vadd.f32 0.0, %v2695
    %v2697 = vpop.f32.mrb[0].mxu0
    %v2698 = vadd.f32 0.0, %v2697
    %v2699 = vpop.f32.mrb[0].mxu0
    %v2700 = vpop.f32.mrb[0].mxu0
    %2701 = vdwg.mxu0
    %2702 = vmatprep.subr.bf16.mxu0 %v2536
    %2703 = vmatpush1.bf16.msra.mxu0 %v2535
    %2704 = vmatprep.subr.bf16.mxu0 %v2544
    %2705 = vmatpush1.bf16.msra.mxu0 %v2543
    %2706 = vmatprep.subr.bf16.mxu0 %v2552
    %2707 = vmatpush1.bf16.msra.mxu0 %v2551
    %2708 = vmatprep.subr.bf16.mxu0 %v2560
    %2709 = vmatpush1.bf16.msra.mxu0 %v2559
    %2710 = vmatprep.subr.bf16.mxu0 %v2568
    %2711 = vmatpush1.bf16.msra.mxu0 %v2567
    %2712 = vmatprep.subr.bf16.mxu0 %v2576
    %2713 = vmatpush1.bf16.msra.mxu0 %v2575
    %2714 = vmatprep.subr.bf16.mxu0 %v2584
    %2715 = vmatpush1.bf16.msra.mxu0 %v2583
    %2716 = vmatprep.subr.bf16.mxu0 %v2592
    %2717 = vmatpush1.bf16.msra.mxu0 %v2591
    %2718 = vmatprep.subr.bf16.mxu0 %v2600
    %2719 = vmatpush1.bf16.msra.mxu0 %v2599
    %2720 = vmatprep.subr.bf16.mxu0 %v2608
    %2721 = vmatpush1.bf16.msra.mxu0 %v2607
    %2722 = vmatprep.subr.bf16.mxu0 %v2616
    %2723 = vmatpush1.bf16.msra.mxu0 %v2615
    %2724 = vmatprep.subr.bf16.mxu0 %v2624
    %2725 = vmatpush1.bf16.msra.mxu0 %v2623
    %2726 = vmatprep.subr.bf16.mxu0 %v2632
    %2727 = vmatpush1.bf16.msra.mxu0 %v2631
    %2728 = vmatprep.subr.bf16.mxu0 %v2640
    %2729 = vmatpush1.bf16.msra.mxu0 %v2639
    %2730 = vmatprep.subr.bf16.mxu0 %v2648
    %2731 = vmatpush1.bf16.msra.mxu0 %v2647
    %2732 = vmatprep.subr.bf16.mxu0 %v2656
    %2733 = vmatpush1.bf16.msra.mxu0 %v2655
    %2734 = vmatprep.mubr.bf16.mxu0 %v2532
    %2735 = vmatmul.mubr.bf16.gmra.mrb[0].mxu0 %v2531
    %v2736 = vpop.f32.mrb[0].mxu0
    %v2737 = vadd.f32 0.0, %v2736
    %v2738 = vpop.f32.mrb[0].mxu0
    %v2739 = vadd.f32 0.0, %v2738
    %v2740 = vpop.f32.mrb[0].mxu0
    %v2741 = vpop.f32.mrb[0].mxu0
    %2742 = vdwg.mxu0
    %2743 = vmatprep.subr.bf16.mxu0 %v2538
    %2744 = vmatpush1.bf16.msra.mxu0 %v2537
    %2745 = vmatprep.subr.bf16.mxu0 %v2546
    %2746 = vmatpush1.bf16.msra.mxu0 %v2545
    %2747 = vmatprep.subr.bf16.mxu0 %v2554
    %2748 = vmatpush1.bf16.msra.mxu0 %v2553
    %2749 = vmatprep.subr.bf16.mxu0 %v2562
    %2750 = vmatpush1.bf16.msra.mxu0 %v2561
    %2751 = vmatprep.subr.bf16.mxu0 %v2570
    %2752 = vmatpush1.bf16.msra.mxu0 %v2569
    %2753 = vmatprep.subr.bf16.mxu0 %v2578
    %2754 = vmatpush1.bf16.msra.mxu0 %v2577
    %2755 = vmatprep.subr.bf16.mxu0 %v2586
    %2756 = vmatpush1.bf16.msra.mxu0 %v2585
    %2757 = vmatprep.subr.bf16.mxu0 %v2594
    %2758 = vmatpush1.bf16.msra.mxu0 %v2593
    %2759 = vmatprep.subr.bf16.mxu0 %v2602
    %2760 = vmatpush1.bf16.msra.mxu0 %v2601
    %2761 = vmatprep.subr.bf16.mxu0 %v2610
    %2762 = vmatpush1.bf16.msra.mxu0 %v2609
    %2763 = vmatprep.subr.bf16.mxu0 %v2618
    %2764 = vmatpush1.bf16.msra.mxu0 %v2617
    %2765 = vmatprep.subr.bf16.mxu0 %v2626
    %2766 = vmatpush1.bf16.msra.mxu0 %v2625
    %2767 = vmatprep.subr.bf16.mxu0 %v2634
    %2768 = vmatpush1.bf16.msra.mxu0 %v2633
    %2769 = vmatprep.subr.bf16.mxu0 %v2642
    %2770 = vmatpush1.bf16.msra.mxu0 %v2641
    %2771 = vmatprep.subr.bf16.mxu0 %v2650
    %2772 = vmatpush1.bf16.msra.mxu0 %v2649
    %2773 = vmatprep.subr.bf16.mxu0 %v2658
    %2774 = vmatpush1.bf16.msra.mxu0 %v2657
    %2775 = vmatprep.mubr.bf16.mxu0 %v2532
    %2776 = vmatmul.mubr.bf16.gmra.mrb[0].mxu0 %v2531
    %v2777 = vpop.f32.mrb[0].mxu0
    %v2778 = vadd.f32 0.0, %v2777
    %v2779 = vpop.f32.mrb[0].mxu0
    %v2780 = vadd.f32 0.0, %v2779
    %v2781 = vpop.f32.mrb[0].mxu0
    %v2782 = vpop.f32.mrb[0].mxu0
    %2783 = vdwg.mxu0
    %2784 = vmatprep.subr.bf16.mxu0 %v2540
    %2785 = vmatpush1.bf16.msra.mxu0 %v2539
    %2786 = vmatprep.subr.bf16.mxu0 %v2548
    %2787 = vmatpush1.bf16.msra.mxu0 %v2547
    %2788 = vmatprep.subr.bf16.mxu0 %v2556
    %2789 = vmatpush1.bf16.msra.mxu0 %v2555
    %2790 = vmatprep.subr.bf16.mxu0 %v2564
    %2791 = vmatpush1.bf16.msra.mxu0 %v2563
    %2792 = vmatprep.subr.bf16.mxu0 %v2572
    %2793 = vmatpush1.bf16.msra.mxu0 %v2571
    %2794 = vmatprep.subr.bf16.mxu0 %v2580
    %2795 = vmatpush1.bf16.msra.mxu0 %v2579
    %2796 = vmatprep.subr.bf16.mxu0 %v2588
    %2797 = vmatpush1.bf16.msra.mxu0 %v2587
    %2798 = vmatprep.subr.bf16.mxu0 %v2596
    %2799 = vmatpush1.bf16.msra.mxu0 %v2595
    %2800 = vmatprep.subr.bf16.mxu0 %v2604
    %2801 = vmatpush1.bf16.msra.mxu0 %v2603
    %2802 = vmatprep.subr.bf16.mxu0 %v2612
    %2803 = vmatpush1.bf16.msra.mxu0 %v2611
    %2804 = vmatprep.subr.bf16.mxu0 %v2620
    %2805 = vmatpush1.bf16.msra.mxu0 %v2619
    %2806 = vmatprep.subr.bf16.mxu0 %v2628
    %2807 = vmatpush1.bf16.msra.mxu0 %v2627
    %2808 = vmatprep.subr.bf16.mxu0 %v2636
    %2809 = vmatpush1.bf16.msra.mxu0 %v2635
    %2810 = vmatprep.subr.bf16.mxu0 %v2644
    %2811 = vmatpush1.bf16.msra.mxu0 %v2643
    %2812 = vmatprep.subr.bf16.mxu0 %v2652
    %2813 = vmatpush1.bf16.msra.mxu0 %v2651
    %2814 = vmatprep.subr.bf16.mxu0 %v2660
    %2815 = vmatpush1.bf16.msra.mxu0 %v2659
    %2816 = vmatprep.mubr.bf16.mxu0 %v2532
    %2817 = vmatmul.mubr.bf16.gmra.mrb[0].mxu0 %v2531
    %v2818 = vpop.f32.mrb[0].mxu0
    %v2819 = vadd.f32 0.0, %v2818
    %v2820 = vpop.f32.mrb[0].mxu0
    %v2821 = vadd.f32 0.0, %v2820
    %v2822 = vpop.f32.mrb[0].mxu0
    %v2823 = vpop.f32.mrb[0].mxu0
    %2824 = vdwg.mxu0
    %v2825 = vadd.f32 %v2523, %v2696
    %v2826 = vadd.f32 %v2524, %v2698
    %v2827 = vadd.f32 %v2525, %v2737
    %v2828 = vadd.f32 %v2526, %v2739
    %v2829 = vadd.f32 %v2527, %v2778
    %v2830 = vadd.f32 %v2528, %v2780
    %v2831 = vadd.f32 %v2529, %v2819
    %v2832 = vadd.f32 %v2530, %v2821
    %v2833 = vxor.u32 %v2515, 2147483648
    %v2834 = vxor.u32 %v2516, 2147483648
    %v2835 = vmul.f32 %v2833, 1.442695
    %v2836 = vpow.pop %v2835
    %v2837 = vmul.f32 %v2834, 1.442695
    %v2838 = vpow.pop %v2837
    %v2839 = vadd.f32 %v2836, 1.0
    %v2840 = vadd.f32 %v2838, 1.0
    %v2841 = vrcp.pop %v2839
    %v2842 = vmul.f32 1.0, %v2841
    %v2843 = vrcp.pop %v2840
    %v2844 = vmul.f32 1.0, %v2843
    %v2845 = vxor.u32 %v2517, 2147483648
    %v2846 = vxor.u32 %v2518, 2147483648
    %v2847 = vmul.f32 %v2845, 1.442695
    %v2848 = vpow.pop %v2847
    %v2849 = vmul.f32 %v2846, 1.442695
    %v2850 = vpow.pop %v2849
    %v2851 = vadd.f32 %v2848, 1.0
    %v2852 = vadd.f32 %v2850, 1.0
    %v2853 = vrcp.pop %v2851
    %v2854 = vmul.f32 1.0, %v2853
    %v2855 = vrcp.pop %v2852
    %v2856 = vmul.f32 1.0, %v2855
    %v2857 = vtanh.pop %v2519
    %v2858 = vtanh.pop %v2520
    %v2859 = vxor.u32 %v2521, 2147483648
    %v2860 = vxor.u32 %v2522, 2147483648
    %v2861 = vmul.f32 %v2859, 1.442695
    %v2862 = vpow.pop %v2861
    %v2863 = vmul.f32 %v2860, 1.442695
    %v2864 = vpow.pop %v2863
    %v2865 = vadd.f32 %v2862, 1.0
    %v2866 = vadd.f32 %v2864, 1.0
    %v2867 = vrcp.pop %v2865
    %v2868 = vmul.f32 1.0, %v2867
    %v2869 = vrcp.pop %v2866
    %v2870 = vmul.f32 1.0, %v2869
    %v2871 = vmul.f32 %v2854, %v2155
    %v2872 = vmul.f32 %v2856, %v2156
    %v2873 = vmul.f32 %v2842, %v2857
    %v2874 = vmul.f32 %v2844, %v2858
    %v2875 = vadd.f32 %v2871, %v2873
    %v2876 = vadd.f32 %v2872, %v2874
    %v2877 = vtanh.pop %v2875
    %v2878 = vtanh.pop %v2876
    %v2879 = vmul.f32 %v2868, %v2877
    %v2880 = vmul.f32 %v2870, %v2878
    %v2881 = vxor.u32 %v2825, 2147483648
    %v2882 = vxor.u32 %v2826, 2147483648
    %v2883 = vmul.f32 %v2881, 1.442695
    %v2884 = vpow.pop %v2883
    %v2885 = vmul.f32 %v2882, 1.442695
    %v2886 = vpow.pop %v2885
    %v2887 = vadd.f32 %v2884, 1.0
    %v2888 = vadd.f32 %v2886, 1.0
    %v2889 = vrcp.pop %v2887
    %v2890 = vmul.f32 1.0, %v2889
    %v2891 = vrcp.pop %v2888
    %v2892 = vmul.f32 1.0, %v2891
    %v2893 = vxor.u32 %v2827, 2147483648
    %v2894 = vxor.u32 %v2828, 2147483648
    %v2895 = vmul.f32 %v2893, 1.442695
    %v2896 = vpow.pop %v2895
    %v2897 = vmul.f32 %v2894, 1.442695
    %v2898 = vpow.pop %v2897
    %v2899 = vadd.f32 %v2896, 1.0
    %v2900 = vadd.f32 %v2898, 1.0
    %v2901 = vrcp.pop %v2899
    %v2902 = vmul.f32 1.0, %v2901
    %v2903 = vrcp.pop %v2900
    %v2904 = vmul.f32 1.0, %v2903
    %v2905 = vtanh.pop %v2829
    %v2906 = vtanh.pop %v2830
    %v2907 = vxor.u32 %v2831, 2147483648
    %v2908 = vxor.u32 %v2832, 2147483648
    %v2909 = vmul.f32 %v2907, 1.442695
    %v2910 = vpow.pop %v2909
    %v2911 = vmul.f32 %v2908, 1.442695
    %v2912 = vpow.pop %v2911
    %v2913 = vadd.f32 %v2910, 1.0
    %v2914 = vadd.f32 %v2912, 1.0
    %v2915 = vrcp.pop %v2913
    %v2916 = vmul.f32 1.0, %v2915
    %v2917 = vrcp.pop %v2914
    %v2918 = vmul.f32 1.0, %v2917
    %v2919 = vmul.f32 %v2902, %v2203
    %v2920 = vmul.f32 %v2904, %v2204
    %v2921 = vmul.f32 %v2890, %v2905
    %v2922 = vmul.f32 %v2892, %v2906
    %v2923 = vadd.f32 %v2919, %v2921
    %v2924 = vadd.f32 %v2920, %v2922
    %v2925 = vtanh.pop %v2923
    %v2926 = vtanh.pop %v2924
    %v2927 = vmul.f32 %v2916, %v2925
    %v2928 = vmul.f32 %v2918, %v2926
    %2929 = vst [vmem:[#allocation3 + $0x20] sm:$0xff] %v2879
    %2930 = vst [vmem:[#allocation3 + $0x28] sm:$0xff] %v2880
    %2931 = vst [vmem:[#allocation3 + $0xd0] sm:$0xff] %v2927
    %2932 = vst [vmem:[#allocation3 + $0xd8] sm:$0xff] %v2928
    %v2933 = vld [vmem:[#allocation2 + $0x100] sm:$0xff]
    %v2934 = vld [vmem:[#allocation2 + $0x108] sm:$0xff]
    %v2935 = vld [vmem:[#allocation2 + $0x110] sm:$0xff]
    %v2936 = vld [vmem:[#allocation2 + $0x118] sm:$0xff]
    %v2937 = vld [vmem:[#allocation2 + $0x120] sm:$0xff]
    %v2938 = vld [vmem:[#allocation2 + $0x128] sm:$0xff]
    %v2939 = vld [vmem:[#allocation2 + $0x130] sm:$0xff]
    %v2940 = vld [vmem:[#allocation2 + $0x138] sm:$0xff]
    %v2941 = vpack.c.bf16 %v2879, %v2879
    %v2942 = vpack.c.bf16 %v2880, %v2880
    %v2943 = vld [vmem:[#allocation5] sm:$0xff]
    %v2944 = vld [vmem:[#allocation5 + $0x8] sm:$0xff]
    %v2945 = vld [vmem:[#allocation5 + $0x10] sm:$0xff]
    %v2946 = vld [vmem:[#allocation5 + $0x18] sm:$0xff]
    %v2947 = vld [vmem:[#allocation5 + $0x20] sm:$0xff]
    %v2948 = vld [vmem:[#allocation5 + $0x28] sm:$0xff]
    %v2949 = vld [vmem:[#allocation5 + $0x30] sm:$0xff]
    %v2950 = vld [vmem:[#allocation5 + $0x38] sm:$0xff]
    %v2951 = vld [vmem:[#allocation5 + $0x40] sm:$0xff]
    %v2952 = vld [vmem:[#allocation5 + $0x48] sm:$0xff]
    %v2953 = vld [vmem:[#allocation5 + $0x50] sm:$0xff]
    %v2954 = vld [vmem:[#allocation5 + $0x58] sm:$0xff]
    %v2955 = vld [vmem:[#allocation5 + $0x60] sm:$0xff]
    %v2956 = vld [vmem:[#allocation5 + $0x68] sm:$0xff]
    %v2957 = vld [vmem:[#allocation5 + $0x70] sm:$0xff]
    %v2958 = vld [vmem:[#allocation5 + $0x78] sm:$0xff]
    %v2959 = vld [vmem:[#allocation5 + $0x80] sm:$0xff]
    %v2960 = vld [vmem:[#allocation5 + $0x88] sm:$0xff]
    %v2961 = vld [vmem:[#allocation5 + $0x90] sm:$0xff]
    %v2962 = vld [vmem:[#allocation5 + $0x98] sm:$0xff]
    %v2963 = vld [vmem:[#allocation5 + $0xa0] sm:$0xff]
    %v2964 = vld [vmem:[#allocation5 + $0xa8] sm:$0xff]
    %v2965 = vld [vmem:[#allocation5 + $0xb0] sm:$0xff]
    %v2966 = vld [vmem:[#allocation5 + $0xb8] sm:$0xff]
    %v2967 = vld [vmem:[#allocation5 + $0xc0] sm:$0xff]
    %v2968 = vld [vmem:[#allocation5 + $0xc8] sm:$0xff]
    %v2969 = vld [vmem:[#allocation5 + $0xd0] sm:$0xff]
    %v2970 = vld [vmem:[#allocation5 + $0xd8] sm:$0xff]
    %v2971 = vld [vmem:[#allocation5 + $0xe0] sm:$0xff]
    %v2972 = vld [vmem:[#allocation5 + $0xe8] sm:$0xff]
    %v2973 = vld [vmem:[#allocation5 + $0xf0] sm:$0xff]
    %v2974 = vld [vmem:[#allocation5 + $0xf8] sm:$0xff]
    %v2975 = vld [vmem:[#allocation5 + $0x100] sm:$0xff]
    %v2976 = vld [vmem:[#allocation5 + $0x108] sm:$0xff]
    %v2977 = vld [vmem:[#allocation5 + $0x110] sm:$0xff]
    %v2978 = vld [vmem:[#allocation5 + $0x118] sm:$0xff]
    %v2979 = vld [vmem:[#allocation5 + $0x120] sm:$0xff]
    %v2980 = vld [vmem:[#allocation5 + $0x128] sm:$0xff]
    %v2981 = vld [vmem:[#allocation5 + $0x130] sm:$0xff]
    %v2982 = vld [vmem:[#allocation5 + $0x138] sm:$0xff]
    %v2983 = vld [vmem:[#allocation5 + $0x140] sm:$0xff]
    %v2984 = vld [vmem:[#allocation5 + $0x148] sm:$0xff]
    %v2985 = vld [vmem:[#allocation5 + $0x150] sm:$0xff]
    %v2986 = vld [vmem:[#allocation5 + $0x158] sm:$0xff]
    %v2987 = vld [vmem:[#allocation5 + $0x160] sm:$0xff]
    %v2988 = vld [vmem:[#allocation5 + $0x168] sm:$0xff]
    %v2989 = vld [vmem:[#allocation5 + $0x170] sm:$0xff]
    %v2990 = vld [vmem:[#allocation5 + $0x178] sm:$0xff]
    %v2991 = vld [vmem:[#allocation5 + $0x180] sm:$0xff]
    %v2992 = vld [vmem:[#allocation5 + $0x188] sm:$0xff]
    %v2993 = vld [vmem:[#allocation5 + $0x190] sm:$0xff]
    %v2994 = vld [vmem:[#allocation5 + $0x198] sm:$0xff]
    %v2995 = vld [vmem:[#allocation5 + $0x1a0] sm:$0xff]
    %v2996 = vld [vmem:[#allocation5 + $0x1a8] sm:$0xff]
    %v2997 = vld [vmem:[#allocation5 + $0x1b0] sm:$0xff]
    %v2998 = vld [vmem:[#allocation5 + $0x1b8] sm:$0xff]
    %v2999 = vld [vmem:[#allocation5 + $0x1c0] sm:$0xff]
    %v3000 = vld [vmem:[#allocation5 + $0x1c8] sm:$0xff]
    %v3001 = vld [vmem:[#allocation5 + $0x1d0] sm:$0xff]
    %v3002 = vld [vmem:[#allocation5 + $0x1d8] sm:$0xff]
    %v3003 = vld [vmem:[#allocation5 + $0x1e0] sm:$0xff]
    %v3004 = vld [vmem:[#allocation5 + $0x1e8] sm:$0xff]
    %v3005 = vld [vmem:[#allocation5 + $0x1f0] sm:$0xff]
    %v3006 = vld [vmem:[#allocation5 + $0x1f8] sm:$0xff]
    %v3007 = vld [vmem:[#allocation5 + $0x200] sm:$0xff]
    %v3008 = vld [vmem:[#allocation5 + $0x208] sm:$0xff]
    %v3009 = vld [vmem:[#allocation5 + $0x210] sm:$0xff]
    %v3010 = vld [vmem:[#allocation5 + $0x218] sm:$0xff]
    %v3011 = vld [vmem:[#allocation5 + $0x220] sm:$0xff]
    %v3012 = vld [vmem:[#allocation5 + $0x228] sm:$0xff]
    %v3013 = vld [vmem:[#allocation5 + $0x230] sm:$0xff]
    %v3014 = vld [vmem:[#allocation5 + $0x238] sm:$0xff]
    %v3015 = vld [vmem:[#allocation5 + $0x240] sm:$0xff]
    %v3016 = vld [vmem:[#allocation5 + $0x248] sm:$0xff]
    %v3017 = vld [vmem:[#allocation5 + $0x250] sm:$0xff]
    %v3018 = vld [vmem:[#allocation5 + $0x258] sm:$0xff]
    %v3019 = vld [vmem:[#allocation5 + $0x260] sm:$0xff]
    %v3020 = vld [vmem:[#allocation5 + $0x268] sm:$0xff]
    %v3021 = vld [vmem:[#allocation5 + $0x270] sm:$0xff]
    %v3022 = vld [vmem:[#allocation5 + $0x278] sm:$0xff]
    %v3023 = vld [vmem:[#allocation5 + $0x280] sm:$0xff]
    %v3024 = vld [vmem:[#allocation5 + $0x288] sm:$0xff]
    %v3025 = vld [vmem:[#allocation5 + $0x290] sm:$0xff]
    %v3026 = vld [vmem:[#allocation5 + $0x298] sm:$0xff]
    %v3027 = vld [vmem:[#allocation5 + $0x2a0] sm:$0xff]
    %v3028 = vld [vmem:[#allocation5 + $0x2a8] sm:$0xff]
    %v3029 = vld [vmem:[#allocation5 + $0x2b0] sm:$0xff]
    %v3030 = vld [vmem:[#allocation5 + $0x2b8] sm:$0xff]
    %v3031 = vld [vmem:[#allocation5 + $0x2c0] sm:$0xff]
    %v3032 = vld [vmem:[#allocation5 + $0x2c8] sm:$0xff]
    %v3033 = vld [vmem:[#allocation5 + $0x2d0] sm:$0xff]
    %v3034 = vld [vmem:[#allocation5 + $0x2d8] sm:$0xff]
    %v3035 = vld [vmem:[#allocation5 + $0x2e0] sm:$0xff]
    %v3036 = vld [vmem:[#allocation5 + $0x2e8] sm:$0xff]
    %v3037 = vld [vmem:[#allocation5 + $0x2f0] sm:$0xff]
    %v3038 = vld [vmem:[#allocation5 + $0x2f8] sm:$0xff]
    %v3039 = vld [vmem:[#allocation5 + $0x300] sm:$0xff]
    %v3040 = vld [vmem:[#allocation5 + $0x308] sm:$0xff]
    %v3041 = vld [vmem:[#allocation5 + $0x310] sm:$0xff]
    %v3042 = vld [vmem:[#allocation5 + $0x318] sm:$0xff]
    %v3043 = vld [vmem:[#allocation5 + $0x320] sm:$0xff]
    %v3044 = vld [vmem:[#allocation5 + $0x328] sm:$0xff]
    %v3045 = vld [vmem:[#allocation5 + $0x330] sm:$0xff]
    %v3046 = vld [vmem:[#allocation5 + $0x338] sm:$0xff]
    %v3047 = vld [vmem:[#allocation5 + $0x340] sm:$0xff]
    %v3048 = vld [vmem:[#allocation5 + $0x348] sm:$0xff]
    %v3049 = vld [vmem:[#allocation5 + $0x350] sm:$0xff]
    %v3050 = vld [vmem:[#allocation5 + $0x358] sm:$0xff]
    %v3051 = vld [vmem:[#allocation5 + $0x360] sm:$0xff]
    %v3052 = vld [vmem:[#allocation5 + $0x368] sm:$0xff]
    %v3053 = vld [vmem:[#allocation5 + $0x370] sm:$0xff]
    %v3054 = vld [vmem:[#allocation5 + $0x378] sm:$0xff]
    %v3055 = vld [vmem:[#allocation5 + $0x380] sm:$0xff]
    %v3056 = vld [vmem:[#allocation5 + $0x388] sm:$0xff]
    %v3057 = vld [vmem:[#allocation5 + $0x390] sm:$0xff]
    %v3058 = vld [vmem:[#allocation5 + $0x398] sm:$0xff]
    %v3059 = vld [vmem:[#allocation5 + $0x3a0] sm:$0xff]
    %v3060 = vld [vmem:[#allocation5 + $0x3a8] sm:$0xff]
    %v3061 = vld [vmem:[#allocation5 + $0x3b0] sm:$0xff]
    %v3062 = vld [vmem:[#allocation5 + $0x3b8] sm:$0xff]
    %v3063 = vld [vmem:[#allocation5 + $0x3c0] sm:$0xff]
    %v3064 = vld [vmem:[#allocation5 + $0x3c8] sm:$0xff]
    %v3065 = vld [vmem:[#allocation5 + $0x3d0] sm:$0xff]
    %v3066 = vld [vmem:[#allocation5 + $0x3d8] sm:$0xff]
    %v3067 = vld [vmem:[#allocation5 + $0x3e0] sm:$0xff]
    %v3068 = vld [vmem:[#allocation5 + $0x3e8] sm:$0xff]
    %v3069 = vld [vmem:[#allocation5 + $0x3f0] sm:$0xff]
    %v3070 = vld [vmem:[#allocation5 + $0x3f8] sm:$0xff]
    %3071 = vmatprep.subr.bf16.mxu0 %v2944
    %3072 = vmatpush1.bf16.msra.mxu0 %v2943
    %3073 = vmatprep.subr.bf16.mxu0 %v2952
    %3074 = vmatpush1.bf16.msra.mxu0 %v2951
    %3075 = vmatprep.subr.bf16.mxu0 %v2960
    %3076 = vmatpush1.bf16.msra.mxu0 %v2959
    %3077 = vmatprep.subr.bf16.mxu0 %v2968
    %3078 = vmatpush1.bf16.msra.mxu0 %v2967
    %3079 = vmatprep.subr.bf16.mxu0 %v2976
    %3080 = vmatpush1.bf16.msra.mxu0 %v2975
    %3081 = vmatprep.subr.bf16.mxu0 %v2984
    %3082 = vmatpush1.bf16.msra.mxu0 %v2983
    %3083 = vmatprep.subr.bf16.mxu0 %v2992
    %3084 = vmatpush1.bf16.msra.mxu0 %v2991
    %3085 = vmatprep.subr.bf16.mxu0 %v3000
    %3086 = vmatpush1.bf16.msra.mxu0 %v2999
    %3087 = vmatprep.subr.bf16.mxu0 %v3008
    %3088 = vmatpush1.bf16.msra.mxu0 %v3007
    %3089 = vmatprep.subr.bf16.mxu0 %v3016
    %3090 = vmatpush1.bf16.msra.mxu0 %v3015
    %3091 = vmatprep.subr.bf16.mxu0 %v3024
    %3092 = vmatpush1.bf16.msra.mxu0 %v3023
    %3093 = vmatprep.subr.bf16.mxu0 %v3032
    %3094 = vmatpush1.bf16.msra.mxu0 %v3031
    %3095 = vmatprep.subr.bf16.mxu0 %v3040
    %3096 = vmatpush1.bf16.msra.mxu0 %v3039
    %3097 = vmatprep.subr.bf16.mxu0 %v3048
    %3098 = vmatpush1.bf16.msra.mxu0 %v3047
    %3099 = vmatprep.subr.bf16.mxu0 %v3056
    %3100 = vmatpush1.bf16.msra.mxu0 %v3055
    %3101 = vmatprep.subr.bf16.mxu0 %v3064
    %3102 = vmatpush1.bf16.msra.mxu0 %v3063
    %3103 = vmatprep.mubr.bf16.mxu0 %v2942
    %3104 = vmatmul.mubr.bf16.gmra.mrb[0].mxu0 %v2941
    %v3105 = vpop.f32.mrb[0].mxu0
    %v3106 = vadd.f32 0.0, %v3105
    %v3107 = vpop.f32.mrb[0].mxu0
    %v3108 = vadd.f32 0.0, %v3107
    %v3109 = vpop.f32.mrb[0].mxu0
    %v3110 = vpop.f32.mrb[0].mxu0
    %3111 = vdwg.mxu0
    %3112 = vmatprep.subr.bf16.mxu0 %v2946
    %3113 = vmatpush1.bf16.msra.mxu0 %v2945
    %3114 = vmatprep.subr.bf16.mxu0 %v2954
    %3115 = vmatpush1.bf16.msra.mxu0 %v2953
    %3116 = vmatprep.subr.bf16.mxu0 %v2962
    %3117 = vmatpush1.bf16.msra.mxu0 %v2961
    %3118 = vmatprep.subr.bf16.mxu0 %v2970
    %3119 = vmatpush1.bf16.msra.mxu0 %v2969
    %3120 = vmatprep.subr.bf16.mxu0 %v2978
    %3121 = vmatpush1.bf16.msra.mxu0 %v2977
    %3122 = vmatprep.subr.bf16.mxu0 %v2986
    %3123 = vmatpush1.bf16.msra.mxu0 %v2985
    %3124 = vmatprep.subr.bf16.mxu0 %v2994
    %3125 = vmatpush1.bf16.msra.mxu0 %v2993
    %3126 = vmatprep.subr.bf16.mxu0 %v3002
    %3127 = vmatpush1.bf16.msra.mxu0 %v3001
    %3128 = vmatprep.subr.bf16.mxu0 %v3010
    %3129 = vmatpush1.bf16.msra.mxu0 %v3009
    %3130 = vmatprep.subr.bf16.mxu0 %v3018
    %3131 = vmatpush1.bf16.msra.mxu0 %v3017
    %3132 = vmatprep.subr.bf16.mxu0 %v3026
    %3133 = vmatpush1.bf16.msra.mxu0 %v3025
    %3134 = vmatprep.subr.bf16.mxu0 %v3034
    %3135 = vmatpush1.bf16.msra.mxu0 %v3033
    %3136 = vmatprep.subr.bf16.mxu0 %v3042
    %3137 = vmatpush1.bf16.msra.mxu0 %v3041
    %3138 = vmatprep.subr.bf16.mxu0 %v3050
    %3139 = vmatpush1.bf16.msra.mxu0 %v3049
    %3140 = vmatprep.subr.bf16.mxu0 %v3058
    %3141 = vmatpush1.bf16.msra.mxu0 %v3057
    %3142 = vmatprep.subr.bf16.mxu0 %v3066
    %3143 = vmatpush1.bf16.msra.mxu0 %v3065
    %3144 = vmatprep.mubr.bf16.mxu0 %v2942
    %3145 = vmatmul.mubr.bf16.gmra.mrb[0].mxu0 %v2941
    %v3146 = vpop.f32.mrb[0].mxu0
    %v3147 = vadd.f32 0.0, %v3146
    %v3148 = vpop.f32.mrb[0].mxu0
    %v3149 = vadd.f32 0.0, %v3148
    %v3150 = vpop.f32.mrb[0].mxu0
    %v3151 = vpop.f32.mrb[0].mxu0
    %3152 = vdwg.mxu0
    %3153 = vmatprep.subr.bf16.mxu0 %v2948
    %3154 = vmatpush1.bf16.msra.mxu0 %v2947
    %3155 = vmatprep.subr.bf16.mxu0 %v2956
    %3156 = vmatpush1.bf16.msra.mxu0 %v2955
    %3157 = vmatprep.subr.bf16.mxu0 %v2964
    %3158 = vmatpush1.bf16.msra.mxu0 %v2963
    %3159 = vmatprep.subr.bf16.mxu0 %v2972
    %3160 = vmatpush1.bf16.msra.mxu0 %v2971
    %3161 = vmatprep.subr.bf16.mxu0 %v2980
    %3162 = vmatpush1.bf16.msra.mxu0 %v2979
    %3163 = vmatprep.subr.bf16.mxu0 %v2988
    %3164 = vmatpush1.bf16.msra.mxu0 %v2987
    %3165 = vmatprep.subr.bf16.mxu0 %v2996
    %3166 = vmatpush1.bf16.msra.mxu0 %v2995
    %3167 = vmatprep.subr.bf16.mxu0 %v3004
    %3168 = vmatpush1.bf16.msra.mxu0 %v3003
    %3169 = vmatprep.subr.bf16.mxu0 %v3012
    %3170 = vmatpush1.bf16.msra.mxu0 %v3011
    %3171 = vmatprep.subr.bf16.mxu0 %v3020
    %3172 = vmatpush1.bf16.msra.mxu0 %v3019
    %3173 = vmatprep.subr.bf16.mxu0 %v3028
    %3174 = vmatpush1.bf16.msra.mxu0 %v3027
    %3175 = vmatprep.subr.bf16.mxu0 %v3036
    %3176 = vmatpush1.bf16.msra.mxu0 %v3035
    %3177 = vmatprep.subr.bf16.mxu0 %v3044
    %3178 = vmatpush1.bf16.msra.mxu0 %v3043
    %3179 = vmatprep.subr.bf16.mxu0 %v3052
    %3180 = vmatpush1.bf16.msra.mxu0 %v3051
    %3181 = vmatprep.subr.bf16.mxu0 %v3060
    %3182 = vmatpush1.bf16.msra.mxu0 %v3059
    %3183 = vmatprep.subr.bf16.mxu0 %v3068
    %3184 = vmatpush1.bf16.msra.mxu0 %v3067
    %3185 = vmatprep.mubr.bf16.mxu0 %v2942
    %3186 = vmatmul.mubr.bf16.gmra.mrb[0].mxu0 %v2941
    %v3187 = vpop.f32.mrb[0].mxu0
    %v3188 = vadd.f32 0.0, %v3187
    %v3189 = vpop.f32.mrb[0].mxu0
    %v3190 = vadd.f32 0.0, %v3189
    %v3191 = vpop.f32.mrb[0].mxu0
    %v3192 = vpop.f32.mrb[0].mxu0
    %3193 = vdwg.mxu0
    %3194 = vmatprep.subr.bf16.mxu0 %v2950
    %3195 = vmatpush1.bf16.msra.mxu0 %v2949
    %3196 = vmatprep.subr.bf16.mxu0 %v2958
    %3197 = vmatpush1.bf16.msra.mxu0 %v2957
    %3198 = vmatprep.subr.bf16.mxu0 %v2966
    %3199 = vmatpush1.bf16.msra.mxu0 %v2965
    %3200 = vmatprep.subr.bf16.mxu0 %v2974
    %3201 = vmatpush1.bf16.msra.mxu0 %v2973
    %3202 = vmatprep.subr.bf16.mxu0 %v2982
    %3203 = vmatpush1.bf16.msra.mxu0 %v2981
    %3204 = vmatprep.subr.bf16.mxu0 %v2990
    %3205 = vmatpush1.bf16.msra.mxu0 %v2989
    %3206 = vmatprep.subr.bf16.mxu0 %v2998
    %3207 = vmatpush1.bf16.msra.mxu0 %v2997
    %3208 = vmatprep.subr.bf16.mxu0 %v3006
    %3209 = vmatpush1.bf16.msra.mxu0 %v3005
    %3210 = vmatprep.subr.bf16.mxu0 %v3014
    %3211 = vmatpush1.bf16.msra.mxu0 %v3013
    %3212 = vmatprep.subr.bf16.mxu0 %v3022
    %3213 = vmatpush1.bf16.msra.mxu0 %v3021
    %3214 = vmatprep.subr.bf16.mxu0 %v3030
    %3215 = vmatpush1.bf16.msra.mxu0 %v3029
    %3216 = vmatprep.subr.bf16.mxu0 %v3038
    %3217 = vmatpush1.bf16.msra.mxu0 %v3037
    %3218 = vmatprep.subr.bf16.mxu0 %v3046
    %3219 = vmatpush1.bf16.msra.mxu0 %v3045
    %3220 = vmatprep.subr.bf16.mxu0 %v3054
    %3221 = vmatpush1.bf16.msra.mxu0 %v3053
    %3222 = vmatprep.subr.bf16.mxu0 %v3062
    %3223 = vmatpush1.bf16.msra.mxu0 %v3061
    %3224 = vmatprep.subr.bf16.mxu0 %v3070
    %3225 = vmatpush1.bf16.msra.mxu0 %v3069
    %3226 = vmatprep.mubr.bf16.mxu0 %v2942
    %3227 = vmatmul.mubr.bf16.gmra.mrb[0].mxu0 %v2941
    %v3228 = vpop.f32.mrb[0].mxu0
    %v3229 = vadd.f32 0.0, %v3228
    %v3230 = vpop.f32.mrb[0].mxu0
    %v3231 = vadd.f32 0.0, %v3230
    %v3232 = vpop.f32.mrb[0].mxu0
    %v3233 = vpop.f32.mrb[0].mxu0
    %3234 = vdwg.mxu0
    %v3235 = vadd.f32 %v2933, %v3106
    %v3236 = vadd.f32 %v2934, %v3108
    %v3237 = vadd.f32 %v2935, %v3147
    %v3238 = vadd.f32 %v2936, %v3149
    %v3239 = vadd.f32 %v2937, %v3188
    %v3240 = vadd.f32 %v2938, %v3190
    %v3241 = vadd.f32 %v2939, %v3229
    %v3242 = vadd.f32 %v2940, %v3231
    %v3243 = vld [vmem:[#allocation2 + $0x2c0] sm:$0xff]
    %v3244 = vld [vmem:[#allocation2 + $0x2c8] sm:$0xff]
    %v3245 = vld [vmem:[#allocation2 + $0x2d0] sm:$0xff]
    %v3246 = vld [vmem:[#allocation2 + $0x2d8] sm:$0xff]
    %v3247 = vld [vmem:[#allocation2 + $0x2e0] sm:$0xff]
    %v3248 = vld [vmem:[#allocation2 + $0x2e8] sm:$0xff]
    %v3249 = vld [vmem:[#allocation2 + $0x2f0] sm:$0xff]
    %v3250 = vld [vmem:[#allocation2 + $0x2f8] sm:$0xff]
    %v3251 = vpack.c.bf16 %v2927, %v2927
    %v3252 = vpack.c.bf16 %v2928, %v2928
    %v3253 = vld [vmem:[#allocation6] sm:$0xff]
    %v3254 = vld [vmem:[#allocation6 + $0x8] sm:$0xff]
    %v3255 = vld [vmem:[#allocation6 + $0x10] sm:$0xff]
    %v3256 = vld [vmem:[#allocation6 + $0x18] sm:$0xff]
    %v3257 = vld [vmem:[#allocation6 + $0x20] sm:$0xff]
    %v3258 = vld [vmem:[#allocation6 + $0x28] sm:$0xff]
    %v3259 = vld [vmem:[#allocation6 + $0x30] sm:$0xff]
    %v3260 = vld [vmem:[#allocation6 + $0x38] sm:$0xff]
    %v3261 = vld [vmem:[#allocation6 + $0x40] sm:$0xff]
    %v3262 = vld [vmem:[#allocation6 + $0x48] sm:$0xff]
    %v3263 = vld [vmem:[#allocation6 + $0x50] sm:$0xff]
    %v3264 = vld [vmem:[#allocation6 + $0x58] sm:$0xff]
    %v3265 = vld [vmem:[#allocation6 + $0x60] sm:$0xff]
    %v3266 = vld [vmem:[#allocation6 + $0x68] sm:$0xff]
    %v3267 = vld [vmem:[#allocation6 + $0x70] sm:$0xff]
    %v3268 = vld [vmem:[#allocation6 + $0x78] sm:$0xff]
    %v3269 = vld [vmem:[#allocation6 + $0x80] sm:$0xff]
    %v3270 = vld [vmem:[#allocation6 + $0x88] sm:$0xff]
    %v3271 = vld [vmem:[#allocation6 + $0x90] sm:$0xff]
    %v3272 = vld [vmem:[#allocation6 + $0x98] sm:$0xff]
    %v3273 = vld [vmem:[#allocation6 + $0xa0] sm:$0xff]
    %v3274 = vld [vmem:[#allocation6 + $0xa8] sm:$0xff]
    %v3275 = vld [vmem:[#allocation6 + $0xb0] sm:$0xff]
    %v3276 = vld [vmem:[#allocation6 + $0xb8] sm:$0xff]
    %v3277 = vld [vmem:[#allocation6 + $0xc0] sm:$0xff]
    %v3278 = vld [vmem:[#allocation6 + $0xc8] sm:$0xff]
    %v3279 = vld [vmem:[#allocation6 + $0xd0] sm:$0xff]
    %v3280 = vld [vmem:[#allocation6 + $0xd8] sm:$0xff]
    %v3281 = vld [vmem:[#allocation6 + $0xe0] sm:$0xff]
    %v3282 = vld [vmem:[#allocation6 + $0xe8] sm:$0xff]
    %v3283 = vld [vmem:[#allocation6 + $0xf0] sm:$0xff]
    %v3284 = vld [vmem:[#allocation6 + $0xf8] sm:$0xff]
    %v3285 = vld [vmem:[#allocation6 + $0x100] sm:$0xff]
    %v3286 = vld [vmem:[#allocation6 + $0x108] sm:$0xff]
    %v3287 = vld [vmem:[#allocation6 + $0x110] sm:$0xff]
    %v3288 = vld [vmem:[#allocation6 + $0x118] sm:$0xff]
    %v3289 = vld [vmem:[#allocation6 + $0x120] sm:$0xff]
    %v3290 = vld [vmem:[#allocation6 + $0x128] sm:$0xff]
    %v3291 = vld [vmem:[#allocation6 + $0x130] sm:$0xff]
    %v3292 = vld [vmem:[#allocation6 + $0x138] sm:$0xff]
    %v3293 = vld [vmem:[#allocation6 + $0x140] sm:$0xff]
    %v3294 = vld [vmem:[#allocation6 + $0x148] sm:$0xff]
    %v3295 = vld [vmem:[#allocation6 + $0x150] sm:$0xff]
    %v3296 = vld [vmem:[#allocation6 + $0x158] sm:$0xff]
    %v3297 = vld [vmem:[#allocation6 + $0x160] sm:$0xff]
    %v3298 = vld [vmem:[#allocation6 + $0x168] sm:$0xff]
    %v3299 = vld [vmem:[#allocation6 + $0x170] sm:$0xff]
    %v3300 = vld [vmem:[#allocation6 + $0x178] sm:$0xff]
    %v3301 = vld [vmem:[#allocation6 + $0x180] sm:$0xff]
    %v3302 = vld [vmem:[#allocation6 + $0x188] sm:$0xff]
    %v3303 = vld [vmem:[#allocation6 + $0x190] sm:$0xff]
    %v3304 = vld [vmem:[#allocation6 + $0x198] sm:$0xff]
    %v3305 = vld [vmem:[#allocation6 + $0x1a0] sm:$0xff]
    %v3306 = vld [vmem:[#allocation6 + $0x1a8] sm:$0xff]
    %v3307 = vld [vmem:[#allocation6 + $0x1b0] sm:$0xff]
    %v3308 = vld [vmem:[#allocation6 + $0x1b8] sm:$0xff]
    %v3309 = vld [vmem:[#allocation6 + $0x1c0] sm:$0xff]
    %v3310 = vld [vmem:[#allocation6 + $0x1c8] sm:$0xff]
    %v3311 = vld [vmem:[#allocation6 + $0x1d0] sm:$0xff]
    %v3312 = vld [vmem:[#allocation6 + $0x1d8] sm:$0xff]
    %v3313 = vld [vmem:[#allocation6 + $0x1e0] sm:$0xff]
    %v3314 = vld [vmem:[#allocation6 + $0x1e8] sm:$0xff]
    %v3315 = vld [vmem:[#allocation6 + $0x1f0] sm:$0xff]
    %v3316 = vld [vmem:[#allocation6 + $0x1f8] sm:$0xff]
    %v3317 = vld [vmem:[#allocation6 + $0x200] sm:$0xff]
    %v3318 = vld [vmem:[#allocation6 + $0x208] sm:$0xff]
    %v3319 = vld [vmem:[#allocation6 + $0x210] sm:$0xff]
    %v3320 = vld [vmem:[#allocation6 + $0x218] sm:$0xff]
    %v3321 = vld [vmem:[#allocation6 + $0x220] sm:$0xff]
    %v3322 = vld [vmem:[#allocation6 + $0x228] sm:$0xff]
    %v3323 = vld [vmem:[#allocation6 + $0x230] sm:$0xff]
    %v3324 = vld [vmem:[#allocation6 + $0x238] sm:$0xff]
    %v3325 = vld [vmem:[#allocation6 + $0x240] sm:$0xff]
    %v3326 = vld [vmem:[#allocation6 + $0x248] sm:$0xff]
    %v3327 = vld [vmem:[#allocation6 + $0x250] sm:$0xff]
    %v3328 = vld [vmem:[#allocation6 + $0x258] sm:$0xff]
    %v3329 = vld [vmem:[#allocation6 + $0x260] sm:$0xff]
    %v3330 = vld [vmem:[#allocation6 + $0x268] sm:$0xff]
    %v3331 = vld [vmem:[#allocation6 + $0x270] sm:$0xff]
    %v3332 = vld [vmem:[#allocation6 + $0x278] sm:$0xff]
    %v3333 = vld [vmem:[#allocation6 + $0x280] sm:$0xff]
    %v3334 = vld [vmem:[#allocation6 + $0x288] sm:$0xff]
    %v3335 = vld [vmem:[#allocation6 + $0x290] sm:$0xff]
    %v3336 = vld [vmem:[#allocation6 + $0x298] sm:$0xff]
    %v3337 = vld [vmem:[#allocation6 + $0x2a0] sm:$0xff]
    %v3338 = vld [vmem:[#allocation6 + $0x2a8] sm:$0xff]
    %v3339 = vld [vmem:[#allocation6 + $0x2b0] sm:$0xff]
    %v3340 = vld [vmem:[#allocation6 + $0x2b8] sm:$0xff]
    %v3341 = vld [vmem:[#allocation6 + $0x2c0] sm:$0xff]
    %v3342 = vld [vmem:[#allocation6 + $0x2c8] sm:$0xff]
    %v3343 = vld [vmem:[#allocation6 + $0x2d0] sm:$0xff]
    %v3344 = vld [vmem:[#allocation6 + $0x2d8] sm:$0xff]
    %v3345 = vld [vmem:[#allocation6 + $0x2e0] sm:$0xff]
    %v3346 = vld [vmem:[#allocation6 + $0x2e8] sm:$0xff]
    %v3347 = vld [vmem:[#allocation6 + $0x2f0] sm:$0xff]
    %v3348 = vld [vmem:[#allocation6 + $0x2f8] sm:$0xff]
    %v3349 = vld [vmem:[#allocation6 + $0x300] sm:$0xff]
    %v3350 = vld [vmem:[#allocation6 + $0x308] sm:$0xff]
    %v3351 = vld [vmem:[#allocation6 + $0x310] sm:$0xff]
    %v3352 = vld [vmem:[#allocation6 + $0x318] sm:$0xff]
    %v3353 = vld [vmem:[#allocation6 + $0x320] sm:$0xff]
    %v3354 = vld [vmem:[#allocation6 + $0x328] sm:$0xff]
    %v3355 = vld [vmem:[#allocation6 + $0x330] sm:$0xff]
    %v3356 = vld [vmem:[#allocation6 + $0x338] sm:$0xff]
    %v3357 = vld [vmem:[#allocation6 + $0x340] sm:$0xff]
    %v3358 = vld [vmem:[#allocation6 + $0x348] sm:$0xff]
    %v3359 = vld [vmem:[#allocation6 + $0x350] sm:$0xff]
    %v3360 = vld [vmem:[#allocation6 + $0x358] sm:$0xff]
    %v3361 = vld [vmem:[#allocation6 + $0x360] sm:$0xff]
    %v3362 = vld [vmem:[#allocation6 + $0x368] sm:$0xff]
    %v3363 = vld [vmem:[#allocation6 + $0x370] sm:$0xff]
    %v3364 = vld [vmem:[#allocation6 + $0x378] sm:$0xff]
    %v3365 = vld [vmem:[#allocation6 + $0x380] sm:$0xff]
    %v3366 = vld [vmem:[#allocation6 + $0x388] sm:$0xff]
    %v3367 = vld [vmem:[#allocation6 + $0x390] sm:$0xff]
    %v3368 = vld [vmem:[#allocation6 + $0x398] sm:$0xff]
    %v3369 = vld [vmem:[#allocation6 + $0x3a0] sm:$0xff]
    %v3370 = vld [vmem:[#allocation6 + $0x3a8] sm:$0xff]
    %v3371 = vld [vmem:[#allocation6 + $0x3b0] sm:$0xff]
    %v3372 = vld [vmem:[#allocation6 + $0x3b8] sm:$0xff]
    %v3373 = vld [vmem:[#allocation6 + $0x3c0] sm:$0xff]
    %v3374 = vld [vmem:[#allocation6 + $0x3c8] sm:$0xff]
    %v3375 = vld [vmem:[#allocation6 + $0x3d0] sm:$0xff]
    %v3376 = vld [vmem:[#allocation6 + $0x3d8] sm:$0xff]
    %v3377 = vld [vmem:[#allocation6 + $0x3e0] sm:$0xff]
    %v3378 = vld [vmem:[#allocation6 + $0x3e8] sm:$0xff]
    %v3379 = vld [vmem:[#allocation6 + $0x3f0] sm:$0xff]
    %v3380 = vld [vmem:[#allocation6 + $0x3f8] sm:$0xff]
    %3381 = vmatprep.subr.bf16.mxu0 %v3254
    %3382 = vmatpush1.bf16.msra.mxu0 %v3253
    %3383 = vmatprep.subr.bf16.mxu0 %v3262
    %3384 = vmatpush1.bf16.msra.mxu0 %v3261
    %3385 = vmatprep.subr.bf16.mxu0 %v3270
    %3386 = vmatpush1.bf16.msra.mxu0 %v3269
    %3387 = vmatprep.subr.bf16.mxu0 %v3278
    %3388 = vmatpush1.bf16.msra.mxu0 %v3277
    %3389 = vmatprep.subr.bf16.mxu0 %v3286
    %3390 = vmatpush1.bf16.msra.mxu0 %v3285
    %3391 = vmatprep.subr.bf16.mxu0 %v3294
    %3392 = vmatpush1.bf16.msra.mxu0 %v3293
    %3393 = vmatprep.subr.bf16.mxu0 %v3302
    %3394 = vmatpush1.bf16.msra.mxu0 %v3301
    %3395 = vmatprep.subr.bf16.mxu0 %v3310
    %3396 = vmatpush1.bf16.msra.mxu0 %v3309
    %3397 = vmatprep.subr.bf16.mxu0 %v3318
    %3398 = vmatpush1.bf16.msra.mxu0 %v3317
    %3399 = vmatprep.subr.bf16.mxu0 %v3326
    %3400 = vmatpush1.bf16.msra.mxu0 %v3325
    %3401 = vmatprep.subr.bf16.mxu0 %v3334
    %3402 = vmatpush1.bf16.msra.mxu0 %v3333
    %3403 = vmatprep.subr.bf16.mxu0 %v3342
    %3404 = vmatpush1.bf16.msra.mxu0 %v3341
    %3405 = vmatprep.subr.bf16.mxu0 %v3350
    %3406 = vmatpush1.bf16.msra.mxu0 %v3349
    %3407 = vmatprep.subr.bf16.mxu0 %v3358
    %3408 = vmatpush1.bf16.msra.mxu0 %v3357
    %3409 = vmatprep.subr.bf16.mxu0 %v3366
    %3410 = vmatpush1.bf16.msra.mxu0 %v3365
    %3411 = vmatprep.subr.bf16.mxu0 %v3374
    %3412 = vmatpush1.bf16.msra.mxu0 %v3373
    %3413 = vmatprep.mubr.bf16.mxu0 %v3252
    %3414 = vmatmul.mubr.bf16.gmra.mrb[0].mxu0 %v3251
    %v3415 = vpop.f32.mrb[0].mxu0
    %v3416 = vadd.f32 0.0, %v3415
    %v3417 = vpop.f32.mrb[0].mxu0
    %v3418 = vadd.f32 0.0, %v3417
    %v3419 = vpop.f32.mrb[0].mxu0
    %v3420 = vpop.f32.mrb[0].mxu0
    %3421 = vdwg.mxu0
    %3422 = vmatprep.subr.bf16.mxu0 %v3256
    %3423 = vmatpush1.bf16.msra.mxu0 %v3255
    %3424 = vmatprep.subr.bf16.mxu0 %v3264
    %3425 = vmatpush1.bf16.msra.mxu0 %v3263
    %3426 = vmatprep.subr.bf16.mxu0 %v3272
    %3427 = vmatpush1.bf16.msra.mxu0 %v3271
    %3428 = vmatprep.subr.bf16.mxu0 %v3280
    %3429 = vmatpush1.bf16.msra.mxu0 %v3279
    %3430 = vmatprep.subr.bf16.mxu0 %v3288
    %3431 = vmatpush1.bf16.msra.mxu0 %v3287
    %3432 = vmatprep.subr.bf16.mxu0 %v3296
    %3433 = vmatpush1.bf16.msra.mxu0 %v3295
    %3434 = vmatprep.subr.bf16.mxu0 %v3304
    %3435 = vmatpush1.bf16.msra.mxu0 %v3303
    %3436 = vmatprep.subr.bf16.mxu0 %v3312
    %3437 = vmatpush1.bf16.msra.mxu0 %v3311
    %3438 = vmatprep.subr.bf16.mxu0 %v3320
    %3439 = vmatpush1.bf16.msra.mxu0 %v3319
    %3440 = vmatprep.subr.bf16.mxu0 %v3328
    %3441 = vmatpush1.bf16.msra.mxu0 %v3327
    %3442 = vmatprep.subr.bf16.mxu0 %v3336
    %3443 = vmatpush1.bf16.msra.mxu0 %v3335
    %3444 = vmatprep.subr.bf16.mxu0 %v3344
    %3445 = vmatpush1.bf16.msra.mxu0 %v3343
    %3446 = vmatprep.subr.bf16.mxu0 %v3352
    %3447 = vmatpush1.bf16.msra.mxu0 %v3351
    %3448 = vmatprep.subr.bf16.mxu0 %v3360
    %3449 = vmatpush1.bf16.msra.mxu0 %v3359
    %3450 = vmatprep.subr.bf16.mxu0 %v3368
    %3451 = vmatpush1.bf16.msra.mxu0 %v3367
    %3452 = vmatprep.subr.bf16.mxu0 %v3376
    %3453 = vmatpush1.bf16.msra.mxu0 %v3375
    %3454 = vmatprep.mubr.bf16.mxu0 %v3252
    %3455 = vmatmul.mubr.bf16.gmra.mrb[0].mxu0 %v3251
    %v3456 = vpop.f32.mrb[0].mxu0
    %v3457 = vadd.f32 0.0, %v3456
    %v3458 = vpop.f32.mrb[0].mxu0
    %v3459 = vadd.f32 0.0, %v3458
    %v3460 = vpop.f32.mrb[0].mxu0
    %v3461 = vpop.f32.mrb[0].mxu0
    %3462 = vdwg.mxu0
    %3463 = vmatprep.subr.bf16.mxu0 %v3258
    %3464 = vmatpush1.bf16.msra.mxu0 %v3257
    %3465 = vmatprep.subr.bf16.mxu0 %v3266
    %3466 = vmatpush1.bf16.msra.mxu0 %v3265
    %3467 = vmatprep.subr.bf16.mxu0 %v3274
    %3468 = vmatpush1.bf16.msra.mxu0 %v3273
    %3469 = vmatprep.subr.bf16.mxu0 %v3282
    %3470 = vmatpush1.bf16.msra.mxu0 %v3281
    %3471 = vmatprep.subr.bf16.mxu0 %v3290
    %3472 = vmatpush1.bf16.msra.mxu0 %v3289
    %3473 = vmatprep.subr.bf16.mxu0 %v3298
    %3474 = vmatpush1.bf16.msra.mxu0 %v3297
    %3475 = vmatprep.subr.bf16.mxu0 %v3306
    %3476 = vmatpush1.bf16.msra.mxu0 %v3305
    %3477 = vmatprep.subr.bf16.mxu0 %v3314
    %3478 = vmatpush1.bf16.msra.mxu0 %v3313
    %3479 = vmatprep.subr.bf16.mxu0 %v3322
    %3480 = vmatpush1.bf16.msra.mxu0 %v3321
    %3481 = vmatprep.subr.bf16.mxu0 %v3330
    %3482 = vmatpush1.bf16.msra.mxu0 %v3329
    %3483 = vmatprep.subr.bf16.mxu0 %v3338
    %3484 = vmatpush1.bf16.msra.mxu0 %v3337
    %3485 = vmatprep.subr.bf16.mxu0 %v3346
    %3486 = vmatpush1.bf16.msra.mxu0 %v3345
    %3487 = vmatprep.subr.bf16.mxu0 %v3354
    %3488 = vmatpush1.bf16.msra.mxu0 %v3353
    %3489 = vmatprep.subr.bf16.mxu0 %v3362
    %3490 = vmatpush1.bf16.msra.mxu0 %v3361
    %3491 = vmatprep.subr.bf16.mxu0 %v3370
    %3492 = vmatpush1.bf16.msra.mxu0 %v3369
    %3493 = vmatprep.subr.bf16.mxu0 %v3378
    %3494 = vmatpush1.bf16.msra.mxu0 %v3377
    %3495 = vmatprep.mubr.bf16.mxu0 %v3252
    %3496 = vmatmul.mubr.bf16.gmra.mrb[0].mxu0 %v3251
    %v3497 = vpop.f32.mrb[0].mxu0
    %v3498 = vadd.f32 0.0, %v3497
    %v3499 = vpop.f32.mrb[0].mxu0
    %v3500 = vadd.f32 0.0, %v3499
    %v3501 = vpop.f32.mrb[0].mxu0
    %v3502 = vpop.f32.mrb[0].mxu0
    %3503 = vdwg.mxu0
    %3504 = vmatprep.subr.bf16.mxu0 %v3260
    %3505 = vmatpush1.bf16.msra.mxu0 %v3259
    %3506 = vmatprep.subr.bf16.mxu0 %v3268
    %3507 = vmatpush1.bf16.msra.mxu0 %v3267
    %3508 = vmatprep.subr.bf16.mxu0 %v3276
    %3509 = vmatpush1.bf16.msra.mxu0 %v3275
    %3510 = vmatprep.subr.bf16.mxu0 %v3284
    %3511 = vmatpush1.bf16.msra.mxu0 %v3283
    %3512 = vmatprep.subr.bf16.mxu0 %v3292
    %3513 = vmatpush1.bf16.msra.mxu0 %v3291
    %3514 = vmatprep.subr.bf16.mxu0 %v3300
    %3515 = vmatpush1.bf16.msra.mxu0 %v3299
    %3516 = vmatprep.subr.bf16.mxu0 %v3308
    %3517 = vmatpush1.bf16.msra.mxu0 %v3307
    %3518 = vmatprep.subr.bf16.mxu0 %v3316
    %3519 = vmatpush1.bf16.msra.mxu0 %v3315
    %3520 = vmatprep.subr.bf16.mxu0 %v3324
    %3521 = vmatpush1.bf16.msra.mxu0 %v3323
    %3522 = vmatprep.subr.bf16.mxu0 %v3332
    %3523 = vmatpush1.bf16.msra.mxu0 %v3331
    %3524 = vmatprep.subr.bf16.mxu0 %v3340
    %3525 = vmatpush1.bf16.msra.mxu0 %v3339
    %3526 = vmatprep.subr.bf16.mxu0 %v3348
    %3527 = vmatpush1.bf16.msra.mxu0 %v3347
    %3528 = vmatprep.subr.bf16.mxu0 %v3356
    %3529 = vmatpush1.bf16.msra.mxu0 %v3355
    %3530 = vmatprep.subr.bf16.mxu0 %v3364
    %3531 = vmatpush1.bf16.msra.mxu0 %v3363
    %3532 = vmatprep.subr.bf16.mxu0 %v3372
    %3533 = vmatpush1.bf16.msra.mxu0 %v3371
    %3534 = vmatprep.subr.bf16.mxu0 %v3380
    %3535 = vmatpush1.bf16.msra.mxu0 %v3379
    %3536 = vmatprep.mubr.bf16.mxu0 %v3252
    %3537 = vmatmul.mubr.bf16.gmra.mrb[0].mxu0 %v3251
    %v3538 = vpop.f32.mrb[0].mxu0
    %v3539 = vadd.f32 0.0, %v3538
    %v3540 = vpop.f32.mrb[0].mxu0
    %v3541 = vadd.f32 0.0, %v3540
    %v3542 = vpop.f32.mrb[0].mxu0
    %v3543 = vpop.f32.mrb[0].mxu0
    %3544 = vdwg.mxu0
    %v3545 = vadd.f32 %v3243, %v3416
    %v3546 = vadd.f32 %v3244, %v3418
    %v3547 = vadd.f32 %v3245, %v3457
    %v3548 = vadd.f32 %v3246, %v3459
    %v3549 = vadd.f32 %v3247, %v3498
    %v3550 = vadd.f32 %v3248, %v3500
    %v3551 = vadd.f32 %v3249, %v3539
    %v3552 = vadd.f32 %v3250, %v3541
    %v3553 = vxor.u32 %v3235, 2147483648
    %v3554 = vxor.u32 %v3236, 2147483648
    %v3555 = vmul.f32 %v3553, 1.442695
    %v3556 = vpow.pop %v3555
    %v3557 = vmul.f32 %v3554, 1.442695
    %v3558 = vpow.pop %v3557
    %v3559 = vadd.f32 %v3556, 1.0
    %v3560 = vadd.f32 %v3558, 1.0
    %v3561 = vrcp.pop %v3559
    %v3562 = vmul.f32 1.0, %v3561
    %v3563 = vrcp.pop %v3560
    %v3564 = vmul.f32 1.0, %v3563
    %v3565 = vxor.u32 %v3237, 2147483648
    %v3566 = vxor.u32 %v3238, 2147483648
    %v3567 = vmul.f32 %v3565, 1.442695
    %v3568 = vpow.pop %v3567
    %v3569 = vmul.f32 %v3566, 1.442695
    %v3570 = vpow.pop %v3569
    %v3571 = vadd.f32 %v3568, 1.0
    %v3572 = vadd.f32 %v3570, 1.0
    %v3573 = vrcp.pop %v3571
    %v3574 = vmul.f32 1.0, %v3573
    %v3575 = vrcp.pop %v3572
    %v3576 = vmul.f32 1.0, %v3575
    %v3577 = vtanh.pop %v3239
    %v3578 = vtanh.pop %v3240
    %v3579 = vxor.u32 %v3241, 2147483648
    %v3580 = vxor.u32 %v3242, 2147483648
    %v3581 = vmul.f32 %v3579, 1.442695
    %v3582 = vpow.pop %v3581
    %v3583 = vmul.f32 %v3580, 1.442695
    %v3584 = vpow.pop %v3583
    %v3585 = vadd.f32 %v3582, 1.0
    %v3586 = vadd.f32 %v3584, 1.0
    %v3587 = vrcp.pop %v3585
    %v3588 = vmul.f32 1.0, %v3587
    %v3589 = vrcp.pop %v3586
    %v3590 = vmul.f32 1.0, %v3589
    %v3591 = vmul.f32 %v3574, %v2875
    %v3592 = vmul.f32 %v3576, %v2876
    %v3593 = vmul.f32 %v3562, %v3577
    %v3594 = vmul.f32 %v3564, %v3578
    %v3595 = vadd.f32 %v3591, %v3593
    %v3596 = vadd.f32 %v3592, %v3594
    %v3597 = vtanh.pop %v3595
    %v3598 = vtanh.pop %v3596
    %v3599 = vmul.f32 %v3588, %v3597
    %v3600 = vmul.f32 %v3590, %v3598
    %v3601 = vxor.u32 %v3545, 2147483648
    %v3602 = vxor.u32 %v3546, 2147483648
    %v3603 = vmul.f32 %v3601, 1.442695
    %v3604 = vpow.pop %v3603
    %v3605 = vmul.f32 %v3602, 1.442695
    %v3606 = vpow.pop %v3605
    %v3607 = vadd.f32 %v3604, 1.0
    %v3608 = vadd.f32 %v3606, 1.0
    %v3609 = vrcp.pop %v3607
    %v3610 = vmul.f32 1.0, %v3609
    %v3611 = vrcp.pop %v3608
    %v3612 = vmul.f32 1.0, %v3611
    %v3613 = vxor.u32 %v3547, 2147483648
    %v3614 = vxor.u32 %v3548, 2147483648
    %v3615 = vmul.f32 %v3613, 1.442695
    %v3616 = vpow.pop %v3615
    %v3617 = vmul.f32 %v3614, 1.442695
    %v3618 = vpow.pop %v3617
    %v3619 = vadd.f32 %v3616, 1.0
    %v3620 = vadd.f32 %v3618, 1.0
    %v3621 = vrcp.pop %v3619
    %v3622 = vmul.f32 1.0, %v3621
    %v3623 = vrcp.pop %v3620
    %v3624 = vmul.f32 1.0, %v3623
    %v3625 = vtanh.pop %v3549
    %v3626 = vtanh.pop %v3550
    %v3627 = vxor.u32 %v3551, 2147483648
    %v3628 = vxor.u32 %v3552, 2147483648
    %v3629 = vmul.f32 %v3627, 1.442695
    %v3630 = vpow.pop %v3629
    %v3631 = vmul.f32 %v3628, 1.442695
    %v3632 = vpow.pop %v3631
    %v3633 = vadd.f32 %v3630, 1.0
    %v3634 = vadd.f32 %v3632, 1.0
    %v3635 = vrcp.pop %v3633
    %v3636 = vmul.f32 1.0, %v3635
    %v3637 = vrcp.pop %v3634
    %v3638 = vmul.f32 1.0, %v3637
    %v3639 = vmul.f32 %v3622, %v2923
    %v3640 = vmul.f32 %v3624, %v2924
    %v3641 = vmul.f32 %v3610, %v3625
    %v3642 = vmul.f32 %v3612, %v3626
    %v3643 = vadd.f32 %v3639, %v3641
    %v3644 = vadd.f32 %v3640, %v3642
    %v3645 = vtanh.pop %v3643
    %v3646 = vtanh.pop %v3644
    %v3647 = vmul.f32 %v3636, %v3645
    %v3648 = vmul.f32 %v3638, %v3646
    %3649 = vst [vmem:[#allocation3 + $0x40] sm:$0xff] %v3599
    %3650 = vst [vmem:[#allocation3 + $0x48] sm:$0xff] %v3600
    %3651 = vst [vmem:[#allocation3 + $0xb0] sm:$0xff] %v3647
    %3652 = vst [vmem:[#allocation3 + $0xb8] sm:$0xff] %v3648
    %v3653 = vld [vmem:[#allocation2 + $0x180] sm:$0xff]
    %v3654 = vld [vmem:[#allocation2 + $0x188] sm:$0xff]
    %v3655 = vld [vmem:[#allocation2 + $0x190] sm:$0xff]
    %v3656 = vld [vmem:[#allocation2 + $0x198] sm:$0xff]
    %v3657 = vld [vmem:[#allocation2 + $0x1a0] sm:$0xff]
    %v3658 = vld [vmem:[#allocation2 + $0x1a8] sm:$0xff]
    %v3659 = vld [vmem:[#allocation2 + $0x1b0] sm:$0xff]
    %v3660 = vld [vmem:[#allocation2 + $0x1b8] sm:$0xff]
    %v3661 = vpack.c.bf16 %v3599, %v3599
    %v3662 = vpack.c.bf16 %v3600, %v3600
    %v3663 = vld [vmem:[#allocation5] sm:$0xff]
    %v3664 = vld [vmem:[#allocation5 + $0x8] sm:$0xff]
    %v3665 = vld [vmem:[#allocation5 + $0x10] sm:$0xff]
    %v3666 = vld [vmem:[#allocation5 + $0x18] sm:$0xff]
    %v3667 = vld [vmem:[#allocation5 + $0x20] sm:$0xff]
    %v3668 = vld [vmem:[#allocation5 + $0x28] sm:$0xff]
    %v3669 = vld [vmem:[#allocation5 + $0x30] sm:$0xff]
    %v3670 = vld [vmem:[#allocation5 + $0x38] sm:$0xff]
    %v3671 = vld [vmem:[#allocation5 + $0x40] sm:$0xff]
    %v3672 = vld [vmem:[#allocation5 + $0x48] sm:$0xff]
    %v3673 = vld [vmem:[#allocation5 + $0x50] sm:$0xff]
    %v3674 = vld [vmem:[#allocation5 + $0x58] sm:$0xff]
    %v3675 = vld [vmem:[#allocation5 + $0x60] sm:$0xff]
    %v3676 = vld [vmem:[#allocation5 + $0x68] sm:$0xff]
    %v3677 = vld [vmem:[#allocation5 + $0x70] sm:$0xff]
    %v3678 = vld [vmem:[#allocation5 + $0x78] sm:$0xff]
    %v3679 = vld [vmem:[#allocation5 + $0x80] sm:$0xff]
    %v3680 = vld [vmem:[#allocation5 + $0x88] sm:$0xff]
    %v3681 = vld [vmem:[#allocation5 + $0x90] sm:$0xff]
    %v3682 = vld [vmem:[#allocation5 + $0x98] sm:$0xff]
    %v3683 = vld [vmem:[#allocation5 + $0xa0] sm:$0xff]
    %v3684 = vld [vmem:[#allocation5 + $0xa8] sm:$0xff]
    %v3685 = vld [vmem:[#allocation5 + $0xb0] sm:$0xff]
    %v3686 = vld [vmem:[#allocation5 + $0xb8] sm:$0xff]
    %v3687 = vld [vmem:[#allocation5 + $0xc0] sm:$0xff]
    %v3688 = vld [vmem:[#allocation5 + $0xc8] sm:$0xff]
    %v3689 = vld [vmem:[#allocation5 + $0xd0] sm:$0xff]
    %v3690 = vld [vmem:[#allocation5 + $0xd8] sm:$0xff]
    %v3691 = vld [vmem:[#allocation5 + $0xe0] sm:$0xff]
    %v3692 = vld [vmem:[#allocation5 + $0xe8] sm:$0xff]
    %v3693 = vld [vmem:[#allocation5 + $0xf0] sm:$0xff]
    %v3694 = vld [vmem:[#allocation5 + $0xf8] sm:$0xff]
    %v3695 = vld [vmem:[#allocation5 + $0x100] sm:$0xff]
    %v3696 = vld [vmem:[#allocation5 + $0x108] sm:$0xff]
    %v3697 = vld [vmem:[#allocation5 + $0x110] sm:$0xff]
    %v3698 = vld [vmem:[#allocation5 + $0x118] sm:$0xff]
    %v3699 = vld [vmem:[#allocation5 + $0x120] sm:$0xff]
    %v3700 = vld [vmem:[#allocation5 + $0x128] sm:$0xff]
    %v3701 = vld [vmem:[#allocation5 + $0x130] sm:$0xff]
    %v3702 = vld [vmem:[#allocation5 + $0x138] sm:$0xff]
    %v3703 = vld [vmem:[#allocation5 + $0x140] sm:$0xff]
    %v3704 = vld [vmem:[#allocation5 + $0x148] sm:$0xff]
    %v3705 = vld [vmem:[#allocation5 + $0x150] sm:$0xff]
    %v3706 = vld [vmem:[#allocation5 + $0x158] sm:$0xff]
    %v3707 = vld [vmem:[#allocation5 + $0x160] sm:$0xff]
    %v3708 = vld [vmem:[#allocation5 + $0x168] sm:$0xff]
    %v3709 = vld [vmem:[#allocation5 + $0x170] sm:$0xff]
    %v3710 = vld [vmem:[#allocation5 + $0x178] sm:$0xff]
    %v3711 = vld [vmem:[#allocation5 + $0x180] sm:$0xff]
    %v3712 = vld [vmem:[#allocation5 + $0x188] sm:$0xff]
    %v3713 = vld [vmem:[#allocation5 + $0x190] sm:$0xff]
    %v3714 = vld [vmem:[#allocation5 + $0x198] sm:$0xff]
    %v3715 = vld [vmem:[#allocation5 + $0x1a0] sm:$0xff]
    %v3716 = vld [vmem:[#allocation5 + $0x1a8] sm:$0xff]
    %v3717 = vld [vmem:[#allocation5 + $0x1b0] sm:$0xff]
    %v3718 = vld [vmem:[#allocation5 + $0x1b8] sm:$0xff]
    %v3719 = vld [vmem:[#allocation5 + $0x1c0] sm:$0xff]
    %v3720 = vld [vmem:[#allocation5 + $0x1c8] sm:$0xff]
    %v3721 = vld [vmem:[#allocation5 + $0x1d0] sm:$0xff]
    %v3722 = vld [vmem:[#allocation5 + $0x1d8] sm:$0xff]
    %v3723 = vld [vmem:[#allocation5 + $0x1e0] sm:$0xff]
    %v3724 = vld [vmem:[#allocation5 + $0x1e8] sm:$0xff]
    %v3725 = vld [vmem:[#allocation5 + $0x1f0] sm:$0xff]
    %v3726 = vld [vmem:[#allocation5 + $0x1f8] sm:$0xff]
    %v3727 = vld [vmem:[#allocation5 + $0x200] sm:$0xff]
    %v3728 = vld [vmem:[#allocation5 + $0x208] sm:$0xff]
    %v3729 = vld [vmem:[#allocation5 + $0x210] sm:$0xff]
    %v3730 = vld [vmem:[#allocation5 + $0x218] sm:$0xff]
    %v3731 = vld [vmem:[#allocation5 + $0x220] sm:$0xff]
    %v3732 = vld [vmem:[#allocation5 + $0x228] sm:$0xff]
    %v3733 = vld [vmem:[#allocation5 + $0x230] sm:$0xff]
    %v3734 = vld [vmem:[#allocation5 + $0x238] sm:$0xff]
    %v3735 = vld [vmem:[#allocation5 + $0x240] sm:$0xff]
    %v3736 = vld [vmem:[#allocation5 + $0x248] sm:$0xff]
    %v3737 = vld [vmem:[#allocation5 + $0x250] sm:$0xff]
    %v3738 = vld [vmem:[#allocation5 + $0x258] sm:$0xff]
    %v3739 = vld [vmem:[#allocation5 + $0x260] sm:$0xff]
    %v3740 = vld [vmem:[#allocation5 + $0x268] sm:$0xff]
    %v3741 = vld [vmem:[#allocation5 + $0x270] sm:$0xff]
    %v3742 = vld [vmem:[#allocation5 + $0x278] sm:$0xff]
    %v3743 = vld [vmem:[#allocation5 + $0x280] sm:$0xff]
    %v3744 = vld [vmem:[#allocation5 + $0x288] sm:$0xff]
    %v3745 = vld [vmem:[#allocation5 + $0x290] sm:$0xff]
    %v3746 = vld [vmem:[#allocation5 + $0x298] sm:$0xff]
    %v3747 = vld [vmem:[#allocation5 + $0x2a0] sm:$0xff]
    %v3748 = vld [vmem:[#allocation5 + $0x2a8] sm:$0xff]
    %v3749 = vld [vmem:[#allocation5 + $0x2b0] sm:$0xff]
    %v3750 = vld [vmem:[#allocation5 + $0x2b8] sm:$0xff]
    %v3751 = vld [vmem:[#allocation5 + $0x2c0] sm:$0xff]
    %v3752 = vld [vmem:[#allocation5 + $0x2c8] sm:$0xff]
    %v3753 = vld [vmem:[#allocation5 + $0x2d0] sm:$0xff]
    %v3754 = vld [vmem:[#allocation5 + $0x2d8] sm:$0xff]
    %v3755 = vld [vmem:[#allocation5 + $0x2e0] sm:$0xff]
    %v3756 = vld [vmem:[#allocation5 + $0x2e8] sm:$0xff]
    %v3757 = vld [vmem:[#allocation5 + $0x2f0] sm:$0xff]
    %v3758 = vld [vmem:[#allocation5 + $0x2f8] sm:$0xff]
    %v3759 = vld [vmem:[#allocation5 + $0x300] sm:$0xff]
    %v3760 = vld [vmem:[#allocation5 + $0x308] sm:$0xff]
    %v3761 = vld [vmem:[#allocation5 + $0x310] sm:$0xff]
    %v3762 = vld [vmem:[#allocation5 + $0x318] sm:$0xff]
    %v3763 = vld [vmem:[#allocation5 + $0x320] sm:$0xff]
    %v3764 = vld [vmem:[#allocation5 + $0x328] sm:$0xff]
    %v3765 = vld [vmem:[#allocation5 + $0x330] sm:$0xff]
    %v3766 = vld [vmem:[#allocation5 + $0x338] sm:$0xff]
    %v3767 = vld [vmem:[#allocation5 + $0x340] sm:$0xff]
    %v3768 = vld [vmem:[#allocation5 + $0x348] sm:$0xff]
    %v3769 = vld [vmem:[#allocation5 + $0x350] sm:$0xff]
    %v3770 = vld [vmem:[#allocation5 + $0x358] sm:$0xff]
    %v3771 = vld [vmem:[#allocation5 + $0x360] sm:$0xff]
    %v3772 = vld [vmem:[#allocation5 + $0x368] sm:$0xff]
    %v3773 = vld [vmem:[#allocation5 + $0x370] sm:$0xff]
    %v3774 = vld [vmem:[#allocation5 + $0x378] sm:$0xff]
    %v3775 = vld [vmem:[#allocation5 + $0x380] sm:$0xff]
    %v3776 = vld [vmem:[#allocation5 + $0x388] sm:$0xff]
    %v3777 = vld [vmem:[#allocation5 + $0x390] sm:$0xff]
    %v3778 = vld [vmem:[#allocation5 + $0x398] sm:$0xff]
    %v3779 = vld [vmem:[#allocation5 + $0x3a0] sm:$0xff]
    %v3780 = vld [vmem:[#allocation5 + $0x3a8] sm:$0xff]
    %v3781 = vld [vmem:[#allocation5 + $0x3b0] sm:$0xff]
    %v3782 = vld [vmem:[#allocation5 + $0x3b8] sm:$0xff]
    %v3783 = vld [vmem:[#allocation5 + $0x3c0] sm:$0xff]
    %v3784 = vld [vmem:[#allocation5 + $0x3c8] sm:$0xff]
    %v3785 = vld [vmem:[#allocation5 + $0x3d0] sm:$0xff]
    %v3786 = vld [vmem:[#allocation5 + $0x3d8] sm:$0xff]
    %v3787 = vld [vmem:[#allocation5 + $0x3e0] sm:$0xff]
    %v3788 = vld [vmem:[#allocation5 + $0x3e8] sm:$0xff]
    %v3789 = vld [vmem:[#allocation5 + $0x3f0] sm:$0xff]
    %v3790 = vld [vmem:[#allocation5 + $0x3f8] sm:$0xff]
    %3791 = vmatprep.subr.bf16.mxu0 %v3664
    %3792 = vmatpush1.bf16.msra.mxu0 %v3663
    %3793 = vmatprep.subr.bf16.mxu0 %v3672
    %3794 = vmatpush1.bf16.msra.mxu0 %v3671
    %3795 = vmatprep.subr.bf16.mxu0 %v3680
    %3796 = vmatpush1.bf16.msra.mxu0 %v3679
    %3797 = vmatprep.subr.bf16.mxu0 %v3688
    %3798 = vmatpush1.bf16.msra.mxu0 %v3687
    %3799 = vmatprep.subr.bf16.mxu0 %v3696
    %3800 = vmatpush1.bf16.msra.mxu0 %v3695
    %3801 = vmatprep.subr.bf16.mxu0 %v3704
    %3802 = vmatpush1.bf16.msra.mxu0 %v3703
    %3803 = vmatprep.subr.bf16.mxu0 %v3712
    %3804 = vmatpush1.bf16.msra.mxu0 %v3711
    %3805 = vmatprep.subr.bf16.mxu0 %v3720
    %3806 = vmatpush1.bf16.msra.mxu0 %v3719
    %3807 = vmatprep.subr.bf16.mxu0 %v3728
    %3808 = vmatpush1.bf16.msra.mxu0 %v3727
    %3809 = vmatprep.subr.bf16.mxu0 %v3736
    %3810 = vmatpush1.bf16.msra.mxu0 %v3735
    %3811 = vmatprep.subr.bf16.mxu0 %v3744
    %3812 = vmatpush1.bf16.msra.mxu0 %v3743
    %3813 = vmatprep.subr.bf16.mxu0 %v3752
    %3814 = vmatpush1.bf16.msra.mxu0 %v3751
    %3815 = vmatprep.subr.bf16.mxu0 %v3760
    %3816 = vmatpush1.bf16.msra.mxu0 %v3759
    %3817 = vmatprep.subr.bf16.mxu0 %v3768
    %3818 = vmatpush1.bf16.msra.mxu0 %v3767
    %3819 = vmatprep.subr.bf16.mxu0 %v3776
    %3820 = vmatpush1.bf16.msra.mxu0 %v3775
    %3821 = vmatprep.subr.bf16.mxu0 %v3784
    %3822 = vmatpush1.bf16.msra.mxu0 %v3783
    %3823 = vmatprep.mubr.bf16.mxu0 %v3662
    %3824 = vmatmul.mubr.bf16.gmra.mrb[0].mxu0 %v3661
    %v3825 = vpop.f32.mrb[0].mxu0
    %v3826 = vadd.f32 0.0, %v3825
    %v3827 = vpop.f32.mrb[0].mxu0
    %v3828 = vadd.f32 0.0, %v3827
    %v3829 = vpop.f32.mrb[0].mxu0
    %v3830 = vpop.f32.mrb[0].mxu0
    %3831 = vdwg.mxu0
    %3832 = vmatprep.subr.bf16.mxu0 %v3666
    %3833 = vmatpush1.bf16.msra.mxu0 %v3665
    %3834 = vmatprep.subr.bf16.mxu0 %v3674
    %3835 = vmatpush1.bf16.msra.mxu0 %v3673
    %3836 = vmatprep.subr.bf16.mxu0 %v3682
    %3837 = vmatpush1.bf16.msra.mxu0 %v3681
    %3838 = vmatprep.subr.bf16.mxu0 %v3690
    %3839 = vmatpush1.bf16.msra.mxu0 %v3689
    %3840 = vmatprep.subr.bf16.mxu0 %v3698
    %3841 = vmatpush1.bf16.msra.mxu0 %v3697
    %3842 = vmatprep.subr.bf16.mxu0 %v3706
    %3843 = vmatpush1.bf16.msra.mxu0 %v3705
    %3844 = vmatprep.subr.bf16.mxu0 %v3714
    %3845 = vmatpush1.bf16.msra.mxu0 %v3713
    %3846 = vmatprep.subr.bf16.mxu0 %v3722
    %3847 = vmatpush1.bf16.msra.mxu0 %v3721
    %3848 = vmatprep.subr.bf16.mxu0 %v3730
    %3849 = vmatpush1.bf16.msra.mxu0 %v3729
    %3850 = vmatprep.subr.bf16.mxu0 %v3738
    %3851 = vmatpush1.bf16.msra.mxu0 %v3737
    %3852 = vmatprep.subr.bf16.mxu0 %v3746
    %3853 = vmatpush1.bf16.msra.mxu0 %v3745
    %3854 = vmatprep.subr.bf16.mxu0 %v3754
    %3855 = vmatpush1.bf16.msra.mxu0 %v3753
    %3856 = vmatprep.subr.bf16.mxu0 %v3762
    %3857 = vmatpush1.bf16.msra.mxu0 %v3761
    %3858 = vmatprep.subr.bf16.mxu0 %v3770
    %3859 = vmatpush1.bf16.msra.mxu0 %v3769
    %3860 = vmatprep.subr.bf16.mxu0 %v3778
    %3861 = vmatpush1.bf16.msra.mxu0 %v3777
    %3862 = vmatprep.subr.bf16.mxu0 %v3786
    %3863 = vmatpush1.bf16.msra.mxu0 %v3785
    %3864 = vmatprep.mubr.bf16.mxu0 %v3662
    %3865 = vmatmul.mubr.bf16.gmra.mrb[0].mxu0 %v3661
    %v3866 = vpop.f32.mrb[0].mxu0
    %v3867 = vadd.f32 0.0, %v3866
    %v3868 = vpop.f32.mrb[0].mxu0
    %v3869 = vadd.f32 0.0, %v3868
    %v3870 = vpop.f32.mrb[0].mxu0
    %v3871 = vpop.f32.mrb[0].mxu0
    %3872 = vdwg.mxu0
    %3873 = vmatprep.subr.bf16.mxu0 %v3668
    %3874 = vmatpush1.bf16.msra.mxu0 %v3667
    %3875 = vmatprep.subr.bf16.mxu0 %v3676
    %3876 = vmatpush1.bf16.msra.mxu0 %v3675
    %3877 = vmatprep.subr.bf16.mxu0 %v3684
    %3878 = vmatpush1.bf16.msra.mxu0 %v3683
    %3879 = vmatprep.subr.bf16.mxu0 %v3692
    %3880 = vmatpush1.bf16.msra.mxu0 %v3691
    %3881 = vmatprep.subr.bf16.mxu0 %v3700
    %3882 = vmatpush1.bf16.msra.mxu0 %v3699
    %3883 = vmatprep.subr.bf16.mxu0 %v3708
    %3884 = vmatpush1.bf16.msra.mxu0 %v3707
    %3885 = vmatprep.subr.bf16.mxu0 %v3716
    %3886 = vmatpush1.bf16.msra.mxu0 %v3715
    %3887 = vmatprep.subr.bf16.mxu0 %v3724
    %3888 = vmatpush1.bf16.msra.mxu0 %v3723
    %3889 = vmatprep.subr.bf16.mxu0 %v3732
    %3890 = vmatpush1.bf16.msra.mxu0 %v3731
    %3891 = vmatprep.subr.bf16.mxu0 %v3740
    %3892 = vmatpush1.bf16.msra.mxu0 %v3739
    %3893 = vmatprep.subr.bf16.mxu0 %v3748
    %3894 = vmatpush1.bf16.msra.mxu0 %v3747
    %3895 = vmatprep.subr.bf16.mxu0 %v3756
    %3896 = vmatpush1.bf16.msra.mxu0 %v3755
    %3897 = vmatprep.subr.bf16.mxu0 %v3764
    %3898 = vmatpush1.bf16.msra.mxu0 %v3763
    %3899 = vmatprep.subr.bf16.mxu0 %v3772
    %3900 = vmatpush1.bf16.msra.mxu0 %v3771
    %3901 = vmatprep.subr.bf16.mxu0 %v3780
    %3902 = vmatpush1.bf16.msra.mxu0 %v3779
    %3903 = vmatprep.subr.bf16.mxu0 %v3788
    %3904 = vmatpush1.bf16.msra.mxu0 %v3787
    %3905 = vmatprep.mubr.bf16.mxu0 %v3662
    %3906 = vmatmul.mubr.bf16.gmra.mrb[0].mxu0 %v3661
    %v3907 = vpop.f32.mrb[0].mxu0
    %v3908 = vadd.f32 0.0, %v3907
    %v3909 = vpop.f32.mrb[0].mxu0
    %v3910 = vadd.f32 0.0, %v3909
    %v3911 = vpop.f32.mrb[0].mxu0
    %v3912 = vpop.f32.mrb[0].mxu0
    %3913 = vdwg.mxu0
    %3914 = vmatprep.subr.bf16.mxu0 %v3670
    %3915 = vmatpush1.bf16.msra.mxu0 %v3669
    %3916 = vmatprep.subr.bf16.mxu0 %v3678
    %3917 = vmatpush1.bf16.msra.mxu0 %v3677
    %3918 = vmatprep.subr.bf16.mxu0 %v3686
    %3919 = vmatpush1.bf16.msra.mxu0 %v3685
    %3920 = vmatprep.subr.bf16.mxu0 %v3694
    %3921 = vmatpush1.bf16.msra.mxu0 %v3693
    %3922 = vmatprep.subr.bf16.mxu0 %v3702
    %3923 = vmatpush1.bf16.msra.mxu0 %v3701
    %3924 = vmatprep.subr.bf16.mxu0 %v3710
    %3925 = vmatpush1.bf16.msra.mxu0 %v3709
    %3926 = vmatprep.subr.bf16.mxu0 %v3718
    %3927 = vmatpush1.bf16.msra.mxu0 %v3717
    %3928 = vmatprep.subr.bf16.mxu0 %v3726
    %3929 = vmatpush1.bf16.msra.mxu0 %v3725
    %3930 = vmatprep.subr.bf16.mxu0 %v3734
    %3931 = vmatpush1.bf16.msra.mxu0 %v3733
    %3932 = vmatprep.subr.bf16.mxu0 %v3742
    %3933 = vmatpush1.bf16.msra.mxu0 %v3741
    %3934 = vmatprep.subr.bf16.mxu0 %v3750
    %3935 = vmatpush1.bf16.msra.mxu0 %v3749
    %3936 = vmatprep.subr.bf16.mxu0 %v3758
    %3937 = vmatpush1.bf16.msra.mxu0 %v3757
    %3938 = vmatprep.subr.bf16.mxu0 %v3766
    %3939 = vmatpush1.bf16.msra.mxu0 %v3765
    %3940 = vmatprep.subr.bf16.mxu0 %v3774
    %3941 = vmatpush1.bf16.msra.mxu0 %v3773
    %3942 = vmatprep.subr.bf16.mxu0 %v3782
    %3943 = vmatpush1.bf16.msra.mxu0 %v3781
    %3944 = vmatprep.subr.bf16.mxu0 %v3790
    %3945 = vmatpush1.bf16.msra.mxu0 %v3789
    %3946 = vmatprep.mubr.bf16.mxu0 %v3662
    %3947 = vmatmul.mubr.bf16.gmra.mrb[0].mxu0 %v3661
    %v3948 = vpop.f32.mrb[0].mxu0
    %v3949 = vadd.f32 0.0, %v3948
    %v3950 = vpop.f32.mrb[0].mxu0
    %v3951 = vadd.f32 0.0, %v3950
    %v3952 = vpop.f32.mrb[0].mxu0
    %v3953 = vpop.f32.mrb[0].mxu0
    %3954 = vdwg.mxu0
    %v3955 = vadd.f32 %v3653, %v3826
    %v3956 = vadd.f32 %v3654, %v3828
    %v3957 = vadd.f32 %v3655, %v3867
    %v3958 = vadd.f32 %v3656, %v3869
    %v3959 = vadd.f32 %v3657, %v3908
    %v3960 = vadd.f32 %v3658, %v3910
    %v3961 = vadd.f32 %v3659, %v3949
    %v3962 = vadd.f32 %v3660, %v3951
    %v3963 = vld [vmem:[#allocation2 + $0x240] sm:$0xff]
    %v3964 = vld [vmem:[#allocation2 + $0x248] sm:$0xff]
    %v3965 = vld [vmem:[#allocation2 + $0x250] sm:$0xff]
    %v3966 = vld [vmem:[#allocation2 + $0x258] sm:$0xff]
    %v3967 = vld [vmem:[#allocation2 + $0x260] sm:$0xff]
    %v3968 = vld [vmem:[#allocation2 + $0x268] sm:$0xff]
    %v3969 = vld [vmem:[#allocation2 + $0x270] sm:$0xff]
    %v3970 = vld [vmem:[#allocation2 + $0x278] sm:$0xff]
    %v3971 = vpack.c.bf16 %v3647, %v3647
    %v3972 = vpack.c.bf16 %v3648, %v3648
    %v3973 = vld [vmem:[#allocation6] sm:$0xff]
    %v3974 = vld [vmem:[#allocation6 + $0x8] sm:$0xff]
    %v3975 = vld [vmem:[#allocation6 + $0x10] sm:$0xff]
    %v3976 = vld [vmem:[#allocation6 + $0x18] sm:$0xff]
    %v3977 = vld [vmem:[#allocation6 + $0x20] sm:$0xff]
    %v3978 = vld [vmem:[#allocation6 + $0x28] sm:$0xff]
    %v3979 = vld [vmem:[#allocation6 + $0x30] sm:$0xff]
    %v3980 = vld [vmem:[#allocation6 + $0x38] sm:$0xff]
    %v3981 = vld [vmem:[#allocation6 + $0x40] sm:$0xff]
    %v3982 = vld [vmem:[#allocation6 + $0x48] sm:$0xff]
    %v3983 = vld [vmem:[#allocation6 + $0x50] sm:$0xff]
    %v3984 = vld [vmem:[#allocation6 + $0x58] sm:$0xff]
    %v3985 = vld [vmem:[#allocation6 + $0x60] sm:$0xff]
    %v3986 = vld [vmem:[#allocation6 + $0x68] sm:$0xff]
    %v3987 = vld [vmem:[#allocation6 + $0x70] sm:$0xff]
    %v3988 = vld [vmem:[#allocation6 + $0x78] sm:$0xff]
    %v3989 = vld [vmem:[#allocation6 + $0x80] sm:$0xff]
    %v3990 = vld [vmem:[#allocation6 + $0x88] sm:$0xff]
    %v3991 = vld [vmem:[#allocation6 + $0x90] sm:$0xff]
    %v3992 = vld [vmem:[#allocation6 + $0x98] sm:$0xff]
    %v3993 = vld [vmem:[#allocation6 + $0xa0] sm:$0xff]
    %v3994 = vld [vmem:[#allocation6 + $0xa8] sm:$0xff]
    %v3995 = vld [vmem:[#allocation6 + $0xb0] sm:$0xff]
    %v3996 = vld [vmem:[#allocation6 + $0xb8] sm:$0xff]
    %v3997 = vld [vmem:[#allocation6 + $0xc0] sm:$0xff]
    %v3998 = vld [vmem:[#allocation6 + $0xc8] sm:$0xff]
    %v3999 = vld [vmem:[#allocation6 + $0xd0] sm:$0xff]
    %v4000 = vld [vmem:[#allocation6 + $0xd8] sm:$0xff]
    %v4001 = vld [vmem:[#allocation6 + $0xe0] sm:$0xff]
    %v4002 = vld [vmem:[#allocation6 + $0xe8] sm:$0xff]
    %v4003 = vld [vmem:[#allocation6 + $0xf0] sm:$0xff]
    %v4004 = vld [vmem:[#allocation6 + $0xf8] sm:$0xff]
    %v4005 = vld [vmem:[#allocation6 + $0x100] sm:$0xff]
    %v4006 = vld [vmem:[#allocation6 + $0x108] sm:$0xff]
    %v4007 = vld [vmem:[#allocation6 + $0x110] sm:$0xff]
    %v4008 = vld [vmem:[#allocation6 + $0x118] sm:$0xff]
    %v4009 = vld [vmem:[#allocation6 + $0x120] sm:$0xff]
    %v4010 = vld [vmem:[#allocation6 + $0x128] sm:$0xff]
    %v4011 = vld [vmem:[#allocation6 + $0x130] sm:$0xff]
    %v4012 = vld [vmem:[#allocation6 + $0x138] sm:$0xff]
    %v4013 = vld [vmem:[#allocation6 + $0x140] sm:$0xff]
    %v4014 = vld [vmem:[#allocation6 + $0x148] sm:$0xff]
    %v4015 = vld [vmem:[#allocation6 + $0x150] sm:$0xff]
    %v4016 = vld [vmem:[#allocation6 + $0x158] sm:$0xff]
    %v4017 = vld [vmem:[#allocation6 + $0x160] sm:$0xff]
    %v4018 = vld [vmem:[#allocation6 + $0x168] sm:$0xff]
    %v4019 = vld [vmem:[#allocation6 + $0x170] sm:$0xff]
    %v4020 = vld [vmem:[#allocation6 + $0x178] sm:$0xff]
    %v4021 = vld [vmem:[#allocation6 + $0x180] sm:$0xff]
    %v4022 = vld [vmem:[#allocation6 + $0x188] sm:$0xff]
    %v4023 = vld [vmem:[#allocation6 + $0x190] sm:$0xff]
    %v4024 = vld [vmem:[#allocation6 + $0x198] sm:$0xff]
    %v4025 = vld [vmem:[#allocation6 + $0x1a0] sm:$0xff]
    %v4026 = vld [vmem:[#allocation6 + $0x1a8] sm:$0xff]
    %v4027 = vld [vmem:[#allocation6 + $0x1b0] sm:$0xff]
    %v4028 = vld [vmem:[#allocation6 + $0x1b8] sm:$0xff]
    %v4029 = vld [vmem:[#allocation6 + $0x1c0] sm:$0xff]
    %v4030 = vld [vmem:[#allocation6 + $0x1c8] sm:$0xff]
    %v4031 = vld [vmem:[#allocation6 + $0x1d0] sm:$0xff]
    %v4032 = vld [vmem:[#allocation6 + $0x1d8] sm:$0xff]
    %v4033 = vld [vmem:[#allocation6 + $0x1e0] sm:$0xff]
    %v4034 = vld [vmem:[#allocation6 + $0x1e8] sm:$0xff]
    %v4035 = vld [vmem:[#allocation6 + $0x1f0] sm:$0xff]
    %v4036 = vld [vmem:[#allocation6 + $0x1f8] sm:$0xff]
    %v4037 = vld [vmem:[#allocation6 + $0x200] sm:$0xff]
    %v4038 = vld [vmem:[#allocation6 + $0x208] sm:$0xff]
    %v4039 = vld [vmem:[#allocation6 + $0x210] sm:$0xff]
    %v4040 = vld [vmem:[#allocation6 + $0x218] sm:$0xff]
    %v4041 = vld [vmem:[#allocation6 + $0x220] sm:$0xff]
    %v4042 = vld [vmem:[#allocation6 + $0x228] sm:$0xff]
    %v4043 = vld [vmem:[#allocation6 + $0x230] sm:$0xff]
    %v4044 = vld [vmem:[#allocation6 + $0x238] sm:$0xff]
    %v4045 = vld [vmem:[#allocation6 + $0x240] sm:$0xff]
    %v4046 = vld [vmem:[#allocation6 + $0x248] sm:$0xff]
    %v4047 = vld [vmem:[#allocation6 + $0x250] sm:$0xff]
    %v4048 = vld [vmem:[#allocation6 + $0x258] sm:$0xff]
    %v4049 = vld [vmem:[#allocation6 + $0x260] sm:$0xff]
    %v4050 = vld [vmem:[#allocation6 + $0x268] sm:$0xff]
    %v4051 = vld [vmem:[#allocation6 + $0x270] sm:$0xff]
    %v4052 = vld [vmem:[#allocation6 + $0x278] sm:$0xff]
    %v4053 = vld [vmem:[#allocation6 + $0x280] sm:$0xff]
    %v4054 = vld [vmem:[#allocation6 + $0x288] sm:$0xff]
    %v4055 = vld [vmem:[#allocation6 + $0x290] sm:$0xff]
    %v4056 = vld [vmem:[#allocation6 + $0x298] sm:$0xff]
    %v4057 = vld [vmem:[#allocation6 + $0x2a0] sm:$0xff]
    %v4058 = vld [vmem:[#allocation6 + $0x2a8] sm:$0xff]
    %v4059 = vld [vmem:[#allocation6 + $0x2b0] sm:$0xff]
    %v4060 = vld [vmem:[#allocation6 + $0x2b8] sm:$0xff]
    %v4061 = vld [vmem:[#allocation6 + $0x2c0] sm:$0xff]
    %v4062 = vld [vmem:[#allocation6 + $0x2c8] sm:$0xff]
    %v4063 = vld [vmem:[#allocation6 + $0x2d0] sm:$0xff]
    %v4064 = vld [vmem:[#allocation6 + $0x2d8] sm:$0xff]
    %v4065 = vld [vmem:[#allocation6 + $0x2e0] sm:$0xff]
    %v4066 = vld [vmem:[#allocation6 + $0x2e8] sm:$0xff]
    %v4067 = vld [vmem:[#allocation6 + $0x2f0] sm:$0xff]
    %v4068 = vld [vmem:[#allocation6 + $0x2f8] sm:$0xff]
    %v4069 = vld [vmem:[#allocation6 + $0x300] sm:$0xff]
    %v4070 = vld [vmem:[#allocation6 + $0x308] sm:$0xff]
    %v4071 = vld [vmem:[#allocation6 + $0x310] sm:$0xff]
    %v4072 = vld [vmem:[#allocation6 + $0x318] sm:$0xff]
    %v4073 = vld [vmem:[#allocation6 + $0x320] sm:$0xff]
    %v4074 = vld [vmem:[#allocation6 + $0x328] sm:$0xff]
    %v4075 = vld [vmem:[#allocation6 + $0x330] sm:$0xff]
    %v4076 = vld [vmem:[#allocation6 + $0x338] sm:$0xff]
    %v4077 = vld [vmem:[#allocation6 + $0x340] sm:$0xff]
    %v4078 = vld [vmem:[#allocation6 + $0x348] sm:$0xff]
    %v4079 = vld [vmem:[#allocation6 + $0x350] sm:$0xff]
    %v4080 = vld [vmem:[#allocation6 + $0x358] sm:$0xff]
    %v4081 = vld [vmem:[#allocation6 + $0x360] sm:$0xff]
    %v4082 = vld [vmem:[#allocation6 + $0x368] sm:$0xff]
    %v4083 = vld [vmem:[#allocation6 + $0x370] sm:$0xff]
    %v4084 = vld [vmem:[#allocation6 + $0x378] sm:$0xff]
    %v4085 = vld [vmem:[#allocation6 + $0x380] sm:$0xff]
    %v4086 = vld [vmem:[#allocation6 + $0x388] sm:$0xff]
    %v4087 = vld [vmem:[#allocation6 + $0x390] sm:$0xff]
    %v4088 = vld [vmem:[#allocation6 + $0x398] sm:$0xff]
    %v4089 = vld [vmem:[#allocation6 + $0x3a0] sm:$0xff]
    %v4090 = vld [vmem:[#allocation6 + $0x3a8] sm:$0xff]
    %v4091 = vld [vmem:[#allocation6 + $0x3b0] sm:$0xff]
    %v4092 = vld [vmem:[#allocation6 + $0x3b8] sm:$0xff]
    %v4093 = vld [vmem:[#allocation6 + $0x3c0] sm:$0xff]
    %v4094 = vld [vmem:[#allocation6 + $0x3c8] sm:$0xff]
    %v4095 = vld [vmem:[#allocation6 + $0x3d0] sm:$0xff]
    %v4096 = vld [vmem:[#allocation6 + $0x3d8] sm:$0xff]
    %v4097 = vld [vmem:[#allocation6 + $0x3e0] sm:$0xff]
    %v4098 = vld [vmem:[#allocation6 + $0x3e8] sm:$0xff]
    %v4099 = vld [vmem:[#allocation6 + $0x3f0] sm:$0xff]
    %v4100 = vld [vmem:[#allocation6 + $0x3f8] sm:$0xff]
    %4101 = vmatprep.subr.bf16.mxu0 %v3974
    %4102 = vmatpush1.bf16.msra.mxu0 %v3973
    %4103 = vmatprep.subr.bf16.mxu0 %v3982
    %4104 = vmatpush1.bf16.msra.mxu0 %v3981
    %4105 = vmatprep.subr.bf16.mxu0 %v3990
    %4106 = vmatpush1.bf16.msra.mxu0 %v3989
    %4107 = vmatprep.subr.bf16.mxu0 %v3998
    %4108 = vmatpush1.bf16.msra.mxu0 %v3997
    %4109 = vmatprep.subr.bf16.mxu0 %v4006
    %4110 = vmatpush1.bf16.msra.mxu0 %v4005
    %4111 = vmatprep.subr.bf16.mxu0 %v4014
    %4112 = vmatpush1.bf16.msra.mxu0 %v4013
    %4113 = vmatprep.subr.bf16.mxu0 %v4022
    %4114 = vmatpush1.bf16.msra.mxu0 %v4021
    %4115 = vmatprep.subr.bf16.mxu0 %v4030
    %4116 = vmatpush1.bf16.msra.mxu0 %v4029
    %4117 = vmatprep.subr.bf16.mxu0 %v4038
    %4118 = vmatpush1.bf16.msra.mxu0 %v4037
    %4119 = vmatprep.subr.bf16.mxu0 %v4046
    %4120 = vmatpush1.bf16.msra.mxu0 %v4045
    %4121 = vmatprep.subr.bf16.mxu0 %v4054
    %4122 = vmatpush1.bf16.msra.mxu0 %v4053
    %4123 = vmatprep.subr.bf16.mxu0 %v4062
    %4124 = vmatpush1.bf16.msra.mxu0 %v4061
    %4125 = vmatprep.subr.bf16.mxu0 %v4070
    %4126 = vmatpush1.bf16.msra.mxu0 %v4069
    %4127 = vmatprep.subr.bf16.mxu0 %v4078
    %4128 = vmatpush1.bf16.msra.mxu0 %v4077
    %4129 = vmatprep.subr.bf16.mxu0 %v4086
    %4130 = vmatpush1.bf16.msra.mxu0 %v4085
    %4131 = vmatprep.subr.bf16.mxu0 %v4094
    %4132 = vmatpush1.bf16.msra.mxu0 %v4093
    %4133 = vmatprep.mubr.bf16.mxu0 %v3972
    %4134 = vmatmul.mubr.bf16.gmra.mrb[0].mxu0 %v3971
    %v4135 = vpop.f32.mrb[0].mxu0
    %v4136 = vadd.f32 0.0, %v4135
    %v4137 = vpop.f32.mrb[0].mxu0
    %v4138 = vadd.f32 0.0, %v4137
    %v4139 = vpop.f32.mrb[0].mxu0
    %v4140 = vpop.f32.mrb[0].mxu0
    %4141 = vdwg.mxu0
    %4142 = vmatprep.subr.bf16.mxu0 %v3976
    %4143 = vmatpush1.bf16.msra.mxu0 %v3975
    %4144 = vmatprep.subr.bf16.mxu0 %v3984
    %4145 = vmatpush1.bf16.msra.mxu0 %v3983
    %4146 = vmatprep.subr.bf16.mxu0 %v3992
    %4147 = vmatpush1.bf16.msra.mxu0 %v3991
    %4148 = vmatprep.subr.bf16.mxu0 %v4000
    %4149 = vmatpush1.bf16.msra.mxu0 %v3999
    %4150 = vmatprep.subr.bf16.mxu0 %v4008
    %4151 = vmatpush1.bf16.msra.mxu0 %v4007
    %4152 = vmatprep.subr.bf16.mxu0 %v4016
    %4153 = vmatpush1.bf16.msra.mxu0 %v4015
    %4154 = vmatprep.subr.bf16.mxu0 %v4024
    %4155 = vmatpush1.bf16.msra.mxu0 %v4023
    %4156 = vmatprep.subr.bf16.mxu0 %v4032
    %4157 = vmatpush1.bf16.msra.mxu0 %v4031
    %4158 = vmatprep.subr.bf16.mxu0 %v4040
    %4159 = vmatpush1.bf16.msra.mxu0 %v4039
    %4160 = vmatprep.subr.bf16.mxu0 %v4048
    %4161 = vmatpush1.bf16.msra.mxu0 %v4047
    %4162 = vmatprep.subr.bf16.mxu0 %v4056
    %4163 = vmatpush1.bf16.msra.mxu0 %v4055
    %4164 = vmatprep.subr.bf16.mxu0 %v4064
    %4165 = vmatpush1.bf16.msra.mxu0 %v4063
    %4166 = vmatprep.subr.bf16.mxu0 %v4072
    %4167 = vmatpush1.bf16.msra.mxu0 %v4071
    %4168 = vmatprep.subr.bf16.mxu0 %v4080
    %4169 = vmatpush1.bf16.msra.mxu0 %v4079
    %4170 = vmatprep.subr.bf16.mxu0 %v4088
    %4171 = vmatpush1.bf16.msra.mxu0 %v4087
    %4172 = vmatprep.subr.bf16.mxu0 %v4096
    %4173 = vmatpush1.bf16.msra.mxu0 %v4095
    %4174 = vmatprep.mubr.bf16.mxu0 %v3972
    %4175 = vmatmul.mubr.bf16.gmra.mrb[0].mxu0 %v3971
    %v4176 = vpop.f32.mrb[0].mxu0
    %v4177 = vadd.f32 0.0, %v4176
    %v4178 = vpop.f32.mrb[0].mxu0
    %v4179 = vadd.f32 0.0, %v4178
    %v4180 = vpop.f32.mrb[0].mxu0
    %v4181 = vpop.f32.mrb[0].mxu0
    %4182 = vdwg.mxu0
    %4183 = vmatprep.subr.bf16.mxu0 %v3978
    %4184 = vmatpush1.bf16.msra.mxu0 %v3977
    %4185 = vmatprep.subr.bf16.mxu0 %v3986
    %4186 = vmatpush1.bf16.msra.mxu0 %v3985
    %4187 = vmatprep.subr.bf16.mxu0 %v3994
    %4188 = vmatpush1.bf16.msra.mxu0 %v3993
    %4189 = vmatprep.subr.bf16.mxu0 %v4002
    %4190 = vmatpush1.bf16.msra.mxu0 %v4001
    %4191 = vmatprep.subr.bf16.mxu0 %v4010
    %4192 = vmatpush1.bf16.msra.mxu0 %v4009
    %4193 = vmatprep.subr.bf16.mxu0 %v4018
    %4194 = vmatpush1.bf16.msra.mxu0 %v4017
    %4195 = vmatprep.subr.bf16.mxu0 %v4026
    %4196 = vmatpush1.bf16.msra.mxu0 %v4025
    %4197 = vmatprep.subr.bf16.mxu0 %v4034
    %4198 = vmatpush1.bf16.msra.mxu0 %v4033
    %4199 = vmatprep.subr.bf16.mxu0 %v4042
    %4200 = vmatpush1.bf16.msra.mxu0 %v4041
    %4201 = vmatprep.subr.bf16.mxu0 %v4050
    %4202 = vmatpush1.bf16.msra.mxu0 %v4049
    %4203 = vmatprep.subr.bf16.mxu0 %v4058
    %4204 = vmatpush1.bf16.msra.mxu0 %v4057
    %4205 = vmatprep.subr.bf16.mxu0 %v4066
    %4206 = vmatpush1.bf16.msra.mxu0 %v4065
    %4207 = vmatprep.subr.bf16.mxu0 %v4074
    %4208 = vmatpush1.bf16.msra.mxu0 %v4073
    %4209 = vmatprep.subr.bf16.mxu0 %v4082
    %4210 = vmatpush1.bf16.msra.mxu0 %v4081
    %4211 = vmatprep.subr.bf16.mxu0 %v4090
    %4212 = vmatpush1.bf16.msra.mxu0 %v4089
    %4213 = vmatprep.subr.bf16.mxu0 %v4098
    %4214 = vmatpush1.bf16.msra.mxu0 %v4097
    %4215 = vmatprep.mubr.bf16.mxu0 %v3972
    %4216 = vmatmul.mubr.bf16.gmra.mrb[0].mxu0 %v3971
    %v4217 = vpop.f32.mrb[0].mxu0
    %v4218 = vadd.f32 0.0, %v4217
    %v4219 = vpop.f32.mrb[0].mxu0
    %v4220 = vadd.f32 0.0, %v4219
    %v4221 = vpop.f32.mrb[0].mxu0
    %v4222 = vpop.f32.mrb[0].mxu0
    %4223 = vdwg.mxu0
    %4224 = vmatprep.subr.bf16.mxu0 %v3980
    %4225 = vmatpush1.bf16.msra.mxu0 %v3979
    %4226 = vmatprep.subr.bf16.mxu0 %v3988
    %4227 = vmatpush1.bf16.msra.mxu0 %v3987
    %4228 = vmatprep.subr.bf16.mxu0 %v3996
    %4229 = vmatpush1.bf16.msra.mxu0 %v3995
    %4230 = vmatprep.subr.bf16.mxu0 %v4004
    %4231 = vmatpush1.bf16.msra.mxu0 %v4003
    %4232 = vmatprep.subr.bf16.mxu0 %v4012
    %4233 = vmatpush1.bf16.msra.mxu0 %v4011
    %4234 = vmatprep.subr.bf16.mxu0 %v4020
    %4235 = vmatpush1.bf16.msra.mxu0 %v4019
    %4236 = vmatprep.subr.bf16.mxu0 %v4028
    %4237 = vmatpush1.bf16.msra.mxu0 %v4027
    %4238 = vmatprep.subr.bf16.mxu0 %v4036
    %4239 = vmatpush1.bf16.msra.mxu0 %v4035
    %4240 = vmatprep.subr.bf16.mxu0 %v4044
    %4241 = vmatpush1.bf16.msra.mxu0 %v4043
    %4242 = vmatprep.subr.bf16.mxu0 %v4052
    %4243 = vmatpush1.bf16.msra.mxu0 %v4051
    %4244 = vmatprep.subr.bf16.mxu0 %v4060
    %4245 = vmatpush1.bf16.msra.mxu0 %v4059
    %4246 = vmatprep.subr.bf16.mxu0 %v4068
    %4247 = vmatpush1.bf16.msra.mxu0 %v4067
    %4248 = vmatprep.subr.bf16.mxu0 %v4076
    %4249 = vmatpush1.bf16.msra.mxu0 %v4075
    %4250 = vmatprep.subr.bf16.mxu0 %v4084
    %4251 = vmatpush1.bf16.msra.mxu0 %v4083
    %4252 = vmatprep.subr.bf16.mxu0 %v4092
    %4253 = vmatpush1.bf16.msra.mxu0 %v4091
    %4254 = vmatprep.subr.bf16.mxu0 %v4100
    %4255 = vmatpush1.bf16.msra.mxu0 %v4099
    %4256 = vmatprep.mubr.bf16.mxu0 %v3972
    %4257 = vmatmul.mubr.bf16.gmra.mrb[0].mxu0 %v3971
    %v4258 = vpop.f32.mrb[0].mxu0
    %v4259 = vadd.f32 0.0, %v4258
    %v4260 = vpop.f32.mrb[0].mxu0
    %v4261 = vadd.f32 0.0, %v4260
    %v4262 = vpop.f32.mrb[0].mxu0
    %v4263 = vpop.f32.mrb[0].mxu0
    %4264 = vdwg.mxu0
    %v4265 = vadd.f32 %v3963, %v4136
    %v4266 = vadd.f32 %v3964, %v4138
    %v4267 = vadd.f32 %v3965, %v4177
    %v4268 = vadd.f32 %v3966, %v4179
    %v4269 = vadd.f32 %v3967, %v4218
    %v4270 = vadd.f32 %v3968, %v4220
    %v4271 = vadd.f32 %v3969, %v4259
    %v4272 = vadd.f32 %v3970, %v4261
    %v4273 = vxor.u32 %v3955, 2147483648
    %v4274 = vxor.u32 %v3956, 2147483648
    %v4275 = vmul.f32 %v4273, 1.442695
    %v4276 = vpow.pop %v4275
    %v4277 = vmul.f32 %v4274, 1.442695
    %v4278 = vpow.pop %v4277
    %v4279 = vadd.f32 %v4276, 1.0
    %v4280 = vadd.f32 %v4278, 1.0
    %v4281 = vrcp.pop %v4279
    %v4282 = vmul.f32 1.0, %v4281
    %v4283 = vrcp.pop %v4280
    %v4284 = vmul.f32 1.0, %v4283
    %v4285 = vxor.u32 %v3957, 2147483648
    %v4286 = vxor.u32 %v3958, 2147483648
    %v4287 = vmul.f32 %v4285, 1.442695
    %v4288 = vpow.pop %v4287
    %v4289 = vmul.f32 %v4286, 1.442695
    %v4290 = vpow.pop %v4289
    %v4291 = vadd.f32 %v4288, 1.0
    %v4292 = vadd.f32 %v4290, 1.0
    %v4293 = vrcp.pop %v4291
    %v4294 = vmul.f32 1.0, %v4293
    %v4295 = vrcp.pop %v4292
    %v4296 = vmul.f32 1.0, %v4295
    %v4297 = vtanh.pop %v3959
    %v4298 = vtanh.pop %v3960
    %v4299 = vxor.u32 %v3961, 2147483648
    %v4300 = vxor.u32 %v3962, 2147483648
    %v4301 = vmul.f32 %v4299, 1.442695
    %v4302 = vpow.pop %v4301
    %v4303 = vmul.f32 %v4300, 1.442695
    %v4304 = vpow.pop %v4303
    %v4305 = vadd.f32 %v4302, 1.0
    %v4306 = vadd.f32 %v4304, 1.0
    %v4307 = vrcp.pop %v4305
    %v4308 = vmul.f32 1.0, %v4307
    %v4309 = vrcp.pop %v4306
    %v4310 = vmul.f32 1.0, %v4309
    %v4311 = vmul.f32 %v4294, %v3595
    %v4312 = vmul.f32 %v4296, %v3596
    %v4313 = vmul.f32 %v4282, %v4297
    %v4314 = vmul.f32 %v4284, %v4298
    %v4315 = vadd.f32 %v4311, %v4313
    %v4316 = vadd.f32 %v4312, %v4314
    %v4317 = vtanh.pop %v4315
    %v4318 = vtanh.pop %v4316
    %v4319 = vmul.f32 %v4308, %v4317
    %v4320 = vmul.f32 %v4310, %v4318
    %v4321 = vxor.u32 %v4265, 2147483648
    %v4322 = vxor.u32 %v4266, 2147483648
    %v4323 = vmul.f32 %v4321, 1.442695
    %v4324 = vpow.pop %v4323
    %v4325 = vmul.f32 %v4322, 1.442695
    %v4326 = vpow.pop %v4325
    %v4327 = vadd.f32 %v4324, 1.0
    %v4328 = vadd.f32 %v4326, 1.0
    %v4329 = vrcp.pop %v4327
    %v4330 = vmul.f32 1.0, %v4329
    %v4331 = vrcp.pop %v4328
    %v4332 = vmul.f32 1.0, %v4331
    %v4333 = vxor.u32 %v4267, 2147483648
    %v4334 = vxor.u32 %v4268, 2147483648
    %v4335 = vmul.f32 %v4333, 1.442695
    %v4336 = vpow.pop %v4335
    %v4337 = vmul.f32 %v4334, 1.442695
    %v4338 = vpow.pop %v4337
    %v4339 = vadd.f32 %v4336, 1.0
    %v4340 = vadd.f32 %v4338, 1.0
    %v4341 = vrcp.pop %v4339
    %v4342 = vmul.f32 1.0, %v4341
    %v4343 = vrcp.pop %v4340
    %v4344 = vmul.f32 1.0, %v4343
    %v4345 = vtanh.pop %v4269
    %v4346 = vtanh.pop %v4270
    %v4347 = vxor.u32 %v4271, 2147483648
    %v4348 = vxor.u32 %v4272, 2147483648
    %v4349 = vmul.f32 %v4347, 1.442695
    %v4350 = vpow.pop %v4349
    %v4351 = vmul.f32 %v4348, 1.442695
    %v4352 = vpow.pop %v4351
    %v4353 = vadd.f32 %v4350, 1.0
    %v4354 = vadd.f32 %v4352, 1.0
    %v4355 = vrcp.pop %v4353
    %v4356 = vmul.f32 1.0, %v4355
    %v4357 = vrcp.pop %v4354
    %v4358 = vmul.f32 1.0, %v4357
    %v4359 = vmul.f32 %v4342, %v3643
    %v4360 = vmul.f32 %v4344, %v3644
    %v4361 = vmul.f32 %v4330, %v4345
    %v4362 = vmul.f32 %v4332, %v4346
    %v4363 = vadd.f32 %v4359, %v4361
    %v4364 = vadd.f32 %v4360, %v4362
    %v4365 = vtanh.pop %v4363
    %v4366 = vtanh.pop %v4364
    %v4367 = vmul.f32 %v4356, %v4365
    %v4368 = vmul.f32 %v4358, %v4366
    %4369 = vst [vmem:[#allocation3 + $0x60] sm:$0xff] %v4319
    %4370 = vst [vmem:[#allocation3 + $0x68] sm:$0xff] %v4320
    %4371 = vst [vmem:[#allocation3 + $0x90] sm:$0xff] %v4367
    %4372 = vst [vmem:[#allocation3 + $0x98] sm:$0xff] %v4368
    %v4373 = vld [vmem:[#allocation2 + $0x200] sm:$0xff]
    %v4374 = vld [vmem:[#allocation2 + $0x208] sm:$0xff]
    %v4375 = vld [vmem:[#allocation2 + $0x210] sm:$0xff]
    %v4376 = vld [vmem:[#allocation2 + $0x218] sm:$0xff]
    %v4377 = vld [vmem:[#allocation2 + $0x220] sm:$0xff]
    %v4378 = vld [vmem:[#allocation2 + $0x228] sm:$0xff]
    %v4379 = vld [vmem:[#allocation2 + $0x230] sm:$0xff]
    %v4380 = vld [vmem:[#allocation2 + $0x238] sm:$0xff]
    %v4381 = vpack.c.bf16 %v4319, %v4319
    %v4382 = vpack.c.bf16 %v4320, %v4320
    %v4383 = vld [vmem:[#allocation5] sm:$0xff]
    %v4384 = vld [vmem:[#allocation5 + $0x8] sm:$0xff]
    %v4385 = vld [vmem:[#allocation5 + $0x10] sm:$0xff]
    %v4386 = vld [vmem:[#allocation5 + $0x18] sm:$0xff]
    %v4387 = vld [vmem:[#allocation5 + $0x20] sm:$0xff]
    %v4388 = vld [vmem:[#allocation5 + $0x28] sm:$0xff]
    %v4389 = vld [vmem:[#allocation5 + $0x30] sm:$0xff]
    %v4390 = vld [vmem:[#allocation5 + $0x38] sm:$0xff]
    %v4391 = vld [vmem:[#allocation5 + $0x40] sm:$0xff]
    %v4392 = vld [vmem:[#allocation5 + $0x48] sm:$0xff]
    %v4393 = vld [vmem:[#allocation5 + $0x50] sm:$0xff]
    %v4394 = vld [vmem:[#allocation5 + $0x58] sm:$0xff]
    %v4395 = vld [vmem:[#allocation5 + $0x60] sm:$0xff]
    %v4396 = vld [vmem:[#allocation5 + $0x68] sm:$0xff]
    %v4397 = vld [vmem:[#allocation5 + $0x70] sm:$0xff]
    %v4398 = vld [vmem:[#allocation5 + $0x78] sm:$0xff]
    %v4399 = vld [vmem:[#allocation5 + $0x80] sm:$0xff]
    %v4400 = vld [vmem:[#allocation5 + $0x88] sm:$0xff]
    %v4401 = vld [vmem:[#allocation5 + $0x90] sm:$0xff]
    %v4402 = vld [vmem:[#allocation5 + $0x98] sm:$0xff]
    %v4403 = vld [vmem:[#allocation5 + $0xa0] sm:$0xff]
    %v4404 = vld [vmem:[#allocation5 + $0xa8] sm:$0xff]
    %v4405 = vld [vmem:[#allocation5 + $0xb0] sm:$0xff]
    %v4406 = vld [vmem:[#allocation5 + $0xb8] sm:$0xff]
    %v4407 = vld [vmem:[#allocation5 + $0xc0] sm:$0xff]
    %v4408 = vld [vmem:[#allocation5 + $0xc8] sm:$0xff]
    %v4409 = vld [vmem:[#allocation5 + $0xd0] sm:$0xff]
    %v4410 = vld [vmem:[#allocation5 + $0xd8] sm:$0xff]
    %v4411 = vld [vmem:[#allocation5 + $0xe0] sm:$0xff]
    %v4412 = vld [vmem:[#allocation5 + $0xe8] sm:$0xff]
    %v4413 = vld [vmem:[#allocation5 + $0xf0] sm:$0xff]
    %v4414 = vld [vmem:[#allocation5 + $0xf8] sm:$0xff]
    %v4415 = vld [vmem:[#allocation5 + $0x100] sm:$0xff]
    %v4416 = vld [vmem:[#allocation5 + $0x108] sm:$0xff]
    %v4417 = vld [vmem:[#allocation5 + $0x110] sm:$0xff]
    %v4418 = vld [vmem:[#allocation5 + $0x118] sm:$0xff]
    %v4419 = vld [vmem:[#allocation5 + $0x120] sm:$0xff]
    %v4420 = vld [vmem:[#allocation5 + $0x128] sm:$0xff]
    %v4421 = vld [vmem:[#allocation5 + $0x130] sm:$0xff]
    %v4422 = vld [vmem:[#allocation5 + $0x138] sm:$0xff]
    %v4423 = vld [vmem:[#allocation5 + $0x140] sm:$0xff]
    %v4424 = vld [vmem:[#allocation5 + $0x148] sm:$0xff]
    %v4425 = vld [vmem:[#allocation5 + $0x150] sm:$0xff]
    %v4426 = vld [vmem:[#allocation5 + $0x158] sm:$0xff]
    %v4427 = vld [vmem:[#allocation5 + $0x160] sm:$0xff]
    %v4428 = vld [vmem:[#allocation5 + $0x168] sm:$0xff]
    %v4429 = vld [vmem:[#allocation5 + $0x170] sm:$0xff]
    %v4430 = vld [vmem:[#allocation5 + $0x178] sm:$0xff]
    %v4431 = vld [vmem:[#allocation5 + $0x180] sm:$0xff]
    %v4432 = vld [vmem:[#allocation5 + $0x188] sm:$0xff]
    %v4433 = vld [vmem:[#allocation5 + $0x190] sm:$0xff]
    %v4434 = vld [vmem:[#allocation5 + $0x198] sm:$0xff]
    %v4435 = vld [vmem:[#allocation5 + $0x1a0] sm:$0xff]
    %v4436 = vld [vmem:[#allocation5 + $0x1a8] sm:$0xff]
    %v4437 = vld [vmem:[#allocation5 + $0x1b0] sm:$0xff]
    %v4438 = vld [vmem:[#allocation5 + $0x1b8] sm:$0xff]
    %v4439 = vld [vmem:[#allocation5 + $0x1c0] sm:$0xff]
    %v4440 = vld [vmem:[#allocation5 + $0x1c8] sm:$0xff]
    %v4441 = vld [vmem:[#allocation5 + $0x1d0] sm:$0xff]
    %v4442 = vld [vmem:[#allocation5 + $0x1d8] sm:$0xff]
    %v4443 = vld [vmem:[#allocation5 + $0x1e0] sm:$0xff]
    %v4444 = vld [vmem:[#allocation5 + $0x1e8] sm:$0xff]
    %v4445 = vld [vmem:[#allocation5 + $0x1f0] sm:$0xff]
    %v4446 = vld [vmem:[#allocation5 + $0x1f8] sm:$0xff]
    %v4447 = vld [vmem:[#allocation5 + $0x200] sm:$0xff]
    %v4448 = vld [vmem:[#allocation5 + $0x208] sm:$0xff]
    %v4449 = vld [vmem:[#allocation5 + $0x210] sm:$0xff]
    %v4450 = vld [vmem:[#allocation5 + $0x218] sm:$0xff]
    %v4451 = vld [vmem:[#allocation5 + $0x220] sm:$0xff]
    %v4452 = vld [vmem:[#allocation5 + $0x228] sm:$0xff]
    %v4453 = vld [vmem:[#allocation5 + $0x230] sm:$0xff]
    %v4454 = vld [vmem:[#allocation5 + $0x238] sm:$0xff]
    %v4455 = vld [vmem:[#allocation5 + $0x240] sm:$0xff]
    %v4456 = vld [vmem:[#allocation5 + $0x248] sm:$0xff]
    %v4457 = vld [vmem:[#allocation5 + $0x250] sm:$0xff]
    %v4458 = vld [vmem:[#allocation5 + $0x258] sm:$0xff]
    %v4459 = vld [vmem:[#allocation5 + $0x260] sm:$0xff]
    %v4460 = vld [vmem:[#allocation5 + $0x268] sm:$0xff]
    %v4461 = vld [vmem:[#allocation5 + $0x270] sm:$0xff]
    %v4462 = vld [vmem:[#allocation5 + $0x278] sm:$0xff]
    %v4463 = vld [vmem:[#allocation5 + $0x280] sm:$0xff]
    %v4464 = vld [vmem:[#allocation5 + $0x288] sm:$0xff]
    %v4465 = vld [vmem:[#allocation5 + $0x290] sm:$0xff]
    %v4466 = vld [vmem:[#allocation5 + $0x298] sm:$0xff]
    %v4467 = vld [vmem:[#allocation5 + $0x2a0] sm:$0xff]
    %v4468 = vld [vmem:[#allocation5 + $0x2a8] sm:$0xff]
    %v4469 = vld [vmem:[#allocation5 + $0x2b0] sm:$0xff]
    %v4470 = vld [vmem:[#allocation5 + $0x2b8] sm:$0xff]
    %v4471 = vld [vmem:[#allocation5 + $0x2c0] sm:$0xff]
    %v4472 = vld [vmem:[#allocation5 + $0x2c8] sm:$0xff]
    %v4473 = vld [vmem:[#allocation5 + $0x2d0] sm:$0xff]
    %v4474 = vld [vmem:[#allocation5 + $0x2d8] sm:$0xff]
    %v4475 = vld [vmem:[#allocation5 + $0x2e0] sm:$0xff]
    %v4476 = vld [vmem:[#allocation5 + $0x2e8] sm:$0xff]
    %v4477 = vld [vmem:[#allocation5 + $0x2f0] sm:$0xff]
    %v4478 = vld [vmem:[#allocation5 + $0x2f8] sm:$0xff]
    %v4479 = vld [vmem:[#allocation5 + $0x300] sm:$0xff]
    %v4480 = vld [vmem:[#allocation5 + $0x308] sm:$0xff]
    %v4481 = vld [vmem:[#allocation5 + $0x310] sm:$0xff]
    %v4482 = vld [vmem:[#allocation5 + $0x318] sm:$0xff]
    %v4483 = vld [vmem:[#allocation5 + $0x320] sm:$0xff]
    %v4484 = vld [vmem:[#allocation5 + $0x328] sm:$0xff]
    %v4485 = vld [vmem:[#allocation5 + $0x330] sm:$0xff]
    %v4486 = vld [vmem:[#allocation5 + $0x338] sm:$0xff]
    %v4487 = vld [vmem:[#allocation5 + $0x340] sm:$0xff]
    %v4488 = vld [vmem:[#allocation5 + $0x348] sm:$0xff]
    %v4489 = vld [vmem:[#allocation5 + $0x350] sm:$0xff]
    %v4490 = vld [vmem:[#allocation5 + $0x358] sm:$0xff]
    %v4491 = vld [vmem:[#allocation5 + $0x360] sm:$0xff]
    %v4492 = vld [vmem:[#allocation5 + $0x368] sm:$0xff]
    %v4493 = vld [vmem:[#allocation5 + $0x370] sm:$0xff]
    %v4494 = vld [vmem:[#allocation5 + $0x378] sm:$0xff]
    %v4495 = vld [vmem:[#allocation5 + $0x380] sm:$0xff]
    %v4496 = vld [vmem:[#allocation5 + $0x388] sm:$0xff]
    %v4497 = vld [vmem:[#allocation5 + $0x390] sm:$0xff]
    %v4498 = vld [vmem:[#allocation5 + $0x398] sm:$0xff]
    %v4499 = vld [vmem:[#allocation5 + $0x3a0] sm:$0xff]
    %v4500 = vld [vmem:[#allocation5 + $0x3a8] sm:$0xff]
    %v4501 = vld [vmem:[#allocation5 + $0x3b0] sm:$0xff]
    %v4502 = vld [vmem:[#allocation5 + $0x3b8] sm:$0xff]
    %v4503 = vld [vmem:[#allocation5 + $0x3c0] sm:$0xff]
    %v4504 = vld [vmem:[#allocation5 + $0x3c8] sm:$0xff]
    %v4505 = vld [vmem:[#allocation5 + $0x3d0] sm:$0xff]
    %v4506 = vld [vmem:[#allocation5 + $0x3d8] sm:$0xff]
    %v4507 = vld [vmem:[#allocation5 + $0x3e0] sm:$0xff]
    %v4508 = vld [vmem:[#allocation5 + $0x3e8] sm:$0xff]
    %v4509 = vld [vmem:[#allocation5 + $0x3f0] sm:$0xff]
    %v4510 = vld [vmem:[#allocation5 + $0x3f8] sm:$0xff]
    %4511 = vmatprep.subr.bf16.mxu0 %v4384
    %4512 = vmatpush1.bf16.msra.mxu0 %v4383
    %4513 = vmatprep.subr.bf16.mxu0 %v4392
    %4514 = vmatpush1.bf16.msra.mxu0 %v4391
    %4515 = vmatprep.subr.bf16.mxu0 %v4400
    %4516 = vmatpush1.bf16.msra.mxu0 %v4399
    %4517 = vmatprep.subr.bf16.mxu0 %v4408
    %4518 = vmatpush1.bf16.msra.mxu0 %v4407
    %4519 = vmatprep.subr.bf16.mxu0 %v4416
    %4520 = vmatpush1.bf16.msra.mxu0 %v4415
    %4521 = vmatprep.subr.bf16.mxu0 %v4424
    %4522 = vmatpush1.bf16.msra.mxu0 %v4423
    %4523 = vmatprep.subr.bf16.mxu0 %v4432
    %4524 = vmatpush1.bf16.msra.mxu0 %v4431
    %4525 = vmatprep.subr.bf16.mxu0 %v4440
    %4526 = vmatpush1.bf16.msra.mxu0 %v4439
    %4527 = vmatprep.subr.bf16.mxu0 %v4448
    %4528 = vmatpush1.bf16.msra.mxu0 %v4447
    %4529 = vmatprep.subr.bf16.mxu0 %v4456
    %4530 = vmatpush1.bf16.msra.mxu0 %v4455
    %4531 = vmatprep.subr.bf16.mxu0 %v4464
    %4532 = vmatpush1.bf16.msra.mxu0 %v4463
    %4533 = vmatprep.subr.bf16.mxu0 %v4472
    %4534 = vmatpush1.bf16.msra.mxu0 %v4471
    %4535 = vmatprep.subr.bf16.mxu0 %v4480
    %4536 = vmatpush1.bf16.msra.mxu0 %v4479
    %4537 = vmatprep.subr.bf16.mxu0 %v4488
    %4538 = vmatpush1.bf16.msra.mxu0 %v4487
    %4539 = vmatprep.subr.bf16.mxu0 %v4496
    %4540 = vmatpush1.bf16.msra.mxu0 %v4495
    %4541 = vmatprep.subr.bf16.mxu0 %v4504
    %4542 = vmatpush1.bf16.msra.mxu0 %v4503
    %4543 = vmatprep.mubr.bf16.mxu0 %v4382
    %4544 = vmatmul.mubr.bf16.gmra.mrb[0].mxu0 %v4381
    %v4545 = vpop.f32.mrb[0].mxu0
    %v4546 = vadd.f32 0.0, %v4545
    %v4547 = vpop.f32.mrb[0].mxu0
    %v4548 = vadd.f32 0.0, %v4547
    %v4549 = vpop.f32.mrb[0].mxu0
    %v4550 = vpop.f32.mrb[0].mxu0
    %4551 = vdwg.mxu0
    %4552 = vmatprep.subr.bf16.mxu0 %v4386
    %4553 = vmatpush1.bf16.msra.mxu0 %v4385
    %4554 = vmatprep.subr.bf16.mxu0 %v4394
    %4555 = vmatpush1.bf16.msra.mxu0 %v4393
    %4556 = vmatprep.subr.bf16.mxu0 %v4402
    %4557 = vmatpush1.bf16.msra.mxu0 %v4401
    %4558 = vmatprep.subr.bf16.mxu0 %v4410
    %4559 = vmatpush1.bf16.msra.mxu0 %v4409
    %4560 = vmatprep.subr.bf16.mxu0 %v4418
    %4561 = vmatpush1.bf16.msra.mxu0 %v4417
    %4562 = vmatprep.subr.bf16.mxu0 %v4426
    %4563 = vmatpush1.bf16.msra.mxu0 %v4425
    %4564 = vmatprep.subr.bf16.mxu0 %v4434
    %4565 = vmatpush1.bf16.msra.mxu0 %v4433
    %4566 = vmatprep.subr.bf16.mxu0 %v4442
    %4567 = vmatpush1.bf16.msra.mxu0 %v4441
    %4568 = vmatprep.subr.bf16.mxu0 %v4450
    %4569 = vmatpush1.bf16.msra.mxu0 %v4449
    %4570 = vmatprep.subr.bf16.mxu0 %v4458
    %4571 = vmatpush1.bf16.msra.mxu0 %v4457
    %4572 = vmatprep.subr.bf16.mxu0 %v4466
    %4573 = vmatpush1.bf16.msra.mxu0 %v4465
    %4574 = vmatprep.subr.bf16.mxu0 %v4474
    %4575 = vmatpush1.bf16.msra.mxu0 %v4473
    %4576 = vmatprep.subr.bf16.mxu0 %v4482
    %4577 = vmatpush1.bf16.msra.mxu0 %v4481
    %4578 = vmatprep.subr.bf16.mxu0 %v4490
    %4579 = vmatpush1.bf16.msra.mxu0 %v4489
    %4580 = vmatprep.subr.bf16.mxu0 %v4498
    %4581 = vmatpush1.bf16.msra.mxu0 %v4497
    %4582 = vmatprep.subr.bf16.mxu0 %v4506
    %4583 = vmatpush1.bf16.msra.mxu0 %v4505
    %4584 = vmatprep.mubr.bf16.mxu0 %v4382
    %4585 = vmatmul.mubr.bf16.gmra.mrb[0].mxu0 %v4381
    %v4586 = vpop.f32.mrb[0].mxu0
    %v4587 = vadd.f32 0.0, %v4586
    %v4588 = vpop.f32.mrb[0].mxu0
    %v4589 = vadd.f32 0.0, %v4588
    %v4590 = vpop.f32.mrb[0].mxu0
    %v4591 = vpop.f32.mrb[0].mxu0
    %4592 = vdwg.mxu0
    %4593 = vmatprep.subr.bf16.mxu0 %v4388
    %4594 = vmatpush1.bf16.msra.mxu0 %v4387
    %4595 = vmatprep.subr.bf16.mxu0 %v4396
    %4596 = vmatpush1.bf16.msra.mxu0 %v4395
    %4597 = vmatprep.subr.bf16.mxu0 %v4404
    %4598 = vmatpush1.bf16.msra.mxu0 %v4403
    %4599 = vmatprep.subr.bf16.mxu0 %v4412
    %4600 = vmatpush1.bf16.msra.mxu0 %v4411
    %4601 = vmatprep.subr.bf16.mxu0 %v4420
    %4602 = vmatpush1.bf16.msra.mxu0 %v4419
    %4603 = vmatprep.subr.bf16.mxu0 %v4428
    %4604 = vmatpush1.bf16.msra.mxu0 %v4427
    %4605 = vmatprep.subr.bf16.mxu0 %v4436
    %4606 = vmatpush1.bf16.msra.mxu0 %v4435
    %4607 = vmatprep.subr.bf16.mxu0 %v4444
    %4608 = vmatpush1.bf16.msra.mxu0 %v4443
    %4609 = vmatprep.subr.bf16.mxu0 %v4452
    %4610 = vmatpush1.bf16.msra.mxu0 %v4451
    %4611 = vmatprep.subr.bf16.mxu0 %v4460
    %4612 = vmatpush1.bf16.msra.mxu0 %v4459
    %4613 = vmatprep.subr.bf16.mxu0 %v4468
    %4614 = vmatpush1.bf16.msra.mxu0 %v4467
    %4615 = vmatprep.subr.bf16.mxu0 %v4476
    %4616 = vmatpush1.bf16.msra.mxu0 %v4475
    %4617 = vmatprep.subr.bf16.mxu0 %v4484
    %4618 = vmatpush1.bf16.msra.mxu0 %v4483
    %4619 = vmatprep.subr.bf16.mxu0 %v4492
    %4620 = vmatpush1.bf16.msra.mxu0 %v4491
    %4621 = vmatprep.subr.bf16.mxu0 %v4500
    %4622 = vmatpush1.bf16.msra.mxu0 %v4499
    %4623 = vmatprep.subr.bf16.mxu0 %v4508
    %4624 = vmatpush1.bf16.msra.mxu0 %v4507
    %4625 = vmatprep.mubr.bf16.mxu0 %v4382
    %4626 = vmatmul.mubr.bf16.gmra.mrb[0].mxu0 %v4381
    %v4627 = vpop.f32.mrb[0].mxu0
    %v4628 = vadd.f32 0.0, %v4627
    %v4629 = vpop.f32.mrb[0].mxu0
    %v4630 = vadd.f32 0.0, %v4629
    %v4631 = vpop.f32.mrb[0].mxu0
    %v4632 = vpop.f32.mrb[0].mxu0
    %4633 = vdwg.mxu0
    %4634 = vmatprep.subr.bf16.mxu0 %v4390
    %4635 = vmatpush1.bf16.msra.mxu0 %v4389
    %4636 = vmatprep.subr.bf16.mxu0 %v4398
    %4637 = vmatpush1.bf16.msra.mxu0 %v4397
    %4638 = vmatprep.subr.bf16.mxu0 %v4406
    %4639 = vmatpush1.bf16.msra.mxu0 %v4405
    %4640 = vmatprep.subr.bf16.mxu0 %v4414
    %4641 = vmatpush1.bf16.msra.mxu0 %v4413
    %4642 = vmatprep.subr.bf16.mxu0 %v4422
    %4643 = vmatpush1.bf16.msra.mxu0 %v4421
    %4644 = vmatprep.subr.bf16.mxu0 %v4430
    %4645 = vmatpush1.bf16.msra.mxu0 %v4429
    %4646 = vmatprep.subr.bf16.mxu0 %v4438
    %4647 = vmatpush1.bf16.msra.mxu0 %v4437
    %4648 = vmatprep.subr.bf16.mxu0 %v4446
    %4649 = vmatpush1.bf16.msra.mxu0 %v4445
    %4650 = vmatprep.subr.bf16.mxu0 %v4454
    %4651 = vmatpush1.bf16.msra.mxu0 %v4453
    %4652 = vmatprep.subr.bf16.mxu0 %v4462
    %4653 = vmatpush1.bf16.msra.mxu0 %v4461
    %4654 = vmatprep.subr.bf16.mxu0 %v4470
    %4655 = vmatpush1.bf16.msra.mxu0 %v4469
    %4656 = vmatprep.subr.bf16.mxu0 %v4478
    %4657 = vmatpush1.bf16.msra.mxu0 %v4477
    %4658 = vmatprep.subr.bf16.mxu0 %v4486
    %4659 = vmatpush1.bf16.msra.mxu0 %v4485
    %4660 = vmatprep.subr.bf16.mxu0 %v4494
    %4661 = vmatpush1.bf16.msra.mxu0 %v4493
    %4662 = vmatprep.subr.bf16.mxu0 %v4502
    %4663 = vmatpush1.bf16.msra.mxu0 %v4501
    %4664 = vmatprep.subr.bf16.mxu0 %v4510
    %4665 = vmatpush1.bf16.msra.mxu0 %v4509
    %4666 = vmatprep.mubr.bf16.mxu0 %v4382
    %4667 = vmatmul.mubr.bf16.gmra.mrb[0].mxu0 %v4381
    %v4668 = vpop.f32.mrb[0].mxu0
    %v4669 = vadd.f32 0.0, %v4668
    %v4670 = vpop.f32.mrb[0].mxu0
    %v4671 = vadd.f32 0.0, %v4670
    %v4672 = vpop.f32.mrb[0].mxu0
    %v4673 = vpop.f32.mrb[0].mxu0
    %4674 = vdwg.mxu0
    %v4675 = vadd.f32 %v4373, %v4546
    %v4676 = vadd.f32 %v4374, %v4548
    %v4677 = vadd.f32 %v4375, %v4587
    %v4678 = vadd.f32 %v4376, %v4589
    %v4679 = vadd.f32 %v4377, %v4628
    %v4680 = vadd.f32 %v4378, %v4630
    %v4681 = vadd.f32 %v4379, %v4669
    %v4682 = vadd.f32 %v4380, %v4671
    %v4683 = vld [vmem:[#allocation2 + $0x1c0] sm:$0xff]
    %v4684 = vld [vmem:[#allocation2 + $0x1c8] sm:$0xff]
    %v4685 = vld [vmem:[#allocation2 + $0x1d0] sm:$0xff]
    %v4686 = vld [vmem:[#allocation2 + $0x1d8] sm:$0xff]
    %v4687 = vld [vmem:[#allocation2 + $0x1e0] sm:$0xff]
    %v4688 = vld [vmem:[#allocation2 + $0x1e8] sm:$0xff]
    %v4689 = vld [vmem:[#allocation2 + $0x1f0] sm:$0xff]
    %v4690 = vld [vmem:[#allocation2 + $0x1f8] sm:$0xff]
    %v4691 = vpack.c.bf16 %v4367, %v4367
    %v4692 = vpack.c.bf16 %v4368, %v4368
    %v4693 = vld [vmem:[#allocation6] sm:$0xff]
    %v4694 = vld [vmem:[#allocation6 + $0x8] sm:$0xff]
    %v4695 = vld [vmem:[#allocation6 + $0x10] sm:$0xff]
    %v4696 = vld [vmem:[#allocation6 + $0x18] sm:$0xff]
    %v4697 = vld [vmem:[#allocation6 + $0x20] sm:$0xff]
    %v4698 = vld [vmem:[#allocation6 + $0x28] sm:$0xff]
    %v4699 = vld [vmem:[#allocation6 + $0x30] sm:$0xff]
    %v4700 = vld [vmem:[#allocation6 + $0x38] sm:$0xff]
    %v4701 = vld [vmem:[#allocation6 + $0x40] sm:$0xff]
    %v4702 = vld [vmem:[#allocation6 + $0x48] sm:$0xff]
    %v4703 = vld [vmem:[#allocation6 + $0x50] sm:$0xff]
    %v4704 = vld [vmem:[#allocation6 + $0x58] sm:$0xff]
    %v4705 = vld [vmem:[#allocation6 + $0x60] sm:$0xff]
    %v4706 = vld [vmem:[#allocation6 + $0x68] sm:$0xff]
    %v4707 = vld [vmem:[#allocation6 + $0x70] sm:$0xff]
    %v4708 = vld [vmem:[#allocation6 + $0x78] sm:$0xff]
    %v4709 = vld [vmem:[#allocation6 + $0x80] sm:$0xff]
    %v4710 = vld [vmem:[#allocation6 + $0x88] sm:$0xff]
    %v4711 = vld [vmem:[#allocation6 + $0x90] sm:$0xff]
    %v4712 = vld [vmem:[#allocation6 + $0x98] sm:$0xff]
    %v4713 = vld [vmem:[#allocation6 + $0xa0] sm:$0xff]
    %v4714 = vld [vmem:[#allocation6 + $0xa8] sm:$0xff]
    %v4715 = vld [vmem:[#allocation6 + $0xb0] sm:$0xff]
    %v4716 = vld [vmem:[#allocation6 + $0xb8] sm:$0xff]
    %v4717 = vld [vmem:[#allocation6 + $0xc0] sm:$0xff]
    %v4718 = vld [vmem:[#allocation6 + $0xc8] sm:$0xff]
    %v4719 = vld [vmem:[#allocation6 + $0xd0] sm:$0xff]
    %v4720 = vld [vmem:[#allocation6 + $0xd8] sm:$0xff]
    %v4721 = vld [vmem:[#allocation6 + $0xe0] sm:$0xff]
    %v4722 = vld [vmem:[#allocation6 + $0xe8] sm:$0xff]
    %v4723 = vld [vmem:[#allocation6 + $0xf0] sm:$0xff]
    %v4724 = vld [vmem:[#allocation6 + $0xf8] sm:$0xff]
    %v4725 = vld [vmem:[#allocation6 + $0x100] sm:$0xff]
    %v4726 = vld [vmem:[#allocation6 + $0x108] sm:$0xff]
    %v4727 = vld [vmem:[#allocation6 + $0x110] sm:$0xff]
    %v4728 = vld [vmem:[#allocation6 + $0x118] sm:$0xff]
    %v4729 = vld [vmem:[#allocation6 + $0x120] sm:$0xff]
    %v4730 = vld [vmem:[#allocation6 + $0x128] sm:$0xff]
    %v4731 = vld [vmem:[#allocation6 + $0x130] sm:$0xff]
    %v4732 = vld [vmem:[#allocation6 + $0x138] sm:$0xff]
    %v4733 = vld [vmem:[#allocation6 + $0x140] sm:$0xff]
    %v4734 = vld [vmem:[#allocation6 + $0x148] sm:$0xff]
    %v4735 = vld [vmem:[#allocation6 + $0x150] sm:$0xff]
    %v4736 = vld [vmem:[#allocation6 + $0x158] sm:$0xff]
    %v4737 = vld [vmem:[#allocation6 + $0x160] sm:$0xff]
    %v4738 = vld [vmem:[#allocation6 + $0x168] sm:$0xff]
    %v4739 = vld [vmem:[#allocation6 + $0x170] sm:$0xff]
    %v4740 = vld [vmem:[#allocation6 + $0x178] sm:$0xff]
    %v4741 = vld [vmem:[#allocation6 + $0x180] sm:$0xff]
    %v4742 = vld [vmem:[#allocation6 + $0x188] sm:$0xff]
    %v4743 = vld [vmem:[#allocation6 + $0x190] sm:$0xff]
    %v4744 = vld [vmem:[#allocation6 + $0x198] sm:$0xff]
    %v4745 = vld [vmem:[#allocation6 + $0x1a0] sm:$0xff]
    %v4746 = vld [vmem:[#allocation6 + $0x1a8] sm:$0xff]
    %v4747 = vld [vmem:[#allocation6 + $0x1b0] sm:$0xff]
    %v4748 = vld [vmem:[#allocation6 + $0x1b8] sm:$0xff]
    %v4749 = vld [vmem:[#allocation6 + $0x1c0] sm:$0xff]
    %v4750 = vld [vmem:[#allocation6 + $0x1c8] sm:$0xff]
    %v4751 = vld [vmem:[#allocation6 + $0x1d0] sm:$0xff]
    %v4752 = vld [vmem:[#allocation6 + $0x1d8] sm:$0xff]
    %v4753 = vld [vmem:[#allocation6 + $0x1e0] sm:$0xff]
    %v4754 = vld [vmem:[#allocation6 + $0x1e8] sm:$0xff]
    %v4755 = vld [vmem:[#allocation6 + $0x1f0] sm:$0xff]
    %v4756 = vld [vmem:[#allocation6 + $0x1f8] sm:$0xff]
    %v4757 = vld [vmem:[#allocation6 + $0x200] sm:$0xff]
    %v4758 = vld [vmem:[#allocation6 + $0x208] sm:$0xff]
    %v4759 = vld [vmem:[#allocation6 + $0x210] sm:$0xff]
    %v4760 = vld [vmem:[#allocation6 + $0x218] sm:$0xff]
    %v4761 = vld [vmem:[#allocation6 + $0x220] sm:$0xff]
    %v4762 = vld [vmem:[#allocation6 + $0x228] sm:$0xff]
    %v4763 = vld [vmem:[#allocation6 + $0x230] sm:$0xff]
    %v4764 = vld [vmem:[#allocation6 + $0x238] sm:$0xff]
    %v4765 = vld [vmem:[#allocation6 + $0x240] sm:$0xff]
    %v4766 = vld [vmem:[#allocation6 + $0x248] sm:$0xff]
    %v4767 = vld [vmem:[#allocation6 + $0x250] sm:$0xff]
    %v4768 = vld [vmem:[#allocation6 + $0x258] sm:$0xff]
    %v4769 = vld [vmem:[#allocation6 + $0x260] sm:$0xff]
    %v4770 = vld [vmem:[#allocation6 + $0x268] sm:$0xff]
    %v4771 = vld [vmem:[#allocation6 + $0x270] sm:$0xff]
    %v4772 = vld [vmem:[#allocation6 + $0x278] sm:$0xff]
    %v4773 = vld [vmem:[#allocation6 + $0x280] sm:$0xff]
    %v4774 = vld [vmem:[#allocation6 + $0x288] sm:$0xff]
    %v4775 = vld [vmem:[#allocation6 + $0x290] sm:$0xff]
    %v4776 = vld [vmem:[#allocation6 + $0x298] sm:$0xff]
    %v4777 = vld [vmem:[#allocation6 + $0x2a0] sm:$0xff]
    %v4778 = vld [vmem:[#allocation6 + $0x2a8] sm:$0xff]
    %v4779 = vld [vmem:[#allocation6 + $0x2b0] sm:$0xff]
    %v4780 = vld [vmem:[#allocation6 + $0x2b8] sm:$0xff]
    %v4781 = vld [vmem:[#allocation6 + $0x2c0] sm:$0xff]
    %v4782 = vld [vmem:[#allocation6 + $0x2c8] sm:$0xff]
    %v4783 = vld [vmem:[#allocation6 + $0x2d0] sm:$0xff]
    %v4784 = vld [vmem:[#allocation6 + $0x2d8] sm:$0xff]
    %v4785 = vld [vmem:[#allocation6 + $0x2e0] sm:$0xff]
    %v4786 = vld [vmem:[#allocation6 + $0x2e8] sm:$0xff]
    %v4787 = vld [vmem:[#allocation6 + $0x2f0] sm:$0xff]
    %v4788 = vld [vmem:[#allocation6 + $0x2f8] sm:$0xff]
    %v4789 = vld [vmem:[#allocation6 + $0x300] sm:$0xff]
    %v4790 = vld [vmem:[#allocation6 + $0x308] sm:$0xff]
    %v4791 = vld [vmem:[#allocation6 + $0x310] sm:$0xff]
    %v4792 = vld [vmem:[#allocation6 + $0x318] sm:$0xff]
    %v4793 = vld [vmem:[#allocation6 + $0x320] sm:$0xff]
    %v4794 = vld [vmem:[#allocation6 + $0x328] sm:$0xff]
    %v4795 = vld [vmem:[#allocation6 + $0x330] sm:$0xff]
    %v4796 = vld [vmem:[#allocation6 + $0x338] sm:$0xff]
    %v4797 = vld [vmem:[#allocation6 + $0x340] sm:$0xff]
    %v4798 = vld [vmem:[#allocation6 + $0x348] sm:$0xff]
    %v4799 = vld [vmem:[#allocation6 + $0x350] sm:$0xff]
    %v4800 = vld [vmem:[#allocation6 + $0x358] sm:$0xff]
    %v4801 = vld [vmem:[#allocation6 + $0x360] sm:$0xff]
    %v4802 = vld [vmem:[#allocation6 + $0x368] sm:$0xff]
    %v4803 = vld [vmem:[#allocation6 + $0x370] sm:$0xff]
    %v4804 = vld [vmem:[#allocation6 + $0x378] sm:$0xff]
    %v4805 = vld [vmem:[#allocation6 + $0x380] sm:$0xff]
    %v4806 = vld [vmem:[#allocation6 + $0x388] sm:$0xff]
    %v4807 = vld [vmem:[#allocation6 + $0x390] sm:$0xff]
    %v4808 = vld [vmem:[#allocation6 + $0x398] sm:$0xff]
    %v4809 = vld [vmem:[#allocation6 + $0x3a0] sm:$0xff]
    %v4810 = vld [vmem:[#allocation6 + $0x3a8] sm:$0xff]
    %v4811 = vld [vmem:[#allocation6 + $0x3b0] sm:$0xff]
    %v4812 = vld [vmem:[#allocation6 + $0x3b8] sm:$0xff]
    %v4813 = vld [vmem:[#allocation6 + $0x3c0] sm:$0xff]
    %v4814 = vld [vmem:[#allocation6 + $0x3c8] sm:$0xff]
    %v4815 = vld [vmem:[#allocation6 + $0x3d0] sm:$0xff]
    %v4816 = vld [vmem:[#allocation6 + $0x3d8] sm:$0xff]
    %v4817 = vld [vmem:[#allocation6 + $0x3e0] sm:$0xff]
    %v4818 = vld [vmem:[#allocation6 + $0x3e8] sm:$0xff]
    %v4819 = vld [vmem:[#allocation6 + $0x3f0] sm:$0xff]
    %v4820 = vld [vmem:[#allocation6 + $0x3f8] sm:$0xff]
    %4821 = vmatprep.subr.bf16.mxu0 %v4694
    %4822 = vmatpush1.bf16.msra.mxu0 %v4693
    %4823 = vmatprep.subr.bf16.mxu0 %v4702
    %4824 = vmatpush1.bf16.msra.mxu0 %v4701
    %4825 = vmatprep.subr.bf16.mxu0 %v4710
    %4826 = vmatpush1.bf16.msra.mxu0 %v4709
    %4827 = vmatprep.subr.bf16.mxu0 %v4718
    %4828 = vmatpush1.bf16.msra.mxu0 %v4717
    %4829 = vmatprep.subr.bf16.mxu0 %v4726
    %4830 = vmatpush1.bf16.msra.mxu0 %v4725
    %4831 = vmatprep.subr.bf16.mxu0 %v4734
    %4832 = vmatpush1.bf16.msra.mxu0 %v4733
    %4833 = vmatprep.subr.bf16.mxu0 %v4742
    %4834 = vmatpush1.bf16.msra.mxu0 %v4741
    %4835 = vmatprep.subr.bf16.mxu0 %v4750
    %4836 = vmatpush1.bf16.msra.mxu0 %v4749
    %4837 = vmatprep.subr.bf16.mxu0 %v4758
    %4838 = vmatpush1.bf16.msra.mxu0 %v4757
    %4839 = vmatprep.subr.bf16.mxu0 %v4766
    %4840 = vmatpush1.bf16.msra.mxu0 %v4765
    %4841 = vmatprep.subr.bf16.mxu0 %v4774
    %4842 = vmatpush1.bf16.msra.mxu0 %v4773
    %4843 = vmatprep.subr.bf16.mxu0 %v4782
    %4844 = vmatpush1.bf16.msra.mxu0 %v4781
    %4845 = vmatprep.subr.bf16.mxu0 %v4790
    %4846 = vmatpush1.bf16.msra.mxu0 %v4789
    %4847 = vmatprep.subr.bf16.mxu0 %v4798
    %4848 = vmatpush1.bf16.msra.mxu0 %v4797
    %4849 = vmatprep.subr.bf16.mxu0 %v4806
    %4850 = vmatpush1.bf16.msra.mxu0 %v4805
    %4851 = vmatprep.subr.bf16.mxu0 %v4814
    %4852 = vmatpush1.bf16.msra.mxu0 %v4813
    %4853 = vmatprep.mubr.bf16.mxu0 %v4692
    %4854 = vmatmul.mubr.bf16.gmra.mrb[0].mxu0 %v4691
    %v4855 = vpop.f32.mrb[0].mxu0
    %v4856 = vadd.f32 0.0, %v4855
    %v4857 = vpop.f32.mrb[0].mxu0
    %v4858 = vadd.f32 0.0, %v4857
    %v4859 = vpop.f32.mrb[0].mxu0
    %v4860 = vpop.f32.mrb[0].mxu0
    %4861 = vdwg.mxu0
    %4862 = vmatprep.subr.bf16.mxu0 %v4696
    %4863 = vmatpush1.bf16.msra.mxu0 %v4695
    %4864 = vmatprep.subr.bf16.mxu0 %v4704
    %4865 = vmatpush1.bf16.msra.mxu0 %v4703
    %4866 = vmatprep.subr.bf16.mxu0 %v4712
    %4867 = vmatpush1.bf16.msra.mxu0 %v4711
    %4868 = vmatprep.subr.bf16.mxu0 %v4720
    %4869 = vmatpush1.bf16.msra.mxu0 %v4719
    %4870 = vmatprep.subr.bf16.mxu0 %v4728
    %4871 = vmatpush1.bf16.msra.mxu0 %v4727
    %4872 = vmatprep.subr.bf16.mxu0 %v4736
    %4873 = vmatpush1.bf16.msra.mxu0 %v4735
    %4874 = vmatprep.subr.bf16.mxu0 %v4744
    %4875 = vmatpush1.bf16.msra.mxu0 %v4743
    %4876 = vmatprep.subr.bf16.mxu0 %v4752
    %4877 = vmatpush1.bf16.msra.mxu0 %v4751
    %4878 = vmatprep.subr.bf16.mxu0 %v4760
    %4879 = vmatpush1.bf16.msra.mxu0 %v4759
    %4880 = vmatprep.subr.bf16.mxu0 %v4768
    %4881 = vmatpush1.bf16.msra.mxu0 %v4767
    %4882 = vmatprep.subr.bf16.mxu0 %v4776
    %4883 = vmatpush1.bf16.msra.mxu0 %v4775
    %4884 = vmatprep.subr.bf16.mxu0 %v4784
    %4885 = vmatpush1.bf16.msra.mxu0 %v4783
    %4886 = vmatprep.subr.bf16.mxu0 %v4792
    %4887 = vmatpush1.bf16.msra.mxu0 %v4791
    %4888 = vmatprep.subr.bf16.mxu0 %v4800
    %4889 = vmatpush1.bf16.msra.mxu0 %v4799
    %4890 = vmatprep.subr.bf16.mxu0 %v4808
    %4891 = vmatpush1.bf16.msra.mxu0 %v4807
    %4892 = vmatprep.subr.bf16.mxu0 %v4816
    %4893 = vmatpush1.bf16.msra.mxu0 %v4815
    %4894 = vmatprep.mubr.bf16.mxu0 %v4692
    %4895 = vmatmul.mubr.bf16.gmra.mrb[0].mxu0 %v4691
    %v4896 = vpop.f32.mrb[0].mxu0
    %v4897 = vadd.f32 0.0, %v4896
    %v4898 = vpop.f32.mrb[0].mxu0
    %v4899 = vadd.f32 0.0, %v4898
    %v4900 = vpop.f32.mrb[0].mxu0
    %v4901 = vpop.f32.mrb[0].mxu0
    %4902 = vdwg.mxu0
    %4903 = vmatprep.subr.bf16.mxu0 %v4698
    %4904 = vmatpush1.bf16.msra.mxu0 %v4697
    %4905 = vmatprep.subr.bf16.mxu0 %v4706
    %4906 = vmatpush1.bf16.msra.mxu0 %v4705
    %4907 = vmatprep.subr.bf16.mxu0 %v4714
    %4908 = vmatpush1.bf16.msra.mxu0 %v4713
    %4909 = vmatprep.subr.bf16.mxu0 %v4722
    %4910 = vmatpush1.bf16.msra.mxu0 %v4721
    %4911 = vmatprep.subr.bf16.mxu0 %v4730
    %4912 = vmatpush1.bf16.msra.mxu0 %v4729
    %4913 = vmatprep.subr.bf16.mxu0 %v4738
    %4914 = vmatpush1.bf16.msra.mxu0 %v4737
    %4915 = vmatprep.subr.bf16.mxu0 %v4746
    %4916 = vmatpush1.bf16.msra.mxu0 %v4745
    %4917 = vmatprep.subr.bf16.mxu0 %v4754
    %4918 = vmatpush1.bf16.msra.mxu0 %v4753
    %4919 = vmatprep.subr.bf16.mxu0 %v4762
    %4920 = vmatpush1.bf16.msra.mxu0 %v4761
    %4921 = vmatprep.subr.bf16.mxu0 %v4770
    %4922 = vmatpush1.bf16.msra.mxu0 %v4769
    %4923 = vmatprep.subr.bf16.mxu0 %v4778
    %4924 = vmatpush1.bf16.msra.mxu0 %v4777
    %4925 = vmatprep.subr.bf16.mxu0 %v4786
    %4926 = vmatpush1.bf16.msra.mxu0 %v4785
    %4927 = vmatprep.subr.bf16.mxu0 %v4794
    %4928 = vmatpush1.bf16.msra.mxu0 %v4793
    %4929 = vmatprep.subr.bf16.mxu0 %v4802
    %4930 = vmatpush1.bf16.msra.mxu0 %v4801
    %4931 = vmatprep.subr.bf16.mxu0 %v4810
    %4932 = vmatpush1.bf16.msra.mxu0 %v4809
    %4933 = vmatprep.subr.bf16.mxu0 %v4818
    %4934 = vmatpush1.bf16.msra.mxu0 %v4817
    %4935 = vmatprep.mubr.bf16.mxu0 %v4692
    %4936 = vmatmul.mubr.bf16.gmra.mrb[0].mxu0 %v4691
    %v4937 = vpop.f32.mrb[0].mxu0
    %v4938 = vadd.f32 0.0, %v4937
    %v4939 = vpop.f32.mrb[0].mxu0
    %v4940 = vadd.f32 0.0, %v4939
    %v4941 = vpop.f32.mrb[0].mxu0
    %v4942 = vpop.f32.mrb[0].mxu0
    %4943 = vdwg.mxu0
    %4944 = vmatprep.subr.bf16.mxu0 %v4700
    %4945 = vmatpush1.bf16.msra.mxu0 %v4699
    %4946 = vmatprep.subr.bf16.mxu0 %v4708
    %4947 = vmatpush1.bf16.msra.mxu0 %v4707
    %4948 = vmatprep.subr.bf16.mxu0 %v4716
    %4949 = vmatpush1.bf16.msra.mxu0 %v4715
    %4950 = vmatprep.subr.bf16.mxu0 %v4724
    %4951 = vmatpush1.bf16.msra.mxu0 %v4723
    %4952 = vmatprep.subr.bf16.mxu0 %v4732
    %4953 = vmatpush1.bf16.msra.mxu0 %v4731
    %4954 = vmatprep.subr.bf16.mxu0 %v4740
    %4955 = vmatpush1.bf16.msra.mxu0 %v4739
    %4956 = vmatprep.subr.bf16.mxu0 %v4748
    %4957 = vmatpush1.bf16.msra.mxu0 %v4747
    %4958 = vmatprep.subr.bf16.mxu0 %v4756
    %4959 = vmatpush1.bf16.msra.mxu0 %v4755
    %4960 = vmatprep.subr.bf16.mxu0 %v4764
    %4961 = vmatpush1.bf16.msra.mxu0 %v4763
    %4962 = vmatprep.subr.bf16.mxu0 %v4772
    %4963 = vmatpush1.bf16.msra.mxu0 %v4771
    %4964 = vmatprep.subr.bf16.mxu0 %v4780
    %4965 = vmatpush1.bf16.msra.mxu0 %v4779
    %4966 = vmatprep.subr.bf16.mxu0 %v4788
    %4967 = vmatpush1.bf16.msra.mxu0 %v4787
    %4968 = vmatprep.subr.bf16.mxu0 %v4796
    %4969 = vmatpush1.bf16.msra.mxu0 %v4795
    %4970 = vmatprep.subr.bf16.mxu0 %v4804
    %4971 = vmatpush1.bf16.msra.mxu0 %v4803
    %4972 = vmatprep.subr.bf16.mxu0 %v4812
    %4973 = vmatpush1.bf16.msra.mxu0 %v4811
    %4974 = vmatprep.subr.bf16.mxu0 %v4820
    %4975 = vmatpush1.bf16.msra.mxu0 %v4819
    %4976 = vmatprep.mubr.bf16.mxu0 %v4692
    %4977 = vmatmul.mubr.bf16.gmra.mrb[0].mxu0 %v4691
    %v4978 = vpop.f32.mrb[0].mxu0
    %v4979 = vadd.f32 0.0, %v4978
    %v4980 = vpop.f32.mrb[0].mxu0
    %v4981 = vadd.f32 0.0, %v4980
    %v4982 = vpop.f32.mrb[0].mxu0
    %v4983 = vpop.f32.mrb[0].mxu0
    %4984 = vdwg.mxu0
    %v4985 = vadd.f32 %v4683, %v4856
    %v4986 = vadd.f32 %v4684, %v4858
    %v4987 = vadd.f32 %v4685, %v4897
    %v4988 = vadd.f32 %v4686, %v4899
    %v4989 = vadd.f32 %v4687, %v4938
    %v4990 = vadd.f32 %v4688, %v4940
    %v4991 = vadd.f32 %v4689, %v4979
    %v4992 = vadd.f32 %v4690, %v4981
    %v4993 = vxor.u32 %v4675, 2147483648
    %v4994 = vxor.u32 %v4676, 2147483648
    %v4995 = vmul.f32 %v4993, 1.442695
    %v4996 = vpow.pop %v4995
    %v4997 = vmul.f32 %v4994, 1.442695
    %v4998 = vpow.pop %v4997
    %v4999 = vadd.f32 %v4996, 1.0
    %v5000 = vadd.f32 %v4998, 1.0
    %v5001 = vrcp.pop %v4999
    %v5002 = vmul.f32 1.0, %v5001
    %v5003 = vrcp.pop %v5000
    %v5004 = vmul.f32 1.0, %v5003
    %v5005 = vxor.u32 %v4677, 2147483648
    %v5006 = vxor.u32 %v4678, 2147483648
    %v5007 = vmul.f32 %v5005, 1.442695
    %v5008 = vpow.pop %v5007
    %v5009 = vmul.f32 %v5006, 1.442695
    %v5010 = vpow.pop %v5009
    %v5011 = vadd.f32 %v5008, 1.0
    %v5012 = vadd.f32 %v5010, 1.0
    %v5013 = vrcp.pop %v5011
    %v5014 = vmul.f32 1.0, %v5013
    %v5015 = vrcp.pop %v5012
    %v5016 = vmul.f32 1.0, %v5015
    %v5017 = vtanh.pop %v4679
    %v5018 = vtanh.pop %v4680
    %v5019 = vxor.u32 %v4681, 2147483648
    %v5020 = vxor.u32 %v4682, 2147483648
    %v5021 = vmul.f32 %v5019, 1.442695
    %v5022 = vpow.pop %v5021
    %v5023 = vmul.f32 %v5020, 1.442695
    %v5024 = vpow.pop %v5023
    %v5025 = vadd.f32 %v5022, 1.0
    %v5026 = vadd.f32 %v5024, 1.0
    %v5027 = vrcp.pop %v5025
    %v5028 = vmul.f32 1.0, %v5027
    %v5029 = vrcp.pop %v5026
    %v5030 = vmul.f32 1.0, %v5029
    %v5031 = vmul.f32 %v5014, %v4315
    %v5032 = vmul.f32 %v5016, %v4316
    %v5033 = vmul.f32 %v5002, %v5017
    %v5034 = vmul.f32 %v5004, %v5018
    %v5035 = vadd.f32 %v5031, %v5033
    %v5036 = vadd.f32 %v5032, %v5034
    %v5037 = vtanh.pop %v5035
    %v5038 = vtanh.pop %v5036
    %v5039 = vmul.f32 %v5028, %v5037
    %v5040 = vmul.f32 %v5030, %v5038
    %v5041 = vxor.u32 %v4985, 2147483648
    %v5042 = vxor.u32 %v4986, 2147483648
    %v5043 = vmul.f32 %v5041, 1.442695
    %v5044 = vpow.pop %v5043
    %v5045 = vmul.f32 %v5042, 1.442695
    %v5046 = vpow.pop %v5045
    %v5047 = vadd.f32 %v5044, 1.0
    %v5048 = vadd.f32 %v5046, 1.0
    %v5049 = vrcp.pop %v5047
    %v5050 = vmul.f32 1.0, %v5049
    %v5051 = vrcp.pop %v5048
    %v5052 = vmul.f32 1.0, %v5051
    %v5053 = vxor.u32 %v4987, 2147483648
    %v5054 = vxor.u32 %v4988, 2147483648
    %v5055 = vmul.f32 %v5053, 1.442695
    %v5056 = vpow.pop %v5055
    %v5057 = vmul.f32 %v5054, 1.442695
    %v5058 = vpow.pop %v5057
    %v5059 = vadd.f32 %v5056, 1.0
    %v5060 = vadd.f32 %v5058, 1.0
    %v5061 = vrcp.pop %v5059
    %v5062 = vmul.f32 1.0, %v5061
    %v5063 = vrcp.pop %v5060
    %v5064 = vmul.f32 1.0, %v5063
    %v5065 = vtanh.pop %v4989
    %v5066 = vtanh.pop %v4990
    %v5067 = vxor.u32 %v4991, 2147483648
    %v5068 = vxor.u32 %v4992, 2147483648
    %v5069 = vmul.f32 %v5067, 1.442695
    %v5070 = vpow.pop %v5069
    %v5071 = vmul.f32 %v5068, 1.442695
    %v5072 = vpow.pop %v5071
    %v5073 = vadd.f32 %v5070, 1.0
    %v5074 = vadd.f32 %v5072, 1.0
    %v5075 = vrcp.pop %v5073
    %v5076 = vmul.f32 1.0, %v5075
    %v5077 = vrcp.pop %v5074
    %v5078 = vmul.f32 1.0, %v5077
    %v5079 = vmul.f32 %v5062, %v4363
    %v5080 = vmul.f32 %v5064, %v4364
    %v5081 = vmul.f32 %v5050, %v5065
    %v5082 = vmul.f32 %v5052, %v5066
    %v5083 = vadd.f32 %v5079, %v5081
    %v5084 = vadd.f32 %v5080, %v5082
    %v5085 = vtanh.pop %v5083
    %v5086 = vtanh.pop %v5084
    %v5087 = vmul.f32 %v5076, %v5085
    %v5088 = vmul.f32 %v5078, %v5086
    %5089 = vst [vmem:[#allocation3 + $0x80] sm:$0xff] %v5039
    %5090 = vst [vmem:[#allocation3 + $0x88] sm:$0xff] %v5040
    %5091 = vst [vmem:[#allocation3 + $0x70] sm:$0xff] %v5087
    %5092 = vst [vmem:[#allocation3 + $0x78] sm:$0xff] %v5088
    %v5093 = vld [vmem:[#allocation2 + $0x280] sm:$0xff]
    %v5094 = vld [vmem:[#allocation2 + $0x288] sm:$0xff]
    %v5095 = vld [vmem:[#allocation2 + $0x290] sm:$0xff]
    %v5096 = vld [vmem:[#allocation2 + $0x298] sm:$0xff]
    %v5097 = vld [vmem:[#allocation2 + $0x2a0] sm:$0xff]
    %v5098 = vld [vmem:[#allocation2 + $0x2a8] sm:$0xff]
    %v5099 = vld [vmem:[#allocation2 + $0x2b0] sm:$0xff]
    %v5100 = vld [vmem:[#allocation2 + $0x2b8] sm:$0xff]
    %v5101 = vpack.c.bf16 %v5039, %v5039
    %v5102 = vpack.c.bf16 %v5040, %v5040
    %v5103 = vld [vmem:[#allocation5] sm:$0xff]
    %v5104 = vld [vmem:[#allocation5 + $0x8] sm:$0xff]
    %v5105 = vld [vmem:[#allocation5 + $0x10] sm:$0xff]
    %v5106 = vld [vmem:[#allocation5 + $0x18] sm:$0xff]
    %v5107 = vld [vmem:[#allocation5 + $0x20] sm:$0xff]
    %v5108 = vld [vmem:[#allocation5 + $0x28] sm:$0xff]
    %v5109 = vld [vmem:[#allocation5 + $0x30] sm:$0xff]
    %v5110 = vld [vmem:[#allocation5 + $0x38] sm:$0xff]
    %v5111 = vld [vmem:[#allocation5 + $0x40] sm:$0xff]
    %v5112 = vld [vmem:[#allocation5 + $0x48] sm:$0xff]
    %v5113 = vld [vmem:[#allocation5 + $0x50] sm:$0xff]
    %v5114 = vld [vmem:[#allocation5 + $0x58] sm:$0xff]
    %v5115 = vld [vmem:[#allocation5 + $0x60] sm:$0xff]
    %v5116 = vld [vmem:[#allocation5 + $0x68] sm:$0xff]
    %v5117 = vld [vmem:[#allocation5 + $0x70] sm:$0xff]
    %v5118 = vld [vmem:[#allocation5 + $0x78] sm:$0xff]
    %v5119 = vld [vmem:[#allocation5 + $0x80] sm:$0xff]
    %v5120 = vld [vmem:[#allocation5 + $0x88] sm:$0xff]
    %v5121 = vld [vmem:[#allocation5 + $0x90] sm:$0xff]
    %v5122 = vld [vmem:[#allocation5 + $0x98] sm:$0xff]
    %v5123 = vld [vmem:[#allocation5 + $0xa0] sm:$0xff]
    %v5124 = vld [vmem:[#allocation5 + $0xa8] sm:$0xff]
    %v5125 = vld [vmem:[#allocation5 + $0xb0] sm:$0xff]
    %v5126 = vld [vmem:[#allocation5 + $0xb8] sm:$0xff]
    %v5127 = vld [vmem:[#allocation5 + $0xc0] sm:$0xff]
    %v5128 = vld [vmem:[#allocation5 + $0xc8] sm:$0xff]
    %v5129 = vld [vmem:[#allocation5 + $0xd0] sm:$0xff]
    %v5130 = vld [vmem:[#allocation5 + $0xd8] sm:$0xff]
    %v5131 = vld [vmem:[#allocation5 + $0xe0] sm:$0xff]
    %v5132 = vld [vmem:[#allocation5 + $0xe8] sm:$0xff]
    %v5133 = vld [vmem:[#allocation5 + $0xf0] sm:$0xff]
    %v5134 = vld [vmem:[#allocation5 + $0xf8] sm:$0xff]
    %v5135 = vld [vmem:[#allocation5 + $0x100] sm:$0xff]
    %v5136 = vld [vmem:[#allocation5 + $0x108] sm:$0xff]
    %v5137 = vld [vmem:[#allocation5 + $0x110] sm:$0xff]
    %v5138 = vld [vmem:[#allocation5 + $0x118] sm:$0xff]
    %v5139 = vld [vmem:[#allocation5 + $0x120] sm:$0xff]
    %v5140 = vld [vmem:[#allocation5 + $0x128] sm:$0xff]
    %v5141 = vld [vmem:[#allocation5 + $0x130] sm:$0xff]
    %v5142 = vld [vmem:[#allocation5 + $0x138] sm:$0xff]
    %v5143 = vld [vmem:[#allocation5 + $0x140] sm:$0xff]
    %v5144 = vld [vmem:[#allocation5 + $0x148] sm:$0xff]
    %v5145 = vld [vmem:[#allocation5 + $0x150] sm:$0xff]
    %v5146 = vld [vmem:[#allocation5 + $0x158] sm:$0xff]
    %v5147 = vld [vmem:[#allocation5 + $0x160] sm:$0xff]
    %v5148 = vld [vmem:[#allocation5 + $0x168] sm:$0xff]
    %v5149 = vld [vmem:[#allocation5 + $0x170] sm:$0xff]
    %v5150 = vld [vmem:[#allocation5 + $0x178] sm:$0xff]
    %v5151 = vld [vmem:[#allocation5 + $0x180] sm:$0xff]
    %v5152 = vld [vmem:[#allocation5 + $0x188] sm:$0xff]
    %v5153 = vld [vmem:[#allocation5 + $0x190] sm:$0xff]
    %v5154 = vld [vmem:[#allocation5 + $0x198] sm:$0xff]
    %v5155 = vld [vmem:[#allocation5 + $0x1a0] sm:$0xff]
    %v5156 = vld [vmem:[#allocation5 + $0x1a8] sm:$0xff]
    %v5157 = vld [vmem:[#allocation5 + $0x1b0] sm:$0xff]
    %v5158 = vld [vmem:[#allocation5 + $0x1b8] sm:$0xff]
    %v5159 = vld [vmem:[#allocation5 + $0x1c0] sm:$0xff]
    %v5160 = vld [vmem:[#allocation5 + $0x1c8] sm:$0xff]
    %v5161 = vld [vmem:[#allocation5 + $0x1d0] sm:$0xff]
    %v5162 = vld [vmem:[#allocation5 + $0x1d8] sm:$0xff]
    %v5163 = vld [vmem:[#allocation5 + $0x1e0] sm:$0xff]
    %v5164 = vld [vmem:[#allocation5 + $0x1e8] sm:$0xff]
    %v5165 = vld [vmem:[#allocation5 + $0x1f0] sm:$0xff]
    %v5166 = vld [vmem:[#allocation5 + $0x1f8] sm:$0xff]
    %v5167 = vld [vmem:[#allocation5 + $0x200] sm:$0xff]
    %v5168 = vld [vmem:[#allocation5 + $0x208] sm:$0xff]
    %v5169 = vld [vmem:[#allocation5 + $0x210] sm:$0xff]
    %v5170 = vld [vmem:[#allocation5 + $0x218] sm:$0xff]
    %v5171 = vld [vmem:[#allocation5 + $0x220] sm:$0xff]
    %v5172 = vld [vmem:[#allocation5 + $0x228] sm:$0xff]
    %v5173 = vld [vmem:[#allocation5 + $0x230] sm:$0xff]
    %v5174 = vld [vmem:[#allocation5 + $0x238] sm:$0xff]
    %v5175 = vld [vmem:[#allocation5 + $0x240] sm:$0xff]
    %v5176 = vld [vmem:[#allocation5 + $0x248] sm:$0xff]
    %v5177 = vld [vmem:[#allocation5 + $0x250] sm:$0xff]
    %v5178 = vld [vmem:[#allocation5 + $0x258] sm:$0xff]
    %v5179 = vld [vmem:[#allocation5 + $0x260] sm:$0xff]
    %v5180 = vld [vmem:[#allocation5 + $0x268] sm:$0xff]
    %v5181 = vld [vmem:[#allocation5 + $0x270] sm:$0xff]
    %v5182 = vld [vmem:[#allocation5 + $0x278] sm:$0xff]
    %v5183 = vld [vmem:[#allocation5 + $0x280] sm:$0xff]
    %v5184 = vld [vmem:[#allocation5 + $0x288] sm:$0xff]
    %v5185 = vld [vmem:[#allocation5 + $0x290] sm:$0xff]
    %v5186 = vld [vmem:[#allocation5 + $0x298] sm:$0xff]
    %v5187 = vld [vmem:[#allocation5 + $0x2a0] sm:$0xff]
    %v5188 = vld [vmem:[#allocation5 + $0x2a8] sm:$0xff]
    %v5189 = vld [vmem:[#allocation5 + $0x2b0] sm:$0xff]
    %v5190 = vld [vmem:[#allocation5 + $0x2b8] sm:$0xff]
    %v5191 = vld [vmem:[#allocation5 + $0x2c0] sm:$0xff]
    %v5192 = vld [vmem:[#allocation5 + $0x2c8] sm:$0xff]
    %v5193 = vld [vmem:[#allocation5 + $0x2d0] sm:$0xff]
    %v5194 = vld [vmem:[#allocation5 + $0x2d8] sm:$0xff]
    %v5195 = vld [vmem:[#allocation5 + $0x2e0] sm:$0xff]
    %v5196 = vld [vmem:[#allocation5 + $0x2e8] sm:$0xff]
    %v5197 = vld [vmem:[#allocation5 + $0x2f0] sm:$0xff]
    %v5198 = vld [vmem:[#allocation5 + $0x2f8] sm:$0xff]
    %v5199 = vld [vmem:[#allocation5 + $0x300] sm:$0xff]
    %v5200 = vld [vmem:[#allocation5 + $0x308] sm:$0xff]
    %v5201 = vld [vmem:[#allocation5 + $0x310] sm:$0xff]
    %v5202 = vld [vmem:[#allocation5 + $0x318] sm:$0xff]
    %v5203 = vld [vmem:[#allocation5 + $0x320] sm:$0xff]
    %v5204 = vld [vmem:[#allocation5 + $0x328] sm:$0xff]
    %v5205 = vld [vmem:[#allocation5 + $0x330] sm:$0xff]
    %v5206 = vld [vmem:[#allocation5 + $0x338] sm:$0xff]
    %v5207 = vld [vmem:[#allocation5 + $0x340] sm:$0xff]
    %v5208 = vld [vmem:[#allocation5 + $0x348] sm:$0xff]
    %v5209 = vld [vmem:[#allocation5 + $0x350] sm:$0xff]
    %v5210 = vld [vmem:[#allocation5 + $0x358] sm:$0xff]
    %v5211 = vld [vmem:[#allocation5 + $0x360] sm:$0xff]
    %v5212 = vld [vmem:[#allocation5 + $0x368] sm:$0xff]
    %v5213 = vld [vmem:[#allocation5 + $0x370] sm:$0xff]
    %v5214 = vld [vmem:[#allocation5 + $0x378] sm:$0xff]
    %v5215 = vld [vmem:[#allocation5 + $0x380] sm:$0xff]
    %v5216 = vld [vmem:[#allocation5 + $0x388] sm:$0xff]
    %v5217 = vld [vmem:[#allocation5 + $0x390] sm:$0xff]
    %v5218 = vld [vmem:[#allocation5 + $0x398] sm:$0xff]
    %v5219 = vld [vmem:[#allocation5 + $0x3a0] sm:$0xff]
    %v5220 = vld [vmem:[#allocation5 + $0x3a8] sm:$0xff]
    %v5221 = vld [vmem:[#allocation5 + $0x3b0] sm:$0xff]
    %v5222 = vld [vmem:[#allocation5 + $0x3b8] sm:$0xff]
    %v5223 = vld [vmem:[#allocation5 + $0x3c0] sm:$0xff]
    %v5224 = vld [vmem:[#allocation5 + $0x3c8] sm:$0xff]
    %v5225 = vld [vmem:[#allocation5 + $0x3d0] sm:$0xff]
    %v5226 = vld [vmem:[#allocation5 + $0x3d8] sm:$0xff]
    %v5227 = vld [vmem:[#allocation5 + $0x3e0] sm:$0xff]
    %v5228 = vld [vmem:[#allocation5 + $0x3e8] sm:$0xff]
    %v5229 = vld [vmem:[#allocation5 + $0x3f0] sm:$0xff]
    %v5230 = vld [vmem:[#allocation5 + $0x3f8] sm:$0xff]
    %5231 = vmatprep.subr.bf16.mxu0 %v5104
    %5232 = vmatpush1.bf16.msra.mxu0 %v5103
    %5233 = vmatprep.subr.bf16.mxu0 %v5112
    %5234 = vmatpush1.bf16.msra.mxu0 %v5111
    %5235 = vmatprep.subr.bf16.mxu0 %v5120
    %5236 = vmatpush1.bf16.msra.mxu0 %v5119
    %5237 = vmatprep.subr.bf16.mxu0 %v5128
    %5238 = vmatpush1.bf16.msra.mxu0 %v5127
    %5239 = vmatprep.subr.bf16.mxu0 %v5136
    %5240 = vmatpush1.bf16.msra.mxu0 %v5135
    %5241 = vmatprep.subr.bf16.mxu0 %v5144
    %5242 = vmatpush1.bf16.msra.mxu0 %v5143
    %5243 = vmatprep.subr.bf16.mxu0 %v5152
    %5244 = vmatpush1.bf16.msra.mxu0 %v5151
    %5245 = vmatprep.subr.bf16.mxu0 %v5160
    %5246 = vmatpush1.bf16.msra.mxu0 %v5159
    %5247 = vmatprep.subr.bf16.mxu0 %v5168
    %5248 = vmatpush1.bf16.msra.mxu0 %v5167
    %5249 = vmatprep.subr.bf16.mxu0 %v5176
    %5250 = vmatpush1.bf16.msra.mxu0 %v5175
    %5251 = vmatprep.subr.bf16.mxu0 %v5184
    %5252 = vmatpush1.bf16.msra.mxu0 %v5183
    %5253 = vmatprep.subr.bf16.mxu0 %v5192
    %5254 = vmatpush1.bf16.msra.mxu0 %v5191
    %5255 = vmatprep.subr.bf16.mxu0 %v5200
    %5256 = vmatpush1.bf16.msra.mxu0 %v5199
    %5257 = vmatprep.subr.bf16.mxu0 %v5208
    %5258 = vmatpush1.bf16.msra.mxu0 %v5207
    %5259 = vmatprep.subr.bf16.mxu0 %v5216
    %5260 = vmatpush1.bf16.msra.mxu0 %v5215
    %5261 = vmatprep.subr.bf16.mxu0 %v5224
    %5262 = vmatpush1.bf16.msra.mxu0 %v5223
    %5263 = vmatprep.mubr.bf16.mxu0 %v5102
    %5264 = vmatmul.mubr.bf16.gmra.mrb[0].mxu0 %v5101
    %v5265 = vpop.f32.mrb[0].mxu0
    %v5266 = vadd.f32 0.0, %v5265
    %v5267 = vpop.f32.mrb[0].mxu0
    %v5268 = vadd.f32 0.0, %v5267
    %v5269 = vpop.f32.mrb[0].mxu0
    %v5270 = vpop.f32.mrb[0].mxu0
    %5271 = vdwg.mxu0
    %5272 = vmatprep.subr.bf16.mxu0 %v5106
    %5273 = vmatpush1.bf16.msra.mxu0 %v5105
    %5274 = vmatprep.subr.bf16.mxu0 %v5114
    %5275 = vmatpush1.bf16.msra.mxu0 %v5113
    %5276 = vmatprep.subr.bf16.mxu0 %v5122
    %5277 = vmatpush1.bf16.msra.mxu0 %v5121
    %5278 = vmatprep.subr.bf16.mxu0 %v5130
    %5279 = vmatpush1.bf16.msra.mxu0 %v5129
    %5280 = vmatprep.subr.bf16.mxu0 %v5138
    %5281 = vmatpush1.bf16.msra.mxu0 %v5137
    %5282 = vmatprep.subr.bf16.mxu0 %v5146
    %5283 = vmatpush1.bf16.msra.mxu0 %v5145
    %5284 = vmatprep.subr.bf16.mxu0 %v5154
    %5285 = vmatpush1.bf16.msra.mxu0 %v5153
    %5286 = vmatprep.subr.bf16.mxu0 %v5162
    %5287 = vmatpush1.bf16.msra.mxu0 %v5161
    %5288 = vmatprep.subr.bf16.mxu0 %v5170
    %5289 = vmatpush1.bf16.msra.mxu0 %v5169
    %5290 = vmatprep.subr.bf16.mxu0 %v5178
    %5291 = vmatpush1.bf16.msra.mxu0 %v5177
    %5292 = vmatprep.subr.bf16.mxu0 %v5186
    %5293 = vmatpush1.bf16.msra.mxu0 %v5185
    %5294 = vmatprep.subr.bf16.mxu0 %v5194
    %5295 = vmatpush1.bf16.msra.mxu0 %v5193
    %5296 = vmatprep.subr.bf16.mxu0 %v5202
    %5297 = vmatpush1.bf16.msra.mxu0 %v5201
    %5298 = vmatprep.subr.bf16.mxu0 %v5210
    %5299 = vmatpush1.bf16.msra.mxu0 %v5209
    %5300 = vmatprep.subr.bf16.mxu0 %v5218
    %5301 = vmatpush1.bf16.msra.mxu0 %v5217
    %5302 = vmatprep.subr.bf16.mxu0 %v5226
    %5303 = vmatpush1.bf16.msra.mxu0 %v5225
    %5304 = vmatprep.mubr.bf16.mxu0 %v5102
    %5305 = vmatmul.mubr.bf16.gmra.mrb[0].mxu0 %v5101
    %v5306 = vpop.f32.mrb[0].mxu0
    %v5307 = vadd.f32 0.0, %v5306
    %v5308 = vpop.f32.mrb[0].mxu0
    %v5309 = vadd.f32 0.0, %v5308
    %v5310 = vpop.f32.mrb[0].mxu0
    %v5311 = vpop.f32.mrb[0].mxu0
    %5312 = vdwg.mxu0
    %5313 = vmatprep.subr.bf16.mxu0 %v5108
    %5314 = vmatpush1.bf16.msra.mxu0 %v5107
    %5315 = vmatprep.subr.bf16.mxu0 %v5116
    %5316 = vmatpush1.bf16.msra.mxu0 %v5115
    %5317 = vmatprep.subr.bf16.mxu0 %v5124
    %5318 = vmatpush1.bf16.msra.mxu0 %v5123
    %5319 = vmatprep.subr.bf16.mxu0 %v5132
    %5320 = vmatpush1.bf16.msra.mxu0 %v5131
    %5321 = vmatprep.subr.bf16.mxu0 %v5140
    %5322 = vmatpush1.bf16.msra.mxu0 %v5139
    %5323 = vmatprep.subr.bf16.mxu0 %v5148
    %5324 = vmatpush1.bf16.msra.mxu0 %v5147
    %5325 = vmatprep.subr.bf16.mxu0 %v5156
    %5326 = vmatpush1.bf16.msra.mxu0 %v5155
    %5327 = vmatprep.subr.bf16.mxu0 %v5164
    %5328 = vmatpush1.bf16.msra.mxu0 %v5163
    %5329 = vmatprep.subr.bf16.mxu0 %v5172
    %5330 = vmatpush1.bf16.msra.mxu0 %v5171
    %5331 = vmatprep.subr.bf16.mxu0 %v5180
    %5332 = vmatpush1.bf16.msra.mxu0 %v5179
    %5333 = vmatprep.subr.bf16.mxu0 %v5188
    %5334 = vmatpush1.bf16.msra.mxu0 %v5187
    %5335 = vmatprep.subr.bf16.mxu0 %v5196
    %5336 = vmatpush1.bf16.msra.mxu0 %v5195
    %5337 = vmatprep.subr.bf16.mxu0 %v5204
    %5338 = vmatpush1.bf16.msra.mxu0 %v5203
    %5339 = vmatprep.subr.bf16.mxu0 %v5212
    %5340 = vmatpush1.bf16.msra.mxu0 %v5211
    %5341 = vmatprep.subr.bf16.mxu0 %v5220
    %5342 = vmatpush1.bf16.msra.mxu0 %v5219
    %5343 = vmatprep.subr.bf16.mxu0 %v5228
    %5344 = vmatpush1.bf16.msra.mxu0 %v5227
    %5345 = vmatprep.mubr.bf16.mxu0 %v5102
    %5346 = vmatmul.mubr.bf16.gmra.mrb[0].mxu0 %v5101
    %v5347 = vpop.f32.mrb[0].mxu0
    %v5348 = vadd.f32 0.0, %v5347
    %v5349 = vpop.f32.mrb[0].mxu0
    %v5350 = vadd.f32 0.0, %v5349
    %v5351 = vpop.f32.mrb[0].mxu0
    %v5352 = vpop.f32.mrb[0].mxu0
    %5353 = vdwg.mxu0
    %5354 = vmatprep.subr.bf16.mxu0 %v5110
    %5355 = vmatpush1.bf16.msra.mxu0 %v5109
    %5356 = vmatprep.subr.bf16.mxu0 %v5118
    %5357 = vmatpush1.bf16.msra.mxu0 %v5117
    %5358 = vmatprep.subr.bf16.mxu0 %v5126
    %5359 = vmatpush1.bf16.msra.mxu0 %v5125
    %5360 = vmatprep.subr.bf16.mxu0 %v5134
    %5361 = vmatpush1.bf16.msra.mxu0 %v5133
    %5362 = vmatprep.subr.bf16.mxu0 %v5142
    %5363 = vmatpush1.bf16.msra.mxu0 %v5141
    %5364 = vmatprep.subr.bf16.mxu0 %v5150
    %5365 = vmatpush1.bf16.msra.mxu0 %v5149
    %5366 = vmatprep.subr.bf16.mxu0 %v5158
    %5367 = vmatpush1.bf16.msra.mxu0 %v5157
    %5368 = vmatprep.subr.bf16.mxu0 %v5166
    %5369 = vmatpush1.bf16.msra.mxu0 %v5165
    %5370 = vmatprep.subr.bf16.mxu0 %v5174
    %5371 = vmatpush1.bf16.msra.mxu0 %v5173
    %5372 = vmatprep.subr.bf16.mxu0 %v5182
    %5373 = vmatpush1.bf16.msra.mxu0 %v5181
    %5374 = vmatprep.subr.bf16.mxu0 %v5190
    %5375 = vmatpush1.bf16.msra.mxu0 %v5189
    %5376 = vmatprep.subr.bf16.mxu0 %v5198
    %5377 = vmatpush1.bf16.msra.mxu0 %v5197
    %5378 = vmatprep.subr.bf16.mxu0 %v5206
    %5379 = vmatpush1.bf16.msra.mxu0 %v5205
    %5380 = vmatprep.subr.bf16.mxu0 %v5214
    %5381 = vmatpush1.bf16.msra.mxu0 %v5213
    %5382 = vmatprep.subr.bf16.mxu0 %v5222
    %5383 = vmatpush1.bf16.msra.mxu0 %v5221
    %5384 = vmatprep.subr.bf16.mxu0 %v5230
    %5385 = vmatpush1.bf16.msra.mxu0 %v5229
    %5386 = vmatprep.mubr.bf16.mxu0 %v5102
    %5387 = vmatmul.mubr.bf16.gmra.mrb[0].mxu0 %v5101
    %v5388 = vpop.f32.mrb[0].mxu0
    %v5389 = vadd.f32 0.0, %v5388
    %v5390 = vpop.f32.mrb[0].mxu0
    %v5391 = vadd.f32 0.0, %v5390
    %v5392 = vpop.f32.mrb[0].mxu0
    %v5393 = vpop.f32.mrb[0].mxu0
    %5394 = vdwg.mxu0
    %v5395 = vadd.f32 %v5093, %v5266
    %v5396 = vadd.f32 %v5094, %v5268
    %v5397 = vadd.f32 %v5095, %v5307
    %v5398 = vadd.f32 %v5096, %v5309
    %v5399 = vadd.f32 %v5097, %v5348
    %v5400 = vadd.f32 %v5098, %v5350
    %v5401 = vadd.f32 %v5099, %v5389
    %v5402 = vadd.f32 %v5100, %v5391
    %v5403 = vld [vmem:[#allocation2 + $0x140] sm:$0xff]
    %v5404 = vld [vmem:[#allocation2 + $0x148] sm:$0xff]
    %v5405 = vld [vmem:[#allocation2 + $0x150] sm:$0xff]
    %v5406 = vld [vmem:[#allocation2 + $0x158] sm:$0xff]
    %v5407 = vld [vmem:[#allocation2 + $0x160] sm:$0xff]
    %v5408 = vld [vmem:[#allocation2 + $0x168] sm:$0xff]
    %v5409 = vld [vmem:[#allocation2 + $0x170] sm:$0xff]
    %v5410 = vld [vmem:[#allocation2 + $0x178] sm:$0xff]
    %v5411 = vpack.c.bf16 %v5087, %v5087
    %v5412 = vpack.c.bf16 %v5088, %v5088
    %v5413 = vld [vmem:[#allocation6] sm:$0xff]
    %v5414 = vld [vmem:[#allocation6 + $0x8] sm:$0xff]
    %v5415 = vld [vmem:[#allocation6 + $0x10] sm:$0xff]
    %v5416 = vld [vmem:[#allocation6 + $0x18] sm:$0xff]
    %v5417 = vld [vmem:[#allocation6 + $0x20] sm:$0xff]
    %v5418 = vld [vmem:[#allocation6 + $0x28] sm:$0xff]
    %v5419 = vld [vmem:[#allocation6 + $0x30] sm:$0xff]
    %v5420 = vld [vmem:[#allocation6 + $0x38] sm:$0xff]
    %v5421 = vld [vmem:[#allocation6 + $0x40] sm:$0xff]
    %v5422 = vld [vmem:[#allocation6 + $0x48] sm:$0xff]
    %v5423 = vld [vmem:[#allocation6 + $0x50] sm:$0xff]
    %v5424 = vld [vmem:[#allocation6 + $0x58] sm:$0xff]
    %v5425 = vld [vmem:[#allocation6 + $0x60] sm:$0xff]
    %v5426 = vld [vmem:[#allocation6 + $0x68] sm:$0xff]
    %v5427 = vld [vmem:[#allocation6 + $0x70] sm:$0xff]
    %v5428 = vld [vmem:[#allocation6 + $0x78] sm:$0xff]
    %v5429 = vld [vmem:[#allocation6 + $0x80] sm:$0xff]
    %v5430 = vld [vmem:[#allocation6 + $0x88] sm:$0xff]
    %v5431 = vld [vmem:[#allocation6 + $0x90] sm:$0xff]
    %v5432 = vld [vmem:[#allocation6 + $0x98] sm:$0xff]
    %v5433 = vld [vmem:[#allocation6 + $0xa0] sm:$0xff]
    %v5434 = vld [vmem:[#allocation6 + $0xa8] sm:$0xff]
    %v5435 = vld [vmem:[#allocation6 + $0xb0] sm:$0xff]
    %v5436 = vld [vmem:[#allocation6 + $0xb8] sm:$0xff]
    %v5437 = vld [vmem:[#allocation6 + $0xc0] sm:$0xff]
    %v5438 = vld [vmem:[#allocation6 + $0xc8] sm:$0xff]
    %v5439 = vld [vmem:[#allocation6 + $0xd0] sm:$0xff]
    %v5440 = vld [vmem:[#allocation6 + $0xd8] sm:$0xff]
    %v5441 = vld [vmem:[#allocation6 + $0xe0] sm:$0xff]
    %v5442 = vld [vmem:[#allocation6 + $0xe8] sm:$0xff]
    %v5443 = vld [vmem:[#allocation6 + $0xf0] sm:$0xff]
    %v5444 = vld [vmem:[#allocation6 + $0xf8] sm:$0xff]
    %v5445 = vld [vmem:[#allocation6 + $0x100] sm:$0xff]
    %v5446 = vld [vmem:[#allocation6 + $0x108] sm:$0xff]
    %v5447 = vld [vmem:[#allocation6 + $0x110] sm:$0xff]
    %v5448 = vld [vmem:[#allocation6 + $0x118] sm:$0xff]
    %v5449 = vld [vmem:[#allocation6 + $0x120] sm:$0xff]
    %v5450 = vld [vmem:[#allocation6 + $0x128] sm:$0xff]
    %v5451 = vld [vmem:[#allocation6 + $0x130] sm:$0xff]
    %v5452 = vld [vmem:[#allocation6 + $0x138] sm:$0xff]
    %v5453 = vld [vmem:[#allocation6 + $0x140] sm:$0xff]
    %v5454 = vld [vmem:[#allocation6 + $0x148] sm:$0xff]
    %v5455 = vld [vmem:[#allocation6 + $0x150] sm:$0xff]
    %v5456 = vld [vmem:[#allocation6 + $0x158] sm:$0xff]
    %v5457 = vld [vmem:[#allocation6 + $0x160] sm:$0xff]
    %v5458 = vld [vmem:[#allocation6 + $0x168] sm:$0xff]
    %v5459 = vld [vmem:[#allocation6 + $0x170] sm:$0xff]
    %v5460 = vld [vmem:[#allocation6 + $0x178] sm:$0xff]
    %v5461 = vld [vmem:[#allocation6 + $0x180] sm:$0xff]
    %v5462 = vld [vmem:[#allocation6 + $0x188] sm:$0xff]
    %v5463 = vld [vmem:[#allocation6 + $0x190] sm:$0xff]
    %v5464 = vld [vmem:[#allocation6 + $0x198] sm:$0xff]
    %v5465 = vld [vmem:[#allocation6 + $0x1a0] sm:$0xff]
    %v5466 = vld [vmem:[#allocation6 + $0x1a8] sm:$0xff]
    %v5467 = vld [vmem:[#allocation6 + $0x1b0] sm:$0xff]
    %v5468 = vld [vmem:[#allocation6 + $0x1b8] sm:$0xff]
    %v5469 = vld [vmem:[#allocation6 + $0x1c0] sm:$0xff]
    %v5470 = vld [vmem:[#allocation6 + $0x1c8] sm:$0xff]
    %v5471 = vld [vmem:[#allocation6 + $0x1d0] sm:$0xff]
    %v5472 = vld [vmem:[#allocation6 + $0x1d8] sm:$0xff]
    %v5473 = vld [vmem:[#allocation6 + $0x1e0] sm:$0xff]
    %v5474 = vld [vmem:[#allocation6 + $0x1e8] sm:$0xff]
    %v5475 = vld [vmem:[#allocation6 + $0x1f0] sm:$0xff]
    %v5476 = vld [vmem:[#allocation6 + $0x1f8] sm:$0xff]
    %v5477 = vld [vmem:[#allocation6 + $0x200] sm:$0xff]
    %v5478 = vld [vmem:[#allocation6 + $0x208] sm:$0xff]
    %v5479 = vld [vmem:[#allocation6 + $0x210] sm:$0xff]
    %v5480 = vld [vmem:[#allocation6 + $0x218] sm:$0xff]
    %v5481 = vld [vmem:[#allocation6 + $0x220] sm:$0xff]
    %v5482 = vld [vmem:[#allocation6 + $0x228] sm:$0xff]
    %v5483 = vld [vmem:[#allocation6 + $0x230] sm:$0xff]
    %v5484 = vld [vmem:[#allocation6 + $0x238] sm:$0xff]
    %v5485 = vld [vmem:[#allocation6 + $0x240] sm:$0xff]
    %v5486 = vld [vmem:[#allocation6 + $0x248] sm:$0xff]
    %v5487 = vld [vmem:[#allocation6 + $0x250] sm:$0xff]
    %v5488 = vld [vmem:[#allocation6 + $0x258] sm:$0xff]
    %v5489 = vld [vmem:[#allocation6 + $0x260] sm:$0xff]
    %v5490 = vld [vmem:[#allocation6 + $0x268] sm:$0xff]
    %v5491 = vld [vmem:[#allocation6 + $0x270] sm:$0xff]
    %v5492 = vld [vmem:[#allocation6 + $0x278] sm:$0xff]
    %v5493 = vld [vmem:[#allocation6 + $0x280] sm:$0xff]
    %v5494 = vld [vmem:[#allocation6 + $0x288] sm:$0xff]
    %v5495 = vld [vmem:[#allocation6 + $0x290] sm:$0xff]
    %v5496 = vld [vmem:[#allocation6 + $0x298] sm:$0xff]
    %v5497 = vld [vmem:[#allocation6 + $0x2a0] sm:$0xff]
    %v5498 = vld [vmem:[#allocation6 + $0x2a8] sm:$0xff]
    %v5499 = vld [vmem:[#allocation6 + $0x2b0] sm:$0xff]
    %v5500 = vld [vmem:[#allocation6 + $0x2b8] sm:$0xff]
    %v5501 = vld [vmem:[#allocation6 + $0x2c0] sm:$0xff]
    %v5502 = vld [vmem:[#allocation6 + $0x2c8] sm:$0xff]
    %v5503 = vld [vmem:[#allocation6 + $0x2d0] sm:$0xff]
    %v5504 = vld [vmem:[#allocation6 + $0x2d8] sm:$0xff]
    %v5505 = vld [vmem:[#allocation6 + $0x2e0] sm:$0xff]
    %v5506 = vld [vmem:[#allocation6 + $0x2e8] sm:$0xff]
    %v5507 = vld [vmem:[#allocation6 + $0x2f0] sm:$0xff]
    %v5508 = vld [vmem:[#allocation6 + $0x2f8] sm:$0xff]
    %v5509 = vld [vmem:[#allocation6 + $0x300] sm:$0xff]
    %v5510 = vld [vmem:[#allocation6 + $0x308] sm:$0xff]
    %v5511 = vld [vmem:[#allocation6 + $0x310] sm:$0xff]
    %v5512 = vld [vmem:[#allocation6 + $0x318] sm:$0xff]
    %v5513 = vld [vmem:[#allocation6 + $0x320] sm:$0xff]
    %v5514 = vld [vmem:[#allocation6 + $0x328] sm:$0xff]
    %v5515 = vld [vmem:[#allocation6 + $0x330] sm:$0xff]
    %v5516 = vld [vmem:[#allocation6 + $0x338] sm:$0xff]
    %v5517 = vld [vmem:[#allocation6 + $0x340] sm:$0xff]
    %v5518 = vld [vmem:[#allocation6 + $0x348] sm:$0xff]
    %v5519 = vld [vmem:[#allocation6 + $0x350] sm:$0xff]
    %v5520 = vld [vmem:[#allocation6 + $0x358] sm:$0xff]
    %v5521 = vld [vmem:[#allocation6 + $0x360] sm:$0xff]
    %v5522 = vld [vmem:[#allocation6 + $0x368] sm:$0xff]
    %v5523 = vld [vmem:[#allocation6 + $0x370] sm:$0xff]
    %v5524 = vld [vmem:[#allocation6 + $0x378] sm:$0xff]
    %v5525 = vld [vmem:[#allocation6 + $0x380] sm:$0xff]
    %v5526 = vld [vmem:[#allocation6 + $0x388] sm:$0xff]
    %v5527 = vld [vmem:[#allocation6 + $0x390] sm:$0xff]
    %v5528 = vld [vmem:[#allocation6 + $0x398] sm:$0xff]
    %v5529 = vld [vmem:[#allocation6 + $0x3a0] sm:$0xff]
    %v5530 = vld [vmem:[#allocation6 + $0x3a8] sm:$0xff]
    %v5531 = vld [vmem:[#allocation6 + $0x3b0] sm:$0xff]
    %v5532 = vld [vmem:[#allocation6 + $0x3b8] sm:$0xff]
    %v5533 = vld [vmem:[#allocation6 + $0x3c0] sm:$0xff]
    %v5534 = vld [vmem:[#allocation6 + $0x3c8] sm:$0xff]
    %v5535 = vld [vmem:[#allocation6 + $0x3d0] sm:$0xff]
    %v5536 = vld [vmem:[#allocation6 + $0x3d8] sm:$0xff]
    %v5537 = vld [vmem:[#allocation6 + $0x3e0] sm:$0xff]
    %v5538 = vld [vmem:[#allocation6 + $0x3e8] sm:$0xff]
    %v5539 = vld [vmem:[#allocation6 + $0x3f0] sm:$0xff]
    %v5540 = vld [vmem:[#allocation6 + $0x3f8] sm:$0xff]
    %5541 = vmatprep.subr.bf16.mxu0 %v5414
    %5542 = vmatpush1.bf16.msra.mxu0 %v5413
    %5543 = vmatprep.subr.bf16.mxu0 %v5422
    %5544 = vmatpush1.bf16.msra.mxu0 %v5421
    %5545 = vmatprep.subr.bf16.mxu0 %v5430
    %5546 = vmatpush1.bf16.msra.mxu0 %v5429
    %5547 = vmatprep.subr.bf16.mxu0 %v5438
    %5548 = vmatpush1.bf16.msra.mxu0 %v5437
    %5549 = vmatprep.subr.bf16.mxu0 %v5446
    %5550 = vmatpush1.bf16.msra.mxu0 %v5445
    %5551 = vmatprep.subr.bf16.mxu0 %v5454
    %5552 = vmatpush1.bf16.msra.mxu0 %v5453
    %5553 = vmatprep.subr.bf16.mxu0 %v5462
    %5554 = vmatpush1.bf16.msra.mxu0 %v5461
    %5555 = vmatprep.subr.bf16.mxu0 %v5470
    %5556 = vmatpush1.bf16.msra.mxu0 %v5469
    %5557 = vmatprep.subr.bf16.mxu0 %v5478
    %5558 = vmatpush1.bf16.msra.mxu0 %v5477
    %5559 = vmatprep.subr.bf16.mxu0 %v5486
    %5560 = vmatpush1.bf16.msra.mxu0 %v5485
    %5561 = vmatprep.subr.bf16.mxu0 %v5494
    %5562 = vmatpush1.bf16.msra.mxu0 %v5493
    %5563 = vmatprep.subr.bf16.mxu0 %v5502
    %5564 = vmatpush1.bf16.msra.mxu0 %v5501
    %5565 = vmatprep.subr.bf16.mxu0 %v5510
    %5566 = vmatpush1.bf16.msra.mxu0 %v5509
    %5567 = vmatprep.subr.bf16.mxu0 %v5518
    %5568 = vmatpush1.bf16.msra.mxu0 %v5517
    %5569 = vmatprep.subr.bf16.mxu0 %v5526
    %5570 = vmatpush1.bf16.msra.mxu0 %v5525
    %5571 = vmatprep.subr.bf16.mxu0 %v5534
    %5572 = vmatpush1.bf16.msra.mxu0 %v5533
    %5573 = vmatprep.mubr.bf16.mxu0 %v5412
    %5574 = vmatmul.mubr.bf16.gmra.mrb[0].mxu0 %v5411
    %v5575 = vpop.f32.mrb[0].mxu0
    %v5576 = vadd.f32 0.0, %v5575
    %v5577 = vpop.f32.mrb[0].mxu0
    %v5578 = vadd.f32 0.0, %v5577
    %v5579 = vpop.f32.mrb[0].mxu0
    %v5580 = vpop.f32.mrb[0].mxu0
    %5581 = vdwg.mxu0
    %5582 = vmatprep.subr.bf16.mxu0 %v5416
    %5583 = vmatpush1.bf16.msra.mxu0 %v5415
    %5584 = vmatprep.subr.bf16.mxu0 %v5424
    %5585 = vmatpush1.bf16.msra.mxu0 %v5423
    %5586 = vmatprep.subr.bf16.mxu0 %v5432
    %5587 = vmatpush1.bf16.msra.mxu0 %v5431
    %5588 = vmatprep.subr.bf16.mxu0 %v5440
    %5589 = vmatpush1.bf16.msra.mxu0 %v5439
    %5590 = vmatprep.subr.bf16.mxu0 %v5448
    %5591 = vmatpush1.bf16.msra.mxu0 %v5447
    %5592 = vmatprep.subr.bf16.mxu0 %v5456
    %5593 = vmatpush1.bf16.msra.mxu0 %v5455
    %5594 = vmatprep.subr.bf16.mxu0 %v5464
    %5595 = vmatpush1.bf16.msra.mxu0 %v5463
    %5596 = vmatprep.subr.bf16.mxu0 %v5472
    %5597 = vmatpush1.bf16.msra.mxu0 %v5471
    %5598 = vmatprep.subr.bf16.mxu0 %v5480
    %5599 = vmatpush1.bf16.msra.mxu0 %v5479
    %5600 = vmatprep.subr.bf16.mxu0 %v5488
    %5601 = vmatpush1.bf16.msra.mxu0 %v5487
    %5602 = vmatprep.subr.bf16.mxu0 %v5496
    %5603 = vmatpush1.bf16.msra.mxu0 %v5495
    %5604 = vmatprep.subr.bf16.mxu0 %v5504
    %5605 = vmatpush1.bf16.msra.mxu0 %v5503
    %5606 = vmatprep.subr.bf16.mxu0 %v5512
    %5607 = vmatpush1.bf16.msra.mxu0 %v5511
    %5608 = vmatprep.subr.bf16.mxu0 %v5520
    %5609 = vmatpush1.bf16.msra.mxu0 %v5519
    %5610 = vmatprep.subr.bf16.mxu0 %v5528
    %5611 = vmatpush1.bf16.msra.mxu0 %v5527
    %5612 = vmatprep.subr.bf16.mxu0 %v5536
    %5613 = vmatpush1.bf16.msra.mxu0 %v5535
    %5614 = vmatprep.mubr.bf16.mxu0 %v5412
    %5615 = vmatmul.mubr.bf16.gmra.mrb[0].mxu0 %v5411
    %v5616 = vpop.f32.mrb[0].mxu0
    %v5617 = vadd.f32 0.0, %v5616
    %v5618 = vpop.f32.mrb[0].mxu0
    %v5619 = vadd.f32 0.0, %v5618
    %v5620 = vpop.f32.mrb[0].mxu0
    %v5621 = vpop.f32.mrb[0].mxu0
    %5622 = vdwg.mxu0
    %5623 = vmatprep.subr.bf16.mxu0 %v5418
    %5624 = vmatpush1.bf16.msra.mxu0 %v5417
    %5625 = vmatprep.subr.bf16.mxu0 %v5426
    %5626 = vmatpush1.bf16.msra.mxu0 %v5425
    %5627 = vmatprep.subr.bf16.mxu0 %v5434
    %5628 = vmatpush1.bf16.msra.mxu0 %v5433
    %5629 = vmatprep.subr.bf16.mxu0 %v5442
    %5630 = vmatpush1.bf16.msra.mxu0 %v5441
    %5631 = vmatprep.subr.bf16.mxu0 %v5450
    %5632 = vmatpush1.bf16.msra.mxu0 %v5449
    %5633 = vmatprep.subr.bf16.mxu0 %v5458
    %5634 = vmatpush1.bf16.msra.mxu0 %v5457
    %5635 = vmatprep.subr.bf16.mxu0 %v5466
    %5636 = vmatpush1.bf16.msra.mxu0 %v5465
    %5637 = vmatprep.subr.bf16.mxu0 %v5474
    %5638 = vmatpush1.bf16.msra.mxu0 %v5473
    %5639 = vmatprep.subr.bf16.mxu0 %v5482
    %5640 = vmatpush1.bf16.msra.mxu0 %v5481
    %5641 = vmatprep.subr.bf16.mxu0 %v5490
    %5642 = vmatpush1.bf16.msra.mxu0 %v5489
    %5643 = vmatprep.subr.bf16.mxu0 %v5498
    %5644 = vmatpush1.bf16.msra.mxu0 %v5497
    %5645 = vmatprep.subr.bf16.mxu0 %v5506
    %5646 = vmatpush1.bf16.msra.mxu0 %v5505
    %5647 = vmatprep.subr.bf16.mxu0 %v5514
    %5648 = vmatpush1.bf16.msra.mxu0 %v5513
    %5649 = vmatprep.subr.bf16.mxu0 %v5522
    %5650 = vmatpush1.bf16.msra.mxu0 %v5521
    %5651 = vmatprep.subr.bf16.mxu0 %v5530
    %5652 = vmatpush1.bf16.msra.mxu0 %v5529
    %5653 = vmatprep.subr.bf16.mxu0 %v5538
    %5654 = vmatpush1.bf16.msra.mxu0 %v5537
    %5655 = vmatprep.mubr.bf16.mxu0 %v5412
    %5656 = vmatmul.mubr.bf16.gmra.mrb[0].mxu0 %v5411
    %v5657 = vpop.f32.mrb[0].mxu0
    %v5658 = vadd.f32 0.0, %v5657
    %v5659 = vpop.f32.mrb[0].mxu0
    %v5660 = vadd.f32 0.0, %v5659
    %v5661 = vpop.f32.mrb[0].mxu0
    %v5662 = vpop.f32.mrb[0].mxu0
    %5663 = vdwg.mxu0
    %5664 = vmatprep.subr.bf16.mxu0 %v5420
    %5665 = vmatpush1.bf16.msra.mxu0 %v5419
    %5666 = vmatprep.subr.bf16.mxu0 %v5428
    %5667 = vmatpush1.bf16.msra.mxu0 %v5427
    %5668 = vmatprep.subr.bf16.mxu0 %v5436
    %5669 = vmatpush1.bf16.msra.mxu0 %v5435
    %5670 = vmatprep.subr.bf16.mxu0 %v5444
    %5671 = vmatpush1.bf16.msra.mxu0 %v5443
    %5672 = vmatprep.subr.bf16.mxu0 %v5452
    %5673 = vmatpush1.bf16.msra.mxu0 %v5451
    %5674 = vmatprep.subr.bf16.mxu0 %v5460
    %5675 = vmatpush1.bf16.msra.mxu0 %v5459
    %5676 = vmatprep.subr.bf16.mxu0 %v5468
    %5677 = vmatpush1.bf16.msra.mxu0 %v5467
    %5678 = vmatprep.subr.bf16.mxu0 %v5476
    %5679 = vmatpush1.bf16.msra.mxu0 %v5475
    %5680 = vmatprep.subr.bf16.mxu0 %v5484
    %5681 = vmatpush1.bf16.msra.mxu0 %v5483
    %5682 = vmatprep.subr.bf16.mxu0 %v5492
    %5683 = vmatpush1.bf16.msra.mxu0 %v5491
    %5684 = vmatprep.subr.bf16.mxu0 %v5500
    %5685 = vmatpush1.bf16.msra.mxu0 %v5499
    %5686 = vmatprep.subr.bf16.mxu0 %v5508
    %5687 = vmatpush1.bf16.msra.mxu0 %v5507
    %5688 = vmatprep.subr.bf16.mxu0 %v5516
    %5689 = vmatpush1.bf16.msra.mxu0 %v5515
    %5690 = vmatprep.subr.bf16.mxu0 %v5524
    %5691 = vmatpush1.bf16.msra.mxu0 %v5523
    %5692 = vmatprep.subr.bf16.mxu0 %v5532
    %5693 = vmatpush1.bf16.msra.mxu0 %v5531
    %5694 = vmatprep.subr.bf16.mxu0 %v5540
    %5695 = vmatpush1.bf16.msra.mxu0 %v5539
    %5696 = vmatprep.mubr.bf16.mxu0 %v5412
    %5697 = vmatmul.mubr.bf16.gmra.mrb[0].mxu0 %v5411
    %v5698 = vpop.f32.mrb[0].mxu0
    %v5699 = vadd.f32 0.0, %v5698
    %v5700 = vpop.f32.mrb[0].mxu0
    %v5701 = vadd.f32 0.0, %v5700
    %v5702 = vpop.f32.mrb[0].mxu0
    %v5703 = vpop.f32.mrb[0].mxu0
    %5704 = vdwg.mxu0
    %v5705 = vadd.f32 %v5403, %v5576
    %v5706 = vadd.f32 %v5404, %v5578
    %v5707 = vadd.f32 %v5405, %v5617
    %v5708 = vadd.f32 %v5406, %v5619
    %v5709 = vadd.f32 %v5407, %v5658
    %v5710 = vadd.f32 %v5408, %v5660
    %v5711 = vadd.f32 %v5409, %v5699
    %v5712 = vadd.f32 %v5410, %v5701
    %v5713 = vxor.u32 %v5395, 2147483648
    %v5714 = vxor.u32 %v5396, 2147483648
    %v5715 = vmul.f32 %v5713, 1.442695
    %v5716 = vpow.pop %v5715
    %v5717 = vmul.f32 %v5714, 1.442695
    %v5718 = vpow.pop %v5717
    %v5719 = vadd.f32 %v5716, 1.0
    %v5720 = vadd.f32 %v5718, 1.0
    %v5721 = vrcp.pop %v5719
    %v5722 = vmul.f32 1.0, %v5721
    %v5723 = vrcp.pop %v5720
    %v5724 = vmul.f32 1.0, %v5723
    %v5725 = vxor.u32 %v5397, 2147483648
    %v5726 = vxor.u32 %v5398, 2147483648
    %v5727 = vmul.f32 %v5725, 1.442695
    %v5728 = vpow.pop %v5727
    %v5729 = vmul.f32 %v5726, 1.442695
    %v5730 = vpow.pop %v5729
    %v5731 = vadd.f32 %v5728, 1.0
    %v5732 = vadd.f32 %v5730, 1.0
    %v5733 = vrcp.pop %v5731
    %v5734 = vmul.f32 1.0, %v5733
    %v5735 = vrcp.pop %v5732
    %v5736 = vmul.f32 1.0, %v5735
    %v5737 = vtanh.pop %v5399
    %v5738 = vtanh.pop %v5400
    %v5739 = vxor.u32 %v5401, 2147483648
    %v5740 = vxor.u32 %v5402, 2147483648
    %v5741 = vmul.f32 %v5739, 1.442695
    %v5742 = vpow.pop %v5741
    %v5743 = vmul.f32 %v5740, 1.442695
    %v5744 = vpow.pop %v5743
    %v5745 = vadd.f32 %v5742, 1.0
    %v5746 = vadd.f32 %v5744, 1.0
    %v5747 = vrcp.pop %v5745
    %v5748 = vmul.f32 1.0, %v5747
    %v5749 = vrcp.pop %v5746
    %v5750 = vmul.f32 1.0, %v5749
    %v5751 = vmul.f32 %v5734, %v5035
    %v5752 = vmul.f32 %v5736, %v5036
    %v5753 = vmul.f32 %v5722, %v5737
    %v5754 = vmul.f32 %v5724, %v5738
    %v5755 = vadd.f32 %v5751, %v5753
    %v5756 = vadd.f32 %v5752, %v5754
    %v5757 = vtanh.pop %v5755
    %v5758 = vtanh.pop %v5756
    %v5759 = vmul.f32 %v5748, %v5757
    %v5760 = vmul.f32 %v5750, %v5758
    %v5761 = vxor.u32 %v5705, 2147483648
    %v5762 = vxor.u32 %v5706, 2147483648
    %v5763 = vmul.f32 %v5761, 1.442695
    %v5764 = vpow.pop %v5763
    %v5765 = vmul.f32 %v5762, 1.442695
    %v5766 = vpow.pop %v5765
    %v5767 = vadd.f32 %v5764, 1.0
    %v5768 = vadd.f32 %v5766, 1.0
    %v5769 = vrcp.pop %v5767
    %v5770 = vmul.f32 1.0, %v5769
    %v5771 = vrcp.pop %v5768
    %v5772 = vmul.f32 1.0, %v5771
    %v5773 = vxor.u32 %v5707, 2147483648
    %v5774 = vxor.u32 %v5708, 2147483648
    %v5775 = vmul.f32 %v5773, 1.442695
    %v5776 = vpow.pop %v5775
    %v5777 = vmul.f32 %v5774, 1.442695
    %v5778 = vpow.pop %v5777
    %v5779 = vadd.f32 %v5776, 1.0
    %v5780 = vadd.f32 %v5778, 1.0
    %v5781 = vrcp.pop %v5779
    %v5782 = vmul.f32 1.0, %v5781
    %v5783 = vrcp.pop %v5780
    %v5784 = vmul.f32 1.0, %v5783
    %v5785 = vtanh.pop %v5709
    %v5786 = vtanh.pop %v5710
    %v5787 = vxor.u32 %v5711, 2147483648
    %v5788 = vxor.u32 %v5712, 2147483648
    %v5789 = vmul.f32 %v5787, 1.442695
    %v5790 = vpow.pop %v5789
    %v5791 = vmul.f32 %v5788, 1.442695
    %v5792 = vpow.pop %v5791
    %v5793 = vadd.f32 %v5790, 1.0
    %v5794 = vadd.f32 %v5792, 1.0
    %v5795 = vrcp.pop %v5793
    %v5796 = vmul.f32 1.0, %v5795
    %v5797 = vrcp.pop %v5794
    %v5798 = vmul.f32 1.0, %v5797
    %v5799 = vmul.f32 %v5782, %v5083
    %v5800 = vmul.f32 %v5784, %v5084
    %v5801 = vmul.f32 %v5770, %v5785
    %v5802 = vmul.f32 %v5772, %v5786
    %v5803 = vadd.f32 %v5799, %v5801
    %v5804 = vadd.f32 %v5800, %v5802
    %v5805 = vtanh.pop %v5803
    %v5806 = vtanh.pop %v5804
    %v5807 = vmul.f32 %v5796, %v5805
    %v5808 = vmul.f32 %v5798, %v5806
    %5809 = vst [vmem:[#allocation3 + $0xa0] sm:$0xff] %v5759
    %5810 = vst [vmem:[#allocation3 + $0xa8] sm:$0xff] %v5760
    %5811 = vst [vmem:[#allocation3 + $0x50] sm:$0xff] %v5807
    %5812 = vst [vmem:[#allocation3 + $0x58] sm:$0xff] %v5808
    %v5813 = vld [vmem:[#allocation2 + $0x300] sm:$0xff]
    %v5814 = vld [vmem:[#allocation2 + $0x308] sm:$0xff]
    %v5815 = vld [vmem:[#allocation2 + $0x310] sm:$0xff]
    %v5816 = vld [vmem:[#allocation2 + $0x318] sm:$0xff]
    %v5817 = vld [vmem:[#allocation2 + $0x320] sm:$0xff]
    %v5818 = vld [vmem:[#allocation2 + $0x328] sm:$0xff]
    %v5819 = vld [vmem:[#allocation2 + $0x330] sm:$0xff]
    %v5820 = vld [vmem:[#allocation2 + $0x338] sm:$0xff]
    %v5821 = vpack.c.bf16 %v5759, %v5759
    %v5822 = vpack.c.bf16 %v5760, %v5760
    %v5823 = vld [vmem:[#allocation5] sm:$0xff]
    %v5824 = vld [vmem:[#allocation5 + $0x8] sm:$0xff]
    %v5825 = vld [vmem:[#allocation5 + $0x10] sm:$0xff]
    %v5826 = vld [vmem:[#allocation5 + $0x18] sm:$0xff]
    %v5827 = vld [vmem:[#allocation5 + $0x20] sm:$0xff]
    %v5828 = vld [vmem:[#allocation5 + $0x28] sm:$0xff]
    %v5829 = vld [vmem:[#allocation5 + $0x30] sm:$0xff]
    %v5830 = vld [vmem:[#allocation5 + $0x38] sm:$0xff]
    %v5831 = vld [vmem:[#allocation5 + $0x40] sm:$0xff]
    %v5832 = vld [vmem:[#allocation5 + $0x48] sm:$0xff]
    %v5833 = vld [vmem:[#allocation5 + $0x50] sm:$0xff]
    %v5834 = vld [vmem:[#allocation5 + $0x58] sm:$0xff]
    %v5835 = vld [vmem:[#allocation5 + $0x60] sm:$0xff]
    %v5836 = vld [vmem:[#allocation5 + $0x68] sm:$0xff]
    %v5837 = vld [vmem:[#allocation5 + $0x70] sm:$0xff]
    %v5838 = vld [vmem:[#allocation5 + $0x78] sm:$0xff]
    %v5839 = vld [vmem:[#allocation5 + $0x80] sm:$0xff]
    %v5840 = vld [vmem:[#allocation5 + $0x88] sm:$0xff]
    %v5841 = vld [vmem:[#allocation5 + $0x90] sm:$0xff]
    %v5842 = vld [vmem:[#allocation5 + $0x98] sm:$0xff]
    %v5843 = vld [vmem:[#allocation5 + $0xa0] sm:$0xff]
    %v5844 = vld [vmem:[#allocation5 + $0xa8] sm:$0xff]
    %v5845 = vld [vmem:[#allocation5 + $0xb0] sm:$0xff]
    %v5846 = vld [vmem:[#allocation5 + $0xb8] sm:$0xff]
    %v5847 = vld [vmem:[#allocation5 + $0xc0] sm:$0xff]
    %v5848 = vld [vmem:[#allocation5 + $0xc8] sm:$0xff]
    %v5849 = vld [vmem:[#allocation5 + $0xd0] sm:$0xff]
    %v5850 = vld [vmem:[#allocation5 + $0xd8] sm:$0xff]
    %v5851 = vld [vmem:[#allocation5 + $0xe0] sm:$0xff]
    %v5852 = vld [vmem:[#allocation5 + $0xe8] sm:$0xff]
    %v5853 = vld [vmem:[#allocation5 + $0xf0] sm:$0xff]
    %v5854 = vld [vmem:[#allocation5 + $0xf8] sm:$0xff]
    %v5855 = vld [vmem:[#allocation5 + $0x100] sm:$0xff]
    %v5856 = vld [vmem:[#allocation5 + $0x108] sm:$0xff]
    %v5857 = vld [vmem:[#allocation5 + $0x110] sm:$0xff]
    %v5858 = vld [vmem:[#allocation5 + $0x118] sm:$0xff]
    %v5859 = vld [vmem:[#allocation5 + $0x120] sm:$0xff]
    %v5860 = vld [vmem:[#allocation5 + $0x128] sm:$0xff]
    %v5861 = vld [vmem:[#allocation5 + $0x130] sm:$0xff]
    %v5862 = vld [vmem:[#allocation5 + $0x138] sm:$0xff]
    %v5863 = vld [vmem:[#allocation5 + $0x140] sm:$0xff]
    %v5864 = vld [vmem:[#allocation5 + $0x148] sm:$0xff]
    %v5865 = vld [vmem:[#allocation5 + $0x150] sm:$0xff]
    %v5866 = vld [vmem:[#allocation5 + $0x158] sm:$0xff]
    %v5867 = vld [vmem:[#allocation5 + $0x160] sm:$0xff]
    %v5868 = vld [vmem:[#allocation5 + $0x168] sm:$0xff]
    %v5869 = vld [vmem:[#allocation5 + $0x170] sm:$0xff]
    %v5870 = vld [vmem:[#allocation5 + $0x178] sm:$0xff]
    %v5871 = vld [vmem:[#allocation5 + $0x180] sm:$0xff]
    %v5872 = vld [vmem:[#allocation5 + $0x188] sm:$0xff]
    %v5873 = vld [vmem:[#allocation5 + $0x190] sm:$0xff]
    %v5874 = vld [vmem:[#allocation5 + $0x198] sm:$0xff]
    %v5875 = vld [vmem:[#allocation5 + $0x1a0] sm:$0xff]
    %v5876 = vld [vmem:[#allocation5 + $0x1a8] sm:$0xff]
    %v5877 = vld [vmem:[#allocation5 + $0x1b0] sm:$0xff]
    %v5878 = vld [vmem:[#allocation5 + $0x1b8] sm:$0xff]
    %v5879 = vld [vmem:[#allocation5 + $0x1c0] sm:$0xff]
    %v5880 = vld [vmem:[#allocation5 + $0x1c8] sm:$0xff]
    %v5881 = vld [vmem:[#allocation5 + $0x1d0] sm:$0xff]
    %v5882 = vld [vmem:[#allocation5 + $0x1d8] sm:$0xff]
    %v5883 = vld [vmem:[#allocation5 + $0x1e0] sm:$0xff]
    %v5884 = vld [vmem:[#allocation5 + $0x1e8] sm:$0xff]
    %v5885 = vld [vmem:[#allocation5 + $0x1f0] sm:$0xff]
    %v5886 = vld [vmem:[#allocation5 + $0x1f8] sm:$0xff]
    %v5887 = vld [vmem:[#allocation5 + $0x200] sm:$0xff]
    %v5888 = vld [vmem:[#allocation5 + $0x208] sm:$0xff]
    %v5889 = vld [vmem:[#allocation5 + $0x210] sm:$0xff]
    %v5890 = vld [vmem:[#allocation5 + $0x218] sm:$0xff]
    %v5891 = vld [vmem:[#allocation5 + $0x220] sm:$0xff]
    %v5892 = vld [vmem:[#allocation5 + $0x228] sm:$0xff]
    %v5893 = vld [vmem:[#allocation5 + $0x230] sm:$0xff]
    %v5894 = vld [vmem:[#allocation5 + $0x238] sm:$0xff]
    %v5895 = vld [vmem:[#allocation5 + $0x240] sm:$0xff]
    %v5896 = vld [vmem:[#allocation5 + $0x248] sm:$0xff]
    %v5897 = vld [vmem:[#allocation5 + $0x250] sm:$0xff]
    %v5898 = vld [vmem:[#allocation5 + $0x258] sm:$0xff]
    %v5899 = vld [vmem:[#allocation5 + $0x260] sm:$0xff]
    %v5900 = vld [vmem:[#allocation5 + $0x268] sm:$0xff]
    %v5901 = vld [vmem:[#allocation5 + $0x270] sm:$0xff]
    %v5902 = vld [vmem:[#allocation5 + $0x278] sm:$0xff]
    %v5903 = vld [vmem:[#allocation5 + $0x280] sm:$0xff]
    %v5904 = vld [vmem:[#allocation5 + $0x288] sm:$0xff]
    %v5905 = vld [vmem:[#allocation5 + $0x290] sm:$0xff]
    %v5906 = vld [vmem:[#allocation5 + $0x298] sm:$0xff]
    %v5907 = vld [vmem:[#allocation5 + $0x2a0] sm:$0xff]
    %v5908 = vld [vmem:[#allocation5 + $0x2a8] sm:$0xff]
    %v5909 = vld [vmem:[#allocation5 + $0x2b0] sm:$0xff]
    %v5910 = vld [vmem:[#allocation5 + $0x2b8] sm:$0xff]
    %v5911 = vld [vmem:[#allocation5 + $0x2c0] sm:$0xff]
    %v5912 = vld [vmem:[#allocation5 + $0x2c8] sm:$0xff]
    %v5913 = vld [vmem:[#allocation5 + $0x2d0] sm:$0xff]
    %v5914 = vld [vmem:[#allocation5 + $0x2d8] sm:$0xff]
    %v5915 = vld [vmem:[#allocation5 + $0x2e0] sm:$0xff]
    %v5916 = vld [vmem:[#allocation5 + $0x2e8] sm:$0xff]
    %v5917 = vld [vmem:[#allocation5 + $0x2f0] sm:$0xff]
    %v5918 = vld [vmem:[#allocation5 + $0x2f8] sm:$0xff]
    %v5919 = vld [vmem:[#allocation5 + $0x300] sm:$0xff]
    %v5920 = vld [vmem:[#allocation5 + $0x308] sm:$0xff]
    %v5921 = vld [vmem:[#allocation5 + $0x310] sm:$0xff]
    %v5922 = vld [vmem:[#allocation5 + $0x318] sm:$0xff]
    %v5923 = vld [vmem:[#allocation5 + $0x320] sm:$0xff]
    %v5924 = vld [vmem:[#allocation5 + $0x328] sm:$0xff]
    %v5925 = vld [vmem:[#allocation5 + $0x330] sm:$0xff]
    %v5926 = vld [vmem:[#allocation5 + $0x338] sm:$0xff]
    %v5927 = vld [vmem:[#allocation5 + $0x340] sm:$0xff]
    %v5928 = vld [vmem:[#allocation5 + $0x348] sm:$0xff]
    %v5929 = vld [vmem:[#allocation5 + $0x350] sm:$0xff]
    %v5930 = vld [vmem:[#allocation5 + $0x358] sm:$0xff]
    %v5931 = vld [vmem:[#allocation5 + $0x360] sm:$0xff]
    %v5932 = vld [vmem:[#allocation5 + $0x368] sm:$0xff]
    %v5933 = vld [vmem:[#allocation5 + $0x370] sm:$0xff]
    %v5934 = vld [vmem:[#allocation5 + $0x378] sm:$0xff]
    %v5935 = vld [vmem:[#allocation5 + $0x380] sm:$0xff]
    %v5936 = vld [vmem:[#allocation5 + $0x388] sm:$0xff]
    %v5937 = vld [vmem:[#allocation5 + $0x390] sm:$0xff]
    %v5938 = vld [vmem:[#allocation5 + $0x398] sm:$0xff]
    %v5939 = vld [vmem:[#allocation5 + $0x3a0] sm:$0xff]
    %v5940 = vld [vmem:[#allocation5 + $0x3a8] sm:$0xff]
    %v5941 = vld [vmem:[#allocation5 + $0x3b0] sm:$0xff]
    %v5942 = vld [vmem:[#allocation5 + $0x3b8] sm:$0xff]
    %v5943 = vld [vmem:[#allocation5 + $0x3c0] sm:$0xff]
    %v5944 = vld [vmem:[#allocation5 + $0x3c8] sm:$0xff]
    %v5945 = vld [vmem:[#allocation5 + $0x3d0] sm:$0xff]
    %v5946 = vld [vmem:[#allocation5 + $0x3d8] sm:$0xff]
    %v5947 = vld [vmem:[#allocation5 + $0x3e0] sm:$0xff]
    %v5948 = vld [vmem:[#allocation5 + $0x3e8] sm:$0xff]
    %v5949 = vld [vmem:[#allocation5 + $0x3f0] sm:$0xff]
    %v5950 = vld [vmem:[#allocation5 + $0x3f8] sm:$0xff]
    %5951 = vmatprep.subr.bf16.mxu0 %v5824
    %5952 = vmatpush1.bf16.msra.mxu0 %v5823
    %5953 = vmatprep.subr.bf16.mxu0 %v5832
    %5954 = vmatpush1.bf16.msra.mxu0 %v5831
    %5955 = vmatprep.subr.bf16.mxu0 %v5840
    %5956 = vmatpush1.bf16.msra.mxu0 %v5839
    %5957 = vmatprep.subr.bf16.mxu0 %v5848
    %5958 = vmatpush1.bf16.msra.mxu0 %v5847
    %5959 = vmatprep.subr.bf16.mxu0 %v5856
    %5960 = vmatpush1.bf16.msra.mxu0 %v5855
    %5961 = vmatprep.subr.bf16.mxu0 %v5864
    %5962 = vmatpush1.bf16.msra.mxu0 %v5863
    %5963 = vmatprep.subr.bf16.mxu0 %v5872
    %5964 = vmatpush1.bf16.msra.mxu0 %v5871
    %5965 = vmatprep.subr.bf16.mxu0 %v5880
    %5966 = vmatpush1.bf16.msra.mxu0 %v5879
    %5967 = vmatprep.subr.bf16.mxu0 %v5888
    %5968 = vmatpush1.bf16.msra.mxu0 %v5887
    %5969 = vmatprep.subr.bf16.mxu0 %v5896
    %5970 = vmatpush1.bf16.msra.mxu0 %v5895
    %5971 = vmatprep.subr.bf16.mxu0 %v5904
    %5972 = vmatpush1.bf16.msra.mxu0 %v5903
    %5973 = vmatprep.subr.bf16.mxu0 %v5912
    %5974 = vmatpush1.bf16.msra.mxu0 %v5911
    %5975 = vmatprep.subr.bf16.mxu0 %v5920
    %5976 = vmatpush1.bf16.msra.mxu0 %v5919
    %5977 = vmatprep.subr.bf16.mxu0 %v5928
    %5978 = vmatpush1.bf16.msra.mxu0 %v5927
    %5979 = vmatprep.subr.bf16.mxu0 %v5936
    %5980 = vmatpush1.bf16.msra.mxu0 %v5935
    %5981 = vmatprep.subr.bf16.mxu0 %v5944
    %5982 = vmatpush1.bf16.msra.mxu0 %v5943
    %5983 = vmatprep.mubr.bf16.mxu0 %v5822
    %5984 = vmatmul.mubr.bf16.gmra.mrb[0].mxu0 %v5821
    %v5985 = vpop.f32.mrb[0].mxu0
    %v5986 = vadd.f32 0.0, %v5985
    %v5987 = vpop.f32.mrb[0].mxu0
    %v5988 = vadd.f32 0.0, %v5987
    %v5989 = vpop.f32.mrb[0].mxu0
    %v5990 = vpop.f32.mrb[0].mxu0
    %5991 = vdwg.mxu0
    %5992 = vmatprep.subr.bf16.mxu0 %v5826
    %5993 = vmatpush1.bf16.msra.mxu0 %v5825
    %5994 = vmatprep.subr.bf16.mxu0 %v5834
    %5995 = vmatpush1.bf16.msra.mxu0 %v5833
    %5996 = vmatprep.subr.bf16.mxu0 %v5842
    %5997 = vmatpush1.bf16.msra.mxu0 %v5841
    %5998 = vmatprep.subr.bf16.mxu0 %v5850
    %5999 = vmatpush1.bf16.msra.mxu0 %v5849
    %6000 = vmatprep.subr.bf16.mxu0 %v5858
    %6001 = vmatpush1.bf16.msra.mxu0 %v5857
    %6002 = vmatprep.subr.bf16.mxu0 %v5866
    %6003 = vmatpush1.bf16.msra.mxu0 %v5865
    %6004 = vmatprep.subr.bf16.mxu0 %v5874
    %6005 = vmatpush1.bf16.msra.mxu0 %v5873
    %6006 = vmatprep.subr.bf16.mxu0 %v5882
    %6007 = vmatpush1.bf16.msra.mxu0 %v5881
    %6008 = vmatprep.subr.bf16.mxu0 %v5890
    %6009 = vmatpush1.bf16.msra.mxu0 %v5889
    %6010 = vmatprep.subr.bf16.mxu0 %v5898
    %6011 = vmatpush1.bf16.msra.mxu0 %v5897
    %6012 = vmatprep.subr.bf16.mxu0 %v5906
    %6013 = vmatpush1.bf16.msra.mxu0 %v5905
    %6014 = vmatprep.subr.bf16.mxu0 %v5914
    %6015 = vmatpush1.bf16.msra.mxu0 %v5913
    %6016 = vmatprep.subr.bf16.mxu0 %v5922
    %6017 = vmatpush1.bf16.msra.mxu0 %v5921
    %6018 = vmatprep.subr.bf16.mxu0 %v5930
    %6019 = vmatpush1.bf16.msra.mxu0 %v5929
    %6020 = vmatprep.subr.bf16.mxu0 %v5938
    %6021 = vmatpush1.bf16.msra.mxu0 %v5937
    %6022 = vmatprep.subr.bf16.mxu0 %v5946
    %6023 = vmatpush1.bf16.msra.mxu0 %v5945
    %6024 = vmatprep.mubr.bf16.mxu0 %v5822
    %6025 = vmatmul.mubr.bf16.gmra.mrb[0].mxu0 %v5821
    %v6026 = vpop.f32.mrb[0].mxu0
    %v6027 = vadd.f32 0.0, %v6026
    %v6028 = vpop.f32.mrb[0].mxu0
    %v6029 = vadd.f32 0.0, %v6028
    %v6030 = vpop.f32.mrb[0].mxu0
    %v6031 = vpop.f32.mrb[0].mxu0
    %6032 = vdwg.mxu0
    %6033 = vmatprep.subr.bf16.mxu0 %v5828
    %6034 = vmatpush1.bf16.msra.mxu0 %v5827
    %6035 = vmatprep.subr.bf16.mxu0 %v5836
    %6036 = vmatpush1.bf16.msra.mxu0 %v5835
    %6037 = vmatprep.subr.bf16.mxu0 %v5844
    %6038 = vmatpush1.bf16.msra.mxu0 %v5843
    %6039 = vmatprep.subr.bf16.mxu0 %v5852
    %6040 = vmatpush1.bf16.msra.mxu0 %v5851
    %6041 = vmatprep.subr.bf16.mxu0 %v5860
    %6042 = vmatpush1.bf16.msra.mxu0 %v5859
    %6043 = vmatprep.subr.bf16.mxu0 %v5868
    %6044 = vmatpush1.bf16.msra.mxu0 %v5867
    %6045 = vmatprep.subr.bf16.mxu0 %v5876
    %6046 = vmatpush1.bf16.msra.mxu0 %v5875
    %6047 = vmatprep.subr.bf16.mxu0 %v5884
    %6048 = vmatpush1.bf16.msra.mxu0 %v5883
    %6049 = vmatprep.subr.bf16.mxu0 %v5892
    %6050 = vmatpush1.bf16.msra.mxu0 %v5891
    %6051 = vmatprep.subr.bf16.mxu0 %v5900
    %6052 = vmatpush1.bf16.msra.mxu0 %v5899
    %6053 = vmatprep.subr.bf16.mxu0 %v5908
    %6054 = vmatpush1.bf16.msra.mxu0 %v5907
    %6055 = vmatprep.subr.bf16.mxu0 %v5916
    %6056 = vmatpush1.bf16.msra.mxu0 %v5915
    %6057 = vmatprep.subr.bf16.mxu0 %v5924
    %6058 = vmatpush1.bf16.msra.mxu0 %v5923
    %6059 = vmatprep.subr.bf16.mxu0 %v5932
    %6060 = vmatpush1.bf16.msra.mxu0 %v5931
    %6061 = vmatprep.subr.bf16.mxu0 %v5940
    %6062 = vmatpush1.bf16.msra.mxu0 %v5939
    %6063 = vmatprep.subr.bf16.mxu0 %v5948
    %6064 = vmatpush1.bf16.msra.mxu0 %v5947
    %6065 = vmatprep.mubr.bf16.mxu0 %v5822
    %6066 = vmatmul.mubr.bf16.gmra.mrb[0].mxu0 %v5821
    %v6067 = vpop.f32.mrb[0].mxu0
    %v6068 = vadd.f32 0.0, %v6067
    %v6069 = vpop.f32.mrb[0].mxu0
    %v6070 = vadd.f32 0.0, %v6069
    %v6071 = vpop.f32.mrb[0].mxu0
    %v6072 = vpop.f32.mrb[0].mxu0
    %6073 = vdwg.mxu0
    %6074 = vmatprep.subr.bf16.mxu0 %v5830
    %6075 = vmatpush1.bf16.msra.mxu0 %v5829
    %6076 = vmatprep.subr.bf16.mxu0 %v5838
    %6077 = vmatpush1.bf16.msra.mxu0 %v5837
    %6078 = vmatprep.subr.bf16.mxu0 %v5846
    %6079 = vmatpush1.bf16.msra.mxu0 %v5845
    %6080 = vmatprep.subr.bf16.mxu0 %v5854
    %6081 = vmatpush1.bf16.msra.mxu0 %v5853
    %6082 = vmatprep.subr.bf16.mxu0 %v5862
    %6083 = vmatpush1.bf16.msra.mxu0 %v5861
    %6084 = vmatprep.subr.bf16.mxu0 %v5870
    %6085 = vmatpush1.bf16.msra.mxu0 %v5869
    %6086 = vmatprep.subr.bf16.mxu0 %v5878
    %6087 = vmatpush1.bf16.msra.mxu0 %v5877
    %6088 = vmatprep.subr.bf16.mxu0 %v5886
    %6089 = vmatpush1.bf16.msra.mxu0 %v5885
    %6090 = vmatprep.subr.bf16.mxu0 %v5894
    %6091 = vmatpush1.bf16.msra.mxu0 %v5893
    %6092 = vmatprep.subr.bf16.mxu0 %v5902
    %6093 = vmatpush1.bf16.msra.mxu0 %v5901
    %6094 = vmatprep.subr.bf16.mxu0 %v5910
    %6095 = vmatpush1.bf16.msra.mxu0 %v5909
    %6096 = vmatprep.subr.bf16.mxu0 %v5918
    %6097 = vmatpush1.bf16.msra.mxu0 %v5917
    %6098 = vmatprep.subr.bf16.mxu0 %v5926
    %6099 = vmatpush1.bf16.msra.mxu0 %v5925
    %6100 = vmatprep.subr.bf16.mxu0 %v5934
    %6101 = vmatpush1.bf16.msra.mxu0 %v5933
    %6102 = vmatprep.subr.bf16.mxu0 %v5942
    %6103 = vmatpush1.bf16.msra.mxu0 %v5941
    %6104 = vmatprep.subr.bf16.mxu0 %v5950
    %6105 = vmatpush1.bf16.msra.mxu0 %v5949
    %6106 = vmatprep.mubr.bf16.mxu0 %v5822
    %6107 = vmatmul.mubr.bf16.gmra.mrb[0].mxu0 %v5821
    %v6108 = vpop.f32.mrb[0].mxu0
    %v6109 = vadd.f32 0.0, %v6108
    %v6110 = vpop.f32.mrb[0].mxu0
    %v6111 = vadd.f32 0.0, %v6110
    %v6112 = vpop.f32.mrb[0].mxu0
    %v6113 = vpop.f32.mrb[0].mxu0
    %6114 = vdwg.mxu0
    %v6115 = vadd.f32 %v5813, %v5986
    %v6116 = vadd.f32 %v5814, %v5988
    %v6117 = vadd.f32 %v5815, %v6027
    %v6118 = vadd.f32 %v5816, %v6029
    %v6119 = vadd.f32 %v5817, %v6068
    %v6120 = vadd.f32 %v5818, %v6070
    %v6121 = vadd.f32 %v5819, %v6109
    %v6122 = vadd.f32 %v5820, %v6111
    %v6123 = vld [vmem:[#allocation2 + $0xc0] sm:$0xff]
    %v6124 = vld [vmem:[#allocation2 + $0xc8] sm:$0xff]
    %v6125 = vld [vmem:[#allocation2 + $0xd0] sm:$0xff]
    %v6126 = vld [vmem:[#allocation2 + $0xd8] sm:$0xff]
    %v6127 = vld [vmem:[#allocation2 + $0xe0] sm:$0xff]
    %v6128 = vld [vmem:[#allocation2 + $0xe8] sm:$0xff]
    %v6129 = vld [vmem:[#allocation2 + $0xf0] sm:$0xff]
    %v6130 = vld [vmem:[#allocation2 + $0xf8] sm:$0xff]
    %v6131 = vpack.c.bf16 %v5807, %v5807
    %v6132 = vpack.c.bf16 %v5808, %v5808
    %v6133 = vld [vmem:[#allocation6] sm:$0xff]
    %v6134 = vld [vmem:[#allocation6 + $0x8] sm:$0xff]
    %v6135 = vld [vmem:[#allocation6 + $0x10] sm:$0xff]
    %v6136 = vld [vmem:[#allocation6 + $0x18] sm:$0xff]
    %v6137 = vld [vmem:[#allocation6 + $0x20] sm:$0xff]
    %v6138 = vld [vmem:[#allocation6 + $0x28] sm:$0xff]
    %v6139 = vld [vmem:[#allocation6 + $0x30] sm:$0xff]
    %v6140 = vld [vmem:[#allocation6 + $0x38] sm:$0xff]
    %v6141 = vld [vmem:[#allocation6 + $0x40] sm:$0xff]
    %v6142 = vld [vmem:[#allocation6 + $0x48] sm:$0xff]
    %v6143 = vld [vmem:[#allocation6 + $0x50] sm:$0xff]
    %v6144 = vld [vmem:[#allocation6 + $0x58] sm:$0xff]
    %v6145 = vld [vmem:[#allocation6 + $0x60] sm:$0xff]
    %v6146 = vld [vmem:[#allocation6 + $0x68] sm:$0xff]
    %v6147 = vld [vmem:[#allocation6 + $0x70] sm:$0xff]
    %v6148 = vld [vmem:[#allocation6 + $0x78] sm:$0xff]
    %v6149 = vld [vmem:[#allocation6 + $0x80] sm:$0xff]
    %v6150 = vld [vmem:[#allocation6 + $0x88] sm:$0xff]
    %v6151 = vld [vmem:[#allocation6 + $0x90] sm:$0xff]
    %v6152 = vld [vmem:[#allocation6 + $0x98] sm:$0xff]
    %v6153 = vld [vmem:[#allocation6 + $0xa0] sm:$0xff]
    %v6154 = vld [vmem:[#allocation6 + $0xa8] sm:$0xff]
    %v6155 = vld [vmem:[#allocation6 + $0xb0] sm:$0xff]
    %v6156 = vld [vmem:[#allocation6 + $0xb8] sm:$0xff]
    %v6157 = vld [vmem:[#allocation6 + $0xc0] sm:$0xff]
    %v6158 = vld [vmem:[#allocation6 + $0xc8] sm:$0xff]
    %v6159 = vld [vmem:[#allocation6 + $0xd0] sm:$0xff]
    %v6160 = vld [vmem:[#allocation6 + $0xd8] sm:$0xff]
    %v6161 = vld [vmem:[#allocation6 + $0xe0] sm:$0xff]
    %v6162 = vld [vmem:[#allocation6 + $0xe8] sm:$0xff]
    %v6163 = vld [vmem:[#allocation6 + $0xf0] sm:$0xff]
    %v6164 = vld [vmem:[#allocation6 + $0xf8] sm:$0xff]
    %v6165 = vld [vmem:[#allocation6 + $0x100] sm:$0xff]
    %v6166 = vld [vmem:[#allocation6 + $0x108] sm:$0xff]
    %v6167 = vld [vmem:[#allocation6 + $0x110] sm:$0xff]
    %v6168 = vld [vmem:[#allocation6 + $0x118] sm:$0xff]
    %v6169 = vld [vmem:[#allocation6 + $0x120] sm:$0xff]
    %v6170 = vld [vmem:[#allocation6 + $0x128] sm:$0xff]
    %v6171 = vld [vmem:[#allocation6 + $0x130] sm:$0xff]
    %v6172 = vld [vmem:[#allocation6 + $0x138] sm:$0xff]
    %v6173 = vld [vmem:[#allocation6 + $0x140] sm:$0xff]
    %v6174 = vld [vmem:[#allocation6 + $0x148] sm:$0xff]
    %v6175 = vld [vmem:[#allocation6 + $0x150] sm:$0xff]
    %v6176 = vld [vmem:[#allocation6 + $0x158] sm:$0xff]
    %v6177 = vld [vmem:[#allocation6 + $0x160] sm:$0xff]
    %v6178 = vld [vmem:[#allocation6 + $0x168] sm:$0xff]
    %v6179 = vld [vmem:[#allocation6 + $0x170] sm:$0xff]
    %v6180 = vld [vmem:[#allocation6 + $0x178] sm:$0xff]
    %v6181 = vld [vmem:[#allocation6 + $0x180] sm:$0xff]
    %v6182 = vld [vmem:[#allocation6 + $0x188] sm:$0xff]
    %v6183 = vld [vmem:[#allocation6 + $0x190] sm:$0xff]
    %v6184 = vld [vmem:[#allocation6 + $0x198] sm:$0xff]
    %v6185 = vld [vmem:[#allocation6 + $0x1a0] sm:$0xff]
    %v6186 = vld [vmem:[#allocation6 + $0x1a8] sm:$0xff]
    %v6187 = vld [vmem:[#allocation6 + $0x1b0] sm:$0xff]
    %v6188 = vld [vmem:[#allocation6 + $0x1b8] sm:$0xff]
    %v6189 = vld [vmem:[#allocation6 + $0x1c0] sm:$0xff]
    %v6190 = vld [vmem:[#allocation6 + $0x1c8] sm:$0xff]
    %v6191 = vld [vmem:[#allocation6 + $0x1d0] sm:$0xff]
    %v6192 = vld [vmem:[#allocation6 + $0x1d8] sm:$0xff]
    %v6193 = vld [vmem:[#allocation6 + $0x1e0] sm:$0xff]
    %v6194 = vld [vmem:[#allocation6 + $0x1e8] sm:$0xff]
    %v6195 = vld [vmem:[#allocation6 + $0x1f0] sm:$0xff]
    %v6196 = vld [vmem:[#allocation6 + $0x1f8] sm:$0xff]
    %v6197 = vld [vmem:[#allocation6 + $0x200] sm:$0xff]
    %v6198 = vld [vmem:[#allocation6 + $0x208] sm:$0xff]
    %v6199 = vld [vmem:[#allocation6 + $0x210] sm:$0xff]
    %v6200 = vld [vmem:[#allocation6 + $0x218] sm:$0xff]
    %v6201 = vld [vmem:[#allocation6 + $0x220] sm:$0xff]
    %v6202 = vld [vmem:[#allocation6 + $0x228] sm:$0xff]
    %v6203 = vld [vmem:[#allocation6 + $0x230] sm:$0xff]
    %v6204 = vld [vmem:[#allocation6 + $0x238] sm:$0xff]
    %v6205 = vld [vmem:[#allocation6 + $0x240] sm:$0xff]
    %v6206 = vld [vmem:[#allocation6 + $0x248] sm:$0xff]
    %v6207 = vld [vmem:[#allocation6 + $0x250] sm:$0xff]
    %v6208 = vld [vmem:[#allocation6 + $0x258] sm:$0xff]
    %v6209 = vld [vmem:[#allocation6 + $0x260] sm:$0xff]
    %v6210 = vld [vmem:[#allocation6 + $0x268] sm:$0xff]
    %v6211 = vld [vmem:[#allocation6 + $0x270] sm:$0xff]
    %v6212 = vld [vmem:[#allocation6 + $0x278] sm:$0xff]
    %v6213 = vld [vmem:[#allocation6 + $0x280] sm:$0xff]
    %v6214 = vld [vmem:[#allocation6 + $0x288] sm:$0xff]
    %v6215 = vld [vmem:[#allocation6 + $0x290] sm:$0xff]
    %v6216 = vld [vmem:[#allocation6 + $0x298] sm:$0xff]
    %v6217 = vld [vmem:[#allocation6 + $0x2a0] sm:$0xff]
    %v6218 = vld [vmem:[#allocation6 + $0x2a8] sm:$0xff]
    %v6219 = vld [vmem:[#allocation6 + $0x2b0] sm:$0xff]
    %v6220 = vld [vmem:[#allocation6 + $0x2b8] sm:$0xff]
    %v6221 = vld [vmem:[#allocation6 + $0x2c0] sm:$0xff]
    %v6222 = vld [vmem:[#allocation6 + $0x2c8] sm:$0xff]
    %v6223 = vld [vmem:[#allocation6 + $0x2d0] sm:$0xff]
    %v6224 = vld [vmem:[#allocation6 + $0x2d8] sm:$0xff]
    %v6225 = vld [vmem:[#allocation6 + $0x2e0] sm:$0xff]
    %v6226 = vld [vmem:[#allocation6 + $0x2e8] sm:$0xff]
    %v6227 = vld [vmem:[#allocation6 + $0x2f0] sm:$0xff]
    %v6228 = vld [vmem:[#allocation6 + $0x2f8] sm:$0xff]
    %v6229 = vld [vmem:[#allocation6 + $0x300] sm:$0xff]
    %v6230 = vld [vmem:[#allocation6 + $0x308] sm:$0xff]
    %v6231 = vld [vmem:[#allocation6 + $0x310] sm:$0xff]
    %v6232 = vld [vmem:[#allocation6 + $0x318] sm:$0xff]
    %v6233 = vld [vmem:[#allocation6 + $0x320] sm:$0xff]
    %v6234 = vld [vmem:[#allocation6 + $0x328] sm:$0xff]
    %v6235 = vld [vmem:[#allocation6 + $0x330] sm:$0xff]
    %v6236 = vld [vmem:[#allocation6 + $0x338] sm:$0xff]
    %v6237 = vld [vmem:[#allocation6 + $0x340] sm:$0xff]
    %v6238 = vld [vmem:[#allocation6 + $0x348] sm:$0xff]
    %v6239 = vld [vmem:[#allocation6 + $0x350] sm:$0xff]
    %v6240 = vld [vmem:[#allocation6 + $0x358] sm:$0xff]
    %v6241 = vld [vmem:[#allocation6 + $0x360] sm:$0xff]
    %v6242 = vld [vmem:[#allocation6 + $0x368] sm:$0xff]
    %v6243 = vld [vmem:[#allocation6 + $0x370] sm:$0xff]
    %v6244 = vld [vmem:[#allocation6 + $0x378] sm:$0xff]
    %v6245 = vld [vmem:[#allocation6 + $0x380] sm:$0xff]
    %v6246 = vld [vmem:[#allocation6 + $0x388] sm:$0xff]
    %v6247 = vld [vmem:[#allocation6 + $0x390] sm:$0xff]
    %v6248 = vld [vmem:[#allocation6 + $0x398] sm:$0xff]
    %v6249 = vld [vmem:[#allocation6 + $0x3a0] sm:$0xff]
    %v6250 = vld [vmem:[#allocation6 + $0x3a8] sm:$0xff]
    %v6251 = vld [vmem:[#allocation6 + $0x3b0] sm:$0xff]
    %v6252 = vld [vmem:[#allocation6 + $0x3b8] sm:$0xff]
    %v6253 = vld [vmem:[#allocation6 + $0x3c0] sm:$0xff]
    %v6254 = vld [vmem:[#allocation6 + $0x3c8] sm:$0xff]
    %v6255 = vld [vmem:[#allocation6 + $0x3d0] sm:$0xff]
    %v6256 = vld [vmem:[#allocation6 + $0x3d8] sm:$0xff]
    %v6257 = vld [vmem:[#allocation6 + $0x3e0] sm:$0xff]
    %v6258 = vld [vmem:[#allocation6 + $0x3e8] sm:$0xff]
    %v6259 = vld [vmem:[#allocation6 + $0x3f0] sm:$0xff]
    %v6260 = vld [vmem:[#allocation6 + $0x3f8] sm:$0xff]
    %6261 = vmatprep.subr.bf16.mxu0 %v6134
    %6262 = vmatpush1.bf16.msra.mxu0 %v6133
    %6263 = vmatprep.subr.bf16.mxu0 %v6142
    %6264 = vmatpush1.bf16.msra.mxu0 %v6141
    %6265 = vmatprep.subr.bf16.mxu0 %v6150
    %6266 = vmatpush1.bf16.msra.mxu0 %v6149
    %6267 = vmatprep.subr.bf16.mxu0 %v6158
    %6268 = vmatpush1.bf16.msra.mxu0 %v6157
    %6269 = vmatprep.subr.bf16.mxu0 %v6166
    %6270 = vmatpush1.bf16.msra.mxu0 %v6165
    %6271 = vmatprep.subr.bf16.mxu0 %v6174
    %6272 = vmatpush1.bf16.msra.mxu0 %v6173
    %6273 = vmatprep.subr.bf16.mxu0 %v6182
    %6274 = vmatpush1.bf16.msra.mxu0 %v6181
    %6275 = vmatprep.subr.bf16.mxu0 %v6190
    %6276 = vmatpush1.bf16.msra.mxu0 %v6189
    %6277 = vmatprep.subr.bf16.mxu0 %v6198
    %6278 = vmatpush1.bf16.msra.mxu0 %v6197
    %6279 = vmatprep.subr.bf16.mxu0 %v6206
    %6280 = vmatpush1.bf16.msra.mxu0 %v6205
    %6281 = vmatprep.subr.bf16.mxu0 %v6214
    %6282 = vmatpush1.bf16.msra.mxu0 %v6213
    %6283 = vmatprep.subr.bf16.mxu0 %v6222
    %6284 = vmatpush1.bf16.msra.mxu0 %v6221
    %6285 = vmatprep.subr.bf16.mxu0 %v6230
    %6286 = vmatpush1.bf16.msra.mxu0 %v6229
    %6287 = vmatprep.subr.bf16.mxu0 %v6238
    %6288 = vmatpush1.bf16.msra.mxu0 %v6237
    %6289 = vmatprep.subr.bf16.mxu0 %v6246
    %6290 = vmatpush1.bf16.msra.mxu0 %v6245
    %6291 = vmatprep.subr.bf16.mxu0 %v6254
    %6292 = vmatpush1.bf16.msra.mxu0 %v6253
    %6293 = vmatprep.mubr.bf16.mxu0 %v6132
    %6294 = vmatmul.mubr.bf16.gmra.mrb[0].mxu0 %v6131
    %v6295 = vpop.f32.mrb[0].mxu0
    %v6296 = vadd.f32 0.0, %v6295
    %v6297 = vpop.f32.mrb[0].mxu0
    %v6298 = vadd.f32 0.0, %v6297
    %v6299 = vpop.f32.mrb[0].mxu0
    %v6300 = vpop.f32.mrb[0].mxu0
    %6301 = vdwg.mxu0
    %6302 = vmatprep.subr.bf16.mxu0 %v6136
    %6303 = vmatpush1.bf16.msra.mxu0 %v6135
    %6304 = vmatprep.subr.bf16.mxu0 %v6144
    %6305 = vmatpush1.bf16.msra.mxu0 %v6143
    %6306 = vmatprep.subr.bf16.mxu0 %v6152
    %6307 = vmatpush1.bf16.msra.mxu0 %v6151
    %6308 = vmatprep.subr.bf16.mxu0 %v6160
    %6309 = vmatpush1.bf16.msra.mxu0 %v6159
    %6310 = vmatprep.subr.bf16.mxu0 %v6168
    %6311 = vmatpush1.bf16.msra.mxu0 %v6167
    %6312 = vmatprep.subr.bf16.mxu0 %v6176
    %6313 = vmatpush1.bf16.msra.mxu0 %v6175
    %6314 = vmatprep.subr.bf16.mxu0 %v6184
    %6315 = vmatpush1.bf16.msra.mxu0 %v6183
    %6316 = vmatprep.subr.bf16.mxu0 %v6192
    %6317 = vmatpush1.bf16.msra.mxu0 %v6191
    %6318 = vmatprep.subr.bf16.mxu0 %v6200
    %6319 = vmatpush1.bf16.msra.mxu0 %v6199
    %6320 = vmatprep.subr.bf16.mxu0 %v6208
    %6321 = vmatpush1.bf16.msra.mxu0 %v6207
    %6322 = vmatprep.subr.bf16.mxu0 %v6216
    %6323 = vmatpush1.bf16.msra.mxu0 %v6215
    %6324 = vmatprep.subr.bf16.mxu0 %v6224
    %6325 = vmatpush1.bf16.msra.mxu0 %v6223
    %6326 = vmatprep.subr.bf16.mxu0 %v6232
    %6327 = vmatpush1.bf16.msra.mxu0 %v6231
    %6328 = vmatprep.subr.bf16.mxu0 %v6240
    %6329 = vmatpush1.bf16.msra.mxu0 %v6239
    %6330 = vmatprep.subr.bf16.mxu0 %v6248
    %6331 = vmatpush1.bf16.msra.mxu0 %v6247
    %6332 = vmatprep.subr.bf16.mxu0 %v6256
    %6333 = vmatpush1.bf16.msra.mxu0 %v6255
    %6334 = vmatprep.mubr.bf16.mxu0 %v6132
    %6335 = vmatmul.mubr.bf16.gmra.mrb[0].mxu0 %v6131
    %v6336 = vpop.f32.mrb[0].mxu0
    %v6337 = vadd.f32 0.0, %v6336
    %v6338 = vpop.f32.mrb[0].mxu0
    %v6339 = vadd.f32 0.0, %v6338
    %v6340 = vpop.f32.mrb[0].mxu0
    %v6341 = vpop.f32.mrb[0].mxu0
    %6342 = vdwg.mxu0
    %6343 = vmatprep.subr.bf16.mxu0 %v6138
    %6344 = vmatpush1.bf16.msra.mxu0 %v6137
    %6345 = vmatprep.subr.bf16.mxu0 %v6146
    %6346 = vmatpush1.bf16.msra.mxu0 %v6145
    %6347 = vmatprep.subr.bf16.mxu0 %v6154
    %6348 = vmatpush1.bf16.msra.mxu0 %v6153
    %6349 = vmatprep.subr.bf16.mxu0 %v6162
    %6350 = vmatpush1.bf16.msra.mxu0 %v6161
    %6351 = vmatprep.subr.bf16.mxu0 %v6170
    %6352 = vmatpush1.bf16.msra.mxu0 %v6169
    %6353 = vmatprep.subr.bf16.mxu0 %v6178
    %6354 = vmatpush1.bf16.msra.mxu0 %v6177
    %6355 = vmatprep.subr.bf16.mxu0 %v6186
    %6356 = vmatpush1.bf16.msra.mxu0 %v6185
    %6357 = vmatprep.subr.bf16.mxu0 %v6194
    %6358 = vmatpush1.bf16.msra.mxu0 %v6193
    %6359 = vmatprep.subr.bf16.mxu0 %v6202
    %6360 = vmatpush1.bf16.msra.mxu0 %v6201
    %6361 = vmatprep.subr.bf16.mxu0 %v6210
    %6362 = vmatpush1.bf16.msra.mxu0 %v6209
    %6363 = vmatprep.subr.bf16.mxu0 %v6218
    %6364 = vmatpush1.bf16.msra.mxu0 %v6217
    %6365 = vmatprep.subr.bf16.mxu0 %v6226
    %6366 = vmatpush1.bf16.msra.mxu0 %v6225
    %6367 = vmatprep.subr.bf16.mxu0 %v6234
    %6368 = vmatpush1.bf16.msra.mxu0 %v6233
    %6369 = vmatprep.subr.bf16.mxu0 %v6242
    %6370 = vmatpush1.bf16.msra.mxu0 %v6241
    %6371 = vmatprep.subr.bf16.mxu0 %v6250
    %6372 = vmatpush1.bf16.msra.mxu0 %v6249
    %6373 = vmatprep.subr.bf16.mxu0 %v6258
    %6374 = vmatpush1.bf16.msra.mxu0 %v6257
    %6375 = vmatprep.mubr.bf16.mxu0 %v6132
    %6376 = vmatmul.mubr.bf16.gmra.mrb[0].mxu0 %v6131
    %v6377 = vpop.f32.mrb[0].mxu0
    %v6378 = vadd.f32 0.0, %v6377
    %v6379 = vpop.f32.mrb[0].mxu0
    %v6380 = vadd.f32 0.0, %v6379
    %v6381 = vpop.f32.mrb[0].mxu0
    %v6382 = vpop.f32.mrb[0].mxu0
    %6383 = vdwg.mxu0
    %6384 = vmatprep.subr.bf16.mxu0 %v6140
    %6385 = vmatpush1.bf16.msra.mxu0 %v6139
    %6386 = vmatprep.subr.bf16.mxu0 %v6148
    %6387 = vmatpush1.bf16.msra.mxu0 %v6147
    %6388 = vmatprep.subr.bf16.mxu0 %v6156
    %6389 = vmatpush1.bf16.msra.mxu0 %v6155
    %6390 = vmatprep.subr.bf16.mxu0 %v6164
    %6391 = vmatpush1.bf16.msra.mxu0 %v6163
    %6392 = vmatprep.subr.bf16.mxu0 %v6172
    %6393 = vmatpush1.bf16.msra.mxu0 %v6171
    %6394 = vmatprep.subr.bf16.mxu0 %v6180
    %6395 = vmatpush1.bf16.msra.mxu0 %v6179
    %6396 = vmatprep.subr.bf16.mxu0 %v6188
    %6397 = vmatpush1.bf16.msra.mxu0 %v6187
    %6398 = vmatprep.subr.bf16.mxu0 %v6196
    %6399 = vmatpush1.bf16.msra.mxu0 %v6195
    %6400 = vmatprep.subr.bf16.mxu0 %v6204
    %6401 = vmatpush1.bf16.msra.mxu0 %v6203
    %6402 = vmatprep.subr.bf16.mxu0 %v6212
    %6403 = vmatpush1.bf16.msra.mxu0 %v6211
    %6404 = vmatprep.subr.bf16.mxu0 %v6220
    %6405 = vmatpush1.bf16.msra.mxu0 %v6219
    %6406 = vmatprep.subr.bf16.mxu0 %v6228
    %6407 = vmatpush1.bf16.msra.mxu0 %v6227
    %6408 = vmatprep.subr.bf16.mxu0 %v6236
    %6409 = vmatpush1.bf16.msra.mxu0 %v6235
    %6410 = vmatprep.subr.bf16.mxu0 %v6244
    %6411 = vmatpush1.bf16.msra.mxu0 %v6243
    %6412 = vmatprep.subr.bf16.mxu0 %v6252
    %6413 = vmatpush1.bf16.msra.mxu0 %v6251
    %6414 = vmatprep.subr.bf16.mxu0 %v6260
    %6415 = vmatpush1.bf16.msra.mxu0 %v6259
    %6416 = vmatprep.mubr.bf16.mxu0 %v6132
    %6417 = vmatmul.mubr.bf16.gmra.mrb[0].mxu0 %v6131
    %v6418 = vpop.f32.mrb[0].mxu0
    %v6419 = vadd.f32 0.0, %v6418
    %v6420 = vpop.f32.mrb[0].mxu0
    %v6421 = vadd.f32 0.0, %v6420
    %v6422 = vpop.f32.mrb[0].mxu0
    %v6423 = vpop.f32.mrb[0].mxu0
    %6424 = vdwg.mxu0
    %v6425 = vadd.f32 %v6123, %v6296
    %v6426 = vadd.f32 %v6124, %v6298
    %v6427 = vadd.f32 %v6125, %v6337
    %v6428 = vadd.f32 %v6126, %v6339
    %v6429 = vadd.f32 %v6127, %v6378
    %v6430 = vadd.f32 %v6128, %v6380
    %v6431 = vadd.f32 %v6129, %v6419
    %v6432 = vadd.f32 %v6130, %v6421
    %v6433 = vxor.u32 %v6115, 2147483648
    %v6434 = vxor.u32 %v6116, 2147483648
    %v6435 = vmul.f32 %v6433, 1.442695
    %v6436 = vpow.pop %v6435
    %v6437 = vmul.f32 %v6434, 1.442695
    %v6438 = vpow.pop %v6437
    %v6439 = vadd.f32 %v6436, 1.0
    %v6440 = vadd.f32 %v6438, 1.0
    %v6441 = vrcp.pop %v6439
    %v6442 = vmul.f32 1.0, %v6441
    %v6443 = vrcp.pop %v6440
    %v6444 = vmul.f32 1.0, %v6443
    %v6445 = vxor.u32 %v6117, 2147483648
    %v6446 = vxor.u32 %v6118, 2147483648
    %v6447 = vmul.f32 %v6445, 1.442695
    %v6448 = vpow.pop %v6447
    %v6449 = vmul.f32 %v6446, 1.442695
    %v6450 = vpow.pop %v6449
    %v6451 = vadd.f32 %v6448, 1.0
    %v6452 = vadd.f32 %v6450, 1.0
    %v6453 = vrcp.pop %v6451
    %v6454 = vmul.f32 1.0, %v6453
    %v6455 = vrcp.pop %v6452
    %v6456 = vmul.f32 1.0, %v6455
    %v6457 = vtanh.pop %v6119
    %v6458 = vtanh.pop %v6120
    %v6459 = vxor.u32 %v6121, 2147483648
    %v6460 = vxor.u32 %v6122, 2147483648
    %v6461 = vmul.f32 %v6459, 1.442695
    %v6462 = vpow.pop %v6461
    %v6463 = vmul.f32 %v6460, 1.442695
    %v6464 = vpow.pop %v6463
    %v6465 = vadd.f32 %v6462, 1.0
    %v6466 = vadd.f32 %v6464, 1.0
    %v6467 = vrcp.pop %v6465
    %v6468 = vmul.f32 1.0, %v6467
    %v6469 = vrcp.pop %v6466
    %v6470 = vmul.f32 1.0, %v6469
    %v6471 = vmul.f32 %v6454, %v5755
    %v6472 = vmul.f32 %v6456, %v5756
    %v6473 = vmul.f32 %v6442, %v6457
    %v6474 = vmul.f32 %v6444, %v6458
    %v6475 = vadd.f32 %v6471, %v6473
    %v6476 = vadd.f32 %v6472, %v6474
    %v6477 = vtanh.pop %v6475
    %v6478 = vtanh.pop %v6476
    %v6479 = vmul.f32 %v6468, %v6477
    %v6480 = vmul.f32 %v6470, %v6478
    %v6481 = vxor.u32 %v6425, 2147483648
    %v6482 = vxor.u32 %v6426, 2147483648
    %v6483 = vmul.f32 %v6481, 1.442695
    %v6484 = vpow.pop %v6483
    %v6485 = vmul.f32 %v6482, 1.442695
    %v6486 = vpow.pop %v6485
    %v6487 = vadd.f32 %v6484, 1.0
    %v6488 = vadd.f32 %v6486, 1.0
    %v6489 = vrcp.pop %v6487
    %v6490 = vmul.f32 1.0, %v6489
    %v6491 = vrcp.pop %v6488
    %v6492 = vmul.f32 1.0, %v6491
    %v6493 = vxor.u32 %v6427, 2147483648
    %v6494 = vxor.u32 %v6428, 2147483648
    %v6495 = vmul.f32 %v6493, 1.442695
    %v6496 = vpow.pop %v6495
    %v6497 = vmul.f32 %v6494, 1.442695
    %v6498 = vpow.pop %v6497
    %v6499 = vadd.f32 %v6496, 1.0
    %v6500 = vadd.f32 %v6498, 1.0
    %v6501 = vrcp.pop %v6499
    %v6502 = vmul.f32 1.0, %v6501
    %v6503 = vrcp.pop %v6500
    %v6504 = vmul.f32 1.0, %v6503
    %v6505 = vtanh.pop %v6429
    %v6506 = vtanh.pop %v6430
    %v6507 = vxor.u32 %v6431, 2147483648
    %v6508 = vxor.u32 %v6432, 2147483648
    %v6509 = vmul.f32 %v6507, 1.442695
    %v6510 = vpow.pop %v6509
    %v6511 = vmul.f32 %v6508, 1.442695
    %v6512 = vpow.pop %v6511
    %v6513 = vadd.f32 %v6510, 1.0
    %v6514 = vadd.f32 %v6512, 1.0
    %v6515 = vrcp.pop %v6513
    %v6516 = vmul.f32 1.0, %v6515
    %v6517 = vrcp.pop %v6514
    %v6518 = vmul.f32 1.0, %v6517
    %v6519 = vmul.f32 %v6502, %v5803
    %v6520 = vmul.f32 %v6504, %v5804
    %v6521 = vmul.f32 %v6490, %v6505
    %v6522 = vmul.f32 %v6492, %v6506
    %v6523 = vadd.f32 %v6519, %v6521
    %v6524 = vadd.f32 %v6520, %v6522
    %v6525 = vtanh.pop %v6523
    %v6526 = vtanh.pop %v6524
    %v6527 = vmul.f32 %v6516, %v6525
    %v6528 = vmul.f32 %v6518, %v6526
    %6529 = vst [vmem:[#allocation3 + $0xc0] sm:$0xff] %v6479
    %6530 = vst [vmem:[#allocation3 + $0xc8] sm:$0xff] %v6480
    %6531 = vst [vmem:[#allocation3 + $0x30] sm:$0xff] %v6527
    %6532 = vst [vmem:[#allocation3 + $0x38] sm:$0xff] %v6528
    %v6533 = vld [vmem:[#allocation2 + $0x380] sm:$0xff]
    %v6534 = vld [vmem:[#allocation2 + $0x388] sm:$0xff]
    %v6535 = vld [vmem:[#allocation2 + $0x390] sm:$0xff]
    %v6536 = vld [vmem:[#allocation2 + $0x398] sm:$0xff]
    %v6537 = vld [vmem:[#allocation2 + $0x3a0] sm:$0xff]
    %v6538 = vld [vmem:[#allocation2 + $0x3a8] sm:$0xff]
    %v6539 = vld [vmem:[#allocation2 + $0x3b0] sm:$0xff]
    %v6540 = vld [vmem:[#allocation2 + $0x3b8] sm:$0xff]
    %v6541 = vpack.c.bf16 %v6479, %v6479
    %v6542 = vpack.c.bf16 %v6480, %v6480
    %v6543 = vld [vmem:[#allocation5] sm:$0xff]
    %v6544 = vld [vmem:[#allocation5 + $0x8] sm:$0xff]
    %v6545 = vld [vmem:[#allocation5 + $0x10] sm:$0xff]
    %v6546 = vld [vmem:[#allocation5 + $0x18] sm:$0xff]
    %v6547 = vld [vmem:[#allocation5 + $0x20] sm:$0xff]
    %v6548 = vld [vmem:[#allocation5 + $0x28] sm:$0xff]
    %v6549 = vld [vmem:[#allocation5 + $0x30] sm:$0xff]
    %v6550 = vld [vmem:[#allocation5 + $0x38] sm:$0xff]
    %v6551 = vld [vmem:[#allocation5 + $0x40] sm:$0xff]
    %v6552 = vld [vmem:[#allocation5 + $0x48] sm:$0xff]
    %v6553 = vld [vmem:[#allocation5 + $0x50] sm:$0xff]
    %v6554 = vld [vmem:[#allocation5 + $0x58] sm:$0xff]
    %v6555 = vld [vmem:[#allocation5 + $0x60] sm:$0xff]
    %v6556 = vld [vmem:[#allocation5 + $0x68] sm:$0xff]
    %v6557 = vld [vmem:[#allocation5 + $0x70] sm:$0xff]
    %v6558 = vld [vmem:[#allocation5 + $0x78] sm:$0xff]
    %v6559 = vld [vmem:[#allocation5 + $0x80] sm:$0xff]
    %v6560 = vld [vmem:[#allocation5 + $0x88] sm:$0xff]
    %v6561 = vld [vmem:[#allocation5 + $0x90] sm:$0xff]
    %v6562 = vld [vmem:[#allocation5 + $0x98] sm:$0xff]
    %v6563 = vld [vmem:[#allocation5 + $0xa0] sm:$0xff]
    %v6564 = vld [vmem:[#allocation5 + $0xa8] sm:$0xff]
    %v6565 = vld [vmem:[#allocation5 + $0xb0] sm:$0xff]
    %v6566 = vld [vmem:[#allocation5 + $0xb8] sm:$0xff]
    %v6567 = vld [vmem:[#allocation5 + $0xc0] sm:$0xff]
    %v6568 = vld [vmem:[#allocation5 + $0xc8] sm:$0xff]
    %v6569 = vld [vmem:[#allocation5 + $0xd0] sm:$0xff]
    %v6570 = vld [vmem:[#allocation5 + $0xd8] sm:$0xff]
    %v6571 = vld [vmem:[#allocation5 + $0xe0] sm:$0xff]
    %v6572 = vld [vmem:[#allocation5 + $0xe8] sm:$0xff]
    %v6573 = vld [vmem:[#allocation5 + $0xf0] sm:$0xff]
    %v6574 = vld [vmem:[#allocation5 + $0xf8] sm:$0xff]
    %v6575 = vld [vmem:[#allocation5 + $0x100] sm:$0xff]
    %v6576 = vld [vmem:[#allocation5 + $0x108] sm:$0xff]
    %v6577 = vld [vmem:[#allocation5 + $0x110] sm:$0xff]
    %v6578 = vld [vmem:[#allocation5 + $0x118] sm:$0xff]
    %v6579 = vld [vmem:[#allocation5 + $0x120] sm:$0xff]
    %v6580 = vld [vmem:[#allocation5 + $0x128] sm:$0xff]
    %v6581 = vld [vmem:[#allocation5 + $0x130] sm:$0xff]
    %v6582 = vld [vmem:[#allocation5 + $0x138] sm:$0xff]
    %v6583 = vld [vmem:[#allocation5 + $0x140] sm:$0xff]
    %v6584 = vld [vmem:[#allocation5 + $0x148] sm:$0xff]
    %v6585 = vld [vmem:[#allocation5 + $0x150] sm:$0xff]
    %v6586 = vld [vmem:[#allocation5 + $0x158] sm:$0xff]
    %v6587 = vld [vmem:[#allocation5 + $0x160] sm:$0xff]
    %v6588 = vld [vmem:[#allocation5 + $0x168] sm:$0xff]
    %v6589 = vld [vmem:[#allocation5 + $0x170] sm:$0xff]
    %v6590 = vld [vmem:[#allocation5 + $0x178] sm:$0xff]
    %v6591 = vld [vmem:[#allocation5 + $0x180] sm:$0xff]
    %v6592 = vld [vmem:[#allocation5 + $0x188] sm:$0xff]
    %v6593 = vld [vmem:[#allocation5 + $0x190] sm:$0xff]
    %v6594 = vld [vmem:[#allocation5 + $0x198] sm:$0xff]
    %v6595 = vld [vmem:[#allocation5 + $0x1a0] sm:$0xff]
    %v6596 = vld [vmem:[#allocation5 + $0x1a8] sm:$0xff]
    %v6597 = vld [vmem:[#allocation5 + $0x1b0] sm:$0xff]
    %v6598 = vld [vmem:[#allocation5 + $0x1b8] sm:$0xff]
    %v6599 = vld [vmem:[#allocation5 + $0x1c0] sm:$0xff]
    %v6600 = vld [vmem:[#allocation5 + $0x1c8] sm:$0xff]
    %v6601 = vld [vmem:[#allocation5 + $0x1d0] sm:$0xff]
    %v6602 = vld [vmem:[#allocation5 + $0x1d8] sm:$0xff]
    %v6603 = vld [vmem:[#allocation5 + $0x1e0] sm:$0xff]
    %v6604 = vld [vmem:[#allocation5 + $0x1e8] sm:$0xff]
    %v6605 = vld [vmem:[#allocation5 + $0x1f0] sm:$0xff]
    %v6606 = vld [vmem:[#allocation5 + $0x1f8] sm:$0xff]
    %v6607 = vld [vmem:[#allocation5 + $0x200] sm:$0xff]
    %v6608 = vld [vmem:[#allocation5 + $0x208] sm:$0xff]
    %v6609 = vld [vmem:[#allocation5 + $0x210] sm:$0xff]
    %v6610 = vld [vmem:[#allocation5 + $0x218] sm:$0xff]
    %v6611 = vld [vmem:[#allocation5 + $0x220] sm:$0xff]
    %v6612 = vld [vmem:[#allocation5 + $0x228] sm:$0xff]
    %v6613 = vld [vmem:[#allocation5 + $0x230] sm:$0xff]
    %v6614 = vld [vmem:[#allocation5 + $0x238] sm:$0xff]
    %v6615 = vld [vmem:[#allocation5 + $0x240] sm:$0xff]
    %v6616 = vld [vmem:[#allocation5 + $0x248] sm:$0xff]
    %v6617 = vld [vmem:[#allocation5 + $0x250] sm:$0xff]
    %v6618 = vld [vmem:[#allocation5 + $0x258] sm:$0xff]
    %v6619 = vld [vmem:[#allocation5 + $0x260] sm:$0xff]
    %v6620 = vld [vmem:[#allocation5 + $0x268] sm:$0xff]
    %v6621 = vld [vmem:[#allocation5 + $0x270] sm:$0xff]
    %v6622 = vld [vmem:[#allocation5 + $0x278] sm:$0xff]
    %v6623 = vld [vmem:[#allocation5 + $0x280] sm:$0xff]
    %v6624 = vld [vmem:[#allocation5 + $0x288] sm:$0xff]
    %v6625 = vld [vmem:[#allocation5 + $0x290] sm:$0xff]
    %v6626 = vld [vmem:[#allocation5 + $0x298] sm:$0xff]
    %v6627 = vld [vmem:[#allocation5 + $0x2a0] sm:$0xff]
    %v6628 = vld [vmem:[#allocation5 + $0x2a8] sm:$0xff]
    %v6629 = vld [vmem:[#allocation5 + $0x2b0] sm:$0xff]
    %v6630 = vld [vmem:[#allocation5 + $0x2b8] sm:$0xff]
    %v6631 = vld [vmem:[#allocation5 + $0x2c0] sm:$0xff]
    %v6632 = vld [vmem:[#allocation5 + $0x2c8] sm:$0xff]
    %v6633 = vld [vmem:[#allocation5 + $0x2d0] sm:$0xff]
    %v6634 = vld [vmem:[#allocation5 + $0x2d8] sm:$0xff]
    %v6635 = vld [vmem:[#allocation5 + $0x2e0] sm:$0xff]
    %v6636 = vld [vmem:[#allocation5 + $0x2e8] sm:$0xff]
    %v6637 = vld [vmem:[#allocation5 + $0x2f0] sm:$0xff]
    %v6638 = vld [vmem:[#allocation5 + $0x2f8] sm:$0xff]
    %v6639 = vld [vmem:[#allocation5 + $0x300] sm:$0xff]
    %v6640 = vld [vmem:[#allocation5 + $0x308] sm:$0xff]
    %v6641 = vld [vmem:[#allocation5 + $0x310] sm:$0xff]
    %v6642 = vld [vmem:[#allocation5 + $0x318] sm:$0xff]
    %v6643 = vld [vmem:[#allocation5 + $0x320] sm:$0xff]
    %v6644 = vld [vmem:[#allocation5 + $0x328] sm:$0xff]
    %v6645 = vld [vmem:[#allocation5 + $0x330] sm:$0xff]
    %v6646 = vld [vmem:[#allocation5 + $0x338] sm:$0xff]
    %v6647 = vld [vmem:[#allocation5 + $0x340] sm:$0xff]
    %v6648 = vld [vmem:[#allocation5 + $0x348] sm:$0xff]
    %v6649 = vld [vmem:[#allocation5 + $0x350] sm:$0xff]
    %v6650 = vld [vmem:[#allocation5 + $0x358] sm:$0xff]
    %v6651 = vld [vmem:[#allocation5 + $0x360] sm:$0xff]
    %v6652 = vld [vmem:[#allocation5 + $0x368] sm:$0xff]
    %v6653 = vld [vmem:[#allocation5 + $0x370] sm:$0xff]
    %v6654 = vld [vmem:[#allocation5 + $0x378] sm:$0xff]
    %v6655 = vld [vmem:[#allocation5 + $0x380] sm:$0xff]
    %v6656 = vld [vmem:[#allocation5 + $0x388] sm:$0xff]
    %v6657 = vld [vmem:[#allocation5 + $0x390] sm:$0xff]
    %v6658 = vld [vmem:[#allocation5 + $0x398] sm:$0xff]
    %v6659 = vld [vmem:[#allocation5 + $0x3a0] sm:$0xff]
    %v6660 = vld [vmem:[#allocation5 + $0x3a8] sm:$0xff]
    %v6661 = vld [vmem:[#allocation5 + $0x3b0] sm:$0xff]
    %v6662 = vld [vmem:[#allocation5 + $0x3b8] sm:$0xff]
    %v6663 = vld [vmem:[#allocation5 + $0x3c0] sm:$0xff]
    %v6664 = vld [vmem:[#allocation5 + $0x3c8] sm:$0xff]
    %v6665 = vld [vmem:[#allocation5 + $0x3d0] sm:$0xff]
    %v6666 = vld [vmem:[#allocation5 + $0x3d8] sm:$0xff]
    %v6667 = vld [vmem:[#allocation5 + $0x3e0] sm:$0xff]
    %v6668 = vld [vmem:[#allocation5 + $0x3e8] sm:$0xff]
    %v6669 = vld [vmem:[#allocation5 + $0x3f0] sm:$0xff]
    %v6670 = vld [vmem:[#allocation5 + $0x3f8] sm:$0xff]
    %6671 = vmatprep.subr.bf16.mxu0 %v6544
    %6672 = vmatpush1.bf16.msra.mxu0 %v6543
    %6673 = vmatprep.subr.bf16.mxu0 %v6552
    %6674 = vmatpush1.bf16.msra.mxu0 %v6551
    %6675 = vmatprep.subr.bf16.mxu0 %v6560
    %6676 = vmatpush1.bf16.msra.mxu0 %v6559
    %6677 = vmatprep.subr.bf16.mxu0 %v6568
    %6678 = vmatpush1.bf16.msra.mxu0 %v6567
    %6679 = vmatprep.subr.bf16.mxu0 %v6576
    %6680 = vmatpush1.bf16.msra.mxu0 %v6575
    %6681 = vmatprep.subr.bf16.mxu0 %v6584
    %6682 = vmatpush1.bf16.msra.mxu0 %v6583
    %6683 = vmatprep.subr.bf16.mxu0 %v6592
    %6684 = vmatpush1.bf16.msra.mxu0 %v6591
    %6685 = vmatprep.subr.bf16.mxu0 %v6600
    %6686 = vmatpush1.bf16.msra.mxu0 %v6599
    %6687 = vmatprep.subr.bf16.mxu0 %v6608
    %6688 = vmatpush1.bf16.msra.mxu0 %v6607
    %6689 = vmatprep.subr.bf16.mxu0 %v6616
    %6690 = vmatpush1.bf16.msra.mxu0 %v6615
    %6691 = vmatprep.subr.bf16.mxu0 %v6624
    %6692 = vmatpush1.bf16.msra.mxu0 %v6623
    %6693 = vmatprep.subr.bf16.mxu0 %v6632
    %6694 = vmatpush1.bf16.msra.mxu0 %v6631
    %6695 = vmatprep.subr.bf16.mxu0 %v6640
    %6696 = vmatpush1.bf16.msra.mxu0 %v6639
    %6697 = vmatprep.subr.bf16.mxu0 %v6648
    %6698 = vmatpush1.bf16.msra.mxu0 %v6647
    %6699 = vmatprep.subr.bf16.mxu0 %v6656
    %6700 = vmatpush1.bf16.msra.mxu0 %v6655
    %6701 = vmatprep.subr.bf16.mxu0 %v6664
    %6702 = vmatpush1.bf16.msra.mxu0 %v6663
    %6703 = vmatprep.mubr.bf16.mxu0 %v6542
    %6704 = vmatmul.mubr.bf16.gmra.mrb[0].mxu0 %v6541
    %v6705 = vpop.f32.mrb[0].mxu0
    %v6706 = vadd.f32 0.0, %v6705
    %v6707 = vpop.f32.mrb[0].mxu0
    %v6708 = vadd.f32 0.0, %v6707
    %v6709 = vpop.f32.mrb[0].mxu0
    %v6710 = vpop.f32.mrb[0].mxu0
    %6711 = vdwg.mxu0
    %6712 = vmatprep.subr.bf16.mxu0 %v6546
    %6713 = vmatpush1.bf16.msra.mxu0 %v6545
    %6714 = vmatprep.subr.bf16.mxu0 %v6554
    %6715 = vmatpush1.bf16.msra.mxu0 %v6553
    %6716 = vmatprep.subr.bf16.mxu0 %v6562
    %6717 = vmatpush1.bf16.msra.mxu0 %v6561
    %6718 = vmatprep.subr.bf16.mxu0 %v6570
    %6719 = vmatpush1.bf16.msra.mxu0 %v6569
    %6720 = vmatprep.subr.bf16.mxu0 %v6578
    %6721 = vmatpush1.bf16.msra.mxu0 %v6577
    %6722 = vmatprep.subr.bf16.mxu0 %v6586
    %6723 = vmatpush1.bf16.msra.mxu0 %v6585
    %6724 = vmatprep.subr.bf16.mxu0 %v6594
    %6725 = vmatpush1.bf16.msra.mxu0 %v6593
    %6726 = vmatprep.subr.bf16.mxu0 %v6602
    %6727 = vmatpush1.bf16.msra.mxu0 %v6601
    %6728 = vmatprep.subr.bf16.mxu0 %v6610
    %6729 = vmatpush1.bf16.msra.mxu0 %v6609
    %6730 = vmatprep.subr.bf16.mxu0 %v6618
    %6731 = vmatpush1.bf16.msra.mxu0 %v6617
    %6732 = vmatprep.subr.bf16.mxu0 %v6626
    %6733 = vmatpush1.bf16.msra.mxu0 %v6625
    %6734 = vmatprep.subr.bf16.mxu0 %v6634
    %6735 = vmatpush1.bf16.msra.mxu0 %v6633
    %6736 = vmatprep.subr.bf16.mxu0 %v6642
    %6737 = vmatpush1.bf16.msra.mxu0 %v6641
    %6738 = vmatprep.subr.bf16.mxu0 %v6650
    %6739 = vmatpush1.bf16.msra.mxu0 %v6649
    %6740 = vmatprep.subr.bf16.mxu0 %v6658
    %6741 = vmatpush1.bf16.msra.mxu0 %v6657
    %6742 = vmatprep.subr.bf16.mxu0 %v6666
    %6743 = vmatpush1.bf16.msra.mxu0 %v6665
    %6744 = vmatprep.mubr.bf16.mxu0 %v6542
    %6745 = vmatmul.mubr.bf16.gmra.mrb[0].mxu0 %v6541
    %v6746 = vpop.f32.mrb[0].mxu0
    %v6747 = vadd.f32 0.0, %v6746
    %v6748 = vpop.f32.mrb[0].mxu0
    %v6749 = vadd.f32 0.0, %v6748
    %v6750 = vpop.f32.mrb[0].mxu0
    %v6751 = vpop.f32.mrb[0].mxu0
    %6752 = vdwg.mxu0
    %6753 = vmatprep.subr.bf16.mxu0 %v6548
    %6754 = vmatpush1.bf16.msra.mxu0 %v6547
    %6755 = vmatprep.subr.bf16.mxu0 %v6556
    %6756 = vmatpush1.bf16.msra.mxu0 %v6555
    %6757 = vmatprep.subr.bf16.mxu0 %v6564
    %6758 = vmatpush1.bf16.msra.mxu0 %v6563
    %6759 = vmatprep.subr.bf16.mxu0 %v6572
    %6760 = vmatpush1.bf16.msra.mxu0 %v6571
    %6761 = vmatprep.subr.bf16.mxu0 %v6580
    %6762 = vmatpush1.bf16.msra.mxu0 %v6579
    %6763 = vmatprep.subr.bf16.mxu0 %v6588
    %6764 = vmatpush1.bf16.msra.mxu0 %v6587
    %6765 = vmatprep.subr.bf16.mxu0 %v6596
    %6766 = vmatpush1.bf16.msra.mxu0 %v6595
    %6767 = vmatprep.subr.bf16.mxu0 %v6604
    %6768 = vmatpush1.bf16.msra.mxu0 %v6603
    %6769 = vmatprep.subr.bf16.mxu0 %v6612
    %6770 = vmatpush1.bf16.msra.mxu0 %v6611
    %6771 = vmatprep.subr.bf16.mxu0 %v6620
    %6772 = vmatpush1.bf16.msra.mxu0 %v6619
    %6773 = vmatprep.subr.bf16.mxu0 %v6628
    %6774 = vmatpush1.bf16.msra.mxu0 %v6627
    %6775 = vmatprep.subr.bf16.mxu0 %v6636
    %6776 = vmatpush1.bf16.msra.mxu0 %v6635
    %6777 = vmatprep.subr.bf16.mxu0 %v6644
    %6778 = vmatpush1.bf16.msra.mxu0 %v6643
    %6779 = vmatprep.subr.bf16.mxu0 %v6652
    %6780 = vmatpush1.bf16.msra.mxu0 %v6651
    %6781 = vmatprep.subr.bf16.mxu0 %v6660
    %6782 = vmatpush1.bf16.msra.mxu0 %v6659
    %6783 = vmatprep.subr.bf16.mxu0 %v6668
    %6784 = vmatpush1.bf16.msra.mxu0 %v6667
    %6785 = vmatprep.mubr.bf16.mxu0 %v6542
    %6786 = vmatmul.mubr.bf16.gmra.mrb[0].mxu0 %v6541
    %v6787 = vpop.f32.mrb[0].mxu0
    %v6788 = vadd.f32 0.0, %v6787
    %v6789 = vpop.f32.mrb[0].mxu0
    %v6790 = vadd.f32 0.0, %v6789
    %v6791 = vpop.f32.mrb[0].mxu0
    %v6792 = vpop.f32.mrb[0].mxu0
    %6793 = vdwg.mxu0
    %6794 = vmatprep.subr.bf16.mxu0 %v6550
    %6795 = vmatpush1.bf16.msra.mxu0 %v6549
    %6796 = vmatprep.subr.bf16.mxu0 %v6558
    %6797 = vmatpush1.bf16.msra.mxu0 %v6557
    %6798 = vmatprep.subr.bf16.mxu0 %v6566
    %6799 = vmatpush1.bf16.msra.mxu0 %v6565
    %6800 = vmatprep.subr.bf16.mxu0 %v6574
    %6801 = vmatpush1.bf16.msra.mxu0 %v6573
    %6802 = vmatprep.subr.bf16.mxu0 %v6582
    %6803 = vmatpush1.bf16.msra.mxu0 %v6581
    %6804 = vmatprep.subr.bf16.mxu0 %v6590
    %6805 = vmatpush1.bf16.msra.mxu0 %v6589
    %6806 = vmatprep.subr.bf16.mxu0 %v6598
    %6807 = vmatpush1.bf16.msra.mxu0 %v6597
    %6808 = vmatprep.subr.bf16.mxu0 %v6606
    %6809 = vmatpush1.bf16.msra.mxu0 %v6605
    %6810 = vmatprep.subr.bf16.mxu0 %v6614
    %6811 = vmatpush1.bf16.msra.mxu0 %v6613
    %6812 = vmatprep.subr.bf16.mxu0 %v6622
    %6813 = vmatpush1.bf16.msra.mxu0 %v6621
    %6814 = vmatprep.subr.bf16.mxu0 %v6630
    %6815 = vmatpush1.bf16.msra.mxu0 %v6629
    %6816 = vmatprep.subr.bf16.mxu0 %v6638
    %6817 = vmatpush1.bf16.msra.mxu0 %v6637
    %6818 = vmatprep.subr.bf16.mxu0 %v6646
    %6819 = vmatpush1.bf16.msra.mxu0 %v6645
    %6820 = vmatprep.subr.bf16.mxu0 %v6654
    %6821 = vmatpush1.bf16.msra.mxu0 %v6653
    %6822 = vmatprep.subr.bf16.mxu0 %v6662
    %6823 = vmatpush1.bf16.msra.mxu0 %v6661
    %6824 = vmatprep.subr.bf16.mxu0 %v6670
    %6825 = vmatpush1.bf16.msra.mxu0 %v6669
    %6826 = vmatprep.mubr.bf16.mxu0 %v6542
    %6827 = vmatmul.mubr.bf16.gmra.mrb[0].mxu0 %v6541
    %v6828 = vpop.f32.mrb[0].mxu0
    %v6829 = vadd.f32 0.0, %v6828
    %v6830 = vpop.f32.mrb[0].mxu0
    %v6831 = vadd.f32 0.0, %v6830
    %v6832 = vpop.f32.mrb[0].mxu0
    %v6833 = vpop.f32.mrb[0].mxu0
    %6834 = vdwg.mxu0
    %v6835 = vadd.f32 %v6533, %v6706
    %v6836 = vadd.f32 %v6534, %v6708
    %v6837 = vadd.f32 %v6535, %v6747
    %v6838 = vadd.f32 %v6536, %v6749
    %v6839 = vadd.f32 %v6537, %v6788
    %v6840 = vadd.f32 %v6538, %v6790
    %v6841 = vadd.f32 %v6539, %v6829
    %v6842 = vadd.f32 %v6540, %v6831
    %v6843 = vld [vmem:[#allocation2 + $0x40] sm:$0xff]
    %v6844 = vld [vmem:[#allocation2 + $0x48] sm:$0xff]
    %v6845 = vld [vmem:[#allocation2 + $0x50] sm:$0xff]
    %v6846 = vld [vmem:[#allocation2 + $0x58] sm:$0xff]
    %v6847 = vld [vmem:[#allocation2 + $0x60] sm:$0xff]
    %v6848 = vld [vmem:[#allocation2 + $0x68] sm:$0xff]
    %v6849 = vld [vmem:[#allocation2 + $0x70] sm:$0xff]
    %v6850 = vld [vmem:[#allocation2 + $0x78] sm:$0xff]
    %v6851 = vpack.c.bf16 %v6527, %v6527
    %v6852 = vpack.c.bf16 %v6528, %v6528
    %v6853 = vld [vmem:[#allocation6] sm:$0xff]
    %v6854 = vld [vmem:[#allocation6 + $0x8] sm:$0xff]
    %v6855 = vld [vmem:[#allocation6 + $0x10] sm:$0xff]
    %v6856 = vld [vmem:[#allocation6 + $0x18] sm:$0xff]
    %v6857 = vld [vmem:[#allocation6 + $0x20] sm:$0xff]
    %v6858 = vld [vmem:[#allocation6 + $0x28] sm:$0xff]
    %v6859 = vld [vmem:[#allocation6 + $0x30] sm:$0xff]
    %v6860 = vld [vmem:[#allocation6 + $0x38] sm:$0xff]
    %v6861 = vld [vmem:[#allocation6 + $0x40] sm:$0xff]
    %v6862 = vld [vmem:[#allocation6 + $0x48] sm:$0xff]
    %v6863 = vld [vmem:[#allocation6 + $0x50] sm:$0xff]
    %v6864 = vld [vmem:[#allocation6 + $0x58] sm:$0xff]
    %v6865 = vld [vmem:[#allocation6 + $0x60] sm:$0xff]
    %v6866 = vld [vmem:[#allocation6 + $0x68] sm:$0xff]
    %v6867 = vld [vmem:[#allocation6 + $0x70] sm:$0xff]
    %v6868 = vld [vmem:[#allocation6 + $0x78] sm:$0xff]
    %v6869 = vld [vmem:[#allocation6 + $0x80] sm:$0xff]
    %v6870 = vld [vmem:[#allocation6 + $0x88] sm:$0xff]
    %v6871 = vld [vmem:[#allocation6 + $0x90] sm:$0xff]
    %v6872 = vld [vmem:[#allocation6 + $0x98] sm:$0xff]
    %v6873 = vld [vmem:[#allocation6 + $0xa0] sm:$0xff]
    %v6874 = vld [vmem:[#allocation6 + $0xa8] sm:$0xff]
    %v6875 = vld [vmem:[#allocation6 + $0xb0] sm:$0xff]
    %v6876 = vld [vmem:[#allocation6 + $0xb8] sm:$0xff]
    %v6877 = vld [vmem:[#allocation6 + $0xc0] sm:$0xff]
    %v6878 = vld [vmem:[#allocation6 + $0xc8] sm:$0xff]
    %v6879 = vld [vmem:[#allocation6 + $0xd0] sm:$0xff]
    %v6880 = vld [vmem:[#allocation6 + $0xd8] sm:$0xff]
    %v6881 = vld [vmem:[#allocation6 + $0xe0] sm:$0xff]
    %v6882 = vld [vmem:[#allocation6 + $0xe8] sm:$0xff]
    %v6883 = vld [vmem:[#allocation6 + $0xf0] sm:$0xff]
    %v6884 = vld [vmem:[#allocation6 + $0xf8] sm:$0xff]
    %v6885 = vld [vmem:[#allocation6 + $0x100] sm:$0xff]
    %v6886 = vld [vmem:[#allocation6 + $0x108] sm:$0xff]
    %v6887 = vld [vmem:[#allocation6 + $0x110] sm:$0xff]
    %v6888 = vld [vmem:[#allocation6 + $0x118] sm:$0xff]
    %v6889 = vld [vmem:[#allocation6 + $0x120] sm:$0xff]
    %v6890 = vld [vmem:[#allocation6 + $0x128] sm:$0xff]
    %v6891 = vld [vmem:[#allocation6 + $0x130] sm:$0xff]
    %v6892 = vld [vmem:[#allocation6 + $0x138] sm:$0xff]
    %v6893 = vld [vmem:[#allocation6 + $0x140] sm:$0xff]
    %v6894 = vld [vmem:[#allocation6 + $0x148] sm:$0xff]
    %v6895 = vld [vmem:[#allocation6 + $0x150] sm:$0xff]
    %v6896 = vld [vmem:[#allocation6 + $0x158] sm:$0xff]
    %v6897 = vld [vmem:[#allocation6 + $0x160] sm:$0xff]
    %v6898 = vld [vmem:[#allocation6 + $0x168] sm:$0xff]
    %v6899 = vld [vmem:[#allocation6 + $0x170] sm:$0xff]
    %v6900 = vld [vmem:[#allocation6 + $0x178] sm:$0xff]
    %v6901 = vld [vmem:[#allocation6 + $0x180] sm:$0xff]
    %v6902 = vld [vmem:[#allocation6 + $0x188] sm:$0xff]
    %v6903 = vld [vmem:[#allocation6 + $0x190] sm:$0xff]
    %v6904 = vld [vmem:[#allocation6 + $0x198] sm:$0xff]
    %v6905 = vld [vmem:[#allocation6 + $0x1a0] sm:$0xff]
    %v6906 = vld [vmem:[#allocation6 + $0x1a8] sm:$0xff]
    %v6907 = vld [vmem:[#allocation6 + $0x1b0] sm:$0xff]
    %v6908 = vld [vmem:[#allocation6 + $0x1b8] sm:$0xff]
    %v6909 = vld [vmem:[#allocation6 + $0x1c0] sm:$0xff]
    %v6910 = vld [vmem:[#allocation6 + $0x1c8] sm:$0xff]
    %v6911 = vld [vmem:[#allocation6 + $0x1d0] sm:$0xff]
    %v6912 = vld [vmem:[#allocation6 + $0x1d8] sm:$0xff]
    %v6913 = vld [vmem:[#allocation6 + $0x1e0] sm:$0xff]
    %v6914 = vld [vmem:[#allocation6 + $0x1e8] sm:$0xff]
    %v6915 = vld [vmem:[#allocation6 + $0x1f0] sm:$0xff]
    %v6916 = vld [vmem:[#allocation6 + $0x1f8] sm:$0xff]
    %v6917 = vld [vmem:[#allocation6 + $0x200] sm:$0xff]
    %v6918 = vld [vmem:[#allocation6 + $0x208] sm:$0xff]
    %v6919 = vld [vmem:[#allocation6 + $0x210] sm:$0xff]
    %v6920 = vld [vmem:[#allocation6 + $0x218] sm:$0xff]
    %v6921 = vld [vmem:[#allocation6 + $0x220] sm:$0xff]
    %v6922 = vld [vmem:[#allocation6 + $0x228] sm:$0xff]
    %v6923 = vld [vmem:[#allocation6 + $0x230] sm:$0xff]
    %v6924 = vld [vmem:[#allocation6 + $0x238] sm:$0xff]
    %v6925 = vld [vmem:[#allocation6 + $0x240] sm:$0xff]
    %v6926 = vld [vmem:[#allocation6 + $0x248] sm:$0xff]
    %v6927 = vld [vmem:[#allocation6 + $0x250] sm:$0xff]
    %v6928 = vld [vmem:[#allocation6 + $0x258] sm:$0xff]
    %v6929 = vld [vmem:[#allocation6 + $0x260] sm:$0xff]
    %v6930 = vld [vmem:[#allocation6 + $0x268] sm:$0xff]
    %v6931 = vld [vmem:[#allocation6 + $0x270] sm:$0xff]
    %v6932 = vld [vmem:[#allocation6 + $0x278] sm:$0xff]
    %v6933 = vld [vmem:[#allocation6 + $0x280] sm:$0xff]
    %v6934 = vld [vmem:[#allocation6 + $0x288] sm:$0xff]
    %v6935 = vld [vmem:[#allocation6 + $0x290] sm:$0xff]
    %v6936 = vld [vmem:[#allocation6 + $0x298] sm:$0xff]
    %v6937 = vld [vmem:[#allocation6 + $0x2a0] sm:$0xff]
    %v6938 = vld [vmem:[#allocation6 + $0x2a8] sm:$0xff]
    %v6939 = vld [vmem:[#allocation6 + $0x2b0] sm:$0xff]
    %v6940 = vld [vmem:[#allocation6 + $0x2b8] sm:$0xff]
    %v6941 = vld [vmem:[#allocation6 + $0x2c0] sm:$0xff]
    %v6942 = vld [vmem:[#allocation6 + $0x2c8] sm:$0xff]
    %v6943 = vld [vmem:[#allocation6 + $0x2d0] sm:$0xff]
    %v6944 = vld [vmem:[#allocation6 + $0x2d8] sm:$0xff]
    %v6945 = vld [vmem:[#allocation6 + $0x2e0] sm:$0xff]
    %v6946 = vld [vmem:[#allocation6 + $0x2e8] sm:$0xff]
    %v6947 = vld [vmem:[#allocation6 + $0x2f0] sm:$0xff]
    %v6948 = vld [vmem:[#allocation6 + $0x2f8] sm:$0xff]
    %v6949 = vld [vmem:[#allocation6 + $0x300] sm:$0xff]
    %v6950 = vld [vmem:[#allocation6 + $0x308] sm:$0xff]
    %v6951 = vld [vmem:[#allocation6 + $0x310] sm:$0xff]
    %v6952 = vld [vmem:[#allocation6 + $0x318] sm:$0xff]
    %v6953 = vld [vmem:[#allocation6 + $0x320] sm:$0xff]
    %v6954 = vld [vmem:[#allocation6 + $0x328] sm:$0xff]
    %v6955 = vld [vmem:[#allocation6 + $0x330] sm:$0xff]
    %v6956 = vld [vmem:[#allocation6 + $0x338] sm:$0xff]
    %v6957 = vld [vmem:[#allocation6 + $0x340] sm:$0xff]
    %v6958 = vld [vmem:[#allocation6 + $0x348] sm:$0xff]
    %v6959 = vld [vmem:[#allocation6 + $0x350] sm:$0xff]
    %v6960 = vld [vmem:[#allocation6 + $0x358] sm:$0xff]
    %v6961 = vld [vmem:[#allocation6 + $0x360] sm:$0xff]
    %v6962 = vld [vmem:[#allocation6 + $0x368] sm:$0xff]
    %v6963 = vld [vmem:[#allocation6 + $0x370] sm:$0xff]
    %v6964 = vld [vmem:[#allocation6 + $0x378] sm:$0xff]
    %v6965 = vld [vmem:[#allocation6 + $0x380] sm:$0xff]
    %v6966 = vld [vmem:[#allocation6 + $0x388] sm:$0xff]
    %v6967 = vld [vmem:[#allocation6 + $0x390] sm:$0xff]
    %v6968 = vld [vmem:[#allocation6 + $0x398] sm:$0xff]
    %v6969 = vld [vmem:[#allocation6 + $0x3a0] sm:$0xff]
    %v6970 = vld [vmem:[#allocation6 + $0x3a8] sm:$0xff]
    %v6971 = vld [vmem:[#allocation6 + $0x3b0] sm:$0xff]
    %v6972 = vld [vmem:[#allocation6 + $0x3b8] sm:$0xff]
    %v6973 = vld [vmem:[#allocation6 + $0x3c0] sm:$0xff]
    %v6974 = vld [vmem:[#allocation6 + $0x3c8] sm:$0xff]
    %v6975 = vld [vmem:[#allocation6 + $0x3d0] sm:$0xff]
    %v6976 = vld [vmem:[#allocation6 + $0x3d8] sm:$0xff]
    %v6977 = vld [vmem:[#allocation6 + $0x3e0] sm:$0xff]
    %v6978 = vld [vmem:[#allocation6 + $0x3e8] sm:$0xff]
    %v6979 = vld [vmem:[#allocation6 + $0x3f0] sm:$0xff]
    %v6980 = vld [vmem:[#allocation6 + $0x3f8] sm:$0xff]
    %6981 = vmatprep.subr.bf16.mxu0 %v6854
    %6982 = vmatpush1.bf16.msra.mxu0 %v6853
    %6983 = vmatprep.subr.bf16.mxu0 %v6862
    %6984 = vmatpush1.bf16.msra.mxu0 %v6861
    %6985 = vmatprep.subr.bf16.mxu0 %v6870
    %6986 = vmatpush1.bf16.msra.mxu0 %v6869
    %6987 = vmatprep.subr.bf16.mxu0 %v6878
    %6988 = vmatpush1.bf16.msra.mxu0 %v6877
    %6989 = vmatprep.subr.bf16.mxu0 %v6886
    %6990 = vmatpush1.bf16.msra.mxu0 %v6885
    %6991 = vmatprep.subr.bf16.mxu0 %v6894
    %6992 = vmatpush1.bf16.msra.mxu0 %v6893
    %6993 = vmatprep.subr.bf16.mxu0 %v6902
    %6994 = vmatpush1.bf16.msra.mxu0 %v6901
    %6995 = vmatprep.subr.bf16.mxu0 %v6910
    %6996 = vmatpush1.bf16.msra.mxu0 %v6909
    %6997 = vmatprep.subr.bf16.mxu0 %v6918
    %6998 = vmatpush1.bf16.msra.mxu0 %v6917
    %6999 = vmatprep.subr.bf16.mxu0 %v6926
    %7000 = vmatpush1.bf16.msra.mxu0 %v6925
    %7001 = vmatprep.subr.bf16.mxu0 %v6934
    %7002 = vmatpush1.bf16.msra.mxu0 %v6933
    %7003 = vmatprep.subr.bf16.mxu0 %v6942
    %7004 = vmatpush1.bf16.msra.mxu0 %v6941
    %7005 = vmatprep.subr.bf16.mxu0 %v6950
    %7006 = vmatpush1.bf16.msra.mxu0 %v6949
    %7007 = vmatprep.subr.bf16.mxu0 %v6958
    %7008 = vmatpush1.bf16.msra.mxu0 %v6957
    %7009 = vmatprep.subr.bf16.mxu0 %v6966
    %7010 = vmatpush1.bf16.msra.mxu0 %v6965
    %7011 = vmatprep.subr.bf16.mxu0 %v6974
    %7012 = vmatpush1.bf16.msra.mxu0 %v6973
    %7013 = vmatprep.mubr.bf16.mxu0 %v6852
    %7014 = vmatmul.mubr.bf16.gmra.mrb[0].mxu0 %v6851
    %v7015 = vpop.f32.mrb[0].mxu0
    %v7016 = vadd.f32 0.0, %v7015
    %v7017 = vpop.f32.mrb[0].mxu0
    %v7018 = vadd.f32 0.0, %v7017
    %v7019 = vpop.f32.mrb[0].mxu0
    %v7020 = vpop.f32.mrb[0].mxu0
    %7021 = vdwg.mxu0
    %7022 = vmatprep.subr.bf16.mxu0 %v6856
    %7023 = vmatpush1.bf16.msra.mxu0 %v6855
    %7024 = vmatprep.subr.bf16.mxu0 %v6864
    %7025 = vmatpush1.bf16.msra.mxu0 %v6863
    %7026 = vmatprep.subr.bf16.mxu0 %v6872
    %7027 = vmatpush1.bf16.msra.mxu0 %v6871
    %7028 = vmatprep.subr.bf16.mxu0 %v6880
    %7029 = vmatpush1.bf16.msra.mxu0 %v6879
    %7030 = vmatprep.subr.bf16.mxu0 %v6888
    %7031 = vmatpush1.bf16.msra.mxu0 %v6887
    %7032 = vmatprep.subr.bf16.mxu0 %v6896
    %7033 = vmatpush1.bf16.msra.mxu0 %v6895
    %7034 = vmatprep.subr.bf16.mxu0 %v6904
    %7035 = vmatpush1.bf16.msra.mxu0 %v6903
    %7036 = vmatprep.subr.bf16.mxu0 %v6912
    %7037 = vmatpush1.bf16.msra.mxu0 %v6911
    %7038 = vmatprep.subr.bf16.mxu0 %v6920
    %7039 = vmatpush1.bf16.msra.mxu0 %v6919
    %7040 = vmatprep.subr.bf16.mxu0 %v6928
    %7041 = vmatpush1.bf16.msra.mxu0 %v6927
    %7042 = vmatprep.subr.bf16.mxu0 %v6936
    %7043 = vmatpush1.bf16.msra.mxu0 %v6935
    %7044 = vmatprep.subr.bf16.mxu0 %v6944
    %7045 = vmatpush1.bf16.msra.mxu0 %v6943
    %7046 = vmatprep.subr.bf16.mxu0 %v6952
    %7047 = vmatpush1.bf16.msra.mxu0 %v6951
    %7048 = vmatprep.subr.bf16.mxu0 %v6960
    %7049 = vmatpush1.bf16.msra.mxu0 %v6959
    %7050 = vmatprep.subr.bf16.mxu0 %v6968
    %7051 = vmatpush1.bf16.msra.mxu0 %v6967
    %7052 = vmatprep.subr.bf16.mxu0 %v6976
    %7053 = vmatpush1.bf16.msra.mxu0 %v6975
    %7054 = vmatprep.mubr.bf16.mxu0 %v6852
    %7055 = vmatmul.mubr.bf16.gmra.mrb[0].mxu0 %v6851
    %v7056 = vpop.f32.mrb[0].mxu0
    %v7057 = vadd.f32 0.0, %v7056
    %v7058 = vpop.f32.mrb[0].mxu0
    %v7059 = vadd.f32 0.0, %v7058
    %v7060 = vpop.f32.mrb[0].mxu0
    %v7061 = vpop.f32.mrb[0].mxu0
    %7062 = vdwg.mxu0
    %7063 = vmatprep.subr.bf16.mxu0 %v6858
    %7064 = vmatpush1.bf16.msra.mxu0 %v6857
    %7065 = vmatprep.subr.bf16.mxu0 %v6866
    %7066 = vmatpush1.bf16.msra.mxu0 %v6865
    %7067 = vmatprep.subr.bf16.mxu0 %v6874
    %7068 = vmatpush1.bf16.msra.mxu0 %v6873
    %7069 = vmatprep.subr.bf16.mxu0 %v6882
    %7070 = vmatpush1.bf16.msra.mxu0 %v6881
    %7071 = vmatprep.subr.bf16.mxu0 %v6890
    %7072 = vmatpush1.bf16.msra.mxu0 %v6889
    %7073 = vmatprep.subr.bf16.mxu0 %v6898
    %7074 = vmatpush1.bf16.msra.mxu0 %v6897
    %7075 = vmatprep.subr.bf16.mxu0 %v6906
    %7076 = vmatpush1.bf16.msra.mxu0 %v6905
    %7077 = vmatprep.subr.bf16.mxu0 %v6914
    %7078 = vmatpush1.bf16.msra.mxu0 %v6913
    %7079 = vmatprep.subr.bf16.mxu0 %v6922
    %7080 = vmatpush1.bf16.msra.mxu0 %v6921
    %7081 = vmatprep.subr.bf16.mxu0 %v6930
    %7082 = vmatpush1.bf16.msra.mxu0 %v6929
    %7083 = vmatprep.subr.bf16.mxu0 %v6938
    %7084 = vmatpush1.bf16.msra.mxu0 %v6937
    %7085 = vmatprep.subr.bf16.mxu0 %v6946
    %7086 = vmatpush1.bf16.msra.mxu0 %v6945
    %7087 = vmatprep.subr.bf16.mxu0 %v6954
    %7088 = vmatpush1.bf16.msra.mxu0 %v6953
    %7089 = vmatprep.subr.bf16.mxu0 %v6962
    %7090 = vmatpush1.bf16.msra.mxu0 %v6961
    %7091 = vmatprep.subr.bf16.mxu0 %v6970
    %7092 = vmatpush1.bf16.msra.mxu0 %v6969
    %7093 = vmatprep.subr.bf16.mxu0 %v6978
    %7094 = vmatpush1.bf16.msra.mxu0 %v6977
    %7095 = vmatprep.mubr.bf16.mxu0 %v6852
    %7096 = vmatmul.mubr.bf16.gmra.mrb[0].mxu0 %v6851
    %v7097 = vpop.f32.mrb[0].mxu0
    %v7098 = vadd.f32 0.0, %v7097
    %v7099 = vpop.f32.mrb[0].mxu0
    %v7100 = vadd.f32 0.0, %v7099
    %v7101 = vpop.f32.mrb[0].mxu0
    %v7102 = vpop.f32.mrb[0].mxu0
    %7103 = vdwg.mxu0
    %7104 = vmatprep.subr.bf16.mxu0 %v6860
    %7105 = vmatpush1.bf16.msra.mxu0 %v6859
    %7106 = vmatprep.subr.bf16.mxu0 %v6868
    %7107 = vmatpush1.bf16.msra.mxu0 %v6867
    %7108 = vmatprep.subr.bf16.mxu0 %v6876
    %7109 = vmatpush1.bf16.msra.mxu0 %v6875
    %7110 = vmatprep.subr.bf16.mxu0 %v6884
    %7111 = vmatpush1.bf16.msra.mxu0 %v6883
    %7112 = vmatprep.subr.bf16.mxu0 %v6892
    %7113 = vmatpush1.bf16.msra.mxu0 %v6891
    %7114 = vmatprep.subr.bf16.mxu0 %v6900
    %7115 = vmatpush1.bf16.msra.mxu0 %v6899
    %7116 = vmatprep.subr.bf16.mxu0 %v6908
    %7117 = vmatpush1.bf16.msra.mxu0 %v6907
    %7118 = vmatprep.subr.bf16.mxu0 %v6916
    %7119 = vmatpush1.bf16.msra.mxu0 %v6915
    %7120 = vmatprep.subr.bf16.mxu0 %v6924
    %7121 = vmatpush1.bf16.msra.mxu0 %v6923
    %7122 = vmatprep.subr.bf16.mxu0 %v6932
    %7123 = vmatpush1.bf16.msra.mxu0 %v6931
    %7124 = vmatprep.subr.bf16.mxu0 %v6940
    %7125 = vmatpush1.bf16.msra.mxu0 %v6939
    %7126 = vmatprep.subr.bf16.mxu0 %v6948
    %7127 = vmatpush1.bf16.msra.mxu0 %v6947
    %7128 = vmatprep.subr.bf16.mxu0 %v6956
    %7129 = vmatpush1.bf16.msra.mxu0 %v6955
    %7130 = vmatprep.subr.bf16.mxu0 %v6964
    %7131 = vmatpush1.bf16.msra.mxu0 %v6963
    %7132 = vmatprep.subr.bf16.mxu0 %v6972
    %7133 = vmatpush1.bf16.msra.mxu0 %v6971
    %7134 = vmatprep.subr.bf16.mxu0 %v6980
    %7135 = vmatpush1.bf16.msra.mxu0 %v6979
    %7136 = vmatprep.mubr.bf16.mxu0 %v6852
    %7137 = vmatmul.mubr.bf16.gmra.mrb[0].mxu0 %v6851
    %v7138 = vpop.f32.mrb[0].mxu0
    %v7139 = vadd.f32 0.0, %v7138
    %v7140 = vpop.f32.mrb[0].mxu0
    %v7141 = vadd.f32 0.0, %v7140
    %v7142 = vpop.f32.mrb[0].mxu0
    %v7143 = vpop.f32.mrb[0].mxu0
    %7144 = vdwg.mxu0
    %v7145 = vadd.f32 %v6843, %v7016
    %v7146 = vadd.f32 %v6844, %v7018
    %v7147 = vadd.f32 %v6845, %v7057
    %v7148 = vadd.f32 %v6846, %v7059
    %v7149 = vadd.f32 %v6847, %v7098
    %v7150 = vadd.f32 %v6848, %v7100
    %v7151 = vadd.f32 %v6849, %v7139
    %v7152 = vadd.f32 %v6850, %v7141
    %v7153 = vxor.u32 %v6835, 2147483648
    %v7154 = vxor.u32 %v6836, 2147483648
    %v7155 = vmul.f32 %v7153, 1.442695
    %v7156 = vpow.pop %v7155
    %v7157 = vmul.f32 %v7154, 1.442695
    %v7158 = vpow.pop %v7157
    %v7159 = vadd.f32 %v7156, 1.0
    %v7160 = vadd.f32 %v7158, 1.0
    %v7161 = vrcp.pop %v7159
    %v7162 = vmul.f32 1.0, %v7161
    %v7163 = vrcp.pop %v7160
    %v7164 = vmul.f32 1.0, %v7163
    %v7165 = vxor.u32 %v6837, 2147483648
    %v7166 = vxor.u32 %v6838, 2147483648
    %v7167 = vmul.f32 %v7165, 1.442695
    %v7168 = vpow.pop %v7167
    %v7169 = vmul.f32 %v7166, 1.442695
    %v7170 = vpow.pop %v7169
    %v7171 = vadd.f32 %v7168, 1.0
    %v7172 = vadd.f32 %v7170, 1.0
    %v7173 = vrcp.pop %v7171
    %v7174 = vmul.f32 1.0, %v7173
    %v7175 = vrcp.pop %v7172
    %v7176 = vmul.f32 1.0, %v7175
    %v7177 = vtanh.pop %v6839
    %v7178 = vtanh.pop %v6840
    %v7179 = vxor.u32 %v6841, 2147483648
    %v7180 = vxor.u32 %v6842, 2147483648
    %v7181 = vmul.f32 %v7179, 1.442695
    %v7182 = vpow.pop %v7181
    %v7183 = vmul.f32 %v7180, 1.442695
    %v7184 = vpow.pop %v7183
    %v7185 = vadd.f32 %v7182, 1.0
    %v7186 = vadd.f32 %v7184, 1.0
    %v7187 = vrcp.pop %v7185
    %v7188 = vmul.f32 1.0, %v7187
    %v7189 = vrcp.pop %v7186
    %v7190 = vmul.f32 1.0, %v7189
    %v7191 = vmul.f32 %v7174, %v6475
    %v7192 = vmul.f32 %v7176, %v6476
    %v7193 = vmul.f32 %v7162, %v7177
    %v7194 = vmul.f32 %v7164, %v7178
    %v7195 = vadd.f32 %v7191, %v7193
    %v7196 = vadd.f32 %v7192, %v7194
    %v7197 = vtanh.pop %v7195
    %v7198 = vtanh.pop %v7196
    %v7199 = vmul.f32 %v7188, %v7197
    %v7200 = vmul.f32 %v7190, %v7198
    %v7201 = vxor.u32 %v7145, 2147483648
    %v7202 = vxor.u32 %v7146, 2147483648
    %v7203 = vmul.f32 %v7201, 1.442695
    %v7204 = vpow.pop %v7203
    %v7205 = vmul.f32 %v7202, 1.442695
    %v7206 = vpow.pop %v7205
    %v7207 = vadd.f32 %v7204, 1.0
    %v7208 = vadd.f32 %v7206, 1.0
    %v7209 = vrcp.pop %v7207
    %v7210 = vmul.f32 1.0, %v7209
    %v7211 = vrcp.pop %v7208
    %v7212 = vmul.f32 1.0, %v7211
    %v7213 = vxor.u32 %v7147, 2147483648
    %v7214 = vxor.u32 %v7148, 2147483648
    %v7215 = vmul.f32 %v7213, 1.442695
    %v7216 = vpow.pop %v7215
    %v7217 = vmul.f32 %v7214, 1.442695
    %v7218 = vpow.pop %v7217
    %v7219 = vadd.f32 %v7216, 1.0
    %v7220 = vadd.f32 %v7218, 1.0
    %v7221 = vrcp.pop %v7219
    %v7222 = vmul.f32 1.0, %v7221
    %v7223 = vrcp.pop %v7220
    %v7224 = vmul.f32 1.0, %v7223
    %v7225 = vtanh.pop %v7149
    %v7226 = vtanh.pop %v7150
    %v7227 = vxor.u32 %v7151, 2147483648
    %v7228 = vxor.u32 %v7152, 2147483648
    %v7229 = vmul.f32 %v7227, 1.442695
    %v7230 = vpow.pop %v7229
    %v7231 = vmul.f32 %v7228, 1.442695
    %v7232 = vpow.pop %v7231
    %v7233 = vadd.f32 %v7230, 1.0
    %v7234 = vadd.f32 %v7232, 1.0
    %v7235 = vrcp.pop %v7233
    %v7236 = vmul.f32 1.0, %v7235
    %v7237 = vrcp.pop %v7234
    %v7238 = vmul.f32 1.0, %v7237
    %v7239 = vmul.f32 %v7222, %v6523
    %v7240 = vmul.f32 %v7224, %v6524
    %v7241 = vmul.f32 %v7210, %v7225
    %v7242 = vmul.f32 %v7212, %v7226
    %v7243 = vadd.f32 %v7239, %v7241
    %v7244 = vadd.f32 %v7240, %v7242
    %v7245 = vtanh.pop %v7243
    %v7246 = vtanh.pop %v7244
    %v7247 = vmul.f32 %v7236, %v7245
    %v7248 = vmul.f32 %v7238, %v7246
    %7249 = vst [vmem:[#allocation3 + $0xe0] sm:$0xff] %v7199
    %7250 = vst [vmem:[#allocation3 + $0xe8] sm:$0xff] %v7200
    %7251 = vst [vmem:[#allocation3 + $0x10] sm:$0xff] %v7247
    %7252 = vst [vmem:[#allocation3 + $0x18] sm:$0xff] %v7248
    %s7253 = smul.u32 4, 64
    %s7254 = smul.u32 %s7253, 1
    %s7255 = sshll.u32 %s7254, 4
    %7256 = dma.done %s166, %s7255
    %v7257 = vld [vmem:[#allocation3] sm:$0xff]
    %v7258 = vld [vmem:[#allocation3 + $0x8] sm:$0xff]
    %v7259 = vld [vmem:[#allocation3 + $0x10] sm:$0xff]
    %v7260 = vld [vmem:[#allocation3 + $0x18] sm:$0xff]
    %v7261 = vld [vmem:[#allocation3 + $0x20] sm:$0xff]
    %v7262 = vld [vmem:[#allocation3 + $0x28] sm:$0xff]
    %v7263 = vld [vmem:[#allocation3 + $0x30] sm:$0xff]
    %v7264 = vld [vmem:[#allocation3 + $0x38] sm:$0xff]
    %v7265 = vld [vmem:[#allocation3 + $0x40] sm:$0xff]
    %v7266 = vld [vmem:[#allocation3 + $0x48] sm:$0xff]
    %v7267 = vld [vmem:[#allocation3 + $0x50] sm:$0xff]
    %v7268 = vld [vmem:[#allocation3 + $0x58] sm:$0xff]
    %v7269 = vld [vmem:[#allocation3 + $0x60] sm:$0xff]
    %v7270 = vld [vmem:[#allocation3 + $0x68] sm:$0xff]
    %v7271 = vld [vmem:[#allocation3 + $0x70] sm:$0xff]
    %v7272 = vld [vmem:[#allocation3 + $0x78] sm:$0xff]
    %v7273 = vld [vmem:[#allocation3 + $0x80] sm:$0xff]
    %v7274 = vld [vmem:[#allocation3 + $0x88] sm:$0xff]
    %v7275 = vld [vmem:[#allocation3 + $0x90] sm:$0xff]
    %v7276 = vld [vmem:[#allocation3 + $0x98] sm:$0xff]
    %v7277 = vld [vmem:[#allocation3 + $0xa0] sm:$0xff]
    %v7278 = vld [vmem:[#allocation3 + $0xa8] sm:$0xff]
    %v7279 = vld [vmem:[#allocation3 + $0xb0] sm:$0xff]
    %v7280 = vld [vmem:[#allocation3 + $0xb8] sm:$0xff]
    %v7281 = vld [vmem:[#allocation3 + $0xc0] sm:$0xff]
    %v7282 = vld [vmem:[#allocation3 + $0xc8] sm:$0xff]
    %v7283 = vld [vmem:[#allocation3 + $0xd0] sm:$0xff]
    %v7284 = vld [vmem:[#allocation3 + $0xd8] sm:$0xff]
    %v7285 = vld [vmem:[#allocation3 + $0xe0] sm:$0xff]
    %v7286 = vld [vmem:[#allocation3 + $0xe8] sm:$0xff]
    %v7287 = vld [vmem:[#allocation3 + $0xf0] sm:$0xff]
    %v7288 = vld [vmem:[#allocation3 + $0xf8] sm:$0xff]
    %v7289 = vpack.c.bf16 %v7261, %v7257
    %v7290 = vpack.c.bf16 %v7262, %v7258
    %v7291 = vpack.c.bf16 %v7263, %v7259
    %v7292 = vpack.c.bf16 %v7264, %v7260
    %v7293 = vpack.c.bf16 %v7269, %v7265
    %v7294 = vpack.c.bf16 %v7270, %v7266
    %v7295 = vpack.c.bf16 %v7271, %v7267
    %v7296 = vpack.c.bf16 %v7272, %v7268
    %v7297 = vpack.c.bf16 %v7277, %v7273
    %v7298 = vpack.c.bf16 %v7278, %v7274
    %v7299 = vpack.c.bf16 %v7279, %v7275
    %v7300 = vpack.c.bf16 %v7280, %v7276
    %v7301 = vpack.c.bf16 %v7285, %v7281
    %v7302 = vpack.c.bf16 %v7286, %v7282
    %v7303 = vpack.c.bf16 %v7287, %v7283
    %v7304 = vpack.c.bf16 %v7288, %v7284
    %v7305 = vld [vmem:[#allocation7] sm:$0xff]
    %v7306 = vld [vmem:[#allocation7 + $0x8] sm:$0xff]
    %v7307 = vld [vmem:[#allocation7 + $0x10] sm:$0xff]
    %v7308 = vld [vmem:[#allocation7 + $0x18] sm:$0xff]
    %v7309 = vld [vmem:[#allocation7 + $0x20] sm:$0xff]
    %v7310 = vld [vmem:[#allocation7 + $0x28] sm:$0xff]
    %v7311 = vld [vmem:[#allocation7 + $0x30] sm:$0xff]
    %v7312 = vld [vmem:[#allocation7 + $0x38] sm:$0xff]
    %v7313 = vld [vmem:[#allocation7 + $0x40] sm:$0xff]
    %v7314 = vld [vmem:[#allocation7 + $0x48] sm:$0xff]
    %v7315 = vld [vmem:[#allocation7 + $0x50] sm:$0xff]
    %v7316 = vld [vmem:[#allocation7 + $0x58] sm:$0xff]
    %v7317 = vld [vmem:[#allocation7 + $0x60] sm:$0xff]
    %v7318 = vld [vmem:[#allocation7 + $0x68] sm:$0xff]
    %v7319 = vld [vmem:[#allocation7 + $0x70] sm:$0xff]
    %v7320 = vld [vmem:[#allocation7 + $0x78] sm:$0xff]
    %v7321 = vld [vmem:[#allocation7 + $0x80] sm:$0xff]
    %v7322 = vld [vmem:[#allocation7 + $0x88] sm:$0xff]
    %v7323 = vld [vmem:[#allocation7 + $0x90] sm:$0xff]
    %v7324 = vld [vmem:[#allocation7 + $0x98] sm:$0xff]
    %v7325 = vld [vmem:[#allocation7 + $0xa0] sm:$0xff]
    %v7326 = vld [vmem:[#allocation7 + $0xa8] sm:$0xff]
    %v7327 = vld [vmem:[#allocation7 + $0xb0] sm:$0xff]
    %v7328 = vld [vmem:[#allocation7 + $0xb8] sm:$0xff]
    %v7329 = vld [vmem:[#allocation7 + $0xc0] sm:$0xff]
    %v7330 = vld [vmem:[#allocation7 + $0xc8] sm:$0xff]
    %v7331 = vld [vmem:[#allocation7 + $0xd0] sm:$0xff]
    %v7332 = vld [vmem:[#allocation7 + $0xd8] sm:$0xff]
    %v7333 = vld [vmem:[#allocation7 + $0xe0] sm:$0xff]
    %v7334 = vld [vmem:[#allocation7 + $0xe8] sm:$0xff]
    %v7335 = vld [vmem:[#allocation7 + $0xf0] sm:$0xff]
    %v7336 = vld [vmem:[#allocation7 + $0xf8] sm:$0xff]
    %v7337 = vld [vmem:[%s7] sm:$0x1]
    %v7339 = vlaneseq
    %v7340 = vshrl.u32 %v7339, 7
    %v7341 = vsub.s32 0, %v7340
    %v7342 = vrot.slane %v7337, %v7341
    %7344 = vmatprep.subr.bf16.mxu0 0
    %7345 = vmatpush1.bf16.msra.mxu0 %v7305
    %7346 = vmatprep.subr.bf16.mxu0 0
    %7347 = vmatpush1.bf16.msra.mxu0 %v7306
    %7348 = vmatprep.subr.bf16.mxu0 0
    %7349 = vmatpush1.bf16.msra.mxu0 %v7307
    %7350 = vmatprep.subr.bf16.mxu0 0
    %7351 = vmatpush1.bf16.msra.mxu0 %v7308
    %7352 = vmatprep.subr.bf16.mxu0 0
    %7353 = vmatpush1.bf16.msra.mxu0 %v7309
    %7354 = vmatprep.subr.bf16.mxu0 0
    %7355 = vmatpush1.bf16.msra.mxu0 %v7310
    %7356 = vmatprep.subr.bf16.mxu0 0
    %7357 = vmatpush1.bf16.msra.mxu0 %v7311
    %7358 = vmatprep.subr.bf16.mxu0 0
    %7359 = vmatpush1.bf16.msra.mxu0 %v7312
    %7360 = vmatprep.subr.bf16.mxu0 0
    %7361 = vmatpush1.bf16.msra.mxu0 %v7313
    %7362 = vmatprep.subr.bf16.mxu0 0
    %7363 = vmatpush1.bf16.msra.mxu0 %v7314
    %7364 = vmatprep.subr.bf16.mxu0 0
    %7365 = vmatpush1.bf16.msra.mxu0 %v7315
    %7366 = vmatprep.subr.bf16.mxu0 0
    %7367 = vmatpush1.bf16.msra.mxu0 %v7316
    %7368 = vmatprep.subr.bf16.mxu0 0
    %7369 = vmatpush1.bf16.msra.mxu0 %v7317
    %7370 = vmatprep.subr.bf16.mxu0 0
    %7371 = vmatpush1.bf16.msra.mxu0 %v7318
    %7372 = vmatprep.subr.bf16.mxu0 0
    %7373 = vmatpush1.bf16.msra.mxu0 %v7319
    %7374 = vmatprep.subr.bf16.mxu0 0
    %7375 = vmatpush1.bf16.msra.mxu0 %v7320
    %7376 = vmatprep.mubr.bf16.mxu0 %v7290
    %7377 = vmatmul.mubr.bf16.gmra.mrb[0].mxu0 %v7289
    %v7378 = vpop.f32.mrb[0].mxu0
    %v7379 = vadd.f32 %v7342, %v7378
    %v7380 = vpop.f32.mrb[0].mxu0
    %v7381 = vpop.f32.mrb[0].mxu0
    %v7382 = vadd.f32 %v7342, %v7381
    %v7383 = vpop.f32.mrb[0].mxu0
    %7384 = vmatprep.mubr.bf16.mxu0 %v7294
    %7385 = vmatmul.mubr.bf16.gmra.mrb[0].mxu0 %v7293
    %v7386 = vpop.f32.mrb[0].mxu0
    %v7387 = vadd.f32 %v7342, %v7386
    %v7388 = vpop.f32.mrb[0].mxu0
    %v7389 = vpop.f32.mrb[0].mxu0
    %v7390 = vadd.f32 %v7342, %v7389
    %v7391 = vpop.f32.mrb[0].mxu0
    %7392 = vmatprep.mubr.bf16.mxu0 %v7298
    %7393 = vmatmul.mubr.bf16.gmra.mrb[0].mxu0 %v7297
    %v7394 = vpop.f32.mrb[0].mxu0
    %v7395 = vadd.f32 %v7342, %v7394
    %v7396 = vpop.f32.mrb[0].mxu0
    %v7397 = vpop.f32.mrb[0].mxu0
    %v7398 = vadd.f32 %v7342, %v7397
    %v7399 = vpop.f32.mrb[0].mxu0
    %7400 = vmatprep.mubr.bf16.mxu0 %v7302
    %7401 = vmatmul.mubr.bf16.gmra.mrb[0].mxu0 %v7301
    %v7402 = vpop.f32.mrb[0].mxu0
    %v7403 = vadd.f32 %v7342, %v7402
    %v7404 = vpop.f32.mrb[0].mxu0
    %v7405 = vpop.f32.mrb[0].mxu0
    %v7406 = vadd.f32 %v7342, %v7405
    %v7407 = vpop.f32.mrb[0].mxu0
    %7408 = vdwg.mxu0
    %7409 = vmatprep.subr.bf16.mxu0 0
    %7410 = vmatpush1.bf16.msra.mxu0 %v7321
    %7411 = vmatprep.subr.bf16.mxu0 0
    %7412 = vmatpush1.bf16.msra.mxu0 %v7322
    %7413 = vmatprep.subr.bf16.mxu0 0
    %7414 = vmatpush1.bf16.msra.mxu0 %v7323
    %7415 = vmatprep.subr.bf16.mxu0 0
    %7416 = vmatpush1.bf16.msra.mxu0 %v7324
    %7417 = vmatprep.subr.bf16.mxu0 0
    %7418 = vmatpush1.bf16.msra.mxu0 %v7325
    %7419 = vmatprep.subr.bf16.mxu0 0
    %7420 = vmatpush1.bf16.msra.mxu0 %v7326
    %7421 = vmatprep.subr.bf16.mxu0 0
    %7422 = vmatpush1.bf16.msra.mxu0 %v7327
    %7423 = vmatprep.subr.bf16.mxu0 0
    %7424 = vmatpush1.bf16.msra.mxu0 %v7328
    %7425 = vmatprep.subr.bf16.mxu0 0
    %7426 = vmatpush1.bf16.msra.mxu0 %v7329
    %7427 = vmatprep.subr.bf16.mxu0 0
    %7428 = vmatpush1.bf16.msra.mxu0 %v7330
    %7429 = vmatprep.subr.bf16.mxu0 0
    %7430 = vmatpush1.bf16.msra.mxu0 %v7331
    %7431 = vmatprep.subr.bf16.mxu0 0
    %7432 = vmatpush1.bf16.msra.mxu0 %v7332
    %7433 = vmatprep.subr.bf16.mxu0 0
    %7434 = vmatpush1.bf16.msra.mxu0 %v7333
    %7435 = vmatprep.subr.bf16.mxu0 0
    %7436 = vmatpush1.bf16.msra.mxu0 %v7334
    %7437 = vmatprep.subr.bf16.mxu0 0
    %7438 = vmatpush1.bf16.msra.mxu0 %v7335
    %7439 = vmatprep.subr.bf16.mxu0 0
    %7440 = vmatpush1.bf16.msra.mxu0 %v7336
    %7441 = vmatprep.mubr.bf16.mxu0 %v7292
    %7442 = vmatmul.mubr.bf16.gmra.mrb[0].mxu0 %v7291
    %v7443 = vpop.f32.mrb[0].mxu0
    %v7444 = vadd.f32 %v7379, %v7443
    %v7445 = vpop.f32.mrb[0].mxu0
    %v7446 = vpop.f32.mrb[0].mxu0
    %v7447 = vadd.f32 %v7382, %v7446
    %v7448 = vpop.f32.mrb[0].mxu0
    %7449 = vmatprep.mubr.bf16.mxu0 %v7296
    %7450 = vmatmul.mubr.bf16.gmra.mrb[0].mxu0 %v7295
    %v7451 = vpop.f32.mrb[0].mxu0
    %v7452 = vadd.f32 %v7387, %v7451
    %v7453 = vpop.f32.mrb[0].mxu0
    %v7454 = vpop.f32.mrb[0].mxu0
    %v7455 = vadd.f32 %v7390, %v7454
    %v7456 = vpop.f32.mrb[0].mxu0
    %7457 = vmatprep.mubr.bf16.mxu0 %v7300
    %7458 = vmatmul.mubr.bf16.gmra.mrb[0].mxu0 %v7299
    %v7459 = vpop.f32.mrb[0].mxu0
    %v7460 = vadd.f32 %v7395, %v7459
    %v7461 = vpop.f32.mrb[0].mxu0
    %v7462 = vpop.f32.mrb[0].mxu0
    %v7463 = vadd.f32 %v7398, %v7462
    %v7464 = vpop.f32.mrb[0].mxu0
    %7465 = vmatprep.mubr.bf16.mxu0 %v7304
    %7466 = vmatmul.mubr.bf16.gmra.mrb[0].mxu0 %v7303
    %v7467 = vpop.f32.mrb[0].mxu0
    %v7468 = vadd.f32 %v7403, %v7467
    %v7469 = vpop.f32.mrb[0].mxu0
    %v7470 = vpop.f32.mrb[0].mxu0
    %v7471 = vadd.f32 %v7406, %v7470
    %v7472 = vpop.f32.mrb[0].mxu0
    %7473 = vdwg.mxu0
    %7474 = vst [vmem:[#allocation4] sm:$0xff] %v7444
    %7475 = vst [vmem:[#allocation4 + $0x8] sm:$0xff] %v7447
    %7476 = vst [vmem:[#allocation4 + $0x10] sm:$0xff] %v7452
    %7477 = vst [vmem:[#allocation4 + $0x18] sm:$0xff] %v7455
    %7478 = vst [vmem:[#allocation4 + $0x20] sm:$0xff] %v7460
    %7479 = vst [vmem:[#allocation4 + $0x28] sm:$0xff] %v7463
    %7480 = vst [vmem:[#allocation4 + $0x30] sm:$0xff] %v7468
    %7481 = vst [vmem:[#allocation4 + $0x38] sm:$0xff] %v7471
    %v7482 = vld [vmem:[%s6] sm:$0xf]
    %v7483 = vld [vmem:[%s6 + $0x4] sm:$0xf]
    %v7484 = vld [vmem:[%s6 + $0x8] sm:$0xf]
    %v7485 = vld [vmem:[%s6 + $0xc] sm:$0xf]
    %v7486 = vld [vmem:[#allocation4] sm:$0xff]
    %v7491 = vunpack.c.l.b16 %v7482
    %v7492 = vunpack.c.l.b16 %v7483
    %v7493 = vunpack.c.l.b16 %v7484
    %v7494 = vunpack.c.l.b16 %v7485
    %v7495 = vpack.c.b16 %v7492, %v7491
    %v7496 = vpack.c.b16 %v7494, %v7493
    %vm7499 = vcmask 261120
    %v7501 = vsel %vm7499, 0, 0
    %7503 = vmatprep.subr.bf16.mxu0 0
    %7504 = vmatpush1.bf16.msra.mxu0 %v7495
    %7505 = vmatprep.subr.bf16.mxu0 0
    %7506 = vmatpush1.bf16.msra.mxu0 %v7496
    %7507 = vmatprep.subr.bf16.mxu0 0
    %7508 = vmatpush1.bf16.msra.mxu0 0
    %7509 = vmatprep.subr.bf16.mxu0 0
    %7510 = vmatpush1.bf16.msra.mxu0 0
    %7511 = vmatprep.subr.bf16.mxu0 0
    %7512 = vmatpush1.bf16.msra.mxu0 0
    %7513 = vmatprep.subr.bf16.mxu0 0
    %7514 = vmatpush1.bf16.msra.mxu0 0
    %7515 = vmatprep.subr.bf16.mxu0 0
    %7516 = vmatpush1.bf16.msra.mxu0 0
    %7517 = vmatprep.subr.bf16.mxu0 0
    %7518 = vmatpush1.bf16.msra.mxu0 0
    %7519 = vmatprep.subr.bf16.mxu0 0
    %7520 = vmatpush1.bf16.msra.mxu0 0
    %7521 = vmatprep.subr.bf16.mxu0 0
    %7522 = vmatpush1.bf16.msra.mxu0 0
    %7523 = vmatprep.subr.bf16.mxu0 0
    %7524 = vmatpush1.bf16.msra.mxu0 0
    %7525 = vmatprep.subr.bf16.mxu0 0
    %7526 = vmatpush1.bf16.msra.mxu0 0
    %7527 = vmatprep.subr.bf16.mxu0 0
    %7528 = vmatpush1.bf16.msra.mxu0 0
    %7529 = vmatprep.subr.bf16.mxu0 0
    %7530 = vmatpush1.bf16.msra.mxu0 0
    %7531 = vmatprep.subr.bf16.mxu0 0
    %7532 = vmatpush1.bf16.msra.mxu0 0
    %7533 = vmatprep.subr.bf16.mxu0 0
    %7534 = vmatpush1.bf16.msra.mxu0 0
    %7535 = vmatprep.mubr.bf16.mxu0 0
    %7536 = vmatmul.mubr.bf16.gmra.mrb[0].mxu0 %v7501
    %v7537 = vpop.f32.mrb[0].mxu0
    %v7538 = vadd.f32 0.0, %v7537
    %v7539 = vpop.f32.mrb[0].mxu0
    %v7540 = vpop.f32.mrb[0].mxu0
    %v7541 = vpop.f32.mrb[0].mxu0
    %7542 = vdwg.mxu0
    %v7543 = vadd.f32 %v7486, %v7538
    %v7544 = vxor.u32 %v7543, 2147483648
    %v7545 = vmul.f32 %v7544, 1.442695
    %v7546 = vpow.pop %v7545
    %v7547 = vadd.f32 %v7546, 1.0
    %v7548 = vrcp.pop %v7547
    %v7549 = vmul.f32 1.0, %v7548
    %v7550 = vtanh.pop %v7543
    %v7551 = vmul.f32 %v7549, 0.0
    %7553 = vrot.lane.b32.xlu0 %v7550, 64
    %v7554 = vpop.permute.xlu0 %7553
    %v7556 = vmul.f32 %v7549, %v7554
    %7558 = vrot.lane.b32.xlu0 %v7556, 32
    %v7559 = vpop.permute.xlu0 %7558
    %v7561 = vadd.f32 %v7551, %v7559
    %v7562 = vtanh.pop %v7561
    %7564 = vrot.lane.b32.xlu0 %v7562, 64
    %v7565 = vpop.permute.xlu0 %7564
    %v7567 = vmul.f32 %v7549, %v7565
    %v7568 = vld [vmem:[#allocation4 + $0x8] sm:$0xff]
    %v7569 = vpack.c.bf16 %v7567, %v7567
    %7571 = vrot.lane.b32.xlu0 %v7569, 32
    %v7572 = vpop.permute.xlu0 %7571
    %v7574 = vsel %vm7499, %v7572, 0
    %7576 = vmatprep.subr.bf16.mxu0 0
    %7577 = vmatpush1.bf16.msra.mxu0 %v7495
    %7578 = vmatprep.subr.bf16.mxu0 0
    %7579 = vmatpush1.bf16.msra.mxu0 %v7496
    %7580 = vmatprep.subr.bf16.mxu0 0
    %7581 = vmatpush1.bf16.msra.mxu0 0
    %7582 = vmatprep.subr.bf16.mxu0 0
    %7583 = vmatpush1.bf16.msra.mxu0 0
    %7584 = vmatprep.subr.bf16.mxu0 0
    %7585 = vmatpush1.bf16.msra.mxu0 0
    %7586 = vmatprep.subr.bf16.mxu0 0
    %7587 = vmatpush1.bf16.msra.mxu0 0
    %7588 = vmatprep.subr.bf16.mxu0 0
    %7589 = vmatpush1.bf16.msra.mxu0 0
    %7590 = vmatprep.subr.bf16.mxu0 0
    %7591 = vmatpush1.bf16.msra.mxu0 0
    %7592 = vmatprep.subr.bf16.mxu0 0
    %7593 = vmatpush1.bf16.msra.mxu0 0
    %7594 = vmatprep.subr.bf16.mxu0 0
    %7595 = vmatpush1.bf16.msra.mxu0 0
    %7596 = vmatprep.subr.bf16.mxu0 0
    %7597 = vmatpush1.bf16.msra.mxu0 0
    %7598 = vmatprep.subr.bf16.mxu0 0
    %7599 = vmatpush1.bf16.msra.mxu0 0
    %7600 = vmatprep.subr.bf16.mxu0 0
    %7601 = vmatpush1.bf16.msra.mxu0 0
    %7602 = vmatprep.subr.bf16.mxu0 0
    %7603 = vmatpush1.bf16.msra.mxu0 0
    %7604 = vmatprep.subr.bf16.mxu0 0
    %7605 = vmatpush1.bf16.msra.mxu0 0
    %7606 = vmatprep.subr.bf16.mxu0 0
    %7607 = vmatpush1.bf16.msra.mxu0 0
    %7608 = vmatprep.mubr.bf16.mxu0 0
    %7609 = vmatmul.mubr.bf16.gmra.mrb[0].mxu0 %v7574
    %v7610 = vpop.f32.mrb[0].mxu0
    %v7611 = vadd.f32 0.0, %v7610
    %v7612 = vpop.f32.mrb[0].mxu0
    %v7613 = vpop.f32.mrb[0].mxu0
    %v7614 = vpop.f32.mrb[0].mxu0
    %7615 = vdwg.mxu0
    %v7616 = vadd.f32 %v7568, %v7611
    %v7617 = vxor.u32 %v7616, 2147483648
    %v7618 = vmul.f32 %v7617, 1.442695
    %v7619 = vpow.pop %v7618
    %v7620 = vadd.f32 %v7619, 1.0
    %v7621 = vrcp.pop %v7620
    %v7622 = vmul.f32 1.0, %v7621
    %v7623 = vtanh.pop %v7616
    %v7624 = vmul.f32 %v7622, %v7561
    %7626 = vrot.lane.b32.xlu0 %v7623, 64
    %v7627 = vpop.permute.xlu0 %7626
    %v7629 = vmul.f32 %v7622, %v7627
    %7631 = vrot.lane.b32.xlu0 %v7629, 32
    %v7632 = vpop.permute.xlu0 %7631
    %v7634 = vadd.f32 %v7624, %v7632
    %v7635 = vtanh.pop %v7634
    %7637 = vrot.lane.b32.xlu0 %v7635, 64
    %v7638 = vpop.permute.xlu0 %7637
    %v7640 = vmul.f32 %v7622, %v7638
    %v7641 = vld [vmem:[#allocation4 + $0x10] sm:$0xff]
    %v7642 = vpack.c.bf16 %v7640, %v7640
    %7644 = vrot.lane.b32.xlu0 %v7642, 32
    %v7645 = vpop.permute.xlu0 %7644
    %v7647 = vsel %vm7499, %v7645, 0
    %7649 = vmatprep.subr.bf16.mxu0 0
    %7650 = vmatpush1.bf16.msra.mxu0 %v7495
    %7651 = vmatprep.subr.bf16.mxu0 0
    %7652 = vmatpush1.bf16.msra.mxu0 %v7496
    %7653 = vmatprep.subr.bf16.mxu0 0
    %7654 = vmatpush1.bf16.msra.mxu0 0
    %7655 = vmatprep.subr.bf16.mxu0 0
    %7656 = vmatpush1.bf16.msra.mxu0 0
    %7657 = vmatprep.subr.bf16.mxu0 0
    %7658 = vmatpush1.bf16.msra.mxu0 0
    %7659 = vmatprep.subr.bf16.mxu0 0
    %7660 = vmatpush1.bf16.msra.mxu0 0
    %7661 = vmatprep.subr.bf16.mxu0 0
    %7662 = vmatpush1.bf16.msra.mxu0 0
    %7663 = vmatprep.subr.bf16.mxu0 0
    %7664 = vmatpush1.bf16.msra.mxu0 0
    %7665 = vmatprep.subr.bf16.mxu0 0
    %7666 = vmatpush1.bf16.msra.mxu0 0
    %7667 = vmatprep.subr.bf16.mxu0 0
    %7668 = vmatpush1.bf16.msra.mxu0 0
    %7669 = vmatprep.subr.bf16.mxu0 0
    %7670 = vmatpush1.bf16.msra.mxu0 0
    %7671 = vmatprep.subr.bf16.mxu0 0
    %7672 = vmatpush1.bf16.msra.mxu0 0
    %7673 = vmatprep.subr.bf16.mxu0 0
    %7674 = vmatpush1.bf16.msra.mxu0 0
    %7675 = vmatprep.subr.bf16.mxu0 0
    %7676 = vmatpush1.bf16.msra.mxu0 0
    %7677 = vmatprep.subr.bf16.mxu0 0
    %7678 = vmatpush1.bf16.msra.mxu0 0
    %7679 = vmatprep.subr.bf16.mxu0 0
    %7680 = vmatpush1.bf16.msra.mxu0 0
    %7681 = vmatprep.mubr.bf16.mxu0 0
    %7682 = vmatmul.mubr.bf16.gmra.mrb[0].mxu0 %v7647
    %v7683 = vpop.f32.mrb[0].mxu0
    %v7684 = vadd.f32 0.0, %v7683
    %v7685 = vpop.f32.mrb[0].mxu0
    %v7686 = vpop.f32.mrb[0].mxu0
    %v7687 = vpop.f32.mrb[0].mxu0
    %7688 = vdwg.mxu0
    %v7689 = vadd.f32 %v7641, %v7684
    %v7690 = vxor.u32 %v7689, 2147483648
    %v7691 = vmul.f32 %v7690, 1.442695
    %v7692 = vpow.pop %v7691
    %v7693 = vadd.f32 %v7692, 1.0
    %v7694 = vrcp.pop %v7693
    %v7695 = vmul.f32 1.0, %v7694
    %v7696 = vtanh.pop %v7689
    %v7697 = vmul.f32 %v7695, %v7634
    %7699 = vrot.lane.b32.xlu0 %v7696, 64
    %v7700 = vpop.permute.xlu0 %7699
    %v7702 = vmul.f32 %v7695, %v7700
    %7704 = vrot.lane.b32.xlu0 %v7702, 32
    %v7705 = vpop.permute.xlu0 %7704
    %v7707 = vadd.f32 %v7697, %v7705
    %v7708 = vtanh.pop %v7707
    %7710 = vrot.lane.b32.xlu0 %v7708, 64
    %v7711 = vpop.permute.xlu0 %7710
    %v7713 = vmul.f32 %v7695, %v7711
    %v7714 = vld [vmem:[#allocation4 + $0x18] sm:$0xff]
    %v7715 = vpack.c.bf16 %v7713, %v7713
    %7717 = vrot.lane.b32.xlu0 %v7715, 32
    %v7718 = vpop.permute.xlu0 %7717
    %v7720 = vsel %vm7499, %v7718, 0
    %7722 = vmatprep.subr.bf16.mxu0 0
    %7723 = vmatpush1.bf16.msra.mxu0 %v7495
    %7724 = vmatprep.subr.bf16.mxu0 0
    %7725 = vmatpush1.bf16.msra.mxu0 %v7496
    %7726 = vmatprep.subr.bf16.mxu0 0
    %7727 = vmatpush1.bf16.msra.mxu0 0
    %7728 = vmatprep.subr.bf16.mxu0 0
    %7729 = vmatpush1.bf16.msra.mxu0 0
    %7730 = vmatprep.subr.bf16.mxu0 0
    %7731 = vmatpush1.bf16.msra.mxu0 0
    %7732 = vmatprep.subr.bf16.mxu0 0
    %7733 = vmatpush1.bf16.msra.mxu0 0
    %7734 = vmatprep.subr.bf16.mxu0 0
    %7735 = vmatpush1.bf16.msra.mxu0 0
    %7736 = vmatprep.subr.bf16.mxu0 0
    %7737 = vmatpush1.bf16.msra.mxu0 0
    %7738 = vmatprep.subr.bf16.mxu0 0
    %7739 = vmatpush1.bf16.msra.mxu0 0
    %7740 = vmatprep.subr.bf16.mxu0 0
    %7741 = vmatpush1.bf16.msra.mxu0 0
    %7742 = vmatprep.subr.bf16.mxu0 0
    %7743 = vmatpush1.bf16.msra.mxu0 0
    %7744 = vmatprep.subr.bf16.mxu0 0
    %7745 = vmatpush1.bf16.msra.mxu0 0
    %7746 = vmatprep.subr.bf16.mxu0 0
    %7747 = vmatpush1.bf16.msra.mxu0 0
    %7748 = vmatprep.subr.bf16.mxu0 0
    %7749 = vmatpush1.bf16.msra.mxu0 0
    %7750 = vmatprep.subr.bf16.mxu0 0
    %7751 = vmatpush1.bf16.msra.mxu0 0
    %7752 = vmatprep.subr.bf16.mxu0 0
    %7753 = vmatpush1.bf16.msra.mxu0 0
    %7754 = vmatprep.mubr.bf16.mxu0 0
    %7755 = vmatmul.mubr.bf16.gmra.mrb[0].mxu0 %v7720
    %v7756 = vpop.f32.mrb[0].mxu0
    %v7757 = vadd.f32 0.0, %v7756
    %v7758 = vpop.f32.mrb[0].mxu0
    %v7759 = vpop.f32.mrb[0].mxu0
    %v7760 = vpop.f32.mrb[0].mxu0
    %7761 = vdwg.mxu0
    %v7762 = vadd.f32 %v7714, %v7757
    %v7763 = vxor.u32 %v7762, 2147483648
    %v7764 = vmul.f32 %v7763, 1.442695
    %v7765 = vpow.pop %v7764
    %v7766 = vadd.f32 %v7765, 1.0
    %v7767 = vrcp.pop %v7766
    %v7768 = vmul.f32 1.0, %v7767
    %v7769 = vtanh.pop %v7762
    %v7770 = vmul.f32 %v7768, %v7707
    %7772 = vrot.lane.b32.xlu0 %v7769, 64
    %v7773 = vpop.permute.xlu0 %7772
    %v7775 = vmul.f32 %v7768, %v7773
    %7777 = vrot.lane.b32.xlu0 %v7775, 32
    %v7778 = vpop.permute.xlu0 %7777
    %v7780 = vadd.f32 %v7770, %v7778
    %v7781 = vtanh.pop %v7780
    %7783 = vrot.lane.b32.xlu0 %v7781, 64
    %v7784 = vpop.permute.xlu0 %7783
    %v7786 = vmul.f32 %v7768, %v7784
    %v7787 = vld [vmem:[#allocation4 + $0x20] sm:$0xff]
    %v7788 = vpack.c.bf16 %v7786, %v7786
    %7790 = vrot.lane.b32.xlu0 %v7788, 32
    %v7791 = vpop.permute.xlu0 %7790
    %v7793 = vsel %vm7499, %v7791, 0
    %7795 = vmatprep.subr.bf16.mxu0 0
    %7796 = vmatpush1.bf16.msra.mxu0 %v7495
    %7797 = vmatprep.subr.bf16.mxu0 0
    %7798 = vmatpush1.bf16.msra.mxu0 %v7496
    %7799 = vmatprep.subr.bf16.mxu0 0
    %7800 = vmatpush1.bf16.msra.mxu0 0
    %7801 = vmatprep.subr.bf16.mxu0 0
    %7802 = vmatpush1.bf16.msra.mxu0 0
    %7803 = vmatprep.subr.bf16.mxu0 0
    %7804 = vmatpush1.bf16.msra.mxu0 0
    %7805 = vmatprep.subr.bf16.mxu0 0
    %7806 = vmatpush1.bf16.msra.mxu0 0
    %7807 = vmatprep.subr.bf16.mxu0 0
    %7808 = vmatpush1.bf16.msra.mxu0 0
    %7809 = vmatprep.subr.bf16.mxu0 0
    %7810 = vmatpush1.bf16.msra.mxu0 0
    %7811 = vmatprep.subr.bf16.mxu0 0
    %7812 = vmatpush1.bf16.msra.mxu0 0
    %7813 = vmatprep.subr.bf16.mxu0 0
    %7814 = vmatpush1.bf16.msra.mxu0 0
    %7815 = vmatprep.subr.bf16.mxu0 0
    %7816 = vmatpush1.bf16.msra.mxu0 0
    %7817 = vmatprep.subr.bf16.mxu0 0
    %7818 = vmatpush1.bf16.msra.mxu0 0
    %7819 = vmatprep.subr.bf16.mxu0 0
    %7820 = vmatpush1.bf16.msra.mxu0 0
    %7821 = vmatprep.subr.bf16.mxu0 0
    %7822 = vmatpush1.bf16.msra.mxu0 0
    %7823 = vmatprep.subr.bf16.mxu0 0
    %7824 = vmatpush1.bf16.msra.mxu0 0
    %7825 = vmatprep.subr.bf16.mxu0 0
    %7826 = vmatpush1.bf16.msra.mxu0 0
    %7827 = vmatprep.mubr.bf16.mxu0 0
    %7828 = vmatmul.mubr.bf16.gmra.mrb[0].mxu0 %v7793
    %v7829 = vpop.f32.mrb[0].mxu0
    %v7830 = vadd.f32 0.0, %v7829
    %v7831 = vpop.f32.mrb[0].mxu0
    %v7832 = vpop.f32.mrb[0].mxu0
    %v7833 = vpop.f32.mrb[0].mxu0
    %7834 = vdwg.mxu0
    %v7835 = vadd.f32 %v7787, %v7830
    %v7836 = vxor.u32 %v7835, 2147483648
    %v7837 = vmul.f32 %v7836, 1.442695
    %v7838 = vpow.pop %v7837
    %v7839 = vadd.f32 %v7838, 1.0
    %v7840 = vrcp.pop %v7839
    %v7841 = vmul.f32 1.0, %v7840
    %v7842 = vtanh.pop %v7835
    %v7843 = vmul.f32 %v7841, %v7780
    %7845 = vrot.lane.b32.xlu0 %v7842, 64
    %v7846 = vpop.permute.xlu0 %7845
    %v7848 = vmul.f32 %v7841, %v7846
    %7850 = vrot.lane.b32.xlu0 %v7848, 32
    %v7851 = vpop.permute.xlu0 %7850
    %v7853 = vadd.f32 %v7843, %v7851
    %v7854 = vtanh.pop %v7853
    %7856 = vrot.lane.b32.xlu0 %v7854, 64
    %v7857 = vpop.permute.xlu0 %7856
    %v7859 = vmul.f32 %v7841, %v7857
    %v7860 = vld [vmem:[#allocation4 + $0x28] sm:$0xff]
    %v7861 = vpack.c.bf16 %v7859, %v7859
    %7863 = vrot.lane.b32.xlu0 %v7861, 32
    %v7864 = vpop.permute.xlu0 %7863
    %v7866 = vsel %vm7499, %v7864, 0
    %7868 = vmatprep.subr.bf16.mxu0 0
    %7869 = vmatpush1.bf16.msra.mxu0 %v7495
    %7870 = vmatprep.subr.bf16.mxu0 0
    %7871 = vmatpush1.bf16.msra.mxu0 %v7496
    %7872 = vmatprep.subr.bf16.mxu0 0
    %7873 = vmatpush1.bf16.msra.mxu0 0
    %7874 = vmatprep.subr.bf16.mxu0 0
    %7875 = vmatpush1.bf16.msra.mxu0 0
    %7876 = vmatprep.subr.bf16.mxu0 0
    %7877 = vmatpush1.bf16.msra.mxu0 0
    %7878 = vmatprep.subr.bf16.mxu0 0
    %7879 = vmatpush1.bf16.msra.mxu0 0
    %7880 = vmatprep.subr.bf16.mxu0 0
    %7881 = vmatpush1.bf16.msra.mxu0 0
    %7882 = vmatprep.subr.bf16.mxu0 0
    %7883 = vmatpush1.bf16.msra.mxu0 0
    %7884 = vmatprep.subr.bf16.mxu0 0
    %7885 = vmatpush1.bf16.msra.mxu0 0
    %7886 = vmatprep.subr.bf16.mxu0 0
    %7887 = vmatpush1.bf16.msra.mxu0 0
    %7888 = vmatprep.subr.bf16.mxu0 0
    %7889 = vmatpush1.bf16.msra.mxu0 0
    %7890 = vmatprep.subr.bf16.mxu0 0
    %7891 = vmatpush1.bf16.msra.mxu0 0
    %7892 = vmatprep.subr.bf16.mxu0 0
    %7893 = vmatpush1.bf16.msra.mxu0 0
    %7894 = vmatprep.subr.bf16.mxu0 0
    %7895 = vmatpush1.bf16.msra.mxu0 0
    %7896 = vmatprep.subr.bf16.mxu0 0
    %7897 = vmatpush1.bf16.msra.mxu0 0
    %7898 = vmatprep.subr.bf16.mxu0 0
    %7899 = vmatpush1.bf16.msra.mxu0 0
    %7900 = vmatprep.mubr.bf16.mxu0 0
    %7901 = vmatmul.mubr.bf16.gmra.mrb[0].mxu0 %v7866
    %v7902 = vpop.f32.mrb[0].mxu0
    %v7903 = vadd.f32 0.0, %v7902
    %v7904 = vpop.f32.mrb[0].mxu0
    %v7905 = vpop.f32.mrb[0].mxu0
    %v7906 = vpop.f32.mrb[0].mxu0
    %7907 = vdwg.mxu0
    %v7908 = vadd.f32 %v7860, %v7903
    %v7909 = vxor.u32 %v7908, 2147483648
    %v7910 = vmul.f32 %v7909, 1.442695
    %v7911 = vpow.pop %v7910
    %v7912 = vadd.f32 %v7911, 1.0
    %v7913 = vrcp.pop %v7912
    %v7914 = vmul.f32 1.0, %v7913
    %v7915 = vtanh.pop %v7908
    %v7916 = vmul.f32 %v7914, %v7853
    %7918 = vrot.lane.b32.xlu0 %v7915, 64
    %v7919 = vpop.permute.xlu0 %7918
    %v7921 = vmul.f32 %v7914, %v7919
    %7923 = vrot.lane.b32.xlu0 %v7921, 32
    %v7924 = vpop.permute.xlu0 %7923
    %v7926 = vadd.f32 %v7916, %v7924
    %v7927 = vtanh.pop %v7926
    %7929 = vrot.lane.b32.xlu0 %v7927, 64
    %v7930 = vpop.permute.xlu0 %7929
    %v7932 = vmul.f32 %v7914, %v7930
    %v7933 = vld [vmem:[#allocation4 + $0x30] sm:$0xff]
    %v7934 = vpack.c.bf16 %v7932, %v7932
    %7936 = vrot.lane.b32.xlu0 %v7934, 32
    %v7937 = vpop.permute.xlu0 %7936
    %v7939 = vsel %vm7499, %v7937, 0
    %7941 = vmatprep.subr.bf16.mxu0 0
    %7942 = vmatpush1.bf16.msra.mxu0 %v7495
    %7943 = vmatprep.subr.bf16.mxu0 0
    %7944 = vmatpush1.bf16.msra.mxu0 %v7496
    %7945 = vmatprep.subr.bf16.mxu0 0
    %7946 = vmatpush1.bf16.msra.mxu0 0
    %7947 = vmatprep.subr.bf16.mxu0 0
    %7948 = vmatpush1.bf16.msra.mxu0 0
    %7949 = vmatprep.subr.bf16.mxu0 0
    %7950 = vmatpush1.bf16.msra.mxu0 0
    %7951 = vmatprep.subr.bf16.mxu0 0
    %7952 = vmatpush1.bf16.msra.mxu0 0
    %7953 = vmatprep.subr.bf16.mxu0 0
    %7954 = vmatpush1.bf16.msra.mxu0 0
    %7955 = vmatprep.subr.bf16.mxu0 0
    %7956 = vmatpush1.bf16.msra.mxu0 0
    %7957 = vmatprep.subr.bf16.mxu0 0
    %7958 = vmatpush1.bf16.msra.mxu0 0
    %7959 = vmatprep.subr.bf16.mxu0 0
    %7960 = vmatpush1.bf16.msra.mxu0 0
    %7961 = vmatprep.subr.bf16.mxu0 0
    %7962 = vmatpush1.bf16.msra.mxu0 0
    %7963 = vmatprep.subr.bf16.mxu0 0
    %7964 = vmatpush1.bf16.msra.mxu0 0
    %7965 = vmatprep.subr.bf16.mxu0 0
    %7966 = vmatpush1.bf16.msra.mxu0 0
    %7967 = vmatprep.subr.bf16.mxu0 0
    %7968 = vmatpush1.bf16.msra.mxu0 0
    %7969 = vmatprep.subr.bf16.mxu0 0
    %7970 = vmatpush1.bf16.msra.mxu0 0
    %7971 = vmatprep.subr.bf16.mxu0 0
    %7972 = vmatpush1.bf16.msra.mxu0 0
    %7973 = vmatprep.mubr.bf16.mxu0 0
    %7974 = vmatmul.mubr.bf16.gmra.mrb[0].mxu0 %v7939
    %v7975 = vpop.f32.mrb[0].mxu0
    %v7976 = vadd.f32 0.0, %v7975
    %v7977 = vpop.f32.mrb[0].mxu0
    %v7978 = vpop.f32.mrb[0].mxu0
    %v7979 = vpop.f32.mrb[0].mxu0
    %7980 = vdwg.mxu0
    %v7981 = vadd.f32 %v7933, %v7976
    %v7982 = vxor.u32 %v7981, 2147483648
    %v7983 = vmul.f32 %v7982, 1.442695
    %v7984 = vpow.pop %v7983
    %v7985 = vadd.f32 %v7984, 1.0
    %v7986 = vrcp.pop %v7985
    %v7987 = vmul.f32 1.0, %v7986
    %v7988 = vtanh.pop %v7981
    %v7989 = vmul.f32 %v7987, %v7926
    %7991 = vrot.lane.b32.xlu0 %v7988, 64
    %v7992 = vpop.permute.xlu0 %7991
    %v7994 = vmul.f32 %v7987, %v7992
    %7996 = vrot.lane.b32.xlu0 %v7994, 32
    %v7997 = vpop.permute.xlu0 %7996
    %v7999 = vadd.f32 %v7989, %v7997
    %v8000 = vtanh.pop %v7999
    %8002 = vrot.lane.b32.xlu0 %v8000, 64
    %v8003 = vpop.permute.xlu0 %8002
    %v8005 = vmul.f32 %v7987, %v8003
    %v8006 = vld [vmem:[#allocation4 + $0x38] sm:$0xff]
    %v8007 = vpack.c.bf16 %v8005, %v8005
    %8009 = vrot.lane.b32.xlu0 %v8007, 32
    %v8010 = vpop.permute.xlu0 %8009
    %v8012 = vsel %vm7499, %v8010, 0
    %8014 = vmatprep.subr.bf16.mxu0 0
    %8015 = vmatpush1.bf16.msra.mxu0 %v7495
    %8016 = vmatprep.subr.bf16.mxu0 0
    %8017 = vmatpush1.bf16.msra.mxu0 %v7496
    %8018 = vmatprep.subr.bf16.mxu0 0
    %8019 = vmatpush1.bf16.msra.mxu0 0
    %8020 = vmatprep.subr.bf16.mxu0 0
    %8021 = vmatpush1.bf16.msra.mxu0 0
    %8022 = vmatprep.subr.bf16.mxu0 0
    %8023 = vmatpush1.bf16.msra.mxu0 0
    %8024 = vmatprep.subr.bf16.mxu0 0
    %8025 = vmatpush1.bf16.msra.mxu0 0
    %8026 = vmatprep.subr.bf16.mxu0 0
    %8027 = vmatpush1.bf16.msra.mxu0 0
    %8028 = vmatprep.subr.bf16.mxu0 0
    %8029 = vmatpush1.bf16.msra.mxu0 0
    %8030 = vmatprep.subr.bf16.mxu0 0
    %8031 = vmatpush1.bf16.msra.mxu0 0
    %8032 = vmatprep.subr.bf16.mxu0 0
    %8033 = vmatpush1.bf16.msra.mxu0 0
    %8034 = vmatprep.subr.bf16.mxu0 0
    %8035 = vmatpush1.bf16.msra.mxu0 0
    %8036 = vmatprep.subr.bf16.mxu0 0
    %8037 = vmatpush1.bf16.msra.mxu0 0
    %8038 = vmatprep.subr.bf16.mxu0 0
    %8039 = vmatpush1.bf16.msra.mxu0 0
    %8040 = vmatprep.subr.bf16.mxu0 0
    %8041 = vmatpush1.bf16.msra.mxu0 0
    %8042 = vmatprep.subr.bf16.mxu0 0
    %8043 = vmatpush1.bf16.msra.mxu0 0
    %8044 = vmatprep.subr.bf16.mxu0 0
    %8045 = vmatpush1.bf16.msra.mxu0 0
    %8046 = vmatprep.mubr.bf16.mxu0 0
    %8047 = vmatmul.mubr.bf16.gmra.mrb[0].mxu0 %v8012
    %v8048 = vpop.f32.mrb[0].mxu0
    %v8049 = vadd.f32 0.0, %v8048
    %v8050 = vpop.f32.mrb[0].mxu0
    %v8051 = vpop.f32.mrb[0].mxu0
    %v8052 = vpop.f32.mrb[0].mxu0
    %8053 = vdwg.mxu0
    %v8054 = vadd.f32 %v8006, %v8049
    %v8055 = vxor.u32 %v8054, 2147483648
    %v8056 = vmul.f32 %v8055, 1.442695
    %v8057 = vpow.pop %v8056
    %v8058 = vadd.f32 %v8057, 1.0
    %v8059 = vrcp.pop %v8058
    %v8060 = vmul.f32 1.0, %v8059
    %v8061 = vtanh.pop %v8054
    %v8062 = vmul.f32 %v8060, %v7999
    %8064 = vrot.lane.b32.xlu0 %v8061, 64
    %v8065 = vpop.permute.xlu0 %8064
    %v8067 = vmul.f32 %v8060, %v8065
    %8069 = vrot.lane.b32.xlu0 %v8067, 32
    %v8070 = vpop.permute.xlu0 %8069
    %v8072 = vadd.f32 %v8062, %v8070
    %v8073 = vtanh.pop %v8072
    %8075 = vrot.lane.b32.xlu0 %v8073, 64
    %v8076 = vpop.permute.xlu0 %8075
    %v8078 = vmul.f32 %v8060, %v8076
    %s8079 = sshll.u32 %s7254, 4
    %8080 = dma.done %s178, %s8079
    %v8081 = vld [vmem:[#allocation3 + $0xe0] sm:$0xff]
    %v8082 = vld [vmem:[#allocation3 + $0xe8] sm:$0xff]
    %v8083 = vld [vmem:[#allocation3 + $0xf0] sm:$0xff]
    %v8084 = vld [vmem:[#allocation3 + $0xf8] sm:$0xff]
    %v8085 = vpack.c.bf16 %v8081, %v8081
    %v8086 = vpack.c.bf16 %v8082, %v8082
    %v8087 = vpack.c.bf16 %v8083, %v8083
    %v8088 = vpack.c.bf16 %v8084, %v8084
    %v8089 = vld [vmem:[#allocation8] sm:$0xff]
    %v8090 = vld [vmem:[#allocation8 + $0x8] sm:$0xff]
    %v8091 = vld [vmem:[#allocation8 + $0x10] sm:$0xff]
    %v8092 = vld [vmem:[#allocation8 + $0x18] sm:$0xff]
    %v8093 = vld [vmem:[#allocation8 + $0x20] sm:$0xff]
    %v8094 = vld [vmem:[#allocation8 + $0x28] sm:$0xff]
    %v8095 = vld [vmem:[#allocation8 + $0x30] sm:$0xff]
    %v8096 = vld [vmem:[#allocation8 + $0x38] sm:$0xff]
    %v8097 = vld [vmem:[#allocation8 + $0x40] sm:$0xff]
    %v8098 = vld [vmem:[#allocation8 + $0x48] sm:$0xff]
    %v8099 = vld [vmem:[#allocation8 + $0x50] sm:$0xff]
    %v8100 = vld [vmem:[#allocation8 + $0x58] sm:$0xff]
    %v8101 = vld [vmem:[#allocation8 + $0x60] sm:$0xff]
    %v8102 = vld [vmem:[#allocation8 + $0x68] sm:$0xff]
    %v8103 = vld [vmem:[#allocation8 + $0x70] sm:$0xff]
    %v8104 = vld [vmem:[#allocation8 + $0x78] sm:$0xff]
    %v8105 = vld [vmem:[#allocation8 + $0x80] sm:$0xff]
    %v8106 = vld [vmem:[#allocation8 + $0x88] sm:$0xff]
    %v8107 = vld [vmem:[#allocation8 + $0x90] sm:$0xff]
    %v8108 = vld [vmem:[#allocation8 + $0x98] sm:$0xff]
    %v8109 = vld [vmem:[#allocation8 + $0xa0] sm:$0xff]
    %v8110 = vld [vmem:[#allocation8 + $0xa8] sm:$0xff]
    %v8111 = vld [vmem:[#allocation8 + $0xb0] sm:$0xff]
    %v8112 = vld [vmem:[#allocation8 + $0xb8] sm:$0xff]
    %v8113 = vld [vmem:[#allocation8 + $0xc0] sm:$0xff]
    %v8114 = vld [vmem:[#allocation8 + $0xc8] sm:$0xff]
    %v8115 = vld [vmem:[#allocation8 + $0xd0] sm:$0xff]
    %v8116 = vld [vmem:[#allocation8 + $0xd8] sm:$0xff]
    %v8117 = vld [vmem:[#allocation8 + $0xe0] sm:$0xff]
    %v8118 = vld [vmem:[#allocation8 + $0xe8] sm:$0xff]
    %v8119 = vld [vmem:[#allocation8 + $0xf0] sm:$0xff]
    %v8120 = vld [vmem:[#allocation8 + $0xf8] sm:$0xff]
    %v8121 = vld [vmem:[%s9] sm:$0x1]
    %v8123 = vlaneseq
    %v8124 = vshrl.u32 %v8123, 7
    %v8125 = vsub.s32 0, %v8124
    %v8126 = vrot.slane %v8121, %v8125
    %8128 = vmatprep.subr.bf16.mxu0 0
    %8129 = vmatpush1.bf16.msra.mxu0 %v8089
    %8130 = vmatprep.subr.bf16.mxu0 0
    %8131 = vmatpush1.bf16.msra.mxu0 %v8090
    %8132 = vmatprep.subr.bf16.mxu0 0
    %8133 = vmatpush1.bf16.msra.mxu0 %v8091
    %8134 = vmatprep.subr.bf16.mxu0 0
    %8135 = vmatpush1.bf16.msra.mxu0 %v8092
    %8136 = vmatprep.subr.bf16.mxu0 0
    %8137 = vmatpush1.bf16.msra.mxu0 %v8093
    %8138 = vmatprep.subr.bf16.mxu0 0
    %8139 = vmatpush1.bf16.msra.mxu0 %v8094
    %8140 = vmatprep.subr.bf16.mxu0 0
    %8141 = vmatpush1.bf16.msra.mxu0 %v8095
    %8142 = vmatprep.subr.bf16.mxu0 0
    %8143 = vmatpush1.bf16.msra.mxu0 %v8096
    %8144 = vmatprep.subr.bf16.mxu0 0
    %8145 = vmatpush1.bf16.msra.mxu0 %v8097
    %8146 = vmatprep.subr.bf16.mxu0 0
    %8147 = vmatpush1.bf16.msra.mxu0 %v8098
    %8148 = vmatprep.subr.bf16.mxu0 0
    %8149 = vmatpush1.bf16.msra.mxu0 %v8099
    %8150 = vmatprep.subr.bf16.mxu0 0
    %8151 = vmatpush1.bf16.msra.mxu0 %v8100
    %8152 = vmatprep.subr.bf16.mxu0 0
    %8153 = vmatpush1.bf16.msra.mxu0 %v8101
    %8154 = vmatprep.subr.bf16.mxu0 0
    %8155 = vmatpush1.bf16.msra.mxu0 %v8102
    %8156 = vmatprep.subr.bf16.mxu0 0
    %8157 = vmatpush1.bf16.msra.mxu0 %v8103
    %8158 = vmatprep.subr.bf16.mxu0 0
    %8159 = vmatpush1.bf16.msra.mxu0 %v8104
    %8160 = vmatprep.mubr.bf16.mxu0 %v8086
    %8161 = vmatmul.mubr.bf16.gmra.mrb[0].mxu0 %v8085
    %v8162 = vpop.f32.mrb[0].mxu0
    %v8163 = vadd.f32 %v8126, %v8162
    %v8164 = vpop.f32.mrb[0].mxu0
    %v8165 = vpop.f32.mrb[0].mxu0
    %v8166 = vpop.f32.mrb[0].mxu0
    %8167 = vdwg.mxu0
    %8168 = vmatprep.subr.bf16.mxu0 0
    %8169 = vmatpush1.bf16.msra.mxu0 %v8105
    %8170 = vmatprep.subr.bf16.mxu0 0
    %8171 = vmatpush1.bf16.msra.mxu0 %v8106
    %8172 = vmatprep.subr.bf16.mxu0 0
    %8173 = vmatpush1.bf16.msra.mxu0 %v8107
    %8174 = vmatprep.subr.bf16.mxu0 0
    %8175 = vmatpush1.bf16.msra.mxu0 %v8108
    %8176 = vmatprep.subr.bf16.mxu0 0
    %8177 = vmatpush1.bf16.msra.mxu0 %v8109
    %8178 = vmatprep.subr.bf16.mxu0 0
    %8179 = vmatpush1.bf16.msra.mxu0 %v8110
    %8180 = vmatprep.subr.bf16.mxu0 0
    %8181 = vmatpush1.bf16.msra.mxu0 %v8111
    %8182 = vmatprep.subr.bf16.mxu0 0
    %8183 = vmatpush1.bf16.msra.mxu0 %v8112
    %8184 = vmatprep.subr.bf16.mxu0 0
    %8185 = vmatpush1.bf16.msra.mxu0 %v8113
    %8186 = vmatprep.subr.bf16.mxu0 0
    %8187 = vmatpush1.bf16.msra.mxu0 %v8114
    %8188 = vmatprep.subr.bf16.mxu0 0
    %8189 = vmatpush1.bf16.msra.mxu0 %v8115
    %8190 = vmatprep.subr.bf16.mxu0 0
    %8191 = vmatpush1.bf16.msra.mxu0 %v8116
    %8192 = vmatprep.subr.bf16.mxu0 0
    %8193 = vmatpush1.bf16.msra.mxu0 %v8117
    %8194 = vmatprep.subr.bf16.mxu0 0
    %8195 = vmatpush1.bf16.msra.mxu0 %v8118
    %8196 = vmatprep.subr.bf16.mxu0 0
    %8197 = vmatpush1.bf16.msra.mxu0 %v8119
    %8198 = vmatprep.subr.bf16.mxu0 0
    %8199 = vmatpush1.bf16.msra.mxu0 %v8120
    %8200 = vmatprep.mubr.bf16.mxu0 %v8088
    %8201 = vmatmul.mubr.bf16.gmra.mrb[0].mxu0 %v8087
    %v8202 = vpop.f32.mrb[0].mxu0
    %v8203 = vadd.f32 %v8163, %v8202
    %v8204 = vpop.f32.mrb[0].mxu0
    %v8205 = vpop.f32.mrb[0].mxu0
    %v8206 = vpop.f32.mrb[0].mxu0
    %8207 = vdwg.mxu0
    %v8208 = vxor.u32 %v8203, 2147483648
    %v8209 = vmul.f32 %v8208, 1.442695
    %v8210 = vpow.pop %v8209
    %v8211 = vadd.f32 %v8210, 1.0
    %v8212 = vrcp.pop %v8211
    %v8213 = vmul.f32 1.0, %v8212
    %v8214 = vtanh.pop %v8203
    %v8215 = vmul.f32 %v8213, 0.0
    %8217 = vrot.lane.b32.xlu0 %v8214, 64
    %v8218 = vpop.permute.xlu0 %8217
    %v8220 = vmul.f32 %v8213, %v8218
    %8222 = vrot.lane.b32.xlu0 %v8220, 32
    %v8223 = vpop.permute.xlu0 %8222
    %v8225 = vadd.f32 %v8215, %v8223
    %v8226 = vtanh.pop %v8225
    %8228 = vrot.lane.b32.xlu0 %v8226, 64
    %v8229 = vpop.permute.xlu0 %8228
    %v8231 = vmul.f32 %v8213, %v8229
    %8233 = vrot.lane.b32.xlu0 %v8078, 32
    %v8234 = vpop.permute.xlu0 %8233
    %8237 = vrot.lane.b32.xlu0 %v8231, 64
    %v8238 = vpop.permute.xlu0 %8237
    %v8240 = vsel %vm7499, %v8234, %v8238
    %v8241 = vld [vmem:[#allocation17] sm:$0xff]
    %v8242 = vld [vmem:[#allocation17 + $0x8] sm:$0xff]
    %v8243 = vld [vmem:[#allocation17 + $0x10] sm:$0xff]
    %v8244 = vld [vmem:[#allocation17 + $0x18] sm:$0xff]
    %v8245 = vld [vmem:[#allocation17 + $0x20] sm:$0xff]
    %v8246 = vld [vmem:[#allocation17 + $0x28] sm:$0xff]
    %v8247 = vld [vmem:[#allocation17 + $0x30] sm:$0xff]
    %v8248 = vld [vmem:[#allocation17 + $0x38] sm:$0xff]
    %v8249 = vld [vmem:[%s11] sm:$0x1]
    %v8251 = vlaneseq
    %v8252 = vshrl.u32 %v8251, 7
    %v8253 = vsub.s32 0, %v8252
    %v8254 = vrot.slane %v8249, %v8253
    %vm8256 = vcmask 523264
    %v8258 = vsel %vm8256, %v8240, 0
    %8260 = vmatprep.subr.mxu0 0.0
    %8261 = vmatpush1.msra.mxu0 %v8241
    %8262 = vmatprep.subr.mxu0 0.0
    %8263 = vmatpush1.msra.mxu0 %v8242
    %8264 = vmatprep.subr.mxu0 0.0
    %8265 = vmatpush1.msra.mxu0 %v8243
    %8266 = vmatprep.subr.mxu0 0.0
    %8267 = vmatpush1.msra.mxu0 %v8244
    %8268 = vmatprep.subr.mxu0 0.0
    %8269 = vmatpush1.msra.mxu0 %v8245
    %8270 = vmatprep.subr.mxu0 0.0
    %8271 = vmatpush1.msra.mxu0 %v8246
    %8272 = vmatprep.subr.mxu0 0.0
    %8273 = vmatpush1.msra.mxu0 %v8247
    %8274 = vmatprep.subr.mxu0 0.0
    %8275 = vmatpush1.msra.mxu0 %v8248
    %8276 = vmatprep.subr.mxu0 0.0
    %8277 = vmatpush1.msra.mxu0 0.0
    %8278 = vmatprep.subr.mxu0 0.0
    %8279 = vmatpush1.msra.mxu0 0.0
    %8280 = vmatprep.subr.mxu0 0.0
    %8281 = vmatpush1.msra.mxu0 0.0
    %8282 = vmatprep.subr.mxu0 0.0
    %8283 = vmatpush1.msra.mxu0 0.0
    %8284 = vmatprep.subr.mxu0 0.0
    %8285 = vmatpush1.msra.mxu0 0.0
    %8286 = vmatprep.subr.mxu0 0.0
    %8287 = vmatpush1.msra.mxu0 0.0
    %8288 = vmatprep.subr.mxu0 0.0
    %8289 = vmatpush1.msra.mxu0 0.0
    %8290 = vmatprep.subr.mxu0 0.0
    %8291 = vmatpush1.msra.mxu0 0.0
    %8292 = vmatprep.subr.mxu0 0.0
    %8293 = vmatpush1.msra.mxu0 0.0
    %8294 = vmatprep.subr.mxu0 0.0
    %8295 = vmatpush1.msra.mxu0 0.0
    %8296 = vmatprep.subr.mxu0 0.0
    %8297 = vmatpush1.msra.mxu0 0.0
    %8298 = vmatprep.subr.mxu0 0.0
    %8299 = vmatpush1.msra.mxu0 0.0
    %8300 = vmatprep.subr.mxu0 0.0
    %8301 = vmatpush1.msra.mxu0 0.0
    %8302 = vmatprep.subr.mxu0 0.0
    %8303 = vmatpush1.msra.mxu0 0.0
    %8304 = vmatprep.subr.mxu0 0.0
    %8305 = vmatpush1.msra.mxu0 0.0
    %8306 = vmatprep.subr.mxu0 0.0
    %8307 = vmatpush1.msra.mxu0 0.0
    %8308 = vmatprep.subr.mxu0 0.0
    %8309 = vmatpush1.msra.mxu0 0.0
    %8310 = vmatprep.subr.mxu0 0.0
    %8311 = vmatpush1.msra.mxu0 0.0
    %8312 = vmatprep.subr.mxu0 0.0
    %8313 = vmatpush1.msra.mxu0 0.0
    %8314 = vmatprep.subr.mxu0 0.0
    %8315 = vmatpush1.msra.mxu0 0.0
    %8316 = vmatprep.subr.mxu0 0.0
    %8317 = vmatpush1.msra.mxu0 0.0
    %8318 = vmatprep.subr.mxu0 0.0
    %8319 = vmatpush1.msra.mxu0 0.0
    %8320 = vmatprep.subr.mxu0 0.0
    %8321 = vmatpush1.msra.mxu0 0.0
    %8322 = vmatprep.subr.mxu0 0.0
    %8323 = vmatpush1.msra.mxu0 0.0
    %8324 = vmatprep.mubr.f32.mxu0 0.0
    %8325 = vmatmul.mubr.f32.gmra.mrb[0].mxu0 %v8258
    %v8326 = vpop.f32.mrb[0].mxu0
    %v8327 = vadd.f32 %v8254, %v8326
    %v8328 = vpop.f32.mrb[0].mxu0
    %8329 = vdwg.mxu0
    %v8330 = vtanh.pop %v8327
    %v8331 = vld [vmem:[%s12] sm:$0x1]
    %v8333 = vlaneseq
    %v8334 = vshrl.u32 %v8333, 7
    %v8335 = vsub.s32 0, %v8334
    %v8336 = vrot.slane %v8331, %v8335
    %v8338 = vmul.f32 %v8330, %v8336
    %vm8339 = vcmask 818176
    %v8340 = vsel %vm8339, %v8338, 0.0
    %8341 = vadd.xlane.f32.xlu0 %v8340
    %v8342 = vpop.xlane.xlu0 %8341
    %v8343 = vld [vmem:[#allocation10] sm:$0x1]
    %v8345 = vlaneseq
    %v8346 = vshrl.u32 %v8345, 7
    %v8347 = vsub.s32 0, %v8346
    %v8348 = vrot.slane %v8343, %v8347
    %v8350 = vadd.f32 %v8342, %v8348
    %v8351 = vlaneseq
    %v8352 = vshrl.u32 %v8351, 7
    %vm8353 = vcmp.lt.s32.totalorder %v8352, 2
    %v8354 = vsel %vm8353, %v8350, -1e+30
    %vm8355 = vcmask 7168
    %v8356 = vsel %vm8355, %v8354, -inf
    %v8357 = vrot.slane %v8356, 4
    %v8358 = vmax.f32 %v8356, %v8357
    %v8359 = vrot.slane %v8358, 2
    %v8360 = vmax.f32 %v8358, %v8359
    %v8361 = vrot.slane %v8360, 1
    %v8362 = vmax.f32 %v8360, %v8361
    %v8363 = vsub.f32 %v8354, %v8362
    %v8364 = vmul.f32 %v8363, 1.442695
    %v8365 = vpow.pop %v8364
    %v8366 = vsel %vm8355, %v8365, 0.0
    %v8367 = vrot.slane %v8366, 4
    %v8368 = vadd.f32 %v8366, %v8367
    %v8369 = vrot.slane %v8368, 2
    %v8370 = vadd.f32 %v8368, %v8369
    %v8371 = vrot.slane %v8370, 1
    %v8372 = vadd.f32 %v8370, %v8371
    %v8373 = vrcp.pop %v8372
    %v8374 = vmul.f32 %v8365, %v8373
    %8376 = vset.pattern.permute.xlu0 0
    %8377 = vperm.xlu0 %8376, %v8374
    %v8378 = vpop.permute.xlu0 %8377
    %v8380 = vmul.f32 %v8378, %v8240
    %v8381 = vsel %vm8256, %v8380, 0.0
    %v8382 = vrot.slane %v8381, 4
    %v8383 = vadd.f32 %v8381, %v8382
    %v8384 = vrot.slane %v8383, 2
    %v8385 = vadd.f32 %v8383, %v8384
    %v8386 = vrot.slane %v8385, 1
    %v8387 = vadd.f32 %v8385, %v8386
    %vm8388 = vcmask 516096
    %8389 = vst.msk [vmem:[#allocation19] sm:$0x1] %vm8388, %v8387
    // Predicated region
    $region66: #{tpu_custom_call.1} parent=1 // pred_check
      _
    $region67: #{tpu_custom_call.1} parent=1 // pred_check_branch
      %8391 = sbr.rel (0) target = $region69
    $region68: #{tpu_custom_call.1} parent=1 // pred_region
      %s8393 = ssub.s32 16, 16
      %8394 = vsyncadd [#allocation13], %s8393
      %s8396 = sshll.u32 [#allocation19], 4
      %s8397 = int_to_ptr.vmem [resolvable:$true] %s8396
      %8399 = dma.vmem_to_hbm [thread:$0]  %s8397, 16, %s14, [#allocation13]
    $region69: #{tpu_custom_call.1} parent=1 // pred_fallthru
      _
    // Predicated region
    $region70: #{tpu_custom_call.1} parent=1 // pred_check
      _
    $region71: #{tpu_custom_call.1} parent=1 // pred_check_branch
      %8401 = sbr.rel (0) target = $region73
    $region72: #{tpu_custom_call.1} parent=1 // pred_region
      %8402 = dma.done [#allocation13], 16
    $region73: #{tpu_custom_call.1} parent=1 // pred_fallthru
      _
    %8403 = vsyncpa [#allocation12], 1
    %8404 = vsyncpa [#allocation15], 1
    %8405 = vsyncpa [#allocation18], 1
    %8406 = vsyncpa [#allocation13], 1
  %8407 = vsyncmov [#allocation9]
  %s8408 = vpop.sfrf %8407
  %p8409 = scmp.eq.s32.totalorder %s8408, 0
  %p8410 = pneg %p8409
  %8412 = shalt.err (%p8410)
  %s8413 = scalar_lea.sflag [#allocation9], 1
  %8414 = vsyncmov %s8413
  %s8415 = vpop.sfrf %8414
  %p8416 = scmp.eq.s32.totalorder %s8415, 0
  %p8417 = pneg %p8416
  %8419 = shalt.err (%p8417)
  %s8420 = scalar_lea.sflag [#allocation9], 2
  %8421 = vsyncmov %s8420
  %s8422 = vpop.sfrf %8421
  %p8423 = scmp.eq.s32.totalorder %s8422, 0
  %p8424 = pneg %p8423
  %8426 = shalt.err (%p8424)
  %s8427 = scalar_lea.sflag [#allocation9], 3
  %8428 = vsyncmov %s8427
  %s8429 = vpop.sfrf %8428
  %p8430 = scmp.eq.s32.totalorder %s8429, 0
  %p8431 = pneg %p8430
  %8433 = shalt.err (%p8431)

</llo_original>
